<compile_context>
chip_gen: v6e
topology: v6e:2x2x1
jax: 0.10.0
libtpu: 0.0.40
codegen_flags: <defaults>
</compile_context>

<pallas_src>
import numpy as np
import jax
import jax.numpy as jnp
from jax.experimental import pallas as pl
from jax.experimental.pallas import tpu as pltpu

# ----------------------------- configuration ---------------------------------
SAMPLE_RATE = 16000
N_FFT = 64                      # frame length == hop length (no overlap)
# TODO(synk): get_mel_transform() config (n_fft/hop/overlap/center) is unknown;
#             using a simplified non-overlapping STFT stand-in.
N_FREQS = N_FFT // 2 + 1        # 33
N_MELS = 32
T_FRAMES = 16
WAVE_LEN = N_FFT * T_FRAMES     # 1024 samples
N_FEATURES = 32                 # stand-in backbone output channels
TARGET_SIZE = 24                # TODO(synk): CFG.target_size is undefined; using 24.
GEM_EPS = 1e-6
LANES = 128
LOG10_SCALE = 10.0 / np.log(10.0)

# backbone stand-in geometry: two 3x3 / stride-2 / pad-1 convs
C1, C2 = 8, N_FEATURES
H0, W0 = T_FRAMES, N_MELS       # image = (T, n_mels) = (16, 32)
HO1, WO1 = H0 // 2, W0 // 2     # (8, 16)
HO2, WO2 = HO1 // 2, WO1 // 2   # (4, 8)

TB = 8                          # samples processed per grid step (batch tile)


# ------------------------------ host-side constants ---------------------------
def _hz_to_mel(f):
    return 2595.0 * np.log10(1.0 + f / 700.0)


def _mel_to_hz(m):
    return 700.0 * (10.0 ** (m / 2595.0) - 1.0)


def _mel_filterbank(n_freqs, n_mels, sample_rate):
    f_min, f_max = 0.0, sample_rate / 2.0
    all_freqs = np.linspace(0.0, sample_rate / 2.0, n_freqs)
    m_pts = np.linspace(_hz_to_mel(f_min), _hz_to_mel(f_max), n_mels + 2)
    f_pts = _mel_to_hz(m_pts)
    f_diff = f_pts[1:] - f_pts[:-1]
    slopes = f_pts[None, :] - all_freqs[:, None]
    down = -slopes[:, :-2] / f_diff[:-1]
    up = slopes[:, 2:] / f_diff[1:]
    fb = np.maximum(0.0, np.minimum(down, up))
    return fb.astype(np.float32)                           # (n_freqs, n_mels)


def _row_sel_blk(n_out, n_in, tb):
    """Block-diagonal (over TB samples) row selection:
       L[dy, b*n_out+o, b*n_in+h] = 1 iff h == 2*o + dy - 1 (pad rows are zero)."""
    L = np.zeros((3, tb * n_out, tb * n_in), np.float32)
    for dy in range(3):
        for b in range(tb):
            for o in range(n_out):
                h = 2 * o + dy - 1
                if 0 <= h < n_in:
                    L[dy, b * n_out + o, b * n_in + h] = 1.0
    return L


def _col_sel(n_in_pad, n_in, n_out):
    """S[dx, w, o] = 1 if w == 2*o + dx - 1 (valid w only)."""
    S = np.zeros((3, n_in_pad, n_out), np.float32)
    for dx in range(3):
        for o in range(n_out):
            w = 2 * o + dx - 1
            if 0 <= w < n_in:
                S[dx, w, o] = 1.0
    return S


def make_consts(tb=TB):
    # Windowed DFT folded into ONE lane-dense matrix: cols [0:33] = win*cos,
    # cols [33:66] = -win*sin, rest zero.
    n = np.arange(N_FFT)[:, None].astype(np.float64)
    k = np.arange(N_FREQS)[None, :].astype(np.float64)
    ang = 2.0 * np.pi * n * k / N_FFT
    window = 0.5 - 0.5 * np.cos(2.0 * np.pi * np.arange(N_FFT) / N_FFT)   # periodic Hann
    dft = np.zeros((N_FFT, LANES), np.float32)
    dft[:, :N_FREQS] = window[:, None] * np.cos(ang)
    dft[:, N_FREQS:2 * N_FREQS] = window[:, None] * (-np.sin(ang))

    # Mel filterbank duplicated over the re/im halves so that
    # (re^2 + im^2) @ fb   ==   power_full @ fb2  (single lane-dense matmul).
    fb = _mel_filterbank(N_FREQS, N_MELS, SAMPLE_RATE)
    fb2 = np.zeros((LANES, LANES), np.float32)
    fb2[:N_FREQS, :N_MELS] = fb
    fb2[N_FREQS:2 * N_FREQS, :N_MELS] = fb

    # conv tap-selection constants (row selection block-diagonal over TB)
    l1 = _row_sel_blk(HO1, H0, tb)       # (3, TB*8, TB*16)
    l2 = _row_sel_blk(HO2, HO1, tb)      # (3, TB*4, TB*8)
    sel1 = _col_sel(LANES, W0, WO1)      # (3, 128, 16)  (host-side only)
    sel2 = _col_sel(WO1, WO1, WO2)       # (3, 16, 8)    (host-side only)

    # per-sample spatial row-sum matrix for GeM: (TB, TB*HO2)
    rsum = np.zeros((tb, tb * HO2), np.float32)
    for b in range(tb):
        rsum[b, b * HO2:(b + 1) * HO2] = 1.0

    # GeM lane pooling: mean over each channel's WO2 lanes and HO2 rows
    gpool = np.zeros((C2 * WO2, LANES), np.float32)
    for c in range(C2):
        gpool[c * WO2:(c + 1) * WO2, c] = 1.0 / float(HO2 * WO2)

    return {
        "dft": jnp.asarray(dft, jnp.bfloat16),
        "fb2": jnp.asarray(fb2, jnp.bfloat16),
        "l1": jnp.asarray(l1, jnp.bfloat16),
        "l2": jnp.asarray(l2, jnp.bfloat16),
        "sel1": jnp.asarray(sel1),           # f32, host-side weight folding only
        "sel2": jnp.asarray(sel2),
        "rsum": jnp.asarray(rsum, jnp.bfloat16),
        "gpool": jnp.asarray(gpool, jnp.bfloat16),
    }


# --------------------------------- Pallas kernel ------------------------------
def _fused_forward_kernel(p_ref, frames_ref, dft_ref, fb2_ref,
                          m1_ref, l1_ref, b1_ref,
                          m2_ref, l2_ref, b2_ref,
                          rsum_ref, gpool_ref, whead_ref, bhead_ref,
                          out_ref):
    # ---- wav2img: MelSpectrogram(power=2) + AmplitudeToDB(top_db=None) ----
    frames = frames_ref[...]                                               # (TB*16, 64) bf16
    spec = jnp.dot(frames, dft_ref[...], preferred_element_type=jnp.float32)  # (TB*16,128) [re|im|0]
    power = spec * spec                                                    # f32 (VPU)
    mel = jnp.dot(power.astype(jnp.bfloat16), fb2_ref[...],
                  preferred_element_type=jnp.float32)                      # (TB*16, 128)

    mel3 = mel.reshape(TB, T_FRAMES, LANES)                                # layout-preserving
    lane3 = jax.lax.broadcasted_iota(jnp.int32, mel3.shape, 2)
    valid3 = lane3 < N_MELS
    mel_db = jnp.where(valid3, LOG10_SCALE * jnp.log(jnp.maximum(mel3, 1e-10)), 0.0)

    # ---- channel_norm ----
    # TODO(synk): channel_norm() is not defined in the reference; assuming
    #             per-sample mean/std normalisation over the whole spectrogram.
    n_valid = float(T_FRAMES * N_MELS)
    mean = jnp.sum(jnp.sum(mel_db, axis=2, keepdims=True),
                   axis=1, keepdims=True) * (1.0 / n_valid)                # (TB,1,1)
    cent = mel_db - mean
    var = jnp.sum(jnp.sum(jnp.where(valid3, cent * cent, 0.0), axis=2, keepdims=True),
                  axis=1, keepdims=True) * (1.0 / n_valid)
    img = jnp.where(valid3, cent * jax.lax.rsqrt(var + 1e-6), 0.0)
    img = img.reshape(TB * T_FRAMES, LANES).astype(jnp.bfloat16)           # (TB*16, 128)

    # ---- backbone stand-in: two 3x3 / stride-2 convs as factorised matmuls ----
    # TODO(synk): timm ResNeXt/EfficientNet backbone is an external pretrained
    #             net; replaced by a 2-layer strided-conv stand-in.
    n1 = C1 * WO1
    t1 = jnp.dot(img, m1_ref[...], preferred_element_type=jnp.float32)     # (TB*16, 384)
    t1 = t1.astype(jnp.bfloat16)
    acc1 = jnp.zeros((TB * HO1, n1), jnp.float32)
    for dy in range(3):
        acc1 = acc1 + jnp.dot(l1_ref[dy], t1[:, dy * n1:(dy + 1) * n1],
                              preferred_element_type=jnp.float32)
    h1 = jnp.maximum(acc1 + b1_ref[...], 0.0).astype(jnp.bfloat16)         # (TB*8, 128)

    n2 = C2 * WO2
    t2 = jnp.dot(h1, m2_ref[...], preferred_element_type=jnp.float32)      # (TB*8, 768)
    t2 = t2.astype(jnp.bfloat16)
    acc2 = jnp.zeros((TB * HO2, n2), jnp.float32)
    for dy in range(3):
        acc2 = acc2 + jnp.dot(l2_ref[dy], t2[:, dy * n2:(dy + 1) * n2],
                              preferred_element_type=jnp.float32)
    h2 = jnp.maximum(acc2 + b2_ref[...], 0.0)                              # (TB*4, 256) f32

    # ---- GeM global pool + x[:, :, 0, 0] + Linear head ----
    p = p_ref[0, 0]
    xc = jnp.maximum(h2, GEM_EPS)                   # clamp(min=eps)
    xp = jnp.exp(p * jnp.log(xc)).astype(jnp.bfloat16)                     # x ** p  (EUP)
    ssum = jnp.dot(rsum_ref[...], xp, preferred_element_type=jnp.float32)  # (TB, 256) per-sample row sums
    pooled = jnp.dot(ssum.astype(jnp.bfloat16), gpool_ref[...],
                     preferred_element_type=jnp.float32)                   # (TB, 128) per-channel means
    pooled = jnp.exp(jnp.log(jnp.maximum(pooled, 1e-30)) * (1.0 / p))      # ** (1/p)
    out_ref[...] = (jnp.dot(pooled.astype(jnp.bfloat16), whead_ref[...],
                            preferred_element_type=jnp.float32)
                    + bhead_ref[...])                                      # (TB, 128), first 24 valid


# ------------------------------ JAX glue / wrappers ----------------------------
def init_params(key):
    ks = jax.random.split(key, 4)
    return {
        "conv1_w": 0.1 * jax.random.normal(ks[0], (C1, 1, 3, 3), jnp.float32),
        "conv1_b": jnp.zeros((C1,), jnp.float32),
        "conv2_w": 0.1 * jax.random.normal(ks[1], (C2, C1, 3, 3), jnp.float32),
        "conv2_b": jnp.zeros((C2,), jnp.float32),
        "gem_p": jnp.ones((1, 1), jnp.float32) * 3.0,       # GeM p parameter
        "linear_w": 0.1 * jax.random.normal(ks[2], (TARGET_SIZE, N_FEATURES), jnp.float32),
        "linear_b": 0.01 * jax.random.normal(ks[3], (TARGET_SIZE,), jnp.float32),
    }


def _build_weight_mats(params, consts):
    """Fold conv weights + taps into lane-dense bf16 matmul operands (host side, tiny)."""
    w1 = params["conv1_w"][:, 0]                                     # (C1, 3, 3)
    m1 = jnp.einsum("cyx,xwo->ywco", w1, consts["sel1"]).reshape(3, LANES, C1 * WO1)
    m1cat = jnp.concatenate([m1[0], m1[1], m1[2]], axis=-1).astype(jnp.bfloat16)   # (128, 384)
    w2 = params["conv2_w"]                                           # (C2, C1, 3, 3)
    m2 = jnp.einsum("kcyx,xwo->ycwko", w2, consts["sel2"]).reshape(3, C1 * WO1, C2 * WO2)
    m2cat = jnp.concatenate([m2[0], m2[1], m2[2]], axis=-1).astype(jnp.bfloat16)   # (128, 768)
    b1row = jnp.repeat(params["conv1_b"], WO1)[None, :]              # (1, 128)  f32
    b2row = jnp.repeat(params["conv2_b"], WO2)[None, :]              # (1, 256)  f32
    whead = jnp.zeros((LANES, LANES), jnp.float32)
    whead = whead.at[:N_FEATURES, :TARGET_SIZE].set(params["linear_w"].T).astype(jnp.bfloat16)
    bhead = jnp.zeros((1, LANES), jnp.float32)
    bhead = bhead.at[0, :TARGET_SIZE].set(params["linear_b"])
    return m1cat, m2cat, b1row, b2row, whead, bhead


def forward(params, x, consts):
    B, L = x.shape
    assert L == WAVE_LEN
    b_pad = ((B + TB - 1) // TB) * TB
    if b_pad != B:
        x = jnp.concatenate([x, jnp.zeros((b_pad - B, L), x.dtype)], axis=0)
    # host-side framing is free (contiguous); bf16 halves the per-step frame DMA
    frames = x.reshape(b_pad * T_FRAMES, N_FFT).astype(jnp.bfloat16)

    m1cat, m2cat, b1row, b2row, whead, bhead = _build_weight_mats(params, consts)

    out = pl.pallas_call(
        _fused_forward_kernel,
        out_shape=jax.ShapeDtypeStruct((b_pad, LANES), jnp.float32),
        grid_spec=pltpu.PrefetchScalarGridSpec(
            num_scalar_prefetch=0,
            grid=(b_pad // TB,),
            in_specs=[
                pl.BlockSpec((1, 1), lambda b: (0, 0),
                             memory_space=pltpu.MemorySpace.SMEM),         # gem p (scalar)
                pl.BlockSpec((TB * T_FRAMES, N_FFT), lambda b: (b, 0)),    # frames (TB samples)
                pl.BlockSpec((N_FFT, LANES), lambda b: (0, 0)),            # windowed DFT
                pl.BlockSpec((LANES, LANES), lambda b: (0, 0)),            # mel fb (dup)
                pl.BlockSpec((LANES, 3 * C1 * WO1), lambda b: (0, 0)),     # M1_cat
                pl.BlockSpec((3, TB * HO1, TB * H0), lambda b: (0, 0, 0)), # L1 (block-diag)
                pl.BlockSpec((1, C1 * WO1), lambda b: (0, 0)),             # conv1 bias row
                pl.BlockSpec((LANES, 3 * C2 * WO2), lambda b: (0, 0)),     # M2_cat
                pl.BlockSpec((3, TB * HO2, TB * HO1), lambda b: (0, 0, 0)),# L2 (block-diag)
                pl.BlockSpec((1, C2 * WO2), lambda b: (0, 0)),             # conv2 bias row
                pl.BlockSpec((TB, TB * HO2), lambda b: (0, 0)),            # GeM row-sum matrix
                pl.BlockSpec((C2 * WO2, LANES), lambda b: (0, 0)),         # GeM lane-pool matrix
                pl.BlockSpec((LANES, LANES), lambda b: (0, 0)),            # head weight (padded)
                pl.BlockSpec((1, LANES), lambda b: (0, 0)),                # head bias (padded)
            ],
            out_specs=pl.BlockSpec((TB, LANES), lambda b: (b, 0)),
        ),
        compiler_params=pltpu.CompilerParams(
            dimension_semantics=("parallel",)),          # v7x: shard batch tiles over 2 TCs
    )(params["gem_p"], frames, consts["dft"], consts["fb2"],
      m1cat, consts["l1"], b1row, m2cat, consts["l2"], b2row,
      consts["rsum"], consts["gpool"], whead, bhead)

    return out[:B, :TARGET_SIZE]


if __name__ == "__main__":
    key = jax.random.PRNGKey(0)
    pkey, xkey = jax.random.split(key)
    params = init_params(pkey)
    consts = make_consts()

    B = 16                                     # 2 grid steps of TB=8 (both v7x TCs busy)
    x = jax.random.normal(xkey, (B, WAVE_LEN), jnp.float32)   # (B, L) waveform

    fwd = jax.jit(lambda p, xx: forward(p, xx, consts))
    out = jax.block_until_ready(fwd(params, x))
    assert out.shape == (B, TARGET_SIZE), out.shape
    assert bool(jnp.all(jnp.isfinite(out)))
    print("KERNEL_OK")
</pallas_src>

<mosaic_0001>
module attributes {stable_mosaic.version = 11 : i64} {
  func.func @_fused_forward_kernel(%arg0: i32, %arg1: memref<1x1xf32, #tpu.memory_space<smem>>, %arg2: memref<128x64xbf16, #tpu.memory_space<vmem>>, %arg3: memref<64x128xbf16, #tpu.memory_space<vmem>>, %arg4: memref<128x128xbf16, #tpu.memory_space<vmem>>, %arg5: memref<128x384xbf16, #tpu.memory_space<vmem>>, %arg6: memref<3x64x128xbf16, #tpu.memory_space<vmem>>, %arg7: memref<1x128xf32, #tpu.memory_space<vmem>>, %arg8: memref<128x768xbf16, #tpu.memory_space<vmem>>, %arg9: memref<3x32x64xbf16, #tpu.memory_space<vmem>>, %arg10: memref<1x256xf32, #tpu.memory_space<vmem>>, %arg11: memref<8x32xbf16, #tpu.memory_space<vmem>>, %arg12: memref<256x128xbf16, #tpu.memory_space<vmem>>, %arg13: memref<128x128xbf16, #tpu.memory_space<vmem>>, %arg14: memref<1x128xf32, #tpu.memory_space<vmem>>, %arg15: memref<8x128xf32, #tpu.memory_space<vmem>>) attributes {dimension_semantics = [#tpu.dimension_semantics<parallel>], iteration_bounds = array<i64: 2>, scalar_prefetch = 0 : i64, scratch_operands = 0 : i64, tpu.core_type = #tpu.core_type<tc>, window_params = [{transform_indices = @transform_0, window_bounds = array<i64: 1, 1>}, {transform_indices = @transform_1, window_bounds = array<i64: 128, 64>}, {pipeline_mode = #tpu.pipeline_mode<synchronous>, transform_indices = @transform_2, window_bounds = array<i64: 64, 128>}, {pipeline_mode = #tpu.pipeline_mode<synchronous>, transform_indices = @transform_3, window_bounds = array<i64: 128, 128>}, {pipeline_mode = #tpu.pipeline_mode<synchronous>, transform_indices = @transform_4, window_bounds = array<i64: 128, 384>}, {pipeline_mode = #tpu.pipeline_mode<synchronous>, transform_indices = @transform_5, window_bounds = array<i64: 3, 64, 128>}, {pipeline_mode = #tpu.pipeline_mode<synchronous>, transform_indices = @transform_6, window_bounds = array<i64: 1, 128>}, {pipeline_mode = #tpu.pipeline_mode<synchronous>, transform_indices = @transform_7, window_bounds = array<i64: 128, 768>}, {pipeline_mode = #tpu.pipeline_mode<synchronous>, transform_indices = @transform_8, window_bounds = array<i64: 3, 32, 64>}, {pipeline_mode = #tpu.pipeline_mode<synchronous>, transform_indices = @transform_9, window_bounds = array<i64: 1, 256>}, {pipeline_mode = #tpu.pipeline_mode<synchronous>, transform_indices = @transform_10, window_bounds = array<i64: 8, 32>}, {pipeline_mode = #tpu.pipeline_mode<synchronous>, transform_indices = @transform_11, window_bounds = array<i64: 256, 128>}, {pipeline_mode = #tpu.pipeline_mode<synchronous>, transform_indices = @transform_12, window_bounds = array<i64: 128, 128>}, {pipeline_mode = #tpu.pipeline_mode<synchronous>, transform_indices = @transform_13, window_bounds = array<i64: 1, 128>}, {transform_indices = @transform_14, window_bounds = array<i64: 8, 128>}]} {
    %c0 = arith.constant 0 : index
    %c0_0 = arith.constant 0 : index
    %0 = vector.load %arg2[%c0, %c0_0] : memref<128x64xbf16, #tpu.memory_space<vmem>>, vector<128x64xbf16>
    %c0_1 = arith.constant 0 : index
    %c0_2 = arith.constant 0 : index
    %1 = vector.load %arg3[%c0_1, %c0_2] : memref<64x128xbf16, #tpu.memory_space<vmem>>, vector<64x128xbf16>
    %cst = arith.constant dense<0.000000e+00> : vector<128x128xf32>
    %2 = tpu.matmul %0, %1, %cst {dimension_numbers = #tpu.dot_dimension_numbers<[1], [0], [0], [1], [0, 0, 1, 1], [], []>} : vector<128x64xbf16>, vector<64x128xbf16>, vector<128x128xf32> -> vector<128x128xf32>
    %3 = arith.mulf %2, %2 : vector<128x128xf32>
    %4 = arith.truncf %3 : vector<128x128xf32> to vector<128x128xbf16>
    %c0_3 = arith.constant 0 : index
    %c0_4 = arith.constant 0 : index
    %5 = vector.load %arg4[%c0_3, %c0_4] : memref<128x128xbf16, #tpu.memory_space<vmem>>, vector<128x128xbf16>
    %cst_5 = arith.constant dense<0.000000e+00> : vector<128x128xf32>
    %6 = tpu.matmul %4, %5, %cst_5 {dimension_numbers = #tpu.dot_dimension_numbers<[1], [0], [0], [1], [0, 0, 1, 1], [], []>} : vector<128x128xbf16>, vector<128x128xbf16>, vector<128x128xf32> -> vector<128x128xf32>
    %7 = vector.shape_cast %6 : vector<128x128xf32> to vector<8x16x128xf32>
    %8 = tpu.iota {dimensions = array<i32: 2>} : vector<8x16x128xi32>
    %c32_i32 = arith.constant 32 : i32
    %9 = vector.broadcast %c32_i32 : i32 to vector<8x16x128xi32>
    %10 = arith.cmpi slt, %8, %9 : vector<8x16x128xi32>
    %cst_6 = arith.constant 1.000000e-10 : f32
    %11 = vector.broadcast %cst_6 : f32 to vector<8x16x128xf32>
    %12 = arith.maximumf %7, %11 : vector<8x16x128xf32>
    %13 = math.log %12 : vector<8x16x128xf32>
    %cst_7 = arith.constant 4.34294462 : f32
    %14 = vector.broadcast %cst_7 : f32 to vector<8x16x128xf32>
    %15 = arith.mulf %14, %13 : vector<8x16x128xf32>
    %cst_8 = arith.constant 0.000000e+00 : f32
    %16 = vector.broadcast %cst_8 : f32 to vector<8x16x128xf32>
    %17 = arith.select %10, %15, %16 : vector<8x16x128xi1>, vector<8x16x128xf32>
    %cst_9 = arith.constant dense<0.000000e+00> : vector<8x16xf32>
    %18 = vector.multi_reduction <add>, %17, %cst_9 [2] : vector<8x16x128xf32> to vector<8x16xf32>
    %19 = vector.shape_cast %18 : vector<8x16xf32> to vector<8x16x1xf32>
    %cst_10 = arith.constant dense<0.000000e+00> : vector<8x1xf32>
    %20 = vector.multi_reduction <add>, %19, %cst_10 [1] : vector<8x16x1xf32> to vector<8x1xf32>
    %21 = vector.shape_cast %20 : vector<8x1xf32> to vector<8x1x1xf32>
    %cst_11 = arith.constant 0.001953125 : f32
    %22 = vector.broadcast %cst_11 : f32 to vector<8x1x1xf32>
    %23 = arith.mulf %21, %22 : vector<8x1x1xf32>
    %24 = vector.broadcast %23 : vector<8x1x1xf32> to vector<8x16x128xf32>
    %25 = arith.subf %17, %24 : vector<8x16x128xf32>
    %26 = arith.mulf %25, %25 : vector<8x16x128xf32>
    %cst_12 = arith.constant 0.000000e+00 : f32
    %27 = vector.broadcast %cst_12 : f32 to vector<8x16x128xf32>
    %28 = arith.select %10, %26, %27 : vector<8x16x128xi1>, vector<8x16x128xf32>
    %cst_13 = arith.constant dense<0.000000e+00> : vector<8x16xf32>
    %29 = vector.multi_reduction <add>, %28, %cst_13 [2] : vector<8x16x128xf32> to vector<8x16xf32>
    %30 = vector.shape_cast %29 : vector<8x16xf32> to vector<8x16x1xf32>
    %cst_14 = arith.constant dense<0.000000e+00> : vector<8x1xf32>
    %31 = vector.multi_reduction <add>, %30, %cst_14 [1] : vector<8x16x1xf32> to vector<8x1xf32>
    %32 = vector.shape_cast %31 : vector<8x1xf32> to vector<8x1x1xf32>
    %cst_15 = arith.constant 0.001953125 : f32
    %33 = vector.broadcast %cst_15 : f32 to vector<8x1x1xf32>
    %34 = arith.mulf %32, %33 : vector<8x1x1xf32>
    %cst_16 = arith.constant 9.99999997E-7 : f32
    %35 = vector.broadcast %cst_16 : f32 to vector<8x1x1xf32>
    %36 = arith.addf %34, %35 : vector<8x1x1xf32>
    %37 = math.rsqrt %36 : vector<8x1x1xf32>
    %38 = vector.broadcast %37 : vector<8x1x1xf32> to vector<8x16x128xf32>
    %39 = arith.mulf %25, %38 : vector<8x16x128xf32>
    %cst_17 = arith.constant 0.000000e+00 : f32
    %40 = vector.broadcast %cst_17 : f32 to vector<8x16x128xf32>
    %41 = arith.select %10, %39, %40 : vector<8x16x128xi1>, vector<8x16x128xf32>
    %42 = vector.shape_cast %41 : vector<8x16x128xf32> to vector<128x128xf32>
    %43 = arith.truncf %42 : vector<128x128xf32> to vector<128x128xbf16>
    %c0_18 = arith.constant 0 : index
    %c0_19 = arith.constant 0 : index
    %44 = vector.load %arg5[%c0_18, %c0_19] : memref<128x384xbf16, #tpu.memory_space<vmem>>, vector<128x384xbf16>
    %cst_20 = arith.constant dense<0.000000e+00> : vector<128x384xf32>
    %45 = tpu.matmul %43, %44, %cst_20 {dimension_numbers = #tpu.dot_dimension_numbers<[1], [0], [0], [1], [0, 0, 1, 1], [], []>} : vector<128x128xbf16>, vector<128x384xbf16>, vector<128x384xf32> -> vector<128x384xf32>
    %46 = arith.truncf %45 : vector<128x384xf32> to vector<128x384xbf16>
    %cst_21 = arith.constant 0.000000e+00 : f32
    %47 = vector.broadcast %cst_21 : f32 to vector<64x128xf32>
    %c0_22 = arith.constant 0 : index
    %c0_23 = arith.constant 0 : index
    %c0_24 = arith.constant 0 : index
    %48 = vector.load %arg6[%c0_22, %c0_23, %c0_24] : memref<3x64x128xbf16, #tpu.memory_space<vmem>>, vector<1x64x128xbf16>
    %49 = vector.shape_cast %48 : vector<1x64x128xbf16> to vector<64x128xbf16>
    %50 = vector.extract_strided_slice %46 {offsets = [0, 0], sizes = [128, 128], strides = [1, 1]} : vector<128x384xbf16> to vector<128x128xbf16>
    %cst_25 = arith.constant dense<0.000000e+00> : vector<64x128xf32>
    %51 = tpu.matmul %49, %50, %cst_25 {dimension_numbers = #tpu.dot_dimension_numbers<[1], [0], [0], [1], [0, 0, 1, 1], [], []>} : vector<64x128xbf16>, vector<128x128xbf16>, vector<64x128xf32> -> vector<64x128xf32>
    %52 = arith.addf %47, %51 : vector<64x128xf32>
    %c1 = arith.constant 1 : index
    %c0_26 = arith.constant 0 : index
    %c0_27 = arith.constant 0 : index
    %53 = vector.load %arg6[%c1, %c0_26, %c0_27] : memref<3x64x128xbf16, #tpu.memory_space<vmem>>, vector<1x64x128xbf16>
    %54 = vector.shape_cast %53 : vector<1x64x128xbf16> to vector<64x128xbf16>
    %55 = vector.extract_strided_slice %46 {offsets = [0, 128], sizes = [128, 128], strides = [1, 1]} : vector<128x384xbf16> to vector<128x128xbf16>
    %cst_28 = arith.constant dense<0.000000e+00> : vector<64x128xf32>
    %56 = tpu.matmul %54, %55, %cst_28 {dimension_numbers = #tpu.dot_dimension_numbers<[1], [0], [0], [1], [0, 0, 1, 1], [], []>} : vector<64x128xbf16>, vector<128x128xbf16>, vector<64x128xf32> -> vector<64x128xf32>
    %57 = arith.addf %52, %56 : vector<64x128xf32>
    %c2 = arith.constant 2 : index
    %c0_29 = arith.constant 0 : index
    %c0_30 = arith.constant 0 : index
    %58 = vector.load %arg6[%c2, %c0_29, %c0_30] : memref<3x64x128xbf16, #tpu.memory_space<vmem>>, vector<1x64x128xbf16>
    %59 = vector.shape_cast %58 : vector<1x64x128xbf16> to vector<64x128xbf16>
    %60 = vector.extract_strided_slice %46 {offsets = [0, 256], sizes = [128, 128], strides = [1, 1]} : vector<128x384xbf16> to vector<128x128xbf16>
    %cst_31 = arith.constant dense<0.000000e+00> : vector<64x128xf32>
    %61 = tpu.matmul %59, %60, %cst_31 {dimension_numbers = #tpu.dot_dimension_numbers<[1], [0], [0], [1], [0, 0, 1, 1], [], []>} : vector<64x128xbf16>, vector<128x128xbf16>, vector<64x128xf32> -> vector<64x128xf32>
    %62 = arith.addf %57, %61 : vector<64x128xf32>
    %c0_32 = arith.constant 0 : index
    %c0_33 = arith.constant 0 : index
    %63 = vector.load %arg7[%c0_32, %c0_33] : memref<1x128xf32, #tpu.memory_space<vmem>>, vector<1x128xf32>
    %64 = vector.broadcast %63 : vector<1x128xf32> to vector<64x128xf32>
    %65 = arith.addf %62, %64 : vector<64x128xf32>
    %cst_34 = arith.constant 0.000000e+00 : f32
    %66 = vector.broadcast %cst_34 : f32 to vector<64x128xf32>
    %67 = arith.maximumf %65, %66 : vector<64x128xf32>
    %68 = arith.truncf %67 : vector<64x128xf32> to vector<64x128xbf16>
    %c0_35 = arith.constant 0 : index
    %c0_36 = arith.constant 0 : index
    %69 = vector.load %arg8[%c0_35, %c0_36] : memref<128x768xbf16, #tpu.memory_space<vmem>>, vector<128x768xbf16>
    %cst_37 = arith.constant dense<0.000000e+00> : vector<64x768xf32>
    %70 = tpu.matmul %68, %69, %cst_37 {dimension_numbers = #tpu.dot_dimension_numbers<[1], [0], [0], [1], [0, 0, 1, 1], [], []>} : vector<64x128xbf16>, vector<128x768xbf16>, vector<64x768xf32> -> vector<64x768xf32>
    %71 = arith.truncf %70 : vector<64x768xf32> to vector<64x768xbf16>
    %cst_38 = arith.constant 0.000000e+00 : f32
    %72 = vector.broadcast %cst_38 : f32 to vector<32x256xf32>
    %c0_39 = arith.constant 0 : index
    %c0_40 = arith.constant 0 : index
    %c0_41 = arith.constant 0 : index
    %73 = vector.load %arg9[%c0_39, %c0_40, %c0_41] : memref<3x32x64xbf16, #tpu.memory_space<vmem>>, vector<1x32x64xbf16>
    %74 = vector.shape_cast %73 : vector<1x32x64xbf16> to vector<32x64xbf16>
    %75 = vector.extract_strided_slice %71 {offsets = [0, 0], sizes = [64, 256], strides = [1, 1]} : vector<64x768xbf16> to vector<64x256xbf16>
    %cst_42 = arith.constant dense<0.000000e+00> : vector<32x256xf32>
    %76 = tpu.matmul %74, %75, %cst_42 {dimension_numbers = #tpu.dot_dimension_numbers<[1], [0], [0], [1], [0, 0, 1, 1], [], []>} : vector<32x64xbf16>, vector<64x256xbf16>, vector<32x256xf32> -> vector<32x256xf32>
    %77 = arith.addf %72, %76 : vector<32x256xf32>
    %c1_43 = arith.constant 1 : index
    %c0_44 = arith.constant 0 : index
    %c0_45 = arith.constant 0 : index
    %78 = vector.load %arg9[%c1_43, %c0_44, %c0_45] : memref<3x32x64xbf16, #tpu.memory_space<vmem>>, vector<1x32x64xbf16>
    %79 = vector.shape_cast %78 : vector<1x32x64xbf16> to vector<32x64xbf16>
    %80 = vector.extract_strided_slice %71 {offsets = [0, 256], sizes = [64, 256], strides = [1, 1]} : vector<64x768xbf16> to vector<64x256xbf16>
    %cst_46 = arith.constant dense<0.000000e+00> : vector<32x256xf32>
    %81 = tpu.matmul %79, %80, %cst_46 {dimension_numbers = #tpu.dot_dimension_numbers<[1], [0], [0], [1], [0, 0, 1, 1], [], []>} : vector<32x64xbf16>, vector<64x256xbf16>, vector<32x256xf32> -> vector<32x256xf32>
    %82 = arith.addf %77, %81 : vector<32x256xf32>
    %c2_47 = arith.constant 2 : index
    %c0_48 = arith.constant 0 : index
    %c0_49 = arith.constant 0 : index
    %83 = vector.load %arg9[%c2_47, %c0_48, %c0_49] : memref<3x32x64xbf16, #tpu.memory_space<vmem>>, vector<1x32x64xbf16>
    %84 = vector.shape_cast %83 : vector<1x32x64xbf16> to vector<32x64xbf16>
    %85 = vector.extract_strided_slice %71 {offsets = [0, 512], sizes = [64, 256], strides = [1, 1]} : vector<64x768xbf16> to vector<64x256xbf16>
    %cst_50 = arith.constant dense<0.000000e+00> : vector<32x256xf32>
    %86 = tpu.matmul %84, %85, %cst_50 {dimension_numbers = #tpu.dot_dimension_numbers<[1], [0], [0], [1], [0, 0, 1, 1], [], []>} : vector<32x64xbf16>, vector<64x256xbf16>, vector<32x256xf32> -> vector<32x256xf32>
    %87 = arith.addf %82, %86 : vector<32x256xf32>
    %c0_51 = arith.constant 0 : index
    %c0_52 = arith.constant 0 : index
    %88 = vector.load %arg10[%c0_51, %c0_52] : memref<1x256xf32, #tpu.memory_space<vmem>>, vector<1x256xf32>
    %89 = vector.broadcast %88 : vector<1x256xf32> to vector<32x256xf32>
    %90 = arith.addf %87, %89 : vector<32x256xf32>
    %cst_53 = arith.constant 0.000000e+00 : f32
    %91 = vector.broadcast %cst_53 : f32 to vector<32x256xf32>
    %92 = arith.maximumf %90, %91 : vector<32x256xf32>
    %c0_54 = arith.constant 0 : index
    %c0_55 = arith.constant 0 : index
    %93 = memref.load %arg1[%c0_54, %c0_55] : memref<1x1xf32, #tpu.memory_space<smem>>
    %cst_56 = arith.constant 9.99999997E-7 : f32
    %94 = vector.broadcast %cst_56 : f32 to vector<32x256xf32>
    %95 = arith.maximumf %92, %94 : vector<32x256xf32>
    %96 = math.log %95 : vector<32x256xf32>
    %97 = vector.broadcast %93 : f32 to vector<32x256xf32>
    %98 = arith.mulf %97, %96 : vector<32x256xf32>
    %99 = math.exp %98 : vector<32x256xf32>
    %100 = arith.truncf %99 : vector<32x256xf32> to vector<32x256xbf16>
    %c0_57 = arith.constant 0 : index
    %c0_58 = arith.constant 0 : index
    %101 = vector.load %arg11[%c0_57, %c0_58] : memref<8x32xbf16, #tpu.memory_space<vmem>>, vector<8x32xbf16>
    %cst_59 = arith.constant dense<0.000000e+00> : vector<8x256xf32>
    %102 = tpu.matmul %101, %100, %cst_59 {dimension_numbers = #tpu.dot_dimension_numbers<[1], [0], [0], [1], [0, 0, 1, 1], [], []>} : vector<8x32xbf16>, vector<32x256xbf16>, vector<8x256xf32> -> vector<8x256xf32>
    %103 = arith.truncf %102 : vector<8x256xf32> to vector<8x256xbf16>
    %c0_60 = arith.constant 0 : index
    %c0_61 = arith.constant 0 : index
    %104 = vector.load %arg12[%c0_60, %c0_61] : memref<256x128xbf16, #tpu.memory_space<vmem>>, vector<256x128xbf16>
    %cst_62 = arith.constant dense<0.000000e+00> : vector<8x128xf32>
    %105 = tpu.matmul %103, %104, %cst_62 {dimension_numbers = #tpu.dot_dimension_numbers<[1], [0], [0], [1], [0, 0, 1, 1], [], []>} : vector<8x256xbf16>, vector<256x128xbf16>, vector<8x128xf32> -> vector<8x128xf32>
    %cst_63 = arith.constant 1.000000e-30 : f32
    %106 = vector.broadcast %cst_63 : f32 to vector<8x128xf32>
    %107 = arith.maximumf %105, %106 : vector<8x128xf32>
    %108 = math.log %107 : vector<8x128xf32>
    %cst_64 = arith.constant 1.000000e+00 : f32
    %109 = arith.divf %cst_64, %93 : f32
    %110 = vector.broadcast %109 : f32 to vector<8x128xf32>
    %111 = arith.mulf %108, %110 : vector<8x128xf32>
    %112 = math.exp %111 : vector<8x128xf32>
    %113 = arith.truncf %112 : vector<8x128xf32> to vector<8x128xbf16>
    %c0_65 = arith.constant 0 : index
    %c0_66 = arith.constant 0 : index
    %114 = vector.load %arg13[%c0_65, %c0_66] : memref<128x128xbf16, #tpu.memory_space<vmem>>, vector<128x128xbf16>
    %cst_67 = arith.constant dense<0.000000e+00> : vector<8x128xf32>
    %115 = tpu.matmul %113, %114, %cst_67 {dimension_numbers = #tpu.dot_dimension_numbers<[1], [0], [0], [1], [0, 0, 1, 1], [], []>} : vector<8x128xbf16>, vector<128x128xbf16>, vector<8x128xf32> -> vector<8x128xf32>
    %c0_68 = arith.constant 0 : index
    %c0_69 = arith.constant 0 : index
    %116 = vector.load %arg14[%c0_68, %c0_69] : memref<1x128xf32, #tpu.memory_space<vmem>>, vector<1x128xf32>
    %117 = vector.broadcast %116 : vector<1x128xf32> to vector<8x128xf32>
    %118 = arith.addf %115, %117 : vector<8x128xf32>
    %c0_70 = arith.constant 0 : index
    %c0_71 = arith.constant 0 : index
    %119 = vector.load %arg15[%c0_70, %c0_71] : memref<8x128xf32, #tpu.memory_space<vmem>>, vector<8x128xf32>
    tpu.vector_store %arg15[%c0_70, %c0_71], %118 {strides = array<i32>} : memref<8x128xf32, #tpu.memory_space<vmem>>, vector<8x128xf32>,
    return
  }
  func.func @transform_0(%arg0: i32) -> (i32, i32) {
    %c0_i32 = arith.constant 0 : i32
    %c0_i32_0 = arith.constant 0 : i32
    %c0_i32_1 = arith.constant 0 : i32
    return %c0_i32, %c0_i32_0 : i32, i32
  }
  func.func @transform_1(%arg0: i32) -> (i32, i32) {
    %c0_i32 = arith.constant 0 : i32
    %c0_i32_0 = arith.constant 0 : i32
    return %arg0, %c0_i32 : i32, i32
  }
  func.func @transform_2(%arg0: i32) -> (i32, i32) {
    %c0_i32 = arith.constant 0 : i32
    %c0_i32_0 = arith.constant 0 : i32
    %c0_i32_1 = arith.constant 0 : i32
    return %c0_i32, %c0_i32_0 : i32, i32
  }
  func.func @transform_3(%arg0: i32) -> (i32, i32) {
    %c0_i32 = arith.constant 0 : i32
    %c0_i32_0 = arith.constant 0 : i32
    %c0_i32_1 = arith.constant 0 : i32
    return %c0_i32, %c0_i32_0 : i32, i32
  }
  func.func @transform_4(%arg0: i32) -> (i32, i32) {
    %c0_i32 = arith.constant 0 : i32
    %c0_i32_0 = arith.constant 0 : i32
    %c0_i32_1 = arith.constant 0 : i32
    return %c0_i32, %c0_i32_0 : i32, i32
  }
  func.func @transform_5(%arg0: i32) -> (i32, i32, i32) {
    %c0_i32 = arith.constant 0 : i32
    %c0_i32_0 = arith.constant 0 : i32
    %c0_i32_1 = arith.constant 0 : i32
    %c0_i32_2 = arith.constant 0 : i32
    return %c0_i32, %c0_i32_0, %c0_i32_1 : i32, i32, i32
  }
  func.func @transform_6(%arg0: i32) -> (i32, i32) {
    %c0_i32 = arith.constant 0 : i32
    %c0_i32_0 = arith.constant 0 : i32
    %c0_i32_1 = arith.constant 0 : i32
    return %c0_i32, %c0_i32_0 : i32, i32
  }
  func.func @transform_7(%arg0: i32) -> (i32, i32) {
    %c0_i32 = arith.constant 0 : i32
    %c0_i32_0 = arith.constant 0 : i32
    %c0_i32_1 = arith.constant 0 : i32
    return %c0_i32, %c0_i32_0 : i32, i32
  }
  func.func @transform_8(%arg0: i32) -> (i32, i32, i32) {
    %c0_i32 = arith.constant 0 : i32
    %c0_i32_0 = arith.constant 0 : i32
    %c0_i32_1 = arith.constant 0 : i32
    %c0_i32_2 = arith.constant 0 : i32
    return %c0_i32, %c0_i32_0, %c0_i32_1 : i32, i32, i32
  }
  func.func @transform_9(%arg0: i32) -> (i32, i32) {
    %c0_i32 = arith.constant 0 : i32
    %c0_i32_0 = arith.constant 0 : i32
    %c0_i32_1 = arith.constant 0 : i32
    return %c0_i32, %c0_i32_0 : i32, i32
  }
  func.func @transform_10(%arg0: i32) -> (i32, i32) {
    %c0_i32 = arith.constant 0 : i32
    %c0_i32_0 = arith.constant 0 : i32
    %c0_i32_1 = arith.constant 0 : i32
    return %c0_i32, %c0_i32_0 : i32, i32
  }
  func.func @transform_11(%arg0: i32) -> (i32, i32) {
    %c0_i32 = arith.constant 0 : i32
    %c0_i32_0 = arith.constant 0 : i32
    %c0_i32_1 = arith.constant 0 : i32
    return %c0_i32, %c0_i32_0 : i32, i32
  }
  func.func @transform_12(%arg0: i32) -> (i32, i32) {
    %c0_i32 = arith.constant 0 : i32
    %c0_i32_0 = arith.constant 0 : i32
    %c0_i32_1 = arith.constant 0 : i32
    return %c0_i32, %c0_i32_0 : i32, i32
  }
  func.func @transform_13(%arg0: i32) -> (i32, i32) {
    %c0_i32 = arith.constant 0 : i32
    %c0_i32_0 = arith.constant 0 : i32
    %c0_i32_1 = arith.constant 0 : i32
    return %c0_i32, %c0_i32_0 : i32, i32
  }
  func.func @transform_14(%arg0: i32) -> (i32, i32) {
    %c0_i32 = arith.constant 0 : i32
    %c0_i32_0 = arith.constant 0 : i32
    return %arg0, %c0_i32 : i32, i32
  }
}

</mosaic_0001>

<llo_original>
// kernel: squeeze.2
$region0: #{squeeze.2}
  %s0 = inlined_call_operand.vmem [shape: bf16[1,8,16,32,8], index: 0, kind: input, shape index: {}]
  %s1 = inlined_call_operand.vmem [shape: bf16[128,256], index: 1, kind: output, shape index: {}]
  $region1: #{squeeze.2} parent=0
    #allocation0 [shape = 'u8[131072]{0}', space=vmem, size = 0x20000, scoped, tag = 'scoped mem for output reshape']
    #allocation1 [shape = 'u8[1048576]{0}', space=vmem, size = 0x100000, scoped, tag = 'scoped mem for input reshape']
    %s3 = smul.u32 4, 2
    %s4 = sshll.u32 1, %s3
    %s5 = ssub.s32 %s4, 1
    %s6 = smul.addr 4, 255
    %s7 = scalar_lea.vmem %s0, %s6
    %s8 = sshrl.u32 %s5, 1
    %s9 = sor.u32 %s5, %s8
    %s10 = sand.u32 %s9, 85
    %s11 = sshrl.u32 %s10, 1
    %s12 = sor.u32 %s10, %s11
    %s13 = sand.u32 51, %s12
    %s14 = sshrl.u32 %s13, 2
    %s15 = sor.u32 %s13, %s14
    %s16 = sand.u32 15, %s15
    %v17 = vld [vmem:[%s7] sm:%s16]
    %v18 = vunpack.c.l.bf16 %v17
    %v19 = vunpack.c.h.bf16 %v17
    %s20 = scalar_lea.vmem [#allocation1], 2040
    %21 = vst [vmem:[%s20] sm:%s5] %v18
    %s22 = smul.addr 4, 254
    %s23 = scalar_lea.vmem %s0, %s22
    %s24 = sshrl.u32 %s5, 1
    %s25 = sor.u32 %s5, %s24
    %s26 = sand.u32 %s25, 85
    %s27 = sshrl.u32 %s26, 1
    %s28 = sor.u32 %s26, %s27
    %s29 = sand.u32 51, %s28
    %s30 = sshrl.u32 %s29, 2
    %s31 = sor.u32 %s29, %s30
    %s32 = sand.u32 15, %s31
    %v33 = vld [vmem:[%s23] sm:%s32]
    %v34 = vunpack.c.l.bf16 %v33
    %v35 = vunpack.c.h.bf16 %v33
    %s36 = scalar_lea.vmem [#allocation1], 2032
    %37 = vst [vmem:[%s36] sm:%s5] %v34
    %s38 = smul.addr 4, 253
    %s39 = scalar_lea.vmem %s0, %s38
    %s40 = sshrl.u32 %s5, 1
    %s41 = sor.u32 %s5, %s40
    %s42 = sand.u32 %s41, 85
    %s43 = sshrl.u32 %s42, 1
    %s44 = sor.u32 %s42, %s43
    %s45 = sand.u32 51, %s44
    %s46 = sshrl.u32 %s45, 2
    %s47 = sor.u32 %s45, %s46
    %s48 = sand.u32 15, %s47
    %v49 = vld [vmem:[%s39] sm:%s48]
    %v50 = vunpack.c.l.bf16 %v49
    %v51 = vunpack.c.h.bf16 %v49
    %s52 = scalar_lea.vmem [#allocation1], 2024
    %53 = vst [vmem:[%s52] sm:%s5] %v50
    %s54 = smul.addr 4, 252
    %s55 = scalar_lea.vmem %s0, %s54
    %s56 = sshrl.u32 %s5, 1
    %s57 = sor.u32 %s5, %s56
    %s58 = sand.u32 %s57, 85
    %s59 = sshrl.u32 %s58, 1
    %s60 = sor.u32 %s58, %s59
    %s61 = sand.u32 51, %s60
    %s62 = sshrl.u32 %s61, 2
    %s63 = sor.u32 %s61, %s62
    %s64 = sand.u32 15, %s63
    %v65 = vld [vmem:[%s55] sm:%s64]
    %v66 = vunpack.c.l.bf16 %v65
    %v67 = vunpack.c.h.bf16 %v65
    %s68 = scalar_lea.vmem [#allocation1], 2016
    %69 = vst [vmem:[%s68] sm:%s5] %v66
    %s70 = smul.addr 4, 251
    %s71 = scalar_lea.vmem %s0, %s70
    %s72 = sshrl.u32 %s5, 1
    %s73 = sor.u32 %s5, %s72
    %s74 = sand.u32 %s73, 85
    %s75 = sshrl.u32 %s74, 1
    %s76 = sor.u32 %s74, %s75
    %s77 = sand.u32 51, %s76
    %s78 = sshrl.u32 %s77, 2
    %s79 = sor.u32 %s77, %s78
    %s80 = sand.u32 15, %s79
    %v81 = vld [vmem:[%s71] sm:%s80]
    %v82 = vunpack.c.l.bf16 %v81
    %v83 = vunpack.c.h.bf16 %v81
    %s84 = scalar_lea.vmem [#allocation1], 2008
    %85 = vst [vmem:[%s84] sm:%s5] %v82
    %s86 = smul.addr 4, 250
    %s87 = scalar_lea.vmem %s0, %s86
    %s88 = sshrl.u32 %s5, 1
    %s89 = sor.u32 %s5, %s88
    %s90 = sand.u32 %s89, 85
    %s91 = sshrl.u32 %s90, 1
    %s92 = sor.u32 %s90, %s91
    %s93 = sand.u32 51, %s92
    %s94 = sshrl.u32 %s93, 2
    %s95 = sor.u32 %s93, %s94
    %s96 = sand.u32 15, %s95
    %v97 = vld [vmem:[%s87] sm:%s96]
    %v98 = vunpack.c.l.bf16 %v97
    %v99 = vunpack.c.h.bf16 %v97
    %s100 = scalar_lea.vmem [#allocation1], 2000
    %101 = vst [vmem:[%s100] sm:%s5] %v98
    %s102 = smul.addr 4, 249
    %s103 = scalar_lea.vmem %s0, %s102
    %s104 = sshrl.u32 %s5, 1
    %s105 = sor.u32 %s5, %s104
    %s106 = sand.u32 %s105, 85
    %s107 = sshrl.u32 %s106, 1
    %s108 = sor.u32 %s106, %s107
    %s109 = sand.u32 51, %s108
    %s110 = sshrl.u32 %s109, 2
    %s111 = sor.u32 %s109, %s110
    %s112 = sand.u32 15, %s111
    %v113 = vld [vmem:[%s103] sm:%s112]
    %v114 = vunpack.c.l.bf16 %v113
    %v115 = vunpack.c.h.bf16 %v113
    %s116 = scalar_lea.vmem [#allocation1], 1992
    %117 = vst [vmem:[%s116] sm:%s5] %v114
    %s118 = smul.addr 4, 248
    %s119 = scalar_lea.vmem %s0, %s118
    %s120 = sshrl.u32 %s5, 1
    %s121 = sor.u32 %s5, %s120
    %s122 = sand.u32 %s121, 85
    %s123 = sshrl.u32 %s122, 1
    %s124 = sor.u32 %s122, %s123
    %s125 = sand.u32 51, %s124
    %s126 = sshrl.u32 %s125, 2
    %s127 = sor.u32 %s125, %s126
    %s128 = sand.u32 15, %s127
    %v129 = vld [vmem:[%s119] sm:%s128]
    %v130 = vunpack.c.l.bf16 %v129
    %v131 = vunpack.c.h.bf16 %v129
    %s132 = scalar_lea.vmem [#allocation1], 1984
    %133 = vst [vmem:[%s132] sm:%s5] %v130
    %s134 = smul.addr 4, 247
    %s135 = scalar_lea.vmem %s0, %s134
    %s136 = sshrl.u32 %s5, 1
    %s137 = sor.u32 %s5, %s136
    %s138 = sand.u32 %s137, 85
    %s139 = sshrl.u32 %s138, 1
    %s140 = sor.u32 %s138, %s139
    %s141 = sand.u32 51, %s140
    %s142 = sshrl.u32 %s141, 2
    %s143 = sor.u32 %s141, %s142
    %s144 = sand.u32 15, %s143
    %v145 = vld [vmem:[%s135] sm:%s144]
    %v146 = vunpack.c.l.bf16 %v145
    %v147 = vunpack.c.h.bf16 %v145
    %s148 = scalar_lea.vmem [#allocation1], 1976
    %149 = vst [vmem:[%s148] sm:%s5] %v146
    %s150 = smul.addr 4, 246
    %s151 = scalar_lea.vmem %s0, %s150
    %s152 = sshrl.u32 %s5, 1
    %s153 = sor.u32 %s5, %s152
    %s154 = sand.u32 %s153, 85
    %s155 = sshrl.u32 %s154, 1
    %s156 = sor.u32 %s154, %s155
    %s157 = sand.u32 51, %s156
    %s158 = sshrl.u32 %s157, 2
    %s159 = sor.u32 %s157, %s158
    %s160 = sand.u32 15, %s159
    %v161 = vld [vmem:[%s151] sm:%s160]
    %v162 = vunpack.c.l.bf16 %v161
    %v163 = vunpack.c.h.bf16 %v161
    %s164 = scalar_lea.vmem [#allocation1], 1968
    %165 = vst [vmem:[%s164] sm:%s5] %v162
    %s166 = smul.addr 4, 245
    %s167 = scalar_lea.vmem %s0, %s166
    %s168 = sshrl.u32 %s5, 1
    %s169 = sor.u32 %s5, %s168
    %s170 = sand.u32 %s169, 85
    %s171 = sshrl.u32 %s170, 1
    %s172 = sor.u32 %s170, %s171
    %s173 = sand.u32 51, %s172
    %s174 = sshrl.u32 %s173, 2
    %s175 = sor.u32 %s173, %s174
    %s176 = sand.u32 15, %s175
    %v177 = vld [vmem:[%s167] sm:%s176]
    %v178 = vunpack.c.l.bf16 %v177
    %v179 = vunpack.c.h.bf16 %v177
    %s180 = scalar_lea.vmem [#allocation1], 1960
    %181 = vst [vmem:[%s180] sm:%s5] %v178
    %s182 = smul.addr 4, 244
    %s183 = scalar_lea.vmem %s0, %s182
    %s184 = sshrl.u32 %s5, 1
    %s185 = sor.u32 %s5, %s184
    %s186 = sand.u32 %s185, 85
    %s187 = sshrl.u32 %s186, 1
    %s188 = sor.u32 %s186, %s187
    %s189 = sand.u32 51, %s188
    %s190 = sshrl.u32 %s189, 2
    %s191 = sor.u32 %s189, %s190
    %s192 = sand.u32 15, %s191
    %v193 = vld [vmem:[%s183] sm:%s192]
    %v194 = vunpack.c.l.bf16 %v193
    %v195 = vunpack.c.h.bf16 %v193
    %s196 = scalar_lea.vmem [#allocation1], 1952
    %197 = vst [vmem:[%s196] sm:%s5] %v194
    %s198 = smul.addr 4, 243
    %s199 = scalar_lea.vmem %s0, %s198
    %s200 = sshrl.u32 %s5, 1
    %s201 = sor.u32 %s5, %s200
    %s202 = sand.u32 %s201, 85
    %s203 = sshrl.u32 %s202, 1
    %s204 = sor.u32 %s202, %s203
    %s205 = sand.u32 51, %s204
    %s206 = sshrl.u32 %s205, 2
    %s207 = sor.u32 %s205, %s206
    %s208 = sand.u32 15, %s207
    %v209 = vld [vmem:[%s199] sm:%s208]
    %v210 = vunpack.c.l.bf16 %v209
    %v211 = vunpack.c.h.bf16 %v209
    %s212 = scalar_lea.vmem [#allocation1], 1944
    %213 = vst [vmem:[%s212] sm:%s5] %v210
    %s214 = smul.addr 4, 242
    %s215 = scalar_lea.vmem %s0, %s214
    %s216 = sshrl.u32 %s5, 1
    %s217 = sor.u32 %s5, %s216
    %s218 = sand.u32 %s217, 85
    %s219 = sshrl.u32 %s218, 1
    %s220 = sor.u32 %s218, %s219
    %s221 = sand.u32 51, %s220
    %s222 = sshrl.u32 %s221, 2
    %s223 = sor.u32 %s221, %s222
    %s224 = sand.u32 15, %s223
    %v225 = vld [vmem:[%s215] sm:%s224]
    %v226 = vunpack.c.l.bf16 %v225
    %v227 = vunpack.c.h.bf16 %v225
    %s228 = scalar_lea.vmem [#allocation1], 1936
    %229 = vst [vmem:[%s228] sm:%s5] %v226
    %s230 = smul.addr 4, 241
    %s231 = scalar_lea.vmem %s0, %s230
    %s232 = sshrl.u32 %s5, 1
    %s233 = sor.u32 %s5, %s232
    %s234 = sand.u32 %s233, 85
    %s235 = sshrl.u32 %s234, 1
    %s236 = sor.u32 %s234, %s235
    %s237 = sand.u32 51, %s236
    %s238 = sshrl.u32 %s237, 2
    %s239 = sor.u32 %s237, %s238
    %s240 = sand.u32 15, %s239
    %v241 = vld [vmem:[%s231] sm:%s240]
    %v242 = vunpack.c.l.bf16 %v241
    %v243 = vunpack.c.h.bf16 %v241
    %s244 = scalar_lea.vmem [#allocation1], 1928
    %245 = vst [vmem:[%s244] sm:%s5] %v242
    %s246 = smul.addr 4, 240
    %s247 = scalar_lea.vmem %s0, %s246
    %s248 = sshrl.u32 %s5, 1
    %s249 = sor.u32 %s5, %s248
    %s250 = sand.u32 %s249, 85
    %s251 = sshrl.u32 %s250, 1
    %s252 = sor.u32 %s250, %s251
    %s253 = sand.u32 51, %s252
    %s254 = sshrl.u32 %s253, 2
    %s255 = sor.u32 %s253, %s254
    %s256 = sand.u32 15, %s255
    %v257 = vld [vmem:[%s247] sm:%s256]
    %v258 = vunpack.c.l.bf16 %v257
    %v259 = vunpack.c.h.bf16 %v257
    %s260 = scalar_lea.vmem [#allocation1], 1920
    %261 = vst [vmem:[%s260] sm:%s5] %v258
    %s262 = smul.addr 4, 239
    %s263 = scalar_lea.vmem %s0, %s262
    %s264 = sshrl.u32 %s5, 1
    %s265 = sor.u32 %s5, %s264
    %s266 = sand.u32 %s265, 85
    %s267 = sshrl.u32 %s266, 1
    %s268 = sor.u32 %s266, %s267
    %s269 = sand.u32 51, %s268
    %s270 = sshrl.u32 %s269, 2
    %s271 = sor.u32 %s269, %s270
    %s272 = sand.u32 15, %s271
    %v273 = vld [vmem:[%s263] sm:%s272]
    %v274 = vunpack.c.l.bf16 %v273
    %v275 = vunpack.c.h.bf16 %v273
    %s276 = scalar_lea.vmem [#allocation1], 1912
    %277 = vst [vmem:[%s276] sm:%s5] %v274
    %s278 = smul.addr 4, 238
    %s279 = scalar_lea.vmem %s0, %s278
    %s280 = sshrl.u32 %s5, 1
    %s281 = sor.u32 %s5, %s280
    %s282 = sand.u32 %s281, 85
    %s283 = sshrl.u32 %s282, 1
    %s284 = sor.u32 %s282, %s283
    %s285 = sand.u32 51, %s284
    %s286 = sshrl.u32 %s285, 2
    %s287 = sor.u32 %s285, %s286
    %s288 = sand.u32 15, %s287
    %v289 = vld [vmem:[%s279] sm:%s288]
    %v290 = vunpack.c.l.bf16 %v289
    %v291 = vunpack.c.h.bf16 %v289
    %s292 = scalar_lea.vmem [#allocation1], 1904
    %293 = vst [vmem:[%s292] sm:%s5] %v290
    %s294 = smul.addr 4, 237
    %s295 = scalar_lea.vmem %s0, %s294
    %s296 = sshrl.u32 %s5, 1
    %s297 = sor.u32 %s5, %s296
    %s298 = sand.u32 %s297, 85
    %s299 = sshrl.u32 %s298, 1
    %s300 = sor.u32 %s298, %s299
    %s301 = sand.u32 51, %s300
    %s302 = sshrl.u32 %s301, 2
    %s303 = sor.u32 %s301, %s302
    %s304 = sand.u32 15, %s303
    %v305 = vld [vmem:[%s295] sm:%s304]
    %v306 = vunpack.c.l.bf16 %v305
    %v307 = vunpack.c.h.bf16 %v305
    %s308 = scalar_lea.vmem [#allocation1], 1896
    %309 = vst [vmem:[%s308] sm:%s5] %v306
    %s310 = smul.addr 4, 236
    %s311 = scalar_lea.vmem %s0, %s310
    %s312 = sshrl.u32 %s5, 1
    %s313 = sor.u32 %s5, %s312
    %s314 = sand.u32 %s313, 85
    %s315 = sshrl.u32 %s314, 1
    %s316 = sor.u32 %s314, %s315
    %s317 = sand.u32 51, %s316
    %s318 = sshrl.u32 %s317, 2
    %s319 = sor.u32 %s317, %s318
    %s320 = sand.u32 15, %s319
    %v321 = vld [vmem:[%s311] sm:%s320]
    %v322 = vunpack.c.l.bf16 %v321
    %v323 = vunpack.c.h.bf16 %v321
    %s324 = scalar_lea.vmem [#allocation1], 1888
    %325 = vst [vmem:[%s324] sm:%s5] %v322
    %s326 = smul.addr 4, 235
    %s327 = scalar_lea.vmem %s0, %s326
    %s328 = sshrl.u32 %s5, 1
    %s329 = sor.u32 %s5, %s328
    %s330 = sand.u32 %s329, 85
    %s331 = sshrl.u32 %s330, 1
    %s332 = sor.u32 %s330, %s331
    %s333 = sand.u32 51, %s332
    %s334 = sshrl.u32 %s333, 2
    %s335 = sor.u32 %s333, %s334
    %s336 = sand.u32 15, %s335
    %v337 = vld [vmem:[%s327] sm:%s336]
    %v338 = vunpack.c.l.bf16 %v337
    %v339 = vunpack.c.h.bf16 %v337
    %s340 = scalar_lea.vmem [#allocation1], 1880
    %341 = vst [vmem:[%s340] sm:%s5] %v338
    %s342 = smul.addr 4, 234
    %s343 = scalar_lea.vmem %s0, %s342
    %s344 = sshrl.u32 %s5, 1
    %s345 = sor.u32 %s5, %s344
    %s346 = sand.u32 %s345, 85
    %s347 = sshrl.u32 %s346, 1
    %s348 = sor.u32 %s346, %s347
    %s349 = sand.u32 51, %s348
    %s350 = sshrl.u32 %s349, 2
    %s351 = sor.u32 %s349, %s350
    %s352 = sand.u32 15, %s351
    %v353 = vld [vmem:[%s343] sm:%s352]
    %v354 = vunpack.c.l.bf16 %v353
    %v355 = vunpack.c.h.bf16 %v353
    %s356 = scalar_lea.vmem [#allocation1], 1872
    %357 = vst [vmem:[%s356] sm:%s5] %v354
    %s358 = smul.addr 4, 233
    %s359 = scalar_lea.vmem %s0, %s358
    %s360 = sshrl.u32 %s5, 1
    %s361 = sor.u32 %s5, %s360
    %s362 = sand.u32 %s361, 85
    %s363 = sshrl.u32 %s362, 1
    %s364 = sor.u32 %s362, %s363
    %s365 = sand.u32 51, %s364
    %s366 = sshrl.u32 %s365, 2
    %s367 = sor.u32 %s365, %s366
    %s368 = sand.u32 15, %s367
    %v369 = vld [vmem:[%s359] sm:%s368]
    %v370 = vunpack.c.l.bf16 %v369
    %v371 = vunpack.c.h.bf16 %v369
    %s372 = scalar_lea.vmem [#allocation1], 1864
    %373 = vst [vmem:[%s372] sm:%s5] %v370
    %s374 = smul.addr 4, 232
    %s375 = scalar_lea.vmem %s0, %s374
    %s376 = sshrl.u32 %s5, 1
    %s377 = sor.u32 %s5, %s376
    %s378 = sand.u32 %s377, 85
    %s379 = sshrl.u32 %s378, 1
    %s380 = sor.u32 %s378, %s379
    %s381 = sand.u32 51, %s380
    %s382 = sshrl.u32 %s381, 2
    %s383 = sor.u32 %s381, %s382
    %s384 = sand.u32 15, %s383
    %v385 = vld [vmem:[%s375] sm:%s384]
    %v386 = vunpack.c.l.bf16 %v385
    %v387 = vunpack.c.h.bf16 %v385
    %s388 = scalar_lea.vmem [#allocation1], 1856
    %389 = vst [vmem:[%s388] sm:%s5] %v386
    %s390 = smul.addr 4, 231
    %s391 = scalar_lea.vmem %s0, %s390
    %s392 = sshrl.u32 %s5, 1
    %s393 = sor.u32 %s5, %s392
    %s394 = sand.u32 %s393, 85
    %s395 = sshrl.u32 %s394, 1
    %s396 = sor.u32 %s394, %s395
    %s397 = sand.u32 51, %s396
    %s398 = sshrl.u32 %s397, 2
    %s399 = sor.u32 %s397, %s398
    %s400 = sand.u32 15, %s399
    %v401 = vld [vmem:[%s391] sm:%s400]
    %v402 = vunpack.c.l.bf16 %v401
    %v403 = vunpack.c.h.bf16 %v401
    %s404 = scalar_lea.vmem [#allocation1], 1848
    %405 = vst [vmem:[%s404] sm:%s5] %v402
    %s406 = smul.addr 4, 230
    %s407 = scalar_lea.vmem %s0, %s406
    %s408 = sshrl.u32 %s5, 1
    %s409 = sor.u32 %s5, %s408
    %s410 = sand.u32 %s409, 85
    %s411 = sshrl.u32 %s410, 1
    %s412 = sor.u32 %s410, %s411
    %s413 = sand.u32 51, %s412
    %s414 = sshrl.u32 %s413, 2
    %s415 = sor.u32 %s413, %s414
    %s416 = sand.u32 15, %s415
    %v417 = vld [vmem:[%s407] sm:%s416]
    %v418 = vunpack.c.l.bf16 %v417
    %v419 = vunpack.c.h.bf16 %v417
    %s420 = scalar_lea.vmem [#allocation1], 1840
    %421 = vst [vmem:[%s420] sm:%s5] %v418
    %s422 = smul.addr 4, 229
    %s423 = scalar_lea.vmem %s0, %s422
    %s424 = sshrl.u32 %s5, 1
    %s425 = sor.u32 %s5, %s424
    %s426 = sand.u32 %s425, 85
    %s427 = sshrl.u32 %s426, 1
    %s428 = sor.u32 %s426, %s427
    %s429 = sand.u32 51, %s428
    %s430 = sshrl.u32 %s429, 2
    %s431 = sor.u32 %s429, %s430
    %s432 = sand.u32 15, %s431
    %v433 = vld [vmem:[%s423] sm:%s432]
    %v434 = vunpack.c.l.bf16 %v433
    %v435 = vunpack.c.h.bf16 %v433
    %s436 = scalar_lea.vmem [#allocation1], 1832
    %437 = vst [vmem:[%s436] sm:%s5] %v434
    %s438 = smul.addr 4, 228
    %s439 = scalar_lea.vmem %s0, %s438
    %s440 = sshrl.u32 %s5, 1
    %s441 = sor.u32 %s5, %s440
    %s442 = sand.u32 %s441, 85
    %s443 = sshrl.u32 %s442, 1
    %s444 = sor.u32 %s442, %s443
    %s445 = sand.u32 51, %s444
    %s446 = sshrl.u32 %s445, 2
    %s447 = sor.u32 %s445, %s446
    %s448 = sand.u32 15, %s447
    %v449 = vld [vmem:[%s439] sm:%s448]
    %v450 = vunpack.c.l.bf16 %v449
    %v451 = vunpack.c.h.bf16 %v449
    %s452 = scalar_lea.vmem [#allocation1], 1824
    %453 = vst [vmem:[%s452] sm:%s5] %v450
    %s454 = smul.addr 4, 227
    %s455 = scalar_lea.vmem %s0, %s454
    %s456 = sshrl.u32 %s5, 1
    %s457 = sor.u32 %s5, %s456
    %s458 = sand.u32 %s457, 85
    %s459 = sshrl.u32 %s458, 1
    %s460 = sor.u32 %s458, %s459
    %s461 = sand.u32 51, %s460
    %s462 = sshrl.u32 %s461, 2
    %s463 = sor.u32 %s461, %s462
    %s464 = sand.u32 15, %s463
    %v465 = vld [vmem:[%s455] sm:%s464]
    %v466 = vunpack.c.l.bf16 %v465
    %v467 = vunpack.c.h.bf16 %v465
    %s468 = scalar_lea.vmem [#allocation1], 1816
    %469 = vst [vmem:[%s468] sm:%s5] %v466
    %s470 = smul.addr 4, 226
    %s471 = scalar_lea.vmem %s0, %s470
    %s472 = sshrl.u32 %s5, 1
    %s473 = sor.u32 %s5, %s472
    %s474 = sand.u32 %s473, 85
    %s475 = sshrl.u32 %s474, 1
    %s476 = sor.u32 %s474, %s475
    %s477 = sand.u32 51, %s476
    %s478 = sshrl.u32 %s477, 2
    %s479 = sor.u32 %s477, %s478
    %s480 = sand.u32 15, %s479
    %v481 = vld [vmem:[%s471] sm:%s480]
    %v482 = vunpack.c.l.bf16 %v481
    %v483 = vunpack.c.h.bf16 %v481
    %s484 = scalar_lea.vmem [#allocation1], 1808
    %485 = vst [vmem:[%s484] sm:%s5] %v482
    %s486 = smul.addr 4, 225
    %s487 = scalar_lea.vmem %s0, %s486
    %s488 = sshrl.u32 %s5, 1
    %s489 = sor.u32 %s5, %s488
    %s490 = sand.u32 %s489, 85
    %s491 = sshrl.u32 %s490, 1
    %s492 = sor.u32 %s490, %s491
    %s493 = sand.u32 51, %s492
    %s494 = sshrl.u32 %s493, 2
    %s495 = sor.u32 %s493, %s494
    %s496 = sand.u32 15, %s495
    %v497 = vld [vmem:[%s487] sm:%s496]
    %v498 = vunpack.c.l.bf16 %v497
    %v499 = vunpack.c.h.bf16 %v497
    %s500 = scalar_lea.vmem [#allocation1], 1800
    %501 = vst [vmem:[%s500] sm:%s5] %v498
    %s502 = smul.addr 4, 224
    %s503 = scalar_lea.vmem %s0, %s502
    %s504 = sshrl.u32 %s5, 1
    %s505 = sor.u32 %s5, %s504
    %s506 = sand.u32 %s505, 85
    %s507 = sshrl.u32 %s506, 1
    %s508 = sor.u32 %s506, %s507
    %s509 = sand.u32 51, %s508
    %s510 = sshrl.u32 %s509, 2
    %s511 = sor.u32 %s509, %s510
    %s512 = sand.u32 15, %s511
    %v513 = vld [vmem:[%s503] sm:%s512]
    %v514 = vunpack.c.l.bf16 %v513
    %v515 = vunpack.c.h.bf16 %v513
    %s516 = scalar_lea.vmem [#allocation1], 1792
    %517 = vst [vmem:[%s516] sm:%s5] %v514
    %s518 = smul.addr 4, 223
    %s519 = scalar_lea.vmem %s0, %s518
    %s520 = sshrl.u32 %s5, 1
    %s521 = sor.u32 %s5, %s520
    %s522 = sand.u32 %s521, 85
    %s523 = sshrl.u32 %s522, 1
    %s524 = sor.u32 %s522, %s523
    %s525 = sand.u32 51, %s524
    %s526 = sshrl.u32 %s525, 2
    %s527 = sor.u32 %s525, %s526
    %s528 = sand.u32 15, %s527
    %v529 = vld [vmem:[%s519] sm:%s528]
    %v530 = vunpack.c.l.bf16 %v529
    %v531 = vunpack.c.h.bf16 %v529
    %s532 = scalar_lea.vmem [#allocation1], 1784
    %533 = vst [vmem:[%s532] sm:%s5] %v530
    %s534 = smul.addr 4, 222
    %s535 = scalar_lea.vmem %s0, %s534
    %s536 = sshrl.u32 %s5, 1
    %s537 = sor.u32 %s5, %s536
    %s538 = sand.u32 %s537, 85
    %s539 = sshrl.u32 %s538, 1
    %s540 = sor.u32 %s538, %s539
    %s541 = sand.u32 51, %s540
    %s542 = sshrl.u32 %s541, 2
    %s543 = sor.u32 %s541, %s542
    %s544 = sand.u32 15, %s543
    %v545 = vld [vmem:[%s535] sm:%s544]
    %v546 = vunpack.c.l.bf16 %v545
    %v547 = vunpack.c.h.bf16 %v545
    %s548 = scalar_lea.vmem [#allocation1], 1776
    %549 = vst [vmem:[%s548] sm:%s5] %v546
    %s550 = smul.addr 4, 221
    %s551 = scalar_lea.vmem %s0, %s550
    %s552 = sshrl.u32 %s5, 1
    %s553 = sor.u32 %s5, %s552
    %s554 = sand.u32 %s553, 85
    %s555 = sshrl.u32 %s554, 1
    %s556 = sor.u32 %s554, %s555
    %s557 = sand.u32 51, %s556
    %s558 = sshrl.u32 %s557, 2
    %s559 = sor.u32 %s557, %s558
    %s560 = sand.u32 15, %s559
    %v561 = vld [vmem:[%s551] sm:%s560]
    %v562 = vunpack.c.l.bf16 %v561
    %v563 = vunpack.c.h.bf16 %v561
    %s564 = scalar_lea.vmem [#allocation1], 1768
    %565 = vst [vmem:[%s564] sm:%s5] %v562
    %s566 = smul.addr 4, 220
    %s567 = scalar_lea.vmem %s0, %s566
    %s568 = sshrl.u32 %s5, 1
    %s569 = sor.u32 %s5, %s568
    %s570 = sand.u32 %s569, 85
    %s571 = sshrl.u32 %s570, 1
    %s572 = sor.u32 %s570, %s571
    %s573 = sand.u32 51, %s572
    %s574 = sshrl.u32 %s573, 2
    %s575 = sor.u32 %s573, %s574
    %s576 = sand.u32 15, %s575
    %v577 = vld [vmem:[%s567] sm:%s576]
    %v578 = vunpack.c.l.bf16 %v577
    %v579 = vunpack.c.h.bf16 %v577
    %s580 = scalar_lea.vmem [#allocation1], 1760
    %581 = vst [vmem:[%s580] sm:%s5] %v578
    %s582 = smul.addr 4, 219
    %s583 = scalar_lea.vmem %s0, %s582
    %s584 = sshrl.u32 %s5, 1
    %s585 = sor.u32 %s5, %s584
    %s586 = sand.u32 %s585, 85
    %s587 = sshrl.u32 %s586, 1
    %s588 = sor.u32 %s586, %s587
    %s589 = sand.u32 51, %s588
    %s590 = sshrl.u32 %s589, 2
    %s591 = sor.u32 %s589, %s590
    %s592 = sand.u32 15, %s591
    %v593 = vld [vmem:[%s583] sm:%s592]
    %v594 = vunpack.c.l.bf16 %v593
    %v595 = vunpack.c.h.bf16 %v593
    %s596 = scalar_lea.vmem [#allocation1], 1752
    %597 = vst [vmem:[%s596] sm:%s5] %v594
    %s598 = smul.addr 4, 218
    %s599 = scalar_lea.vmem %s0, %s598
    %s600 = sshrl.u32 %s5, 1
    %s601 = sor.u32 %s5, %s600
    %s602 = sand.u32 %s601, 85
    %s603 = sshrl.u32 %s602, 1
    %s604 = sor.u32 %s602, %s603
    %s605 = sand.u32 51, %s604
    %s606 = sshrl.u32 %s605, 2
    %s607 = sor.u32 %s605, %s606
    %s608 = sand.u32 15, %s607
    %v609 = vld [vmem:[%s599] sm:%s608]
    %v610 = vunpack.c.l.bf16 %v609
    %v611 = vunpack.c.h.bf16 %v609
    %s612 = scalar_lea.vmem [#allocation1], 1744
    %613 = vst [vmem:[%s612] sm:%s5] %v610
    %s614 = smul.addr 4, 217
    %s615 = scalar_lea.vmem %s0, %s614
    %s616 = sshrl.u32 %s5, 1
    %s617 = sor.u32 %s5, %s616
    %s618 = sand.u32 %s617, 85
    %s619 = sshrl.u32 %s618, 1
    %s620 = sor.u32 %s618, %s619
    %s621 = sand.u32 51, %s620
    %s622 = sshrl.u32 %s621, 2
    %s623 = sor.u32 %s621, %s622
    %s624 = sand.u32 15, %s623
    %v625 = vld [vmem:[%s615] sm:%s624]
    %v626 = vunpack.c.l.bf16 %v625
    %v627 = vunpack.c.h.bf16 %v625
    %s628 = scalar_lea.vmem [#allocation1], 1736
    %629 = vst [vmem:[%s628] sm:%s5] %v626
    %s630 = smul.addr 4, 216
    %s631 = scalar_lea.vmem %s0, %s630
    %s632 = sshrl.u32 %s5, 1
    %s633 = sor.u32 %s5, %s632
    %s634 = sand.u32 %s633, 85
    %s635 = sshrl.u32 %s634, 1
    %s636 = sor.u32 %s634, %s635
    %s637 = sand.u32 51, %s636
    %s638 = sshrl.u32 %s637, 2
    %s639 = sor.u32 %s637, %s638
    %s640 = sand.u32 15, %s639
    %v641 = vld [vmem:[%s631] sm:%s640]
    %v642 = vunpack.c.l.bf16 %v641
    %v643 = vunpack.c.h.bf16 %v641
    %s644 = scalar_lea.vmem [#allocation1], 1728
    %645 = vst [vmem:[%s644] sm:%s5] %v642
    %s646 = smul.addr 4, 215
    %s647 = scalar_lea.vmem %s0, %s646
    %s648 = sshrl.u32 %s5, 1
    %s649 = sor.u32 %s5, %s648
    %s650 = sand.u32 %s649, 85
    %s651 = sshrl.u32 %s650, 1
    %s652 = sor.u32 %s650, %s651
    %s653 = sand.u32 51, %s652
    %s654 = sshrl.u32 %s653, 2
    %s655 = sor.u32 %s653, %s654
    %s656 = sand.u32 15, %s655
    %v657 = vld [vmem:[%s647] sm:%s656]
    %v658 = vunpack.c.l.bf16 %v657
    %v659 = vunpack.c.h.bf16 %v657
    %s660 = scalar_lea.vmem [#allocation1], 1720
    %661 = vst [vmem:[%s660] sm:%s5] %v658
    %s662 = smul.addr 4, 214
    %s663 = scalar_lea.vmem %s0, %s662
    %s664 = sshrl.u32 %s5, 1
    %s665 = sor.u32 %s5, %s664
    %s666 = sand.u32 %s665, 85
    %s667 = sshrl.u32 %s666, 1
    %s668 = sor.u32 %s666, %s667
    %s669 = sand.u32 51, %s668
    %s670 = sshrl.u32 %s669, 2
    %s671 = sor.u32 %s669, %s670
    %s672 = sand.u32 15, %s671
    %v673 = vld [vmem:[%s663] sm:%s672]
    %v674 = vunpack.c.l.bf16 %v673
    %v675 = vunpack.c.h.bf16 %v673
    %s676 = scalar_lea.vmem [#allocation1], 1712
    %677 = vst [vmem:[%s676] sm:%s5] %v674
    %s678 = smul.addr 4, 213
    %s679 = scalar_lea.vmem %s0, %s678
    %s680 = sshrl.u32 %s5, 1
    %s681 = sor.u32 %s5, %s680
    %s682 = sand.u32 %s681, 85
    %s683 = sshrl.u32 %s682, 1
    %s684 = sor.u32 %s682, %s683
    %s685 = sand.u32 51, %s684
    %s686 = sshrl.u32 %s685, 2
    %s687 = sor.u32 %s685, %s686
    %s688 = sand.u32 15, %s687
    %v689 = vld [vmem:[%s679] sm:%s688]
    %v690 = vunpack.c.l.bf16 %v689
    %v691 = vunpack.c.h.bf16 %v689
    %s692 = scalar_lea.vmem [#allocation1], 1704
    %693 = vst [vmem:[%s692] sm:%s5] %v690
    %s694 = smul.addr 4, 212
    %s695 = scalar_lea.vmem %s0, %s694
    %s696 = sshrl.u32 %s5, 1
    %s697 = sor.u32 %s5, %s696
    %s698 = sand.u32 %s697, 85
    %s699 = sshrl.u32 %s698, 1
    %s700 = sor.u32 %s698, %s699
    %s701 = sand.u32 51, %s700
    %s702 = sshrl.u32 %s701, 2
    %s703 = sor.u32 %s701, %s702
    %s704 = sand.u32 15, %s703
    %v705 = vld [vmem:[%s695] sm:%s704]
    %v706 = vunpack.c.l.bf16 %v705
    %v707 = vunpack.c.h.bf16 %v705
    %s708 = scalar_lea.vmem [#allocation1], 1696
    %709 = vst [vmem:[%s708] sm:%s5] %v706
    %s710 = smul.addr 4, 211
    %s711 = scalar_lea.vmem %s0, %s710
    %s712 = sshrl.u32 %s5, 1
    %s713 = sor.u32 %s5, %s712
    %s714 = sand.u32 %s713, 85
    %s715 = sshrl.u32 %s714, 1
    %s716 = sor.u32 %s714, %s715
    %s717 = sand.u32 51, %s716
    %s718 = sshrl.u32 %s717, 2
    %s719 = sor.u32 %s717, %s718
    %s720 = sand.u32 15, %s719
    %v721 = vld [vmem:[%s711] sm:%s720]
    %v722 = vunpack.c.l.bf16 %v721
    %v723 = vunpack.c.h.bf16 %v721
    %s724 = scalar_lea.vmem [#allocation1], 1688
    %725 = vst [vmem:[%s724] sm:%s5] %v722
    %s726 = smul.addr 4, 210
    %s727 = scalar_lea.vmem %s0, %s726
    %s728 = sshrl.u32 %s5, 1
    %s729 = sor.u32 %s5, %s728
    %s730 = sand.u32 %s729, 85
    %s731 = sshrl.u32 %s730, 1
    %s732 = sor.u32 %s730, %s731
    %s733 = sand.u32 51, %s732
    %s734 = sshrl.u32 %s733, 2
    %s735 = sor.u32 %s733, %s734
    %s736 = sand.u32 15, %s735
    %v737 = vld [vmem:[%s727] sm:%s736]
    %v738 = vunpack.c.l.bf16 %v737
    %v739 = vunpack.c.h.bf16 %v737
    %s740 = scalar_lea.vmem [#allocation1], 1680
    %741 = vst [vmem:[%s740] sm:%s5] %v738
    %s742 = smul.addr 4, 209
    %s743 = scalar_lea.vmem %s0, %s742
    %s744 = sshrl.u32 %s5, 1
    %s745 = sor.u32 %s5, %s744
    %s746 = sand.u32 %s745, 85
    %s747 = sshrl.u32 %s746, 1
    %s748 = sor.u32 %s746, %s747
    %s749 = sand.u32 51, %s748
    %s750 = sshrl.u32 %s749, 2
    %s751 = sor.u32 %s749, %s750
    %s752 = sand.u32 15, %s751
    %v753 = vld [vmem:[%s743] sm:%s752]
    %v754 = vunpack.c.l.bf16 %v753
    %v755 = vunpack.c.h.bf16 %v753
    %s756 = scalar_lea.vmem [#allocation1], 1672
    %757 = vst [vmem:[%s756] sm:%s5] %v754
    %s758 = smul.addr 4, 208
    %s759 = scalar_lea.vmem %s0, %s758
    %s760 = sshrl.u32 %s5, 1
    %s761 = sor.u32 %s5, %s760
    %s762 = sand.u32 %s761, 85
    %s763 = sshrl.u32 %s762, 1
    %s764 = sor.u32 %s762, %s763
    %s765 = sand.u32 51, %s764
    %s766 = sshrl.u32 %s765, 2
    %s767 = sor.u32 %s765, %s766
    %s768 = sand.u32 15, %s767
    %v769 = vld [vmem:[%s759] sm:%s768]
    %v770 = vunpack.c.l.bf16 %v769
    %v771 = vunpack.c.h.bf16 %v769
    %s772 = scalar_lea.vmem [#allocation1], 1664
    %773 = vst [vmem:[%s772] sm:%s5] %v770
    %s774 = smul.addr 4, 207
    %s775 = scalar_lea.vmem %s0, %s774
    %s776 = sshrl.u32 %s5, 1
    %s777 = sor.u32 %s5, %s776
    %s778 = sand.u32 %s777, 85
    %s779 = sshrl.u32 %s778, 1
    %s780 = sor.u32 %s778, %s779
    %s781 = sand.u32 51, %s780
    %s782 = sshrl.u32 %s781, 2
    %s783 = sor.u32 %s781, %s782
    %s784 = sand.u32 15, %s783
    %v785 = vld [vmem:[%s775] sm:%s784]
    %v786 = vunpack.c.l.bf16 %v785
    %v787 = vunpack.c.h.bf16 %v785
    %s788 = scalar_lea.vmem [#allocation1], 1656
    %789 = vst [vmem:[%s788] sm:%s5] %v786
    %s790 = smul.addr 4, 206
    %s791 = scalar_lea.vmem %s0, %s790
    %s792 = sshrl.u32 %s5, 1
    %s793 = sor.u32 %s5, %s792
    %s794 = sand.u32 %s793, 85
    %s795 = sshrl.u32 %s794, 1
    %s796 = sor.u32 %s794, %s795
    %s797 = sand.u32 51, %s796
    %s798 = sshrl.u32 %s797, 2
    %s799 = sor.u32 %s797, %s798
    %s800 = sand.u32 15, %s799
    %v801 = vld [vmem:[%s791] sm:%s800]
    %v802 = vunpack.c.l.bf16 %v801
    %v803 = vunpack.c.h.bf16 %v801
    %s804 = scalar_lea.vmem [#allocation1], 1648
    %805 = vst [vmem:[%s804] sm:%s5] %v802
    %s806 = smul.addr 4, 205
    %s807 = scalar_lea.vmem %s0, %s806
    %s808 = sshrl.u32 %s5, 1
    %s809 = sor.u32 %s5, %s808
    %s810 = sand.u32 %s809, 85
    %s811 = sshrl.u32 %s810, 1
    %s812 = sor.u32 %s810, %s811
    %s813 = sand.u32 51, %s812
    %s814 = sshrl.u32 %s813, 2
    %s815 = sor.u32 %s813, %s814
    %s816 = sand.u32 15, %s815
    %v817 = vld [vmem:[%s807] sm:%s816]
    %v818 = vunpack.c.l.bf16 %v817
    %v819 = vunpack.c.h.bf16 %v817
    %s820 = scalar_lea.vmem [#allocation1], 1640
    %821 = vst [vmem:[%s820] sm:%s5] %v818
    %s822 = smul.addr 4, 204
    %s823 = scalar_lea.vmem %s0, %s822
    %s824 = sshrl.u32 %s5, 1
    %s825 = sor.u32 %s5, %s824
    %s826 = sand.u32 %s825, 85
    %s827 = sshrl.u32 %s826, 1
    %s828 = sor.u32 %s826, %s827
    %s829 = sand.u32 51, %s828
    %s830 = sshrl.u32 %s829, 2
    %s831 = sor.u32 %s829, %s830
    %s832 = sand.u32 15, %s831
    %v833 = vld [vmem:[%s823] sm:%s832]
    %v834 = vunpack.c.l.bf16 %v833
    %v835 = vunpack.c.h.bf16 %v833
    %s836 = scalar_lea.vmem [#allocation1], 1632
    %837 = vst [vmem:[%s836] sm:%s5] %v834
    %s838 = smul.addr 4, 203
    %s839 = scalar_lea.vmem %s0, %s838
    %s840 = sshrl.u32 %s5, 1
    %s841 = sor.u32 %s5, %s840
    %s842 = sand.u32 %s841, 85
    %s843 = sshrl.u32 %s842, 1
    %s844 = sor.u32 %s842, %s843
    %s845 = sand.u32 51, %s844
    %s846 = sshrl.u32 %s845, 2
    %s847 = sor.u32 %s845, %s846
    %s848 = sand.u32 15, %s847
    %v849 = vld [vmem:[%s839] sm:%s848]
    %v850 = vunpack.c.l.bf16 %v849
    %v851 = vunpack.c.h.bf16 %v849
    %s852 = scalar_lea.vmem [#allocation1], 1624
    %853 = vst [vmem:[%s852] sm:%s5] %v850
    %s854 = smul.addr 4, 202
    %s855 = scalar_lea.vmem %s0, %s854
    %s856 = sshrl.u32 %s5, 1
    %s857 = sor.u32 %s5, %s856
    %s858 = sand.u32 %s857, 85
    %s859 = sshrl.u32 %s858, 1
    %s860 = sor.u32 %s858, %s859
    %s861 = sand.u32 51, %s860
    %s862 = sshrl.u32 %s861, 2
    %s863 = sor.u32 %s861, %s862
    %s864 = sand.u32 15, %s863
    %v865 = vld [vmem:[%s855] sm:%s864]
    %v866 = vunpack.c.l.bf16 %v865
    %v867 = vunpack.c.h.bf16 %v865
    %s868 = scalar_lea.vmem [#allocation1], 1616
    %869 = vst [vmem:[%s868] sm:%s5] %v866
    %s870 = smul.addr 4, 201
    %s871 = scalar_lea.vmem %s0, %s870
    %s872 = sshrl.u32 %s5, 1
    %s873 = sor.u32 %s5, %s872
    %s874 = sand.u32 %s873, 85
    %s875 = sshrl.u32 %s874, 1
    %s876 = sor.u32 %s874, %s875
    %s877 = sand.u32 51, %s876
    %s878 = sshrl.u32 %s877, 2
    %s879 = sor.u32 %s877, %s878
    %s880 = sand.u32 15, %s879
    %v881 = vld [vmem:[%s871] sm:%s880]
    %v882 = vunpack.c.l.bf16 %v881
    %v883 = vunpack.c.h.bf16 %v881
    %s884 = scalar_lea.vmem [#allocation1], 1608
    %885 = vst [vmem:[%s884] sm:%s5] %v882
    %s886 = smul.addr 4, 200
    %s887 = scalar_lea.vmem %s0, %s886
    %s888 = sshrl.u32 %s5, 1
    %s889 = sor.u32 %s5, %s888
    %s890 = sand.u32 %s889, 85
    %s891 = sshrl.u32 %s890, 1
    %s892 = sor.u32 %s890, %s891
    %s893 = sand.u32 51, %s892
    %s894 = sshrl.u32 %s893, 2
    %s895 = sor.u32 %s893, %s894
    %s896 = sand.u32 15, %s895
    %v897 = vld [vmem:[%s887] sm:%s896]
    %v898 = vunpack.c.l.bf16 %v897
    %v899 = vunpack.c.h.bf16 %v897
    %s900 = scalar_lea.vmem [#allocation1], 1600
    %901 = vst [vmem:[%s900] sm:%s5] %v898
    %s902 = smul.addr 4, 199
    %s903 = scalar_lea.vmem %s0, %s902
    %s904 = sshrl.u32 %s5, 1
    %s905 = sor.u32 %s5, %s904
    %s906 = sand.u32 %s905, 85
    %s907 = sshrl.u32 %s906, 1
    %s908 = sor.u32 %s906, %s907
    %s909 = sand.u32 51, %s908
    %s910 = sshrl.u32 %s909, 2
    %s911 = sor.u32 %s909, %s910
    %s912 = sand.u32 15, %s911
    %v913 = vld [vmem:[%s903] sm:%s912]
    %v914 = vunpack.c.l.bf16 %v913
    %v915 = vunpack.c.h.bf16 %v913
    %s916 = scalar_lea.vmem [#allocation1], 1592
    %917 = vst [vmem:[%s916] sm:%s5] %v914
    %s918 = smul.addr 4, 198
    %s919 = scalar_lea.vmem %s0, %s918
    %s920 = sshrl.u32 %s5, 1
    %s921 = sor.u32 %s5, %s920
    %s922 = sand.u32 %s921, 85
    %s923 = sshrl.u32 %s922, 1
    %s924 = sor.u32 %s922, %s923
    %s925 = sand.u32 51, %s924
    %s926 = sshrl.u32 %s925, 2
    %s927 = sor.u32 %s925, %s926
    %s928 = sand.u32 15, %s927
    %v929 = vld [vmem:[%s919] sm:%s928]
    %v930 = vunpack.c.l.bf16 %v929
    %v931 = vunpack.c.h.bf16 %v929
    %s932 = scalar_lea.vmem [#allocation1], 1584
    %933 = vst [vmem:[%s932] sm:%s5] %v930
    %s934 = smul.addr 4, 197
    %s935 = scalar_lea.vmem %s0, %s934
    %s936 = sshrl.u32 %s5, 1
    %s937 = sor.u32 %s5, %s936
    %s938 = sand.u32 %s937, 85
    %s939 = sshrl.u32 %s938, 1
    %s940 = sor.u32 %s938, %s939
    %s941 = sand.u32 51, %s940
    %s942 = sshrl.u32 %s941, 2
    %s943 = sor.u32 %s941, %s942
    %s944 = sand.u32 15, %s943
    %v945 = vld [vmem:[%s935] sm:%s944]
    %v946 = vunpack.c.l.bf16 %v945
    %v947 = vunpack.c.h.bf16 %v945
    %s948 = scalar_lea.vmem [#allocation1], 1576
    %949 = vst [vmem:[%s948] sm:%s5] %v946
    %s950 = smul.addr 4, 196
    %s951 = scalar_lea.vmem %s0, %s950
    %s952 = sshrl.u32 %s5, 1
    %s953 = sor.u32 %s5, %s952
    %s954 = sand.u32 %s953, 85
    %s955 = sshrl.u32 %s954, 1
    %s956 = sor.u32 %s954, %s955
    %s957 = sand.u32 51, %s956
    %s958 = sshrl.u32 %s957, 2
    %s959 = sor.u32 %s957, %s958
    %s960 = sand.u32 15, %s959
    %v961 = vld [vmem:[%s951] sm:%s960]
    %v962 = vunpack.c.l.bf16 %v961
    %v963 = vunpack.c.h.bf16 %v961
    %s964 = scalar_lea.vmem [#allocation1], 1568
    %965 = vst [vmem:[%s964] sm:%s5] %v962
    %s966 = smul.addr 4, 195
    %s967 = scalar_lea.vmem %s0, %s966
    %s968 = sshrl.u32 %s5, 1
    %s969 = sor.u32 %s5, %s968
    %s970 = sand.u32 %s969, 85
    %s971 = sshrl.u32 %s970, 1
    %s972 = sor.u32 %s970, %s971
    %s973 = sand.u32 51, %s972
    %s974 = sshrl.u32 %s973, 2
    %s975 = sor.u32 %s973, %s974
    %s976 = sand.u32 15, %s975
    %v977 = vld [vmem:[%s967] sm:%s976]
    %v978 = vunpack.c.l.bf16 %v977
    %v979 = vunpack.c.h.bf16 %v977
    %s980 = scalar_lea.vmem [#allocation1], 1560
    %981 = vst [vmem:[%s980] sm:%s5] %v978
    %s982 = smul.addr 4, 194
    %s983 = scalar_lea.vmem %s0, %s982
    %s984 = sshrl.u32 %s5, 1
    %s985 = sor.u32 %s5, %s984
    %s986 = sand.u32 %s985, 85
    %s987 = sshrl.u32 %s986, 1
    %s988 = sor.u32 %s986, %s987
    %s989 = sand.u32 51, %s988
    %s990 = sshrl.u32 %s989, 2
    %s991 = sor.u32 %s989, %s990
    %s992 = sand.u32 15, %s991
    %v993 = vld [vmem:[%s983] sm:%s992]
    %v994 = vunpack.c.l.bf16 %v993
    %v995 = vunpack.c.h.bf16 %v993
    %s996 = scalar_lea.vmem [#allocation1], 1552
    %997 = vst [vmem:[%s996] sm:%s5] %v994
    %s998 = smul.addr 4, 193
    %s999 = scalar_lea.vmem %s0, %s998
    %s1000 = sshrl.u32 %s5, 1
    %s1001 = sor.u32 %s5, %s1000
    %s1002 = sand.u32 %s1001, 85
    %s1003 = sshrl.u32 %s1002, 1
    %s1004 = sor.u32 %s1002, %s1003
    %s1005 = sand.u32 51, %s1004
    %s1006 = sshrl.u32 %s1005, 2
    %s1007 = sor.u32 %s1005, %s1006
    %s1008 = sand.u32 15, %s1007
    %v1009 = vld [vmem:[%s999] sm:%s1008]
    %v1010 = vunpack.c.l.bf16 %v1009
    %v1011 = vunpack.c.h.bf16 %v1009
    %s1012 = scalar_lea.vmem [#allocation1], 1544
    %1013 = vst [vmem:[%s1012] sm:%s5] %v1010
    %s1014 = smul.addr 4, 192
    %s1015 = scalar_lea.vmem %s0, %s1014
    %s1016 = sshrl.u32 %s5, 1
    %s1017 = sor.u32 %s5, %s1016
    %s1018 = sand.u32 %s1017, 85
    %s1019 = sshrl.u32 %s1018, 1
    %s1020 = sor.u32 %s1018, %s1019
    %s1021 = sand.u32 51, %s1020
    %s1022 = sshrl.u32 %s1021, 2
    %s1023 = sor.u32 %s1021, %s1022
    %s1024 = sand.u32 15, %s1023
    %v1025 = vld [vmem:[%s1015] sm:%s1024]
    %v1026 = vunpack.c.l.bf16 %v1025
    %v1027 = vunpack.c.h.bf16 %v1025
    %s1028 = scalar_lea.vmem [#allocation1], 1536
    %1029 = vst [vmem:[%s1028] sm:%s5] %v1026
    %s1030 = smul.addr 4, 191
    %s1031 = scalar_lea.vmem %s0, %s1030
    %s1032 = sshrl.u32 %s5, 1
    %s1033 = sor.u32 %s5, %s1032
    %s1034 = sand.u32 %s1033, 85
    %s1035 = sshrl.u32 %s1034, 1
    %s1036 = sor.u32 %s1034, %s1035
    %s1037 = sand.u32 51, %s1036
    %s1038 = sshrl.u32 %s1037, 2
    %s1039 = sor.u32 %s1037, %s1038
    %s1040 = sand.u32 15, %s1039
    %v1041 = vld [vmem:[%s1031] sm:%s1040]
    %v1042 = vunpack.c.l.bf16 %v1041
    %v1043 = vunpack.c.h.bf16 %v1041
    %s1044 = scalar_lea.vmem [#allocation1], 1528
    %1045 = vst [vmem:[%s1044] sm:%s5] %v1042
    %s1046 = smul.addr 4, 190
    %s1047 = scalar_lea.vmem %s0, %s1046
    %s1048 = sshrl.u32 %s5, 1
    %s1049 = sor.u32 %s5, %s1048
    %s1050 = sand.u32 %s1049, 85
    %s1051 = sshrl.u32 %s1050, 1
    %s1052 = sor.u32 %s1050, %s1051
    %s1053 = sand.u32 51, %s1052
    %s1054 = sshrl.u32 %s1053, 2
    %s1055 = sor.u32 %s1053, %s1054
    %s1056 = sand.u32 15, %s1055
    %v1057 = vld [vmem:[%s1047] sm:%s1056]
    %v1058 = vunpack.c.l.bf16 %v1057
    %v1059 = vunpack.c.h.bf16 %v1057
    %s1060 = scalar_lea.vmem [#allocation1], 1520
    %1061 = vst [vmem:[%s1060] sm:%s5] %v1058
    %s1062 = smul.addr 4, 189
    %s1063 = scalar_lea.vmem %s0, %s1062
    %s1064 = sshrl.u32 %s5, 1
    %s1065 = sor.u32 %s5, %s1064
    %s1066 = sand.u32 %s1065, 85
    %s1067 = sshrl.u32 %s1066, 1
    %s1068 = sor.u32 %s1066, %s1067
    %s1069 = sand.u32 51, %s1068
    %s1070 = sshrl.u32 %s1069, 2
    %s1071 = sor.u32 %s1069, %s1070
    %s1072 = sand.u32 15, %s1071
    %v1073 = vld [vmem:[%s1063] sm:%s1072]
    %v1074 = vunpack.c.l.bf16 %v1073
    %v1075 = vunpack.c.h.bf16 %v1073
    %s1076 = scalar_lea.vmem [#allocation1], 1512
    %1077 = vst [vmem:[%s1076] sm:%s5] %v1074
    %s1078 = smul.addr 4, 188
    %s1079 = scalar_lea.vmem %s0, %s1078
    %s1080 = sshrl.u32 %s5, 1
    %s1081 = sor.u32 %s5, %s1080
    %s1082 = sand.u32 %s1081, 85
    %s1083 = sshrl.u32 %s1082, 1
    %s1084 = sor.u32 %s1082, %s1083
    %s1085 = sand.u32 51, %s1084
    %s1086 = sshrl.u32 %s1085, 2
    %s1087 = sor.u32 %s1085, %s1086
    %s1088 = sand.u32 15, %s1087
    %v1089 = vld [vmem:[%s1079] sm:%s1088]
    %v1090 = vunpack.c.l.bf16 %v1089
    %v1091 = vunpack.c.h.bf16 %v1089
    %s1092 = scalar_lea.vmem [#allocation1], 1504
    %1093 = vst [vmem:[%s1092] sm:%s5] %v1090
    %s1094 = smul.addr 4, 187
    %s1095 = scalar_lea.vmem %s0, %s1094
    %s1096 = sshrl.u32 %s5, 1
    %s1097 = sor.u32 %s5, %s1096
    %s1098 = sand.u32 %s1097, 85
    %s1099 = sshrl.u32 %s1098, 1
    %s1100 = sor.u32 %s1098, %s1099
    %s1101 = sand.u32 51, %s1100
    %s1102 = sshrl.u32 %s1101, 2
    %s1103 = sor.u32 %s1101, %s1102
    %s1104 = sand.u32 15, %s1103
    %v1105 = vld [vmem:[%s1095] sm:%s1104]
    %v1106 = vunpack.c.l.bf16 %v1105
    %v1107 = vunpack.c.h.bf16 %v1105
    %s1108 = scalar_lea.vmem [#allocation1], 1496
    %1109 = vst [vmem:[%s1108] sm:%s5] %v1106
    %s1110 = smul.addr 4, 186
    %s1111 = scalar_lea.vmem %s0, %s1110
    %s1112 = sshrl.u32 %s5, 1
    %s1113 = sor.u32 %s5, %s1112
    %s1114 = sand.u32 %s1113, 85
    %s1115 = sshrl.u32 %s1114, 1
    %s1116 = sor.u32 %s1114, %s1115
    %s1117 = sand.u32 51, %s1116
    %s1118 = sshrl.u32 %s1117, 2
    %s1119 = sor.u32 %s1117, %s1118
    %s1120 = sand.u32 15, %s1119
    %v1121 = vld [vmem:[%s1111] sm:%s1120]
    %v1122 = vunpack.c.l.bf16 %v1121
    %v1123 = vunpack.c.h.bf16 %v1121
    %s1124 = scalar_lea.vmem [#allocation1], 1488
    %1125 = vst [vmem:[%s1124] sm:%s5] %v1122
    %s1126 = smul.addr 4, 185
    %s1127 = scalar_lea.vmem %s0, %s1126
    %s1128 = sshrl.u32 %s5, 1
    %s1129 = sor.u32 %s5, %s1128
    %s1130 = sand.u32 %s1129, 85
    %s1131 = sshrl.u32 %s1130, 1
    %s1132 = sor.u32 %s1130, %s1131
    %s1133 = sand.u32 51, %s1132
    %s1134 = sshrl.u32 %s1133, 2
    %s1135 = sor.u32 %s1133, %s1134
    %s1136 = sand.u32 15, %s1135
    %v1137 = vld [vmem:[%s1127] sm:%s1136]
    %v1138 = vunpack.c.l.bf16 %v1137
    %v1139 = vunpack.c.h.bf16 %v1137
    %s1140 = scalar_lea.vmem [#allocation1], 1480
    %1141 = vst [vmem:[%s1140] sm:%s5] %v1138
    %s1142 = smul.addr 4, 184
    %s1143 = scalar_lea.vmem %s0, %s1142
    %s1144 = sshrl.u32 %s5, 1
    %s1145 = sor.u32 %s5, %s1144
    %s1146 = sand.u32 %s1145, 85
    %s1147 = sshrl.u32 %s1146, 1
    %s1148 = sor.u32 %s1146, %s1147
    %s1149 = sand.u32 51, %s1148
    %s1150 = sshrl.u32 %s1149, 2
    %s1151 = sor.u32 %s1149, %s1150
    %s1152 = sand.u32 15, %s1151
    %v1153 = vld [vmem:[%s1143] sm:%s1152]
    %v1154 = vunpack.c.l.bf16 %v1153
    %v1155 = vunpack.c.h.bf16 %v1153
    %s1156 = scalar_lea.vmem [#allocation1], 1472
    %1157 = vst [vmem:[%s1156] sm:%s5] %v1154
    %s1158 = smul.addr 4, 183
    %s1159 = scalar_lea.vmem %s0, %s1158
    %s1160 = sshrl.u32 %s5, 1
    %s1161 = sor.u32 %s5, %s1160
    %s1162 = sand.u32 %s1161, 85
    %s1163 = sshrl.u32 %s1162, 1
    %s1164 = sor.u32 %s1162, %s1163
    %s1165 = sand.u32 51, %s1164
    %s1166 = sshrl.u32 %s1165, 2
    %s1167 = sor.u32 %s1165, %s1166
    %s1168 = sand.u32 15, %s1167
    %v1169 = vld [vmem:[%s1159] sm:%s1168]
    %v1170 = vunpack.c.l.bf16 %v1169
    %v1171 = vunpack.c.h.bf16 %v1169
    %s1172 = scalar_lea.vmem [#allocation1], 1464
    %1173 = vst [vmem:[%s1172] sm:%s5] %v1170
    %s1174 = smul.addr 4, 182
    %s1175 = scalar_lea.vmem %s0, %s1174
    %s1176 = sshrl.u32 %s5, 1
    %s1177 = sor.u32 %s5, %s1176
    %s1178 = sand.u32 %s1177, 85
    %s1179 = sshrl.u32 %s1178, 1
    %s1180 = sor.u32 %s1178, %s1179
    %s1181 = sand.u32 51, %s1180
    %s1182 = sshrl.u32 %s1181, 2
    %s1183 = sor.u32 %s1181, %s1182
    %s1184 = sand.u32 15, %s1183
    %v1185 = vld [vmem:[%s1175] sm:%s1184]
    %v1186 = vunpack.c.l.bf16 %v1185
    %v1187 = vunpack.c.h.bf16 %v1185
    %s1188 = scalar_lea.vmem [#allocation1], 1456
    %1189 = vst [vmem:[%s1188] sm:%s5] %v1186
    %s1190 = smul.addr 4, 181
    %s1191 = scalar_lea.vmem %s0, %s1190
    %s1192 = sshrl.u32 %s5, 1
    %s1193 = sor.u32 %s5, %s1192
    %s1194 = sand.u32 %s1193, 85
    %s1195 = sshrl.u32 %s1194, 1
    %s1196 = sor.u32 %s1194, %s1195
    %s1197 = sand.u32 51, %s1196
    %s1198 = sshrl.u32 %s1197, 2
    %s1199 = sor.u32 %s1197, %s1198
    %s1200 = sand.u32 15, %s1199
    %v1201 = vld [vmem:[%s1191] sm:%s1200]
    %v1202 = vunpack.c.l.bf16 %v1201
    %v1203 = vunpack.c.h.bf16 %v1201
    %s1204 = scalar_lea.vmem [#allocation1], 1448
    %1205 = vst [vmem:[%s1204] sm:%s5] %v1202
    %s1206 = smul.addr 4, 180
    %s1207 = scalar_lea.vmem %s0, %s1206
    %s1208 = sshrl.u32 %s5, 1
    %s1209 = sor.u32 %s5, %s1208
    %s1210 = sand.u32 %s1209, 85
    %s1211 = sshrl.u32 %s1210, 1
    %s1212 = sor.u32 %s1210, %s1211
    %s1213 = sand.u32 51, %s1212
    %s1214 = sshrl.u32 %s1213, 2
    %s1215 = sor.u32 %s1213, %s1214
    %s1216 = sand.u32 15, %s1215
    %v1217 = vld [vmem:[%s1207] sm:%s1216]
    %v1218 = vunpack.c.l.bf16 %v1217
    %v1219 = vunpack.c.h.bf16 %v1217
    %s1220 = scalar_lea.vmem [#allocation1], 1440
    %1221 = vst [vmem:[%s1220] sm:%s5] %v1218
    %s1222 = smul.addr 4, 179
    %s1223 = scalar_lea.vmem %s0, %s1222
    %s1224 = sshrl.u32 %s5, 1
    %s1225 = sor.u32 %s5, %s1224
    %s1226 = sand.u32 %s1225, 85
    %s1227 = sshrl.u32 %s1226, 1
    %s1228 = sor.u32 %s1226, %s1227
    %s1229 = sand.u32 51, %s1228
    %s1230 = sshrl.u32 %s1229, 2
    %s1231 = sor.u32 %s1229, %s1230
    %s1232 = sand.u32 15, %s1231
    %v1233 = vld [vmem:[%s1223] sm:%s1232]
    %v1234 = vunpack.c.l.bf16 %v1233
    %v1235 = vunpack.c.h.bf16 %v1233
    %s1236 = scalar_lea.vmem [#allocation1], 1432
    %1237 = vst [vmem:[%s1236] sm:%s5] %v1234
    %s1238 = smul.addr 4, 178
    %s1239 = scalar_lea.vmem %s0, %s1238
    %s1240 = sshrl.u32 %s5, 1
    %s1241 = sor.u32 %s5, %s1240
    %s1242 = sand.u32 %s1241, 85
    %s1243 = sshrl.u32 %s1242, 1
    %s1244 = sor.u32 %s1242, %s1243
    %s1245 = sand.u32 51, %s1244
    %s1246 = sshrl.u32 %s1245, 2
    %s1247 = sor.u32 %s1245, %s1246
    %s1248 = sand.u32 15, %s1247
    %v1249 = vld [vmem:[%s1239] sm:%s1248]
    %v1250 = vunpack.c.l.bf16 %v1249
    %v1251 = vunpack.c.h.bf16 %v1249
    %s1252 = scalar_lea.vmem [#allocation1], 1424
    %1253 = vst [vmem:[%s1252] sm:%s5] %v1250
    %s1254 = smul.addr 4, 177
    %s1255 = scalar_lea.vmem %s0, %s1254
    %s1256 = sshrl.u32 %s5, 1
    %s1257 = sor.u32 %s5, %s1256
    %s1258 = sand.u32 %s1257, 85
    %s1259 = sshrl.u32 %s1258, 1
    %s1260 = sor.u32 %s1258, %s1259
    %s1261 = sand.u32 51, %s1260
    %s1262 = sshrl.u32 %s1261, 2
    %s1263 = sor.u32 %s1261, %s1262
    %s1264 = sand.u32 15, %s1263
    %v1265 = vld [vmem:[%s1255] sm:%s1264]
    %v1266 = vunpack.c.l.bf16 %v1265
    %v1267 = vunpack.c.h.bf16 %v1265
    %s1268 = scalar_lea.vmem [#allocation1], 1416
    %1269 = vst [vmem:[%s1268] sm:%s5] %v1266
    %s1270 = smul.addr 4, 176
    %s1271 = scalar_lea.vmem %s0, %s1270
    %s1272 = sshrl.u32 %s5, 1
    %s1273 = sor.u32 %s5, %s1272
    %s1274 = sand.u32 %s1273, 85
    %s1275 = sshrl.u32 %s1274, 1
    %s1276 = sor.u32 %s1274, %s1275
    %s1277 = sand.u32 51, %s1276
    %s1278 = sshrl.u32 %s1277, 2
    %s1279 = sor.u32 %s1277, %s1278
    %s1280 = sand.u32 15, %s1279
    %v1281 = vld [vmem:[%s1271] sm:%s1280]
    %v1282 = vunpack.c.l.bf16 %v1281
    %v1283 = vunpack.c.h.bf16 %v1281
    %s1284 = scalar_lea.vmem [#allocation1], 1408
    %1285 = vst [vmem:[%s1284] sm:%s5] %v1282
    %s1286 = smul.addr 4, 175
    %s1287 = scalar_lea.vmem %s0, %s1286
    %s1288 = sshrl.u32 %s5, 1
    %s1289 = sor.u32 %s5, %s1288
    %s1290 = sand.u32 %s1289, 85
    %s1291 = sshrl.u32 %s1290, 1
    %s1292 = sor.u32 %s1290, %s1291
    %s1293 = sand.u32 51, %s1292
    %s1294 = sshrl.u32 %s1293, 2
    %s1295 = sor.u32 %s1293, %s1294
    %s1296 = sand.u32 15, %s1295
    %v1297 = vld [vmem:[%s1287] sm:%s1296]
    %v1298 = vunpack.c.l.bf16 %v1297
    %v1299 = vunpack.c.h.bf16 %v1297
    %s1300 = scalar_lea.vmem [#allocation1], 1400
    %1301 = vst [vmem:[%s1300] sm:%s5] %v1298
    %s1302 = smul.addr 4, 174
    %s1303 = scalar_lea.vmem %s0, %s1302
    %s1304 = sshrl.u32 %s5, 1
    %s1305 = sor.u32 %s5, %s1304
    %s1306 = sand.u32 %s1305, 85
    %s1307 = sshrl.u32 %s1306, 1
    %s1308 = sor.u32 %s1306, %s1307
    %s1309 = sand.u32 51, %s1308
    %s1310 = sshrl.u32 %s1309, 2
    %s1311 = sor.u32 %s1309, %s1310
    %s1312 = sand.u32 15, %s1311
    %v1313 = vld [vmem:[%s1303] sm:%s1312]
    %v1314 = vunpack.c.l.bf16 %v1313
    %v1315 = vunpack.c.h.bf16 %v1313
    %s1316 = scalar_lea.vmem [#allocation1], 1392
    %1317 = vst [vmem:[%s1316] sm:%s5] %v1314
    %s1318 = smul.addr 4, 173
    %s1319 = scalar_lea.vmem %s0, %s1318
    %s1320 = sshrl.u32 %s5, 1
    %s1321 = sor.u32 %s5, %s1320
    %s1322 = sand.u32 %s1321, 85
    %s1323 = sshrl.u32 %s1322, 1
    %s1324 = sor.u32 %s1322, %s1323
    %s1325 = sand.u32 51, %s1324
    %s1326 = sshrl.u32 %s1325, 2
    %s1327 = sor.u32 %s1325, %s1326
    %s1328 = sand.u32 15, %s1327
    %v1329 = vld [vmem:[%s1319] sm:%s1328]
    %v1330 = vunpack.c.l.bf16 %v1329
    %v1331 = vunpack.c.h.bf16 %v1329
    %s1332 = scalar_lea.vmem [#allocation1], 1384
    %1333 = vst [vmem:[%s1332] sm:%s5] %v1330
    %s1334 = smul.addr 4, 172
    %s1335 = scalar_lea.vmem %s0, %s1334
    %s1336 = sshrl.u32 %s5, 1
    %s1337 = sor.u32 %s5, %s1336
    %s1338 = sand.u32 %s1337, 85
    %s1339 = sshrl.u32 %s1338, 1
    %s1340 = sor.u32 %s1338, %s1339
    %s1341 = sand.u32 51, %s1340
    %s1342 = sshrl.u32 %s1341, 2
    %s1343 = sor.u32 %s1341, %s1342
    %s1344 = sand.u32 15, %s1343
    %v1345 = vld [vmem:[%s1335] sm:%s1344]
    %v1346 = vunpack.c.l.bf16 %v1345
    %v1347 = vunpack.c.h.bf16 %v1345
    %s1348 = scalar_lea.vmem [#allocation1], 1376
    %1349 = vst [vmem:[%s1348] sm:%s5] %v1346
    %s1350 = smul.addr 4, 171
    %s1351 = scalar_lea.vmem %s0, %s1350
    %s1352 = sshrl.u32 %s5, 1
    %s1353 = sor.u32 %s5, %s1352
    %s1354 = sand.u32 %s1353, 85
    %s1355 = sshrl.u32 %s1354, 1
    %s1356 = sor.u32 %s1354, %s1355
    %s1357 = sand.u32 51, %s1356
    %s1358 = sshrl.u32 %s1357, 2
    %s1359 = sor.u32 %s1357, %s1358
    %s1360 = sand.u32 15, %s1359
    %v1361 = vld [vmem:[%s1351] sm:%s1360]
    %v1362 = vunpack.c.l.bf16 %v1361
    %v1363 = vunpack.c.h.bf16 %v1361
    %s1364 = scalar_lea.vmem [#allocation1], 1368
    %1365 = vst [vmem:[%s1364] sm:%s5] %v1362
    %s1366 = smul.addr 4, 170
    %s1367 = scalar_lea.vmem %s0, %s1366
    %s1368 = sshrl.u32 %s5, 1
    %s1369 = sor.u32 %s5, %s1368
    %s1370 = sand.u32 %s1369, 85
    %s1371 = sshrl.u32 %s1370, 1
    %s1372 = sor.u32 %s1370, %s1371
    %s1373 = sand.u32 51, %s1372
    %s1374 = sshrl.u32 %s1373, 2
    %s1375 = sor.u32 %s1373, %s1374
    %s1376 = sand.u32 15, %s1375
    %v1377 = vld [vmem:[%s1367] sm:%s1376]
    %v1378 = vunpack.c.l.bf16 %v1377
    %v1379 = vunpack.c.h.bf16 %v1377
    %s1380 = scalar_lea.vmem [#allocation1], 1360
    %1381 = vst [vmem:[%s1380] sm:%s5] %v1378
    %s1382 = smul.addr 4, 169
    %s1383 = scalar_lea.vmem %s0, %s1382
    %s1384 = sshrl.u32 %s5, 1
    %s1385 = sor.u32 %s5, %s1384
    %s1386 = sand.u32 %s1385, 85
    %s1387 = sshrl.u32 %s1386, 1
    %s1388 = sor.u32 %s1386, %s1387
    %s1389 = sand.u32 51, %s1388
    %s1390 = sshrl.u32 %s1389, 2
    %s1391 = sor.u32 %s1389, %s1390
    %s1392 = sand.u32 15, %s1391
    %v1393 = vld [vmem:[%s1383] sm:%s1392]
    %v1394 = vunpack.c.l.bf16 %v1393
    %v1395 = vunpack.c.h.bf16 %v1393
    %s1396 = scalar_lea.vmem [#allocation1], 1352
    %1397 = vst [vmem:[%s1396] sm:%s5] %v1394
    %s1398 = smul.addr 4, 168
    %s1399 = scalar_lea.vmem %s0, %s1398
    %s1400 = sshrl.u32 %s5, 1
    %s1401 = sor.u32 %s5, %s1400
    %s1402 = sand.u32 %s1401, 85
    %s1403 = sshrl.u32 %s1402, 1
    %s1404 = sor.u32 %s1402, %s1403
    %s1405 = sand.u32 51, %s1404
    %s1406 = sshrl.u32 %s1405, 2
    %s1407 = sor.u32 %s1405, %s1406
    %s1408 = sand.u32 15, %s1407
    %v1409 = vld [vmem:[%s1399] sm:%s1408]
    %v1410 = vunpack.c.l.bf16 %v1409
    %v1411 = vunpack.c.h.bf16 %v1409
    %s1412 = scalar_lea.vmem [#allocation1], 1344
    %1413 = vst [vmem:[%s1412] sm:%s5] %v1410
    %s1414 = smul.addr 4, 167
    %s1415 = scalar_lea.vmem %s0, %s1414
    %s1416 = sshrl.u32 %s5, 1
    %s1417 = sor.u32 %s5, %s1416
    %s1418 = sand.u32 %s1417, 85
    %s1419 = sshrl.u32 %s1418, 1
    %s1420 = sor.u32 %s1418, %s1419
    %s1421 = sand.u32 51, %s1420
    %s1422 = sshrl.u32 %s1421, 2
    %s1423 = sor.u32 %s1421, %s1422
    %s1424 = sand.u32 15, %s1423
    %v1425 = vld [vmem:[%s1415] sm:%s1424]
    %v1426 = vunpack.c.l.bf16 %v1425
    %v1427 = vunpack.c.h.bf16 %v1425
    %s1428 = scalar_lea.vmem [#allocation1], 1336
    %1429 = vst [vmem:[%s1428] sm:%s5] %v1426
    %s1430 = smul.addr 4, 166
    %s1431 = scalar_lea.vmem %s0, %s1430
    %s1432 = sshrl.u32 %s5, 1
    %s1433 = sor.u32 %s5, %s1432
    %s1434 = sand.u32 %s1433, 85
    %s1435 = sshrl.u32 %s1434, 1
    %s1436 = sor.u32 %s1434, %s1435
    %s1437 = sand.u32 51, %s1436
    %s1438 = sshrl.u32 %s1437, 2
    %s1439 = sor.u32 %s1437, %s1438
    %s1440 = sand.u32 15, %s1439
    %v1441 = vld [vmem:[%s1431] sm:%s1440]
    %v1442 = vunpack.c.l.bf16 %v1441
    %v1443 = vunpack.c.h.bf16 %v1441
    %s1444 = scalar_lea.vmem [#allocation1], 1328
    %1445 = vst [vmem:[%s1444] sm:%s5] %v1442
    %s1446 = smul.addr 4, 165
    %s1447 = scalar_lea.vmem %s0, %s1446
    %s1448 = sshrl.u32 %s5, 1
    %s1449 = sor.u32 %s5, %s1448
    %s1450 = sand.u32 %s1449, 85
    %s1451 = sshrl.u32 %s1450, 1
    %s1452 = sor.u32 %s1450, %s1451
    %s1453 = sand.u32 51, %s1452
    %s1454 = sshrl.u32 %s1453, 2
    %s1455 = sor.u32 %s1453, %s1454
    %s1456 = sand.u32 15, %s1455
    %v1457 = vld [vmem:[%s1447] sm:%s1456]
    %v1458 = vunpack.c.l.bf16 %v1457
    %v1459 = vunpack.c.h.bf16 %v1457
    %s1460 = scalar_lea.vmem [#allocation1], 1320
    %1461 = vst [vmem:[%s1460] sm:%s5] %v1458
    %s1462 = smul.addr 4, 164
    %s1463 = scalar_lea.vmem %s0, %s1462
    %s1464 = sshrl.u32 %s5, 1
    %s1465 = sor.u32 %s5, %s1464
    %s1466 = sand.u32 %s1465, 85
    %s1467 = sshrl.u32 %s1466, 1
    %s1468 = sor.u32 %s1466, %s1467
    %s1469 = sand.u32 51, %s1468
    %s1470 = sshrl.u32 %s1469, 2
    %s1471 = sor.u32 %s1469, %s1470
    %s1472 = sand.u32 15, %s1471
    %v1473 = vld [vmem:[%s1463] sm:%s1472]
    %v1474 = vunpack.c.l.bf16 %v1473
    %v1475 = vunpack.c.h.bf16 %v1473
    %s1476 = scalar_lea.vmem [#allocation1], 1312
    %1477 = vst [vmem:[%s1476] sm:%s5] %v1474
    %s1478 = smul.addr 4, 163
    %s1479 = scalar_lea.vmem %s0, %s1478
    %s1480 = sshrl.u32 %s5, 1
    %s1481 = sor.u32 %s5, %s1480
    %s1482 = sand.u32 %s1481, 85
    %s1483 = sshrl.u32 %s1482, 1
    %s1484 = sor.u32 %s1482, %s1483
    %s1485 = sand.u32 51, %s1484
    %s1486 = sshrl.u32 %s1485, 2
    %s1487 = sor.u32 %s1485, %s1486
    %s1488 = sand.u32 15, %s1487
    %v1489 = vld [vmem:[%s1479] sm:%s1488]
    %v1490 = vunpack.c.l.bf16 %v1489
    %v1491 = vunpack.c.h.bf16 %v1489
    %s1492 = scalar_lea.vmem [#allocation1], 1304
    %1493 = vst [vmem:[%s1492] sm:%s5] %v1490
    %s1494 = smul.addr 4, 162
    %s1495 = scalar_lea.vmem %s0, %s1494
    %s1496 = sshrl.u32 %s5, 1
    %s1497 = sor.u32 %s5, %s1496
    %s1498 = sand.u32 %s1497, 85
    %s1499 = sshrl.u32 %s1498, 1
    %s1500 = sor.u32 %s1498, %s1499
    %s1501 = sand.u32 51, %s1500
    %s1502 = sshrl.u32 %s1501, 2
    %s1503 = sor.u32 %s1501, %s1502
    %s1504 = sand.u32 15, %s1503
    %v1505 = vld [vmem:[%s1495] sm:%s1504]
    %v1506 = vunpack.c.l.bf16 %v1505
    %v1507 = vunpack.c.h.bf16 %v1505
    %s1508 = scalar_lea.vmem [#allocation1], 1296
    %1509 = vst [vmem:[%s1508] sm:%s5] %v1506
    %s1510 = smul.addr 4, 161
    %s1511 = scalar_lea.vmem %s0, %s1510
    %s1512 = sshrl.u32 %s5, 1
    %s1513 = sor.u32 %s5, %s1512
    %s1514 = sand.u32 %s1513, 85
    %s1515 = sshrl.u32 %s1514, 1
    %s1516 = sor.u32 %s1514, %s1515
    %s1517 = sand.u32 51, %s1516
    %s1518 = sshrl.u32 %s1517, 2
    %s1519 = sor.u32 %s1517, %s1518
    %s1520 = sand.u32 15, %s1519
    %v1521 = vld [vmem:[%s1511] sm:%s1520]
    %v1522 = vunpack.c.l.bf16 %v1521
    %v1523 = vunpack.c.h.bf16 %v1521
    %s1524 = scalar_lea.vmem [#allocation1], 1288
    %1525 = vst [vmem:[%s1524] sm:%s5] %v1522
    %s1526 = smul.addr 4, 160
    %s1527 = scalar_lea.vmem %s0, %s1526
    %s1528 = sshrl.u32 %s5, 1
    %s1529 = sor.u32 %s5, %s1528
    %s1530 = sand.u32 %s1529, 85
    %s1531 = sshrl.u32 %s1530, 1
    %s1532 = sor.u32 %s1530, %s1531
    %s1533 = sand.u32 51, %s1532
    %s1534 = sshrl.u32 %s1533, 2
    %s1535 = sor.u32 %s1533, %s1534
    %s1536 = sand.u32 15, %s1535
    %v1537 = vld [vmem:[%s1527] sm:%s1536]
    %v1538 = vunpack.c.l.bf16 %v1537
    %v1539 = vunpack.c.h.bf16 %v1537
    %s1540 = scalar_lea.vmem [#allocation1], 1280
    %1541 = vst [vmem:[%s1540] sm:%s5] %v1538
    %s1542 = smul.addr 4, 159
    %s1543 = scalar_lea.vmem %s0, %s1542
    %s1544 = sshrl.u32 %s5, 1
    %s1545 = sor.u32 %s5, %s1544
    %s1546 = sand.u32 %s1545, 85
    %s1547 = sshrl.u32 %s1546, 1
    %s1548 = sor.u32 %s1546, %s1547
    %s1549 = sand.u32 51, %s1548
    %s1550 = sshrl.u32 %s1549, 2
    %s1551 = sor.u32 %s1549, %s1550
    %s1552 = sand.u32 15, %s1551
    %v1553 = vld [vmem:[%s1543] sm:%s1552]
    %v1554 = vunpack.c.l.bf16 %v1553
    %v1555 = vunpack.c.h.bf16 %v1553
    %s1556 = scalar_lea.vmem [#allocation1], 1272
    %1557 = vst [vmem:[%s1556] sm:%s5] %v1554
    %s1558 = smul.addr 4, 158
    %s1559 = scalar_lea.vmem %s0, %s1558
    %s1560 = sshrl.u32 %s5, 1
    %s1561 = sor.u32 %s5, %s1560
    %s1562 = sand.u32 %s1561, 85
    %s1563 = sshrl.u32 %s1562, 1
    %s1564 = sor.u32 %s1562, %s1563
    %s1565 = sand.u32 51, %s1564
    %s1566 = sshrl.u32 %s1565, 2
    %s1567 = sor.u32 %s1565, %s1566
    %s1568 = sand.u32 15, %s1567
    %v1569 = vld [vmem:[%s1559] sm:%s1568]
    %v1570 = vunpack.c.l.bf16 %v1569
    %v1571 = vunpack.c.h.bf16 %v1569
    %s1572 = scalar_lea.vmem [#allocation1], 1264
    %1573 = vst [vmem:[%s1572] sm:%s5] %v1570
    %s1574 = smul.addr 4, 157
    %s1575 = scalar_lea.vmem %s0, %s1574
    %s1576 = sshrl.u32 %s5, 1
    %s1577 = sor.u32 %s5, %s1576
    %s1578 = sand.u32 %s1577, 85
    %s1579 = sshrl.u32 %s1578, 1
    %s1580 = sor.u32 %s1578, %s1579
    %s1581 = sand.u32 51, %s1580
    %s1582 = sshrl.u32 %s1581, 2
    %s1583 = sor.u32 %s1581, %s1582
    %s1584 = sand.u32 15, %s1583
    %v1585 = vld [vmem:[%s1575] sm:%s1584]
    %v1586 = vunpack.c.l.bf16 %v1585
    %v1587 = vunpack.c.h.bf16 %v1585
    %s1588 = scalar_lea.vmem [#allocation1], 1256
    %1589 = vst [vmem:[%s1588] sm:%s5] %v1586
    %s1590 = smul.addr 4, 156
    %s1591 = scalar_lea.vmem %s0, %s1590
    %s1592 = sshrl.u32 %s5, 1
    %s1593 = sor.u32 %s5, %s1592
    %s1594 = sand.u32 %s1593, 85
    %s1595 = sshrl.u32 %s1594, 1
    %s1596 = sor.u32 %s1594, %s1595
    %s1597 = sand.u32 51, %s1596
    %s1598 = sshrl.u32 %s1597, 2
    %s1599 = sor.u32 %s1597, %s1598
    %s1600 = sand.u32 15, %s1599
    %v1601 = vld [vmem:[%s1591] sm:%s1600]
    %v1602 = vunpack.c.l.bf16 %v1601
    %v1603 = vunpack.c.h.bf16 %v1601
    %s1604 = scalar_lea.vmem [#allocation1], 1248
    %1605 = vst [vmem:[%s1604] sm:%s5] %v1602
    %s1606 = smul.addr 4, 155
    %s1607 = scalar_lea.vmem %s0, %s1606
    %s1608 = sshrl.u32 %s5, 1
    %s1609 = sor.u32 %s5, %s1608
    %s1610 = sand.u32 %s1609, 85
    %s1611 = sshrl.u32 %s1610, 1
    %s1612 = sor.u32 %s1610, %s1611
    %s1613 = sand.u32 51, %s1612
    %s1614 = sshrl.u32 %s1613, 2
    %s1615 = sor.u32 %s1613, %s1614
    %s1616 = sand.u32 15, %s1615
    %v1617 = vld [vmem:[%s1607] sm:%s1616]
    %v1618 = vunpack.c.l.bf16 %v1617
    %v1619 = vunpack.c.h.bf16 %v1617
    %s1620 = scalar_lea.vmem [#allocation1], 1240
    %1621 = vst [vmem:[%s1620] sm:%s5] %v1618
    %s1622 = smul.addr 4, 154
    %s1623 = scalar_lea.vmem %s0, %s1622
    %s1624 = sshrl.u32 %s5, 1
    %s1625 = sor.u32 %s5, %s1624
    %s1626 = sand.u32 %s1625, 85
    %s1627 = sshrl.u32 %s1626, 1
    %s1628 = sor.u32 %s1626, %s1627
    %s1629 = sand.u32 51, %s1628
    %s1630 = sshrl.u32 %s1629, 2
    %s1631 = sor.u32 %s1629, %s1630
    %s1632 = sand.u32 15, %s1631
    %v1633 = vld [vmem:[%s1623] sm:%s1632]
    %v1634 = vunpack.c.l.bf16 %v1633
    %v1635 = vunpack.c.h.bf16 %v1633
    %s1636 = scalar_lea.vmem [#allocation1], 1232
    %1637 = vst [vmem:[%s1636] sm:%s5] %v1634
    %s1638 = smul.addr 4, 153
    %s1639 = scalar_lea.vmem %s0, %s1638
    %s1640 = sshrl.u32 %s5, 1
    %s1641 = sor.u32 %s5, %s1640
    %s1642 = sand.u32 %s1641, 85
    %s1643 = sshrl.u32 %s1642, 1
    %s1644 = sor.u32 %s1642, %s1643
    %s1645 = sand.u32 51, %s1644
    %s1646 = sshrl.u32 %s1645, 2
    %s1647 = sor.u32 %s1645, %s1646
    %s1648 = sand.u32 15, %s1647
    %v1649 = vld [vmem:[%s1639] sm:%s1648]
    %v1650 = vunpack.c.l.bf16 %v1649
    %v1651 = vunpack.c.h.bf16 %v1649
    %s1652 = scalar_lea.vmem [#allocation1], 1224
    %1653 = vst [vmem:[%s1652] sm:%s5] %v1650
    %s1654 = smul.addr 4, 152
    %s1655 = scalar_lea.vmem %s0, %s1654
    %s1656 = sshrl.u32 %s5, 1
    %s1657 = sor.u32 %s5, %s1656
    %s1658 = sand.u32 %s1657, 85
    %s1659 = sshrl.u32 %s1658, 1
    %s1660 = sor.u32 %s1658, %s1659
    %s1661 = sand.u32 51, %s1660
    %s1662 = sshrl.u32 %s1661, 2
    %s1663 = sor.u32 %s1661, %s1662
    %s1664 = sand.u32 15, %s1663
    %v1665 = vld [vmem:[%s1655] sm:%s1664]
    %v1666 = vunpack.c.l.bf16 %v1665
    %v1667 = vunpack.c.h.bf16 %v1665
    %s1668 = scalar_lea.vmem [#allocation1], 1216
    %1669 = vst [vmem:[%s1668] sm:%s5] %v1666
    %s1670 = smul.addr 4, 151
    %s1671 = scalar_lea.vmem %s0, %s1670
    %s1672 = sshrl.u32 %s5, 1
    %s1673 = sor.u32 %s5, %s1672
    %s1674 = sand.u32 %s1673, 85
    %s1675 = sshrl.u32 %s1674, 1
    %s1676 = sor.u32 %s1674, %s1675
    %s1677 = sand.u32 51, %s1676
    %s1678 = sshrl.u32 %s1677, 2
    %s1679 = sor.u32 %s1677, %s1678
    %s1680 = sand.u32 15, %s1679
    %v1681 = vld [vmem:[%s1671] sm:%s1680]
    %v1682 = vunpack.c.l.bf16 %v1681
    %v1683 = vunpack.c.h.bf16 %v1681
    %s1684 = scalar_lea.vmem [#allocation1], 1208
    %1685 = vst [vmem:[%s1684] sm:%s5] %v1682
    %s1686 = smul.addr 4, 150
    %s1687 = scalar_lea.vmem %s0, %s1686
    %s1688 = sshrl.u32 %s5, 1
    %s1689 = sor.u32 %s5, %s1688
    %s1690 = sand.u32 %s1689, 85
    %s1691 = sshrl.u32 %s1690, 1
    %s1692 = sor.u32 %s1690, %s1691
    %s1693 = sand.u32 51, %s1692
    %s1694 = sshrl.u32 %s1693, 2
    %s1695 = sor.u32 %s1693, %s1694
    %s1696 = sand.u32 15, %s1695
    %v1697 = vld [vmem:[%s1687] sm:%s1696]
    %v1698 = vunpack.c.l.bf16 %v1697
    %v1699 = vunpack.c.h.bf16 %v1697
    %s1700 = scalar_lea.vmem [#allocation1], 1200
    %1701 = vst [vmem:[%s1700] sm:%s5] %v1698
    %s1702 = smul.addr 4, 149
    %s1703 = scalar_lea.vmem %s0, %s1702
    %s1704 = sshrl.u32 %s5, 1
    %s1705 = sor.u32 %s5, %s1704
    %s1706 = sand.u32 %s1705, 85
    %s1707 = sshrl.u32 %s1706, 1
    %s1708 = sor.u32 %s1706, %s1707
    %s1709 = sand.u32 51, %s1708
    %s1710 = sshrl.u32 %s1709, 2
    %s1711 = sor.u32 %s1709, %s1710
    %s1712 = sand.u32 15, %s1711
    %v1713 = vld [vmem:[%s1703] sm:%s1712]
    %v1714 = vunpack.c.l.bf16 %v1713
    %v1715 = vunpack.c.h.bf16 %v1713
    %s1716 = scalar_lea.vmem [#allocation1], 1192
    %1717 = vst [vmem:[%s1716] sm:%s5] %v1714
    %s1718 = smul.addr 4, 148
    %s1719 = scalar_lea.vmem %s0, %s1718
    %s1720 = sshrl.u32 %s5, 1
    %s1721 = sor.u32 %s5, %s1720
    %s1722 = sand.u32 %s1721, 85
    %s1723 = sshrl.u32 %s1722, 1
    %s1724 = sor.u32 %s1722, %s1723
    %s1725 = sand.u32 51, %s1724
    %s1726 = sshrl.u32 %s1725, 2
    %s1727 = sor.u32 %s1725, %s1726
    %s1728 = sand.u32 15, %s1727
    %v1729 = vld [vmem:[%s1719] sm:%s1728]
    %v1730 = vunpack.c.l.bf16 %v1729
    %v1731 = vunpack.c.h.bf16 %v1729
    %s1732 = scalar_lea.vmem [#allocation1], 1184
    %1733 = vst [vmem:[%s1732] sm:%s5] %v1730
    %s1734 = smul.addr 4, 147
    %s1735 = scalar_lea.vmem %s0, %s1734
    %s1736 = sshrl.u32 %s5, 1
    %s1737 = sor.u32 %s5, %s1736
    %s1738 = sand.u32 %s1737, 85
    %s1739 = sshrl.u32 %s1738, 1
    %s1740 = sor.u32 %s1738, %s1739
    %s1741 = sand.u32 51, %s1740
    %s1742 = sshrl.u32 %s1741, 2
    %s1743 = sor.u32 %s1741, %s1742
    %s1744 = sand.u32 15, %s1743
    %v1745 = vld [vmem:[%s1735] sm:%s1744]
    %v1746 = vunpack.c.l.bf16 %v1745
    %v1747 = vunpack.c.h.bf16 %v1745
    %s1748 = scalar_lea.vmem [#allocation1], 1176
    %1749 = vst [vmem:[%s1748] sm:%s5] %v1746
    %s1750 = smul.addr 4, 146
    %s1751 = scalar_lea.vmem %s0, %s1750
    %s1752 = sshrl.u32 %s5, 1
    %s1753 = sor.u32 %s5, %s1752
    %s1754 = sand.u32 %s1753, 85
    %s1755 = sshrl.u32 %s1754, 1
    %s1756 = sor.u32 %s1754, %s1755
    %s1757 = sand.u32 51, %s1756
    %s1758 = sshrl.u32 %s1757, 2
    %s1759 = sor.u32 %s1757, %s1758
    %s1760 = sand.u32 15, %s1759
    %v1761 = vld [vmem:[%s1751] sm:%s1760]
    %v1762 = vunpack.c.l.bf16 %v1761
    %v1763 = vunpack.c.h.bf16 %v1761
    %s1764 = scalar_lea.vmem [#allocation1], 1168
    %1765 = vst [vmem:[%s1764] sm:%s5] %v1762
    %s1766 = smul.addr 4, 145
    %s1767 = scalar_lea.vmem %s0, %s1766
    %s1768 = sshrl.u32 %s5, 1
    %s1769 = sor.u32 %s5, %s1768
    %s1770 = sand.u32 %s1769, 85
    %s1771 = sshrl.u32 %s1770, 1
    %s1772 = sor.u32 %s1770, %s1771
    %s1773 = sand.u32 51, %s1772
    %s1774 = sshrl.u32 %s1773, 2
    %s1775 = sor.u32 %s1773, %s1774
    %s1776 = sand.u32 15, %s1775
    %v1777 = vld [vmem:[%s1767] sm:%s1776]
    %v1778 = vunpack.c.l.bf16 %v1777
    %v1779 = vunpack.c.h.bf16 %v1777
    %s1780 = scalar_lea.vmem [#allocation1], 1160
    %1781 = vst [vmem:[%s1780] sm:%s5] %v1778
    %s1782 = smul.addr 4, 144
    %s1783 = scalar_lea.vmem %s0, %s1782
    %s1784 = sshrl.u32 %s5, 1
    %s1785 = sor.u32 %s5, %s1784
    %s1786 = sand.u32 %s1785, 85
    %s1787 = sshrl.u32 %s1786, 1
    %s1788 = sor.u32 %s1786, %s1787
    %s1789 = sand.u32 51, %s1788
    %s1790 = sshrl.u32 %s1789, 2
    %s1791 = sor.u32 %s1789, %s1790
    %s1792 = sand.u32 15, %s1791
    %v1793 = vld [vmem:[%s1783] sm:%s1792]
    %v1794 = vunpack.c.l.bf16 %v1793
    %v1795 = vunpack.c.h.bf16 %v1793
    %s1796 = scalar_lea.vmem [#allocation1], 1152
    %1797 = vst [vmem:[%s1796] sm:%s5] %v1794
    %s1798 = smul.addr 4, 143
    %s1799 = scalar_lea.vmem %s0, %s1798
    %s1800 = sshrl.u32 %s5, 1
    %s1801 = sor.u32 %s5, %s1800
    %s1802 = sand.u32 %s1801, 85
    %s1803 = sshrl.u32 %s1802, 1
    %s1804 = sor.u32 %s1802, %s1803
    %s1805 = sand.u32 51, %s1804
    %s1806 = sshrl.u32 %s1805, 2
    %s1807 = sor.u32 %s1805, %s1806
    %s1808 = sand.u32 15, %s1807
    %v1809 = vld [vmem:[%s1799] sm:%s1808]
    %v1810 = vunpack.c.l.bf16 %v1809
    %v1811 = vunpack.c.h.bf16 %v1809
    %s1812 = scalar_lea.vmem [#allocation1], 1144
    %1813 = vst [vmem:[%s1812] sm:%s5] %v1810
    %s1814 = smul.addr 4, 142
    %s1815 = scalar_lea.vmem %s0, %s1814
    %s1816 = sshrl.u32 %s5, 1
    %s1817 = sor.u32 %s5, %s1816
    %s1818 = sand.u32 %s1817, 85
    %s1819 = sshrl.u32 %s1818, 1
    %s1820 = sor.u32 %s1818, %s1819
    %s1821 = sand.u32 51, %s1820
    %s1822 = sshrl.u32 %s1821, 2
    %s1823 = sor.u32 %s1821, %s1822
    %s1824 = sand.u32 15, %s1823
    %v1825 = vld [vmem:[%s1815] sm:%s1824]
    %v1826 = vunpack.c.l.bf16 %v1825
    %v1827 = vunpack.c.h.bf16 %v1825
    %s1828 = scalar_lea.vmem [#allocation1], 1136
    %1829 = vst [vmem:[%s1828] sm:%s5] %v1826
    %s1830 = smul.addr 4, 141
    %s1831 = scalar_lea.vmem %s0, %s1830
    %s1832 = sshrl.u32 %s5, 1
    %s1833 = sor.u32 %s5, %s1832
    %s1834 = sand.u32 %s1833, 85
    %s1835 = sshrl.u32 %s1834, 1
    %s1836 = sor.u32 %s1834, %s1835
    %s1837 = sand.u32 51, %s1836
    %s1838 = sshrl.u32 %s1837, 2
    %s1839 = sor.u32 %s1837, %s1838
    %s1840 = sand.u32 15, %s1839
    %v1841 = vld [vmem:[%s1831] sm:%s1840]
    %v1842 = vunpack.c.l.bf16 %v1841
    %v1843 = vunpack.c.h.bf16 %v1841
    %s1844 = scalar_lea.vmem [#allocation1], 1128
    %1845 = vst [vmem:[%s1844] sm:%s5] %v1842
    %s1846 = smul.addr 4, 140
    %s1847 = scalar_lea.vmem %s0, %s1846
    %s1848 = sshrl.u32 %s5, 1
    %s1849 = sor.u32 %s5, %s1848
    %s1850 = sand.u32 %s1849, 85
    %s1851 = sshrl.u32 %s1850, 1
    %s1852 = sor.u32 %s1850, %s1851
    %s1853 = sand.u32 51, %s1852
    %s1854 = sshrl.u32 %s1853, 2
    %s1855 = sor.u32 %s1853, %s1854
    %s1856 = sand.u32 15, %s1855
    %v1857 = vld [vmem:[%s1847] sm:%s1856]
    %v1858 = vunpack.c.l.bf16 %v1857
    %v1859 = vunpack.c.h.bf16 %v1857
    %s1860 = scalar_lea.vmem [#allocation1], 1120
    %1861 = vst [vmem:[%s1860] sm:%s5] %v1858
    %s1862 = smul.addr 4, 139
    %s1863 = scalar_lea.vmem %s0, %s1862
    %s1864 = sshrl.u32 %s5, 1
    %s1865 = sor.u32 %s5, %s1864
    %s1866 = sand.u32 %s1865, 85
    %s1867 = sshrl.u32 %s1866, 1
    %s1868 = sor.u32 %s1866, %s1867
    %s1869 = sand.u32 51, %s1868
    %s1870 = sshrl.u32 %s1869, 2
    %s1871 = sor.u32 %s1869, %s1870
    %s1872 = sand.u32 15, %s1871
    %v1873 = vld [vmem:[%s1863] sm:%s1872]
    %v1874 = vunpack.c.l.bf16 %v1873
    %v1875 = vunpack.c.h.bf16 %v1873
    %s1876 = scalar_lea.vmem [#allocation1], 1112
    %1877 = vst [vmem:[%s1876] sm:%s5] %v1874
    %s1878 = smul.addr 4, 138
    %s1879 = scalar_lea.vmem %s0, %s1878
    %s1880 = sshrl.u32 %s5, 1
    %s1881 = sor.u32 %s5, %s1880
    %s1882 = sand.u32 %s1881, 85
    %s1883 = sshrl.u32 %s1882, 1
    %s1884 = sor.u32 %s1882, %s1883
    %s1885 = sand.u32 51, %s1884
    %s1886 = sshrl.u32 %s1885, 2
    %s1887 = sor.u32 %s1885, %s1886
    %s1888 = sand.u32 15, %s1887
    %v1889 = vld [vmem:[%s1879] sm:%s1888]
    %v1890 = vunpack.c.l.bf16 %v1889
    %v1891 = vunpack.c.h.bf16 %v1889
    %s1892 = scalar_lea.vmem [#allocation1], 1104
    %1893 = vst [vmem:[%s1892] sm:%s5] %v1890
    %s1894 = smul.addr 4, 137
    %s1895 = scalar_lea.vmem %s0, %s1894
    %s1896 = sshrl.u32 %s5, 1
    %s1897 = sor.u32 %s5, %s1896
    %s1898 = sand.u32 %s1897, 85
    %s1899 = sshrl.u32 %s1898, 1
    %s1900 = sor.u32 %s1898, %s1899
    %s1901 = sand.u32 51, %s1900
    %s1902 = sshrl.u32 %s1901, 2
    %s1903 = sor.u32 %s1901, %s1902
    %s1904 = sand.u32 15, %s1903
    %v1905 = vld [vmem:[%s1895] sm:%s1904]
    %v1906 = vunpack.c.l.bf16 %v1905
    %v1907 = vunpack.c.h.bf16 %v1905
    %s1908 = scalar_lea.vmem [#allocation1], 1096
    %1909 = vst [vmem:[%s1908] sm:%s5] %v1906
    %s1910 = smul.addr 4, 136
    %s1911 = scalar_lea.vmem %s0, %s1910
    %s1912 = sshrl.u32 %s5, 1
    %s1913 = sor.u32 %s5, %s1912
    %s1914 = sand.u32 %s1913, 85
    %s1915 = sshrl.u32 %s1914, 1
    %s1916 = sor.u32 %s1914, %s1915
    %s1917 = sand.u32 51, %s1916
    %s1918 = sshrl.u32 %s1917, 2
    %s1919 = sor.u32 %s1917, %s1918
    %s1920 = sand.u32 15, %s1919
    %v1921 = vld [vmem:[%s1911] sm:%s1920]
    %v1922 = vunpack.c.l.bf16 %v1921
    %v1923 = vunpack.c.h.bf16 %v1921
    %s1924 = scalar_lea.vmem [#allocation1], 1088
    %1925 = vst [vmem:[%s1924] sm:%s5] %v1922
    %s1926 = smul.addr 4, 135
    %s1927 = scalar_lea.vmem %s0, %s1926
    %s1928 = sshrl.u32 %s5, 1
    %s1929 = sor.u32 %s5, %s1928
    %s1930 = sand.u32 %s1929, 85
    %s1931 = sshrl.u32 %s1930, 1
    %s1932 = sor.u32 %s1930, %s1931
    %s1933 = sand.u32 51, %s1932
    %s1934 = sshrl.u32 %s1933, 2
    %s1935 = sor.u32 %s1933, %s1934
    %s1936 = sand.u32 15, %s1935
    %v1937 = vld [vmem:[%s1927] sm:%s1936]
    %v1938 = vunpack.c.l.bf16 %v1937
    %v1939 = vunpack.c.h.bf16 %v1937
    %s1940 = scalar_lea.vmem [#allocation1], 1080
    %1941 = vst [vmem:[%s1940] sm:%s5] %v1938
    %s1942 = smul.addr 4, 134
    %s1943 = scalar_lea.vmem %s0, %s1942
    %s1944 = sshrl.u32 %s5, 1
    %s1945 = sor.u32 %s5, %s1944
    %s1946 = sand.u32 %s1945, 85
    %s1947 = sshrl.u32 %s1946, 1
    %s1948 = sor.u32 %s1946, %s1947
    %s1949 = sand.u32 51, %s1948
    %s1950 = sshrl.u32 %s1949, 2
    %s1951 = sor.u32 %s1949, %s1950
    %s1952 = sand.u32 15, %s1951
    %v1953 = vld [vmem:[%s1943] sm:%s1952]
    %v1954 = vunpack.c.l.bf16 %v1953
    %v1955 = vunpack.c.h.bf16 %v1953
    %s1956 = scalar_lea.vmem [#allocation1], 1072
    %1957 = vst [vmem:[%s1956] sm:%s5] %v1954
    %s1958 = smul.addr 4, 133
    %s1959 = scalar_lea.vmem %s0, %s1958
    %s1960 = sshrl.u32 %s5, 1
    %s1961 = sor.u32 %s5, %s1960
    %s1962 = sand.u32 %s1961, 85
    %s1963 = sshrl.u32 %s1962, 1
    %s1964 = sor.u32 %s1962, %s1963
    %s1965 = sand.u32 51, %s1964
    %s1966 = sshrl.u32 %s1965, 2
    %s1967 = sor.u32 %s1965, %s1966
    %s1968 = sand.u32 15, %s1967
    %v1969 = vld [vmem:[%s1959] sm:%s1968]
    %v1970 = vunpack.c.l.bf16 %v1969
    %v1971 = vunpack.c.h.bf16 %v1969
    %s1972 = scalar_lea.vmem [#allocation1], 1064
    %1973 = vst [vmem:[%s1972] sm:%s5] %v1970
    %s1974 = smul.addr 4, 132
    %s1975 = scalar_lea.vmem %s0, %s1974
    %s1976 = sshrl.u32 %s5, 1
    %s1977 = sor.u32 %s5, %s1976
    %s1978 = sand.u32 %s1977, 85
    %s1979 = sshrl.u32 %s1978, 1
    %s1980 = sor.u32 %s1978, %s1979
    %s1981 = sand.u32 51, %s1980
    %s1982 = sshrl.u32 %s1981, 2
    %s1983 = sor.u32 %s1981, %s1982
    %s1984 = sand.u32 15, %s1983
    %v1985 = vld [vmem:[%s1975] sm:%s1984]
    %v1986 = vunpack.c.l.bf16 %v1985
    %v1987 = vunpack.c.h.bf16 %v1985
    %s1988 = scalar_lea.vmem [#allocation1], 1056
    %1989 = vst [vmem:[%s1988] sm:%s5] %v1986
    %s1990 = smul.addr 4, 131
    %s1991 = scalar_lea.vmem %s0, %s1990
    %s1992 = sshrl.u32 %s5, 1
    %s1993 = sor.u32 %s5, %s1992
    %s1994 = sand.u32 %s1993, 85
    %s1995 = sshrl.u32 %s1994, 1
    %s1996 = sor.u32 %s1994, %s1995
    %s1997 = sand.u32 51, %s1996
    %s1998 = sshrl.u32 %s1997, 2
    %s1999 = sor.u32 %s1997, %s1998
    %s2000 = sand.u32 15, %s1999
    %v2001 = vld [vmem:[%s1991] sm:%s2000]
    %v2002 = vunpack.c.l.bf16 %v2001
    %v2003 = vunpack.c.h.bf16 %v2001
    %s2004 = scalar_lea.vmem [#allocation1], 1048
    %2005 = vst [vmem:[%s2004] sm:%s5] %v2002
    %s2006 = smul.addr 4, 130
    %s2007 = scalar_lea.vmem %s0, %s2006
    %s2008 = sshrl.u32 %s5, 1
    %s2009 = sor.u32 %s5, %s2008
    %s2010 = sand.u32 %s2009, 85
    %s2011 = sshrl.u32 %s2010, 1
    %s2012 = sor.u32 %s2010, %s2011
    %s2013 = sand.u32 51, %s2012
    %s2014 = sshrl.u32 %s2013, 2
    %s2015 = sor.u32 %s2013, %s2014
    %s2016 = sand.u32 15, %s2015
    %v2017 = vld [vmem:[%s2007] sm:%s2016]
    %v2018 = vunpack.c.l.bf16 %v2017
    %v2019 = vunpack.c.h.bf16 %v2017
    %s2020 = scalar_lea.vmem [#allocation1], 1040
    %2021 = vst [vmem:[%s2020] sm:%s5] %v2018
    %s2022 = smul.addr 4, 129
    %s2023 = scalar_lea.vmem %s0, %s2022
    %s2024 = sshrl.u32 %s5, 1
    %s2025 = sor.u32 %s5, %s2024
    %s2026 = sand.u32 %s2025, 85
    %s2027 = sshrl.u32 %s2026, 1
    %s2028 = sor.u32 %s2026, %s2027
    %s2029 = sand.u32 51, %s2028
    %s2030 = sshrl.u32 %s2029, 2
    %s2031 = sor.u32 %s2029, %s2030
    %s2032 = sand.u32 15, %s2031
    %v2033 = vld [vmem:[%s2023] sm:%s2032]
    %v2034 = vunpack.c.l.bf16 %v2033
    %v2035 = vunpack.c.h.bf16 %v2033
    %s2036 = scalar_lea.vmem [#allocation1], 1032
    %2037 = vst [vmem:[%s2036] sm:%s5] %v2034
    %s2038 = smul.addr 4, 128
    %s2039 = scalar_lea.vmem %s0, %s2038
    %s2040 = sshrl.u32 %s5, 1
    %s2041 = sor.u32 %s5, %s2040
    %s2042 = sand.u32 %s2041, 85
    %s2043 = sshrl.u32 %s2042, 1
    %s2044 = sor.u32 %s2042, %s2043
    %s2045 = sand.u32 51, %s2044
    %s2046 = sshrl.u32 %s2045, 2
    %s2047 = sor.u32 %s2045, %s2046
    %s2048 = sand.u32 15, %s2047
    %v2049 = vld [vmem:[%s2039] sm:%s2048]
    %v2050 = vunpack.c.l.bf16 %v2049
    %v2051 = vunpack.c.h.bf16 %v2049
    %s2052 = scalar_lea.vmem [#allocation1], 1024
    %2053 = vst [vmem:[%s2052] sm:%s5] %v2050
    %s2054 = smul.addr 4, 127
    %s2055 = scalar_lea.vmem %s0, %s2054
    %s2056 = sshrl.u32 %s5, 1
    %s2057 = sor.u32 %s5, %s2056
    %s2058 = sand.u32 %s2057, 85
    %s2059 = sshrl.u32 %s2058, 1
    %s2060 = sor.u32 %s2058, %s2059
    %s2061 = sand.u32 51, %s2060
    %s2062 = sshrl.u32 %s2061, 2
    %s2063 = sor.u32 %s2061, %s2062
    %s2064 = sand.u32 15, %s2063
    %v2065 = vld [vmem:[%s2055] sm:%s2064]
    %v2066 = vunpack.c.l.bf16 %v2065
    %v2067 = vunpack.c.h.bf16 %v2065
    %s2068 = scalar_lea.vmem [#allocation1], 1016
    %2069 = vst [vmem:[%s2068] sm:%s5] %v2066
    %s2070 = smul.addr 4, 126
    %s2071 = scalar_lea.vmem %s0, %s2070
    %s2072 = sshrl.u32 %s5, 1
    %s2073 = sor.u32 %s5, %s2072
    %s2074 = sand.u32 %s2073, 85
    %s2075 = sshrl.u32 %s2074, 1
    %s2076 = sor.u32 %s2074, %s2075
    %s2077 = sand.u32 51, %s2076
    %s2078 = sshrl.u32 %s2077, 2
    %s2079 = sor.u32 %s2077, %s2078
    %s2080 = sand.u32 15, %s2079
    %v2081 = vld [vmem:[%s2071] sm:%s2080]
    %v2082 = vunpack.c.l.bf16 %v2081
    %v2083 = vunpack.c.h.bf16 %v2081
    %s2084 = scalar_lea.vmem [#allocation1], 1008
    %2085 = vst [vmem:[%s2084] sm:%s5] %v2082
    %s2086 = smul.addr 4, 125
    %s2087 = scalar_lea.vmem %s0, %s2086
    %s2088 = sshrl.u32 %s5, 1
    %s2089 = sor.u32 %s5, %s2088
    %s2090 = sand.u32 %s2089, 85
    %s2091 = sshrl.u32 %s2090, 1
    %s2092 = sor.u32 %s2090, %s2091
    %s2093 = sand.u32 51, %s2092
    %s2094 = sshrl.u32 %s2093, 2
    %s2095 = sor.u32 %s2093, %s2094
    %s2096 = sand.u32 15, %s2095
    %v2097 = vld [vmem:[%s2087] sm:%s2096]
    %v2098 = vunpack.c.l.bf16 %v2097
    %v2099 = vunpack.c.h.bf16 %v2097
    %s2100 = scalar_lea.vmem [#allocation1], 1000
    %2101 = vst [vmem:[%s2100] sm:%s5] %v2098
    %s2102 = smul.addr 4, 124
    %s2103 = scalar_lea.vmem %s0, %s2102
    %s2104 = sshrl.u32 %s5, 1
    %s2105 = sor.u32 %s5, %s2104
    %s2106 = sand.u32 %s2105, 85
    %s2107 = sshrl.u32 %s2106, 1
    %s2108 = sor.u32 %s2106, %s2107
    %s2109 = sand.u32 51, %s2108
    %s2110 = sshrl.u32 %s2109, 2
    %s2111 = sor.u32 %s2109, %s2110
    %s2112 = sand.u32 15, %s2111
    %v2113 = vld [vmem:[%s2103] sm:%s2112]
    %v2114 = vunpack.c.l.bf16 %v2113
    %v2115 = vunpack.c.h.bf16 %v2113
    %s2116 = scalar_lea.vmem [#allocation1], 992
    %2117 = vst [vmem:[%s2116] sm:%s5] %v2114
    %s2118 = smul.addr 4, 123
    %s2119 = scalar_lea.vmem %s0, %s2118
    %s2120 = sshrl.u32 %s5, 1
    %s2121 = sor.u32 %s5, %s2120
    %s2122 = sand.u32 %s2121, 85
    %s2123 = sshrl.u32 %s2122, 1
    %s2124 = sor.u32 %s2122, %s2123
    %s2125 = sand.u32 51, %s2124
    %s2126 = sshrl.u32 %s2125, 2
    %s2127 = sor.u32 %s2125, %s2126
    %s2128 = sand.u32 15, %s2127
    %v2129 = vld [vmem:[%s2119] sm:%s2128]
    %v2130 = vunpack.c.l.bf16 %v2129
    %v2131 = vunpack.c.h.bf16 %v2129
    %s2132 = scalar_lea.vmem [#allocation1], 984
    %2133 = vst [vmem:[%s2132] sm:%s5] %v2130
    %s2134 = smul.addr 4, 122
    %s2135 = scalar_lea.vmem %s0, %s2134
    %s2136 = sshrl.u32 %s5, 1
    %s2137 = sor.u32 %s5, %s2136
    %s2138 = sand.u32 %s2137, 85
    %s2139 = sshrl.u32 %s2138, 1
    %s2140 = sor.u32 %s2138, %s2139
    %s2141 = sand.u32 51, %s2140
    %s2142 = sshrl.u32 %s2141, 2
    %s2143 = sor.u32 %s2141, %s2142
    %s2144 = sand.u32 15, %s2143
    %v2145 = vld [vmem:[%s2135] sm:%s2144]
    %v2146 = vunpack.c.l.bf16 %v2145
    %v2147 = vunpack.c.h.bf16 %v2145
    %s2148 = scalar_lea.vmem [#allocation1], 976
    %2149 = vst [vmem:[%s2148] sm:%s5] %v2146
    %s2150 = smul.addr 4, 121
    %s2151 = scalar_lea.vmem %s0, %s2150
    %s2152 = sshrl.u32 %s5, 1
    %s2153 = sor.u32 %s5, %s2152
    %s2154 = sand.u32 %s2153, 85
    %s2155 = sshrl.u32 %s2154, 1
    %s2156 = sor.u32 %s2154, %s2155
    %s2157 = sand.u32 51, %s2156
    %s2158 = sshrl.u32 %s2157, 2
    %s2159 = sor.u32 %s2157, %s2158
    %s2160 = sand.u32 15, %s2159
    %v2161 = vld [vmem:[%s2151] sm:%s2160]
    %v2162 = vunpack.c.l.bf16 %v2161
    %v2163 = vunpack.c.h.bf16 %v2161
    %s2164 = scalar_lea.vmem [#allocation1], 968
    %2165 = vst [vmem:[%s2164] sm:%s5] %v2162
    %s2166 = smul.addr 4, 120
    %s2167 = scalar_lea.vmem %s0, %s2166
    %s2168 = sshrl.u32 %s5, 1
    %s2169 = sor.u32 %s5, %s2168
    %s2170 = sand.u32 %s2169, 85
    %s2171 = sshrl.u32 %s2170, 1
    %s2172 = sor.u32 %s2170, %s2171
    %s2173 = sand.u32 51, %s2172
    %s2174 = sshrl.u32 %s2173, 2
    %s2175 = sor.u32 %s2173, %s2174
    %s2176 = sand.u32 15, %s2175
    %v2177 = vld [vmem:[%s2167] sm:%s2176]
    %v2178 = vunpack.c.l.bf16 %v2177
    %v2179 = vunpack.c.h.bf16 %v2177
    %s2180 = scalar_lea.vmem [#allocation1], 960
    %2181 = vst [vmem:[%s2180] sm:%s5] %v2178
    %s2182 = smul.addr 4, 119
    %s2183 = scalar_lea.vmem %s0, %s2182
    %s2184 = sshrl.u32 %s5, 1
    %s2185 = sor.u32 %s5, %s2184
    %s2186 = sand.u32 %s2185, 85
    %s2187 = sshrl.u32 %s2186, 1
    %s2188 = sor.u32 %s2186, %s2187
    %s2189 = sand.u32 51, %s2188
    %s2190 = sshrl.u32 %s2189, 2
    %s2191 = sor.u32 %s2189, %s2190
    %s2192 = sand.u32 15, %s2191
    %v2193 = vld [vmem:[%s2183] sm:%s2192]
    %v2194 = vunpack.c.l.bf16 %v2193
    %v2195 = vunpack.c.h.bf16 %v2193
    %s2196 = scalar_lea.vmem [#allocation1], 952
    %2197 = vst [vmem:[%s2196] sm:%s5] %v2194
    %s2198 = smul.addr 4, 118
    %s2199 = scalar_lea.vmem %s0, %s2198
    %s2200 = sshrl.u32 %s5, 1
    %s2201 = sor.u32 %s5, %s2200
    %s2202 = sand.u32 %s2201, 85
    %s2203 = sshrl.u32 %s2202, 1
    %s2204 = sor.u32 %s2202, %s2203
    %s2205 = sand.u32 51, %s2204
    %s2206 = sshrl.u32 %s2205, 2
    %s2207 = sor.u32 %s2205, %s2206
    %s2208 = sand.u32 15, %s2207
    %v2209 = vld [vmem:[%s2199] sm:%s2208]
    %v2210 = vunpack.c.l.bf16 %v2209
    %v2211 = vunpack.c.h.bf16 %v2209
    %s2212 = scalar_lea.vmem [#allocation1], 944
    %2213 = vst [vmem:[%s2212] sm:%s5] %v2210
    %s2214 = smul.addr 4, 117
    %s2215 = scalar_lea.vmem %s0, %s2214
    %s2216 = sshrl.u32 %s5, 1
    %s2217 = sor.u32 %s5, %s2216
    %s2218 = sand.u32 %s2217, 85
    %s2219 = sshrl.u32 %s2218, 1
    %s2220 = sor.u32 %s2218, %s2219
    %s2221 = sand.u32 51, %s2220
    %s2222 = sshrl.u32 %s2221, 2
    %s2223 = sor.u32 %s2221, %s2222
    %s2224 = sand.u32 15, %s2223
    %v2225 = vld [vmem:[%s2215] sm:%s2224]
    %v2226 = vunpack.c.l.bf16 %v2225
    %v2227 = vunpack.c.h.bf16 %v2225
    %s2228 = scalar_lea.vmem [#allocation1], 936
    %2229 = vst [vmem:[%s2228] sm:%s5] %v2226
    %s2230 = smul.addr 4, 116
    %s2231 = scalar_lea.vmem %s0, %s2230
    %s2232 = sshrl.u32 %s5, 1
    %s2233 = sor.u32 %s5, %s2232
    %s2234 = sand.u32 %s2233, 85
    %s2235 = sshrl.u32 %s2234, 1
    %s2236 = sor.u32 %s2234, %s2235
    %s2237 = sand.u32 51, %s2236
    %s2238 = sshrl.u32 %s2237, 2
    %s2239 = sor.u32 %s2237, %s2238
    %s2240 = sand.u32 15, %s2239
    %v2241 = vld [vmem:[%s2231] sm:%s2240]
    %v2242 = vunpack.c.l.bf16 %v2241
    %v2243 = vunpack.c.h.bf16 %v2241
    %s2244 = scalar_lea.vmem [#allocation1], 928
    %2245 = vst [vmem:[%s2244] sm:%s5] %v2242
    %s2246 = smul.addr 4, 115
    %s2247 = scalar_lea.vmem %s0, %s2246
    %s2248 = sshrl.u32 %s5, 1
    %s2249 = sor.u32 %s5, %s2248
    %s2250 = sand.u32 %s2249, 85
    %s2251 = sshrl.u32 %s2250, 1
    %s2252 = sor.u32 %s2250, %s2251
    %s2253 = sand.u32 51, %s2252
    %s2254 = sshrl.u32 %s2253, 2
    %s2255 = sor.u32 %s2253, %s2254
    %s2256 = sand.u32 15, %s2255
    %v2257 = vld [vmem:[%s2247] sm:%s2256]
    %v2258 = vunpack.c.l.bf16 %v2257
    %v2259 = vunpack.c.h.bf16 %v2257
    %s2260 = scalar_lea.vmem [#allocation1], 920
    %2261 = vst [vmem:[%s2260] sm:%s5] %v2258
    %s2262 = smul.addr 4, 114
    %s2263 = scalar_lea.vmem %s0, %s2262
    %s2264 = sshrl.u32 %s5, 1
    %s2265 = sor.u32 %s5, %s2264
    %s2266 = sand.u32 %s2265, 85
    %s2267 = sshrl.u32 %s2266, 1
    %s2268 = sor.u32 %s2266, %s2267
    %s2269 = sand.u32 51, %s2268
    %s2270 = sshrl.u32 %s2269, 2
    %s2271 = sor.u32 %s2269, %s2270
    %s2272 = sand.u32 15, %s2271
    %v2273 = vld [vmem:[%s2263] sm:%s2272]
    %v2274 = vunpack.c.l.bf16 %v2273
    %v2275 = vunpack.c.h.bf16 %v2273
    %s2276 = scalar_lea.vmem [#allocation1], 912
    %2277 = vst [vmem:[%s2276] sm:%s5] %v2274
    %s2278 = smul.addr 4, 113
    %s2279 = scalar_lea.vmem %s0, %s2278
    %s2280 = sshrl.u32 %s5, 1
    %s2281 = sor.u32 %s5, %s2280
    %s2282 = sand.u32 %s2281, 85
    %s2283 = sshrl.u32 %s2282, 1
    %s2284 = sor.u32 %s2282, %s2283
    %s2285 = sand.u32 51, %s2284
    %s2286 = sshrl.u32 %s2285, 2
    %s2287 = sor.u32 %s2285, %s2286
    %s2288 = sand.u32 15, %s2287
    %v2289 = vld [vmem:[%s2279] sm:%s2288]
    %v2290 = vunpack.c.l.bf16 %v2289
    %v2291 = vunpack.c.h.bf16 %v2289
    %s2292 = scalar_lea.vmem [#allocation1], 904
    %2293 = vst [vmem:[%s2292] sm:%s5] %v2290
    %s2294 = smul.addr 4, 112
    %s2295 = scalar_lea.vmem %s0, %s2294
    %s2296 = sshrl.u32 %s5, 1
    %s2297 = sor.u32 %s5, %s2296
    %s2298 = sand.u32 %s2297, 85
    %s2299 = sshrl.u32 %s2298, 1
    %s2300 = sor.u32 %s2298, %s2299
    %s2301 = sand.u32 51, %s2300
    %s2302 = sshrl.u32 %s2301, 2
    %s2303 = sor.u32 %s2301, %s2302
    %s2304 = sand.u32 15, %s2303
    %v2305 = vld [vmem:[%s2295] sm:%s2304]
    %v2306 = vunpack.c.l.bf16 %v2305
    %v2307 = vunpack.c.h.bf16 %v2305
    %s2308 = scalar_lea.vmem [#allocation1], 896
    %2309 = vst [vmem:[%s2308] sm:%s5] %v2306
    %s2310 = smul.addr 4, 111
    %s2311 = scalar_lea.vmem %s0, %s2310
    %s2312 = sshrl.u32 %s5, 1
    %s2313 = sor.u32 %s5, %s2312
    %s2314 = sand.u32 %s2313, 85
    %s2315 = sshrl.u32 %s2314, 1
    %s2316 = sor.u32 %s2314, %s2315
    %s2317 = sand.u32 51, %s2316
    %s2318 = sshrl.u32 %s2317, 2
    %s2319 = sor.u32 %s2317, %s2318
    %s2320 = sand.u32 15, %s2319
    %v2321 = vld [vmem:[%s2311] sm:%s2320]
    %v2322 = vunpack.c.l.bf16 %v2321
    %v2323 = vunpack.c.h.bf16 %v2321
    %s2324 = scalar_lea.vmem [#allocation1], 888
    %2325 = vst [vmem:[%s2324] sm:%s5] %v2322
    %s2326 = smul.addr 4, 110
    %s2327 = scalar_lea.vmem %s0, %s2326
    %s2328 = sshrl.u32 %s5, 1
    %s2329 = sor.u32 %s5, %s2328
    %s2330 = sand.u32 %s2329, 85
    %s2331 = sshrl.u32 %s2330, 1
    %s2332 = sor.u32 %s2330, %s2331
    %s2333 = sand.u32 51, %s2332
    %s2334 = sshrl.u32 %s2333, 2
    %s2335 = sor.u32 %s2333, %s2334
    %s2336 = sand.u32 15, %s2335
    %v2337 = vld [vmem:[%s2327] sm:%s2336]
    %v2338 = vunpack.c.l.bf16 %v2337
    %v2339 = vunpack.c.h.bf16 %v2337
    %s2340 = scalar_lea.vmem [#allocation1], 880
    %2341 = vst [vmem:[%s2340] sm:%s5] %v2338
    %s2342 = smul.addr 4, 109
    %s2343 = scalar_lea.vmem %s0, %s2342
    %s2344 = sshrl.u32 %s5, 1
    %s2345 = sor.u32 %s5, %s2344
    %s2346 = sand.u32 %s2345, 85
    %s2347 = sshrl.u32 %s2346, 1
    %s2348 = sor.u32 %s2346, %s2347
    %s2349 = sand.u32 51, %s2348
    %s2350 = sshrl.u32 %s2349, 2
    %s2351 = sor.u32 %s2349, %s2350
    %s2352 = sand.u32 15, %s2351
    %v2353 = vld [vmem:[%s2343] sm:%s2352]
    %v2354 = vunpack.c.l.bf16 %v2353
    %v2355 = vunpack.c.h.bf16 %v2353
    %s2356 = scalar_lea.vmem [#allocation1], 872
    %2357 = vst [vmem:[%s2356] sm:%s5] %v2354
    %s2358 = smul.addr 4, 108
    %s2359 = scalar_lea.vmem %s0, %s2358
    %s2360 = sshrl.u32 %s5, 1
    %s2361 = sor.u32 %s5, %s2360
    %s2362 = sand.u32 %s2361, 85
    %s2363 = sshrl.u32 %s2362, 1
    %s2364 = sor.u32 %s2362, %s2363
    %s2365 = sand.u32 51, %s2364
    %s2366 = sshrl.u32 %s2365, 2
    %s2367 = sor.u32 %s2365, %s2366
    %s2368 = sand.u32 15, %s2367
    %v2369 = vld [vmem:[%s2359] sm:%s2368]
    %v2370 = vunpack.c.l.bf16 %v2369
    %v2371 = vunpack.c.h.bf16 %v2369
    %s2372 = scalar_lea.vmem [#allocation1], 864
    %2373 = vst [vmem:[%s2372] sm:%s5] %v2370
    %s2374 = smul.addr 4, 107
    %s2375 = scalar_lea.vmem %s0, %s2374
    %s2376 = sshrl.u32 %s5, 1
    %s2377 = sor.u32 %s5, %s2376
    %s2378 = sand.u32 %s2377, 85
    %s2379 = sshrl.u32 %s2378, 1
    %s2380 = sor.u32 %s2378, %s2379
    %s2381 = sand.u32 51, %s2380
    %s2382 = sshrl.u32 %s2381, 2
    %s2383 = sor.u32 %s2381, %s2382
    %s2384 = sand.u32 15, %s2383
    %v2385 = vld [vmem:[%s2375] sm:%s2384]
    %v2386 = vunpack.c.l.bf16 %v2385
    %v2387 = vunpack.c.h.bf16 %v2385
    %s2388 = scalar_lea.vmem [#allocation1], 856
    %2389 = vst [vmem:[%s2388] sm:%s5] %v2386
    %s2390 = smul.addr 4, 106
    %s2391 = scalar_lea.vmem %s0, %s2390
    %s2392 = sshrl.u32 %s5, 1
    %s2393 = sor.u32 %s5, %s2392
    %s2394 = sand.u32 %s2393, 85
    %s2395 = sshrl.u32 %s2394, 1
    %s2396 = sor.u32 %s2394, %s2395
    %s2397 = sand.u32 51, %s2396
    %s2398 = sshrl.u32 %s2397, 2
    %s2399 = sor.u32 %s2397, %s2398
    %s2400 = sand.u32 15, %s2399
    %v2401 = vld [vmem:[%s2391] sm:%s2400]
    %v2402 = vunpack.c.l.bf16 %v2401
    %v2403 = vunpack.c.h.bf16 %v2401
    %s2404 = scalar_lea.vmem [#allocation1], 848
    %2405 = vst [vmem:[%s2404] sm:%s5] %v2402
    %s2406 = smul.addr 4, 105
    %s2407 = scalar_lea.vmem %s0, %s2406
    %s2408 = sshrl.u32 %s5, 1
    %s2409 = sor.u32 %s5, %s2408
    %s2410 = sand.u32 %s2409, 85
    %s2411 = sshrl.u32 %s2410, 1
    %s2412 = sor.u32 %s2410, %s2411
    %s2413 = sand.u32 51, %s2412
    %s2414 = sshrl.u32 %s2413, 2
    %s2415 = sor.u32 %s2413, %s2414
    %s2416 = sand.u32 15, %s2415
    %v2417 = vld [vmem:[%s2407] sm:%s2416]
    %v2418 = vunpack.c.l.bf16 %v2417
    %v2419 = vunpack.c.h.bf16 %v2417
    %s2420 = scalar_lea.vmem [#allocation1], 840
    %2421 = vst [vmem:[%s2420] sm:%s5] %v2418
    %s2422 = smul.addr 4, 104
    %s2423 = scalar_lea.vmem %s0, %s2422
    %s2424 = sshrl.u32 %s5, 1
    %s2425 = sor.u32 %s5, %s2424
    %s2426 = sand.u32 %s2425, 85
    %s2427 = sshrl.u32 %s2426, 1
    %s2428 = sor.u32 %s2426, %s2427
    %s2429 = sand.u32 51, %s2428
    %s2430 = sshrl.u32 %s2429, 2
    %s2431 = sor.u32 %s2429, %s2430
    %s2432 = sand.u32 15, %s2431
    %v2433 = vld [vmem:[%s2423] sm:%s2432]
    %v2434 = vunpack.c.l.bf16 %v2433
    %v2435 = vunpack.c.h.bf16 %v2433
    %s2436 = scalar_lea.vmem [#allocation1], 832
    %2437 = vst [vmem:[%s2436] sm:%s5] %v2434
    %s2438 = smul.addr 4, 103
    %s2439 = scalar_lea.vmem %s0, %s2438
    %s2440 = sshrl.u32 %s5, 1
    %s2441 = sor.u32 %s5, %s2440
    %s2442 = sand.u32 %s2441, 85
    %s2443 = sshrl.u32 %s2442, 1
    %s2444 = sor.u32 %s2442, %s2443
    %s2445 = sand.u32 51, %s2444
    %s2446 = sshrl.u32 %s2445, 2
    %s2447 = sor.u32 %s2445, %s2446
    %s2448 = sand.u32 15, %s2447
    %v2449 = vld [vmem:[%s2439] sm:%s2448]
    %v2450 = vunpack.c.l.bf16 %v2449
    %v2451 = vunpack.c.h.bf16 %v2449
    %s2452 = scalar_lea.vmem [#allocation1], 824
    %2453 = vst [vmem:[%s2452] sm:%s5] %v2450
    %s2454 = smul.addr 4, 102
    %s2455 = scalar_lea.vmem %s0, %s2454
    %s2456 = sshrl.u32 %s5, 1
    %s2457 = sor.u32 %s5, %s2456
    %s2458 = sand.u32 %s2457, 85
    %s2459 = sshrl.u32 %s2458, 1
    %s2460 = sor.u32 %s2458, %s2459
    %s2461 = sand.u32 51, %s2460
    %s2462 = sshrl.u32 %s2461, 2
    %s2463 = sor.u32 %s2461, %s2462
    %s2464 = sand.u32 15, %s2463
    %v2465 = vld [vmem:[%s2455] sm:%s2464]
    %v2466 = vunpack.c.l.bf16 %v2465
    %v2467 = vunpack.c.h.bf16 %v2465
    %s2468 = scalar_lea.vmem [#allocation1], 816
    %2469 = vst [vmem:[%s2468] sm:%s5] %v2466
    %s2470 = smul.addr 4, 101
    %s2471 = scalar_lea.vmem %s0, %s2470
    %s2472 = sshrl.u32 %s5, 1
    %s2473 = sor.u32 %s5, %s2472
    %s2474 = sand.u32 %s2473, 85
    %s2475 = sshrl.u32 %s2474, 1
    %s2476 = sor.u32 %s2474, %s2475
    %s2477 = sand.u32 51, %s2476
    %s2478 = sshrl.u32 %s2477, 2
    %s2479 = sor.u32 %s2477, %s2478
    %s2480 = sand.u32 15, %s2479
    %v2481 = vld [vmem:[%s2471] sm:%s2480]
    %v2482 = vunpack.c.l.bf16 %v2481
    %v2483 = vunpack.c.h.bf16 %v2481
    %s2484 = scalar_lea.vmem [#allocation1], 808
    %2485 = vst [vmem:[%s2484] sm:%s5] %v2482
    %s2486 = smul.addr 4, 100
    %s2487 = scalar_lea.vmem %s0, %s2486
    %s2488 = sshrl.u32 %s5, 1
    %s2489 = sor.u32 %s5, %s2488
    %s2490 = sand.u32 %s2489, 85
    %s2491 = sshrl.u32 %s2490, 1
    %s2492 = sor.u32 %s2490, %s2491
    %s2493 = sand.u32 51, %s2492
    %s2494 = sshrl.u32 %s2493, 2
    %s2495 = sor.u32 %s2493, %s2494
    %s2496 = sand.u32 15, %s2495
    %v2497 = vld [vmem:[%s2487] sm:%s2496]
    %v2498 = vunpack.c.l.bf16 %v2497
    %v2499 = vunpack.c.h.bf16 %v2497
    %s2500 = scalar_lea.vmem [#allocation1], 800
    %2501 = vst [vmem:[%s2500] sm:%s5] %v2498
    %s2502 = smul.addr 4, 99
    %s2503 = scalar_lea.vmem %s0, %s2502
    %s2504 = sshrl.u32 %s5, 1
    %s2505 = sor.u32 %s5, %s2504
    %s2506 = sand.u32 %s2505, 85
    %s2507 = sshrl.u32 %s2506, 1
    %s2508 = sor.u32 %s2506, %s2507
    %s2509 = sand.u32 51, %s2508
    %s2510 = sshrl.u32 %s2509, 2
    %s2511 = sor.u32 %s2509, %s2510
    %s2512 = sand.u32 15, %s2511
    %v2513 = vld [vmem:[%s2503] sm:%s2512]
    %v2514 = vunpack.c.l.bf16 %v2513
    %v2515 = vunpack.c.h.bf16 %v2513
    %s2516 = scalar_lea.vmem [#allocation1], 792
    %2517 = vst [vmem:[%s2516] sm:%s5] %v2514
    %s2518 = smul.addr 4, 98
    %s2519 = scalar_lea.vmem %s0, %s2518
    %s2520 = sshrl.u32 %s5, 1
    %s2521 = sor.u32 %s5, %s2520
    %s2522 = sand.u32 %s2521, 85
    %s2523 = sshrl.u32 %s2522, 1
    %s2524 = sor.u32 %s2522, %s2523
    %s2525 = sand.u32 51, %s2524
    %s2526 = sshrl.u32 %s2525, 2
    %s2527 = sor.u32 %s2525, %s2526
    %s2528 = sand.u32 15, %s2527
    %v2529 = vld [vmem:[%s2519] sm:%s2528]
    %v2530 = vunpack.c.l.bf16 %v2529
    %v2531 = vunpack.c.h.bf16 %v2529
    %s2532 = scalar_lea.vmem [#allocation1], 784
    %2533 = vst [vmem:[%s2532] sm:%s5] %v2530
    %s2534 = smul.addr 4, 97
    %s2535 = scalar_lea.vmem %s0, %s2534
    %s2536 = sshrl.u32 %s5, 1
    %s2537 = sor.u32 %s5, %s2536
    %s2538 = sand.u32 %s2537, 85
    %s2539 = sshrl.u32 %s2538, 1
    %s2540 = sor.u32 %s2538, %s2539
    %s2541 = sand.u32 51, %s2540
    %s2542 = sshrl.u32 %s2541, 2
    %s2543 = sor.u32 %s2541, %s2542
    %s2544 = sand.u32 15, %s2543
    %v2545 = vld [vmem:[%s2535] sm:%s2544]
    %v2546 = vunpack.c.l.bf16 %v2545
    %v2547 = vunpack.c.h.bf16 %v2545
    %s2548 = scalar_lea.vmem [#allocation1], 776
    %2549 = vst [vmem:[%s2548] sm:%s5] %v2546
    %s2550 = smul.addr 4, 96
    %s2551 = scalar_lea.vmem %s0, %s2550
    %s2552 = sshrl.u32 %s5, 1
    %s2553 = sor.u32 %s5, %s2552
    %s2554 = sand.u32 %s2553, 85
    %s2555 = sshrl.u32 %s2554, 1
    %s2556 = sor.u32 %s2554, %s2555
    %s2557 = sand.u32 51, %s2556
    %s2558 = sshrl.u32 %s2557, 2
    %s2559 = sor.u32 %s2557, %s2558
    %s2560 = sand.u32 15, %s2559
    %v2561 = vld [vmem:[%s2551] sm:%s2560]
    %v2562 = vunpack.c.l.bf16 %v2561
    %v2563 = vunpack.c.h.bf16 %v2561
    %s2564 = scalar_lea.vmem [#allocation1], 768
    %2565 = vst [vmem:[%s2564] sm:%s5] %v2562
    %s2566 = smul.addr 4, 95
    %s2567 = scalar_lea.vmem %s0, %s2566
    %s2568 = sshrl.u32 %s5, 1
    %s2569 = sor.u32 %s5, %s2568
    %s2570 = sand.u32 %s2569, 85
    %s2571 = sshrl.u32 %s2570, 1
    %s2572 = sor.u32 %s2570, %s2571
    %s2573 = sand.u32 51, %s2572
    %s2574 = sshrl.u32 %s2573, 2
    %s2575 = sor.u32 %s2573, %s2574
    %s2576 = sand.u32 15, %s2575
    %v2577 = vld [vmem:[%s2567] sm:%s2576]
    %v2578 = vunpack.c.l.bf16 %v2577
    %v2579 = vunpack.c.h.bf16 %v2577
    %s2580 = scalar_lea.vmem [#allocation1], 760
    %2581 = vst [vmem:[%s2580] sm:%s5] %v2578
    %s2582 = smul.addr 4, 94
    %s2583 = scalar_lea.vmem %s0, %s2582
    %s2584 = sshrl.u32 %s5, 1
    %s2585 = sor.u32 %s5, %s2584
    %s2586 = sand.u32 %s2585, 85
    %s2587 = sshrl.u32 %s2586, 1
    %s2588 = sor.u32 %s2586, %s2587
    %s2589 = sand.u32 51, %s2588
    %s2590 = sshrl.u32 %s2589, 2
    %s2591 = sor.u32 %s2589, %s2590
    %s2592 = sand.u32 15, %s2591
    %v2593 = vld [vmem:[%s2583] sm:%s2592]
    %v2594 = vunpack.c.l.bf16 %v2593
    %v2595 = vunpack.c.h.bf16 %v2593
    %s2596 = scalar_lea.vmem [#allocation1], 752
    %2597 = vst [vmem:[%s2596] sm:%s5] %v2594
    %s2598 = smul.addr 4, 93
    %s2599 = scalar_lea.vmem %s0, %s2598
    %s2600 = sshrl.u32 %s5, 1
    %s2601 = sor.u32 %s5, %s2600
    %s2602 = sand.u32 %s2601, 85
    %s2603 = sshrl.u32 %s2602, 1
    %s2604 = sor.u32 %s2602, %s2603
    %s2605 = sand.u32 51, %s2604
    %s2606 = sshrl.u32 %s2605, 2
    %s2607 = sor.u32 %s2605, %s2606
    %s2608 = sand.u32 15, %s2607
    %v2609 = vld [vmem:[%s2599] sm:%s2608]
    %v2610 = vunpack.c.l.bf16 %v2609
    %v2611 = vunpack.c.h.bf16 %v2609
    %s2612 = scalar_lea.vmem [#allocation1], 744
    %2613 = vst [vmem:[%s2612] sm:%s5] %v2610
    %s2614 = smul.addr 4, 92
    %s2615 = scalar_lea.vmem %s0, %s2614
    %s2616 = sshrl.u32 %s5, 1
    %s2617 = sor.u32 %s5, %s2616
    %s2618 = sand.u32 %s2617, 85
    %s2619 = sshrl.u32 %s2618, 1
    %s2620 = sor.u32 %s2618, %s2619
    %s2621 = sand.u32 51, %s2620
    %s2622 = sshrl.u32 %s2621, 2
    %s2623 = sor.u32 %s2621, %s2622
    %s2624 = sand.u32 15, %s2623
    %v2625 = vld [vmem:[%s2615] sm:%s2624]
    %v2626 = vunpack.c.l.bf16 %v2625
    %v2627 = vunpack.c.h.bf16 %v2625
    %s2628 = scalar_lea.vmem [#allocation1], 736
    %2629 = vst [vmem:[%s2628] sm:%s5] %v2626
    %s2630 = smul.addr 4, 91
    %s2631 = scalar_lea.vmem %s0, %s2630
    %s2632 = sshrl.u32 %s5, 1
    %s2633 = sor.u32 %s5, %s2632
    %s2634 = sand.u32 %s2633, 85
    %s2635 = sshrl.u32 %s2634, 1
    %s2636 = sor.u32 %s2634, %s2635
    %s2637 = sand.u32 51, %s2636
    %s2638 = sshrl.u32 %s2637, 2
    %s2639 = sor.u32 %s2637, %s2638
    %s2640 = sand.u32 15, %s2639
    %v2641 = vld [vmem:[%s2631] sm:%s2640]
    %v2642 = vunpack.c.l.bf16 %v2641
    %v2643 = vunpack.c.h.bf16 %v2641
    %s2644 = scalar_lea.vmem [#allocation1], 728
    %2645 = vst [vmem:[%s2644] sm:%s5] %v2642
    %s2646 = smul.addr 4, 90
    %s2647 = scalar_lea.vmem %s0, %s2646
    %s2648 = sshrl.u32 %s5, 1
    %s2649 = sor.u32 %s5, %s2648
    %s2650 = sand.u32 %s2649, 85
    %s2651 = sshrl.u32 %s2650, 1
    %s2652 = sor.u32 %s2650, %s2651
    %s2653 = sand.u32 51, %s2652
    %s2654 = sshrl.u32 %s2653, 2
    %s2655 = sor.u32 %s2653, %s2654
    %s2656 = sand.u32 15, %s2655
    %v2657 = vld [vmem:[%s2647] sm:%s2656]
    %v2658 = vunpack.c.l.bf16 %v2657
    %v2659 = vunpack.c.h.bf16 %v2657
    %s2660 = scalar_lea.vmem [#allocation1], 720
    %2661 = vst [vmem:[%s2660] sm:%s5] %v2658
    %s2662 = smul.addr 4, 89
    %s2663 = scalar_lea.vmem %s0, %s2662
    %s2664 = sshrl.u32 %s5, 1
    %s2665 = sor.u32 %s5, %s2664
    %s2666 = sand.u32 %s2665, 85
    %s2667 = sshrl.u32 %s2666, 1
    %s2668 = sor.u32 %s2666, %s2667
    %s2669 = sand.u32 51, %s2668
    %s2670 = sshrl.u32 %s2669, 2
    %s2671 = sor.u32 %s2669, %s2670
    %s2672 = sand.u32 15, %s2671
    %v2673 = vld [vmem:[%s2663] sm:%s2672]
    %v2674 = vunpack.c.l.bf16 %v2673
    %v2675 = vunpack.c.h.bf16 %v2673
    %s2676 = scalar_lea.vmem [#allocation1], 712
    %2677 = vst [vmem:[%s2676] sm:%s5] %v2674
    %s2678 = smul.addr 4, 88
    %s2679 = scalar_lea.vmem %s0, %s2678
    %s2680 = sshrl.u32 %s5, 1
    %s2681 = sor.u32 %s5, %s2680
    %s2682 = sand.u32 %s2681, 85
    %s2683 = sshrl.u32 %s2682, 1
    %s2684 = sor.u32 %s2682, %s2683
    %s2685 = sand.u32 51, %s2684
    %s2686 = sshrl.u32 %s2685, 2
    %s2687 = sor.u32 %s2685, %s2686
    %s2688 = sand.u32 15, %s2687
    %v2689 = vld [vmem:[%s2679] sm:%s2688]
    %v2690 = vunpack.c.l.bf16 %v2689
    %v2691 = vunpack.c.h.bf16 %v2689
    %s2692 = scalar_lea.vmem [#allocation1], 704
    %2693 = vst [vmem:[%s2692] sm:%s5] %v2690
    %s2694 = smul.addr 4, 87
    %s2695 = scalar_lea.vmem %s0, %s2694
    %s2696 = sshrl.u32 %s5, 1
    %s2697 = sor.u32 %s5, %s2696
    %s2698 = sand.u32 %s2697, 85
    %s2699 = sshrl.u32 %s2698, 1
    %s2700 = sor.u32 %s2698, %s2699
    %s2701 = sand.u32 51, %s2700
    %s2702 = sshrl.u32 %s2701, 2
    %s2703 = sor.u32 %s2701, %s2702
    %s2704 = sand.u32 15, %s2703
    %v2705 = vld [vmem:[%s2695] sm:%s2704]
    %v2706 = vunpack.c.l.bf16 %v2705
    %v2707 = vunpack.c.h.bf16 %v2705
    %s2708 = scalar_lea.vmem [#allocation1], 696
    %2709 = vst [vmem:[%s2708] sm:%s5] %v2706
    %s2710 = smul.addr 4, 86
    %s2711 = scalar_lea.vmem %s0, %s2710
    %s2712 = sshrl.u32 %s5, 1
    %s2713 = sor.u32 %s5, %s2712
    %s2714 = sand.u32 %s2713, 85
    %s2715 = sshrl.u32 %s2714, 1
    %s2716 = sor.u32 %s2714, %s2715
    %s2717 = sand.u32 51, %s2716
    %s2718 = sshrl.u32 %s2717, 2
    %s2719 = sor.u32 %s2717, %s2718
    %s2720 = sand.u32 15, %s2719
    %v2721 = vld [vmem:[%s2711] sm:%s2720]
    %v2722 = vunpack.c.l.bf16 %v2721
    %v2723 = vunpack.c.h.bf16 %v2721
    %s2724 = scalar_lea.vmem [#allocation1], 688
    %2725 = vst [vmem:[%s2724] sm:%s5] %v2722
    %s2726 = smul.addr 4, 85
    %s2727 = scalar_lea.vmem %s0, %s2726
    %s2728 = sshrl.u32 %s5, 1
    %s2729 = sor.u32 %s5, %s2728
    %s2730 = sand.u32 %s2729, 85
    %s2731 = sshrl.u32 %s2730, 1
    %s2732 = sor.u32 %s2730, %s2731
    %s2733 = sand.u32 51, %s2732
    %s2734 = sshrl.u32 %s2733, 2
    %s2735 = sor.u32 %s2733, %s2734
    %s2736 = sand.u32 15, %s2735
    %v2737 = vld [vmem:[%s2727] sm:%s2736]
    %v2738 = vunpack.c.l.bf16 %v2737
    %v2739 = vunpack.c.h.bf16 %v2737
    %s2740 = scalar_lea.vmem [#allocation1], 680
    %2741 = vst [vmem:[%s2740] sm:%s5] %v2738
    %s2742 = smul.addr 4, 84
    %s2743 = scalar_lea.vmem %s0, %s2742
    %s2744 = sshrl.u32 %s5, 1
    %s2745 = sor.u32 %s5, %s2744
    %s2746 = sand.u32 %s2745, 85
    %s2747 = sshrl.u32 %s2746, 1
    %s2748 = sor.u32 %s2746, %s2747
    %s2749 = sand.u32 51, %s2748
    %s2750 = sshrl.u32 %s2749, 2
    %s2751 = sor.u32 %s2749, %s2750
    %s2752 = sand.u32 15, %s2751
    %v2753 = vld [vmem:[%s2743] sm:%s2752]
    %v2754 = vunpack.c.l.bf16 %v2753
    %v2755 = vunpack.c.h.bf16 %v2753
    %s2756 = scalar_lea.vmem [#allocation1], 672
    %2757 = vst [vmem:[%s2756] sm:%s5] %v2754
    %s2758 = smul.addr 4, 83
    %s2759 = scalar_lea.vmem %s0, %s2758
    %s2760 = sshrl.u32 %s5, 1
    %s2761 = sor.u32 %s5, %s2760
    %s2762 = sand.u32 %s2761, 85
    %s2763 = sshrl.u32 %s2762, 1
    %s2764 = sor.u32 %s2762, %s2763
    %s2765 = sand.u32 51, %s2764
    %s2766 = sshrl.u32 %s2765, 2
    %s2767 = sor.u32 %s2765, %s2766
    %s2768 = sand.u32 15, %s2767
    %v2769 = vld [vmem:[%s2759] sm:%s2768]
    %v2770 = vunpack.c.l.bf16 %v2769
    %v2771 = vunpack.c.h.bf16 %v2769
    %s2772 = scalar_lea.vmem [#allocation1], 664
    %2773 = vst [vmem:[%s2772] sm:%s5] %v2770
    %s2774 = smul.addr 4, 82
    %s2775 = scalar_lea.vmem %s0, %s2774
    %s2776 = sshrl.u32 %s5, 1
    %s2777 = sor.u32 %s5, %s2776
    %s2778 = sand.u32 %s2777, 85
    %s2779 = sshrl.u32 %s2778, 1
    %s2780 = sor.u32 %s2778, %s2779
    %s2781 = sand.u32 51, %s2780
    %s2782 = sshrl.u32 %s2781, 2
    %s2783 = sor.u32 %s2781, %s2782
    %s2784 = sand.u32 15, %s2783
    %v2785 = vld [vmem:[%s2775] sm:%s2784]
    %v2786 = vunpack.c.l.bf16 %v2785
    %v2787 = vunpack.c.h.bf16 %v2785
    %s2788 = scalar_lea.vmem [#allocation1], 656
    %2789 = vst [vmem:[%s2788] sm:%s5] %v2786
    %s2790 = smul.addr 4, 81
    %s2791 = scalar_lea.vmem %s0, %s2790
    %s2792 = sshrl.u32 %s5, 1
    %s2793 = sor.u32 %s5, %s2792
    %s2794 = sand.u32 %s2793, 85
    %s2795 = sshrl.u32 %s2794, 1
    %s2796 = sor.u32 %s2794, %s2795
    %s2797 = sand.u32 51, %s2796
    %s2798 = sshrl.u32 %s2797, 2
    %s2799 = sor.u32 %s2797, %s2798
    %s2800 = sand.u32 15, %s2799
    %v2801 = vld [vmem:[%s2791] sm:%s2800]
    %v2802 = vunpack.c.l.bf16 %v2801
    %v2803 = vunpack.c.h.bf16 %v2801
    %s2804 = scalar_lea.vmem [#allocation1], 648
    %2805 = vst [vmem:[%s2804] sm:%s5] %v2802
    %s2806 = smul.addr 4, 80
    %s2807 = scalar_lea.vmem %s0, %s2806
    %s2808 = sshrl.u32 %s5, 1
    %s2809 = sor.u32 %s5, %s2808
    %s2810 = sand.u32 %s2809, 85
    %s2811 = sshrl.u32 %s2810, 1
    %s2812 = sor.u32 %s2810, %s2811
    %s2813 = sand.u32 51, %s2812
    %s2814 = sshrl.u32 %s2813, 2
    %s2815 = sor.u32 %s2813, %s2814
    %s2816 = sand.u32 15, %s2815
    %v2817 = vld [vmem:[%s2807] sm:%s2816]
    %v2818 = vunpack.c.l.bf16 %v2817
    %v2819 = vunpack.c.h.bf16 %v2817
    %s2820 = scalar_lea.vmem [#allocation1], 640
    %2821 = vst [vmem:[%s2820] sm:%s5] %v2818
    %s2822 = smul.addr 4, 79
    %s2823 = scalar_lea.vmem %s0, %s2822
    %s2824 = sshrl.u32 %s5, 1
    %s2825 = sor.u32 %s5, %s2824
    %s2826 = sand.u32 %s2825, 85
    %s2827 = sshrl.u32 %s2826, 1
    %s2828 = sor.u32 %s2826, %s2827
    %s2829 = sand.u32 51, %s2828
    %s2830 = sshrl.u32 %s2829, 2
    %s2831 = sor.u32 %s2829, %s2830
    %s2832 = sand.u32 15, %s2831
    %v2833 = vld [vmem:[%s2823] sm:%s2832]
    %v2834 = vunpack.c.l.bf16 %v2833
    %v2835 = vunpack.c.h.bf16 %v2833
    %s2836 = scalar_lea.vmem [#allocation1], 632
    %2837 = vst [vmem:[%s2836] sm:%s5] %v2834
    %s2838 = smul.addr 4, 78
    %s2839 = scalar_lea.vmem %s0, %s2838
    %s2840 = sshrl.u32 %s5, 1
    %s2841 = sor.u32 %s5, %s2840
    %s2842 = sand.u32 %s2841, 85
    %s2843 = sshrl.u32 %s2842, 1
    %s2844 = sor.u32 %s2842, %s2843
    %s2845 = sand.u32 51, %s2844
    %s2846 = sshrl.u32 %s2845, 2
    %s2847 = sor.u32 %s2845, %s2846
    %s2848 = sand.u32 15, %s2847
    %v2849 = vld [vmem:[%s2839] sm:%s2848]
    %v2850 = vunpack.c.l.bf16 %v2849
    %v2851 = vunpack.c.h.bf16 %v2849
    %s2852 = scalar_lea.vmem [#allocation1], 624
    %2853 = vst [vmem:[%s2852] sm:%s5] %v2850
    %s2854 = smul.addr 4, 77
    %s2855 = scalar_lea.vmem %s0, %s2854
    %s2856 = sshrl.u32 %s5, 1
    %s2857 = sor.u32 %s5, %s2856
    %s2858 = sand.u32 %s2857, 85
    %s2859 = sshrl.u32 %s2858, 1
    %s2860 = sor.u32 %s2858, %s2859
    %s2861 = sand.u32 51, %s2860
    %s2862 = sshrl.u32 %s2861, 2
    %s2863 = sor.u32 %s2861, %s2862
    %s2864 = sand.u32 15, %s2863
    %v2865 = vld [vmem:[%s2855] sm:%s2864]
    %v2866 = vunpack.c.l.bf16 %v2865
    %v2867 = vunpack.c.h.bf16 %v2865
    %s2868 = scalar_lea.vmem [#allocation1], 616
    %2869 = vst [vmem:[%s2868] sm:%s5] %v2866
    %s2870 = smul.addr 4, 76
    %s2871 = scalar_lea.vmem %s0, %s2870
    %s2872 = sshrl.u32 %s5, 1
    %s2873 = sor.u32 %s5, %s2872
    %s2874 = sand.u32 %s2873, 85
    %s2875 = sshrl.u32 %s2874, 1
    %s2876 = sor.u32 %s2874, %s2875
    %s2877 = sand.u32 51, %s2876
    %s2878 = sshrl.u32 %s2877, 2
    %s2879 = sor.u32 %s2877, %s2878
    %s2880 = sand.u32 15, %s2879
    %v2881 = vld [vmem:[%s2871] sm:%s2880]
    %v2882 = vunpack.c.l.bf16 %v2881
    %v2883 = vunpack.c.h.bf16 %v2881
    %s2884 = scalar_lea.vmem [#allocation1], 608
    %2885 = vst [vmem:[%s2884] sm:%s5] %v2882
    %s2886 = smul.addr 4, 75
    %s2887 = scalar_lea.vmem %s0, %s2886
    %s2888 = sshrl.u32 %s5, 1
    %s2889 = sor.u32 %s5, %s2888
    %s2890 = sand.u32 %s2889, 85
    %s2891 = sshrl.u32 %s2890, 1
    %s2892 = sor.u32 %s2890, %s2891
    %s2893 = sand.u32 51, %s2892
    %s2894 = sshrl.u32 %s2893, 2
    %s2895 = sor.u32 %s2893, %s2894
    %s2896 = sand.u32 15, %s2895
    %v2897 = vld [vmem:[%s2887] sm:%s2896]
    %v2898 = vunpack.c.l.bf16 %v2897
    %v2899 = vunpack.c.h.bf16 %v2897
    %s2900 = scalar_lea.vmem [#allocation1], 600
    %2901 = vst [vmem:[%s2900] sm:%s5] %v2898
    %s2902 = smul.addr 4, 74
    %s2903 = scalar_lea.vmem %s0, %s2902
    %s2904 = sshrl.u32 %s5, 1
    %s2905 = sor.u32 %s5, %s2904
    %s2906 = sand.u32 %s2905, 85
    %s2907 = sshrl.u32 %s2906, 1
    %s2908 = sor.u32 %s2906, %s2907
    %s2909 = sand.u32 51, %s2908
    %s2910 = sshrl.u32 %s2909, 2
    %s2911 = sor.u32 %s2909, %s2910
    %s2912 = sand.u32 15, %s2911
    %v2913 = vld [vmem:[%s2903] sm:%s2912]
    %v2914 = vunpack.c.l.bf16 %v2913
    %v2915 = vunpack.c.h.bf16 %v2913
    %s2916 = scalar_lea.vmem [#allocation1], 592
    %2917 = vst [vmem:[%s2916] sm:%s5] %v2914
    %s2918 = smul.addr 4, 73
    %s2919 = scalar_lea.vmem %s0, %s2918
    %s2920 = sshrl.u32 %s5, 1
    %s2921 = sor.u32 %s5, %s2920
    %s2922 = sand.u32 %s2921, 85
    %s2923 = sshrl.u32 %s2922, 1
    %s2924 = sor.u32 %s2922, %s2923
    %s2925 = sand.u32 51, %s2924
    %s2926 = sshrl.u32 %s2925, 2
    %s2927 = sor.u32 %s2925, %s2926
    %s2928 = sand.u32 15, %s2927
    %v2929 = vld [vmem:[%s2919] sm:%s2928]
    %v2930 = vunpack.c.l.bf16 %v2929
    %v2931 = vunpack.c.h.bf16 %v2929
    %s2932 = scalar_lea.vmem [#allocation1], 584
    %2933 = vst [vmem:[%s2932] sm:%s5] %v2930
    %s2934 = smul.addr 4, 72
    %s2935 = scalar_lea.vmem %s0, %s2934
    %s2936 = sshrl.u32 %s5, 1
    %s2937 = sor.u32 %s5, %s2936
    %s2938 = sand.u32 %s2937, 85
    %s2939 = sshrl.u32 %s2938, 1
    %s2940 = sor.u32 %s2938, %s2939
    %s2941 = sand.u32 51, %s2940
    %s2942 = sshrl.u32 %s2941, 2
    %s2943 = sor.u32 %s2941, %s2942
    %s2944 = sand.u32 15, %s2943
    %v2945 = vld [vmem:[%s2935] sm:%s2944]
    %v2946 = vunpack.c.l.bf16 %v2945
    %v2947 = vunpack.c.h.bf16 %v2945
    %s2948 = scalar_lea.vmem [#allocation1], 576
    %2949 = vst [vmem:[%s2948] sm:%s5] %v2946
    %s2950 = smul.addr 4, 71
    %s2951 = scalar_lea.vmem %s0, %s2950
    %s2952 = sshrl.u32 %s5, 1
    %s2953 = sor.u32 %s5, %s2952
    %s2954 = sand.u32 %s2953, 85
    %s2955 = sshrl.u32 %s2954, 1
    %s2956 = sor.u32 %s2954, %s2955
    %s2957 = sand.u32 51, %s2956
    %s2958 = sshrl.u32 %s2957, 2
    %s2959 = sor.u32 %s2957, %s2958
    %s2960 = sand.u32 15, %s2959
    %v2961 = vld [vmem:[%s2951] sm:%s2960]
    %v2962 = vunpack.c.l.bf16 %v2961
    %v2963 = vunpack.c.h.bf16 %v2961
    %s2964 = scalar_lea.vmem [#allocation1], 568
    %2965 = vst [vmem:[%s2964] sm:%s5] %v2962
    %s2966 = smul.addr 4, 70
    %s2967 = scalar_lea.vmem %s0, %s2966
    %s2968 = sshrl.u32 %s5, 1
    %s2969 = sor.u32 %s5, %s2968
    %s2970 = sand.u32 %s2969, 85
    %s2971 = sshrl.u32 %s2970, 1
    %s2972 = sor.u32 %s2970, %s2971
    %s2973 = sand.u32 51, %s2972
    %s2974 = sshrl.u32 %s2973, 2
    %s2975 = sor.u32 %s2973, %s2974
    %s2976 = sand.u32 15, %s2975
    %v2977 = vld [vmem:[%s2967] sm:%s2976]
    %v2978 = vunpack.c.l.bf16 %v2977
    %v2979 = vunpack.c.h.bf16 %v2977
    %s2980 = scalar_lea.vmem [#allocation1], 560
    %2981 = vst [vmem:[%s2980] sm:%s5] %v2978
    %s2982 = smul.addr 4, 69
    %s2983 = scalar_lea.vmem %s0, %s2982
    %s2984 = sshrl.u32 %s5, 1
    %s2985 = sor.u32 %s5, %s2984
    %s2986 = sand.u32 %s2985, 85
    %s2987 = sshrl.u32 %s2986, 1
    %s2988 = sor.u32 %s2986, %s2987
    %s2989 = sand.u32 51, %s2988
    %s2990 = sshrl.u32 %s2989, 2
    %s2991 = sor.u32 %s2989, %s2990
    %s2992 = sand.u32 15, %s2991
    %v2993 = vld [vmem:[%s2983] sm:%s2992]
    %v2994 = vunpack.c.l.bf16 %v2993
    %v2995 = vunpack.c.h.bf16 %v2993
    %s2996 = scalar_lea.vmem [#allocation1], 552
    %2997 = vst [vmem:[%s2996] sm:%s5] %v2994
    %s2998 = smul.addr 4, 68
    %s2999 = scalar_lea.vmem %s0, %s2998
    %s3000 = sshrl.u32 %s5, 1
    %s3001 = sor.u32 %s5, %s3000
    %s3002 = sand.u32 %s3001, 85
    %s3003 = sshrl.u32 %s3002, 1
    %s3004 = sor.u32 %s3002, %s3003
    %s3005 = sand.u32 51, %s3004
    %s3006 = sshrl.u32 %s3005, 2
    %s3007 = sor.u32 %s3005, %s3006
    %s3008 = sand.u32 15, %s3007
    %v3009 = vld [vmem:[%s2999] sm:%s3008]
    %v3010 = vunpack.c.l.bf16 %v3009
    %v3011 = vunpack.c.h.bf16 %v3009
    %s3012 = scalar_lea.vmem [#allocation1], 544
    %3013 = vst [vmem:[%s3012] sm:%s5] %v3010
    %s3014 = smul.addr 4, 67
    %s3015 = scalar_lea.vmem %s0, %s3014
    %s3016 = sshrl.u32 %s5, 1
    %s3017 = sor.u32 %s5, %s3016
    %s3018 = sand.u32 %s3017, 85
    %s3019 = sshrl.u32 %s3018, 1
    %s3020 = sor.u32 %s3018, %s3019
    %s3021 = sand.u32 51, %s3020
    %s3022 = sshrl.u32 %s3021, 2
    %s3023 = sor.u32 %s3021, %s3022
    %s3024 = sand.u32 15, %s3023
    %v3025 = vld [vmem:[%s3015] sm:%s3024]
    %v3026 = vunpack.c.l.bf16 %v3025
    %v3027 = vunpack.c.h.bf16 %v3025
    %s3028 = scalar_lea.vmem [#allocation1], 536
    %3029 = vst [vmem:[%s3028] sm:%s5] %v3026
    %s3030 = smul.addr 4, 66
    %s3031 = scalar_lea.vmem %s0, %s3030
    %s3032 = sshrl.u32 %s5, 1
    %s3033 = sor.u32 %s5, %s3032
    %s3034 = sand.u32 %s3033, 85
    %s3035 = sshrl.u32 %s3034, 1
    %s3036 = sor.u32 %s3034, %s3035
    %s3037 = sand.u32 51, %s3036
    %s3038 = sshrl.u32 %s3037, 2
    %s3039 = sor.u32 %s3037, %s3038
    %s3040 = sand.u32 15, %s3039
    %v3041 = vld [vmem:[%s3031] sm:%s3040]
    %v3042 = vunpack.c.l.bf16 %v3041
    %v3043 = vunpack.c.h.bf16 %v3041
    %s3044 = scalar_lea.vmem [#allocation1], 528
    %3045 = vst [vmem:[%s3044] sm:%s5] %v3042
    %s3046 = smul.addr 4, 65
    %s3047 = scalar_lea.vmem %s0, %s3046
    %s3048 = sshrl.u32 %s5, 1
    %s3049 = sor.u32 %s5, %s3048
    %s3050 = sand.u32 %s3049, 85
    %s3051 = sshrl.u32 %s3050, 1
    %s3052 = sor.u32 %s3050, %s3051
    %s3053 = sand.u32 51, %s3052
    %s3054 = sshrl.u32 %s3053, 2
    %s3055 = sor.u32 %s3053, %s3054
    %s3056 = sand.u32 15, %s3055
    %v3057 = vld [vmem:[%s3047] sm:%s3056]
    %v3058 = vunpack.c.l.bf16 %v3057
    %v3059 = vunpack.c.h.bf16 %v3057
    %s3060 = scalar_lea.vmem [#allocation1], 520
    %3061 = vst [vmem:[%s3060] sm:%s5] %v3058
    %s3062 = smul.addr 4, 64
    %s3063 = scalar_lea.vmem %s0, %s3062
    %s3064 = sshrl.u32 %s5, 1
    %s3065 = sor.u32 %s5, %s3064
    %s3066 = sand.u32 %s3065, 85
    %s3067 = sshrl.u32 %s3066, 1
    %s3068 = sor.u32 %s3066, %s3067
    %s3069 = sand.u32 51, %s3068
    %s3070 = sshrl.u32 %s3069, 2
    %s3071 = sor.u32 %s3069, %s3070
    %s3072 = sand.u32 15, %s3071
    %v3073 = vld [vmem:[%s3063] sm:%s3072]
    %v3074 = vunpack.c.l.bf16 %v3073
    %v3075 = vunpack.c.h.bf16 %v3073
    %s3076 = scalar_lea.vmem [#allocation1], 512
    %3077 = vst [vmem:[%s3076] sm:%s5] %v3074
    %s3078 = smul.addr 4, 63
    %s3079 = scalar_lea.vmem %s0, %s3078
    %s3080 = sshrl.u32 %s5, 1
    %s3081 = sor.u32 %s5, %s3080
    %s3082 = sand.u32 %s3081, 85
    %s3083 = sshrl.u32 %s3082, 1
    %s3084 = sor.u32 %s3082, %s3083
    %s3085 = sand.u32 51, %s3084
    %s3086 = sshrl.u32 %s3085, 2
    %s3087 = sor.u32 %s3085, %s3086
    %s3088 = sand.u32 15, %s3087
    %v3089 = vld [vmem:[%s3079] sm:%s3088]
    %v3090 = vunpack.c.l.bf16 %v3089
    %v3091 = vunpack.c.h.bf16 %v3089
    %s3092 = scalar_lea.vmem [#allocation1], 504
    %3093 = vst [vmem:[%s3092] sm:%s5] %v3090
    %s3094 = smul.addr 4, 62
    %s3095 = scalar_lea.vmem %s0, %s3094
    %s3096 = sshrl.u32 %s5, 1
    %s3097 = sor.u32 %s5, %s3096
    %s3098 = sand.u32 %s3097, 85
    %s3099 = sshrl.u32 %s3098, 1
    %s3100 = sor.u32 %s3098, %s3099
    %s3101 = sand.u32 51, %s3100
    %s3102 = sshrl.u32 %s3101, 2
    %s3103 = sor.u32 %s3101, %s3102
    %s3104 = sand.u32 15, %s3103
    %v3105 = vld [vmem:[%s3095] sm:%s3104]
    %v3106 = vunpack.c.l.bf16 %v3105
    %v3107 = vunpack.c.h.bf16 %v3105
    %s3108 = scalar_lea.vmem [#allocation1], 496
    %3109 = vst [vmem:[%s3108] sm:%s5] %v3106
    %s3110 = smul.addr 4, 61
    %s3111 = scalar_lea.vmem %s0, %s3110
    %s3112 = sshrl.u32 %s5, 1
    %s3113 = sor.u32 %s5, %s3112
    %s3114 = sand.u32 %s3113, 85
    %s3115 = sshrl.u32 %s3114, 1
    %s3116 = sor.u32 %s3114, %s3115
    %s3117 = sand.u32 51, %s3116
    %s3118 = sshrl.u32 %s3117, 2
    %s3119 = sor.u32 %s3117, %s3118
    %s3120 = sand.u32 15, %s3119
    %v3121 = vld [vmem:[%s3111] sm:%s3120]
    %v3122 = vunpack.c.l.bf16 %v3121
    %v3123 = vunpack.c.h.bf16 %v3121
    %s3124 = scalar_lea.vmem [#allocation1], 488
    %3125 = vst [vmem:[%s3124] sm:%s5] %v3122
    %s3126 = smul.addr 4, 60
    %s3127 = scalar_lea.vmem %s0, %s3126
    %s3128 = sshrl.u32 %s5, 1
    %s3129 = sor.u32 %s5, %s3128
    %s3130 = sand.u32 %s3129, 85
    %s3131 = sshrl.u32 %s3130, 1
    %s3132 = sor.u32 %s3130, %s3131
    %s3133 = sand.u32 51, %s3132
    %s3134 = sshrl.u32 %s3133, 2
    %s3135 = sor.u32 %s3133, %s3134
    %s3136 = sand.u32 15, %s3135
    %v3137 = vld [vmem:[%s3127] sm:%s3136]
    %v3138 = vunpack.c.l.bf16 %v3137
    %v3139 = vunpack.c.h.bf16 %v3137
    %s3140 = scalar_lea.vmem [#allocation1], 480
    %3141 = vst [vmem:[%s3140] sm:%s5] %v3138
    %s3142 = smul.addr 4, 59
    %s3143 = scalar_lea.vmem %s0, %s3142
    %s3144 = sshrl.u32 %s5, 1
    %s3145 = sor.u32 %s5, %s3144
    %s3146 = sand.u32 %s3145, 85
    %s3147 = sshrl.u32 %s3146, 1
    %s3148 = sor.u32 %s3146, %s3147
    %s3149 = sand.u32 51, %s3148
    %s3150 = sshrl.u32 %s3149, 2
    %s3151 = sor.u32 %s3149, %s3150
    %s3152 = sand.u32 15, %s3151
    %v3153 = vld [vmem:[%s3143] sm:%s3152]
    %v3154 = vunpack.c.l.bf16 %v3153
    %v3155 = vunpack.c.h.bf16 %v3153
    %s3156 = scalar_lea.vmem [#allocation1], 472
    %3157 = vst [vmem:[%s3156] sm:%s5] %v3154
    %s3158 = smul.addr 4, 58
    %s3159 = scalar_lea.vmem %s0, %s3158
    %s3160 = sshrl.u32 %s5, 1
    %s3161 = sor.u32 %s5, %s3160
    %s3162 = sand.u32 %s3161, 85
    %s3163 = sshrl.u32 %s3162, 1
    %s3164 = sor.u32 %s3162, %s3163
    %s3165 = sand.u32 51, %s3164
    %s3166 = sshrl.u32 %s3165, 2
    %s3167 = sor.u32 %s3165, %s3166
    %s3168 = sand.u32 15, %s3167
    %v3169 = vld [vmem:[%s3159] sm:%s3168]
    %v3170 = vunpack.c.l.bf16 %v3169
    %v3171 = vunpack.c.h.bf16 %v3169
    %s3172 = scalar_lea.vmem [#allocation1], 464
    %3173 = vst [vmem:[%s3172] sm:%s5] %v3170
    %s3174 = smul.addr 4, 57
    %s3175 = scalar_lea.vmem %s0, %s3174
    %s3176 = sshrl.u32 %s5, 1
    %s3177 = sor.u32 %s5, %s3176
    %s3178 = sand.u32 %s3177, 85
    %s3179 = sshrl.u32 %s3178, 1
    %s3180 = sor.u32 %s3178, %s3179
    %s3181 = sand.u32 51, %s3180
    %s3182 = sshrl.u32 %s3181, 2
    %s3183 = sor.u32 %s3181, %s3182
    %s3184 = sand.u32 15, %s3183
    %v3185 = vld [vmem:[%s3175] sm:%s3184]
    %v3186 = vunpack.c.l.bf16 %v3185
    %v3187 = vunpack.c.h.bf16 %v3185
    %s3188 = scalar_lea.vmem [#allocation1], 456
    %3189 = vst [vmem:[%s3188] sm:%s5] %v3186
    %s3190 = smul.addr 4, 56
    %s3191 = scalar_lea.vmem %s0, %s3190
    %s3192 = sshrl.u32 %s5, 1
    %s3193 = sor.u32 %s5, %s3192
    %s3194 = sand.u32 %s3193, 85
    %s3195 = sshrl.u32 %s3194, 1
    %s3196 = sor.u32 %s3194, %s3195
    %s3197 = sand.u32 51, %s3196
    %s3198 = sshrl.u32 %s3197, 2
    %s3199 = sor.u32 %s3197, %s3198
    %s3200 = sand.u32 15, %s3199
    %v3201 = vld [vmem:[%s3191] sm:%s3200]
    %v3202 = vunpack.c.l.bf16 %v3201
    %v3203 = vunpack.c.h.bf16 %v3201
    %s3204 = scalar_lea.vmem [#allocation1], 448
    %3205 = vst [vmem:[%s3204] sm:%s5] %v3202
    %s3206 = smul.addr 4, 55
    %s3207 = scalar_lea.vmem %s0, %s3206
    %s3208 = sshrl.u32 %s5, 1
    %s3209 = sor.u32 %s5, %s3208
    %s3210 = sand.u32 %s3209, 85
    %s3211 = sshrl.u32 %s3210, 1
    %s3212 = sor.u32 %s3210, %s3211
    %s3213 = sand.u32 51, %s3212
    %s3214 = sshrl.u32 %s3213, 2
    %s3215 = sor.u32 %s3213, %s3214
    %s3216 = sand.u32 15, %s3215
    %v3217 = vld [vmem:[%s3207] sm:%s3216]
    %v3218 = vunpack.c.l.bf16 %v3217
    %v3219 = vunpack.c.h.bf16 %v3217
    %s3220 = scalar_lea.vmem [#allocation1], 440
    %3221 = vst [vmem:[%s3220] sm:%s5] %v3218
    %s3222 = smul.addr 4, 54
    %s3223 = scalar_lea.vmem %s0, %s3222
    %s3224 = sshrl.u32 %s5, 1
    %s3225 = sor.u32 %s5, %s3224
    %s3226 = sand.u32 %s3225, 85
    %s3227 = sshrl.u32 %s3226, 1
    %s3228 = sor.u32 %s3226, %s3227
    %s3229 = sand.u32 51, %s3228
    %s3230 = sshrl.u32 %s3229, 2
    %s3231 = sor.u32 %s3229, %s3230
    %s3232 = sand.u32 15, %s3231
    %v3233 = vld [vmem:[%s3223] sm:%s3232]
    %v3234 = vunpack.c.l.bf16 %v3233
    %v3235 = vunpack.c.h.bf16 %v3233
    %s3236 = scalar_lea.vmem [#allocation1], 432
    %3237 = vst [vmem:[%s3236] sm:%s5] %v3234
    %s3238 = smul.addr 4, 53
    %s3239 = scalar_lea.vmem %s0, %s3238
    %s3240 = sshrl.u32 %s5, 1
    %s3241 = sor.u32 %s5, %s3240
    %s3242 = sand.u32 %s3241, 85
    %s3243 = sshrl.u32 %s3242, 1
    %s3244 = sor.u32 %s3242, %s3243
    %s3245 = sand.u32 51, %s3244
    %s3246 = sshrl.u32 %s3245, 2
    %s3247 = sor.u32 %s3245, %s3246
    %s3248 = sand.u32 15, %s3247
    %v3249 = vld [vmem:[%s3239] sm:%s3248]
    %v3250 = vunpack.c.l.bf16 %v3249
    %v3251 = vunpack.c.h.bf16 %v3249
    %s3252 = scalar_lea.vmem [#allocation1], 424
    %3253 = vst [vmem:[%s3252] sm:%s5] %v3250
    %s3254 = smul.addr 4, 52
    %s3255 = scalar_lea.vmem %s0, %s3254
    %s3256 = sshrl.u32 %s5, 1
    %s3257 = sor.u32 %s5, %s3256
    %s3258 = sand.u32 %s3257, 85
    %s3259 = sshrl.u32 %s3258, 1
    %s3260 = sor.u32 %s3258, %s3259
    %s3261 = sand.u32 51, %s3260
    %s3262 = sshrl.u32 %s3261, 2
    %s3263 = sor.u32 %s3261, %s3262
    %s3264 = sand.u32 15, %s3263
    %v3265 = vld [vmem:[%s3255] sm:%s3264]
    %v3266 = vunpack.c.l.bf16 %v3265
    %v3267 = vunpack.c.h.bf16 %v3265
    %s3268 = scalar_lea.vmem [#allocation1], 416
    %3269 = vst [vmem:[%s3268] sm:%s5] %v3266
    %s3270 = smul.addr 4, 51
    %s3271 = scalar_lea.vmem %s0, %s3270
    %s3272 = sshrl.u32 %s5, 1
    %s3273 = sor.u32 %s5, %s3272
    %s3274 = sand.u32 %s3273, 85
    %s3275 = sshrl.u32 %s3274, 1
    %s3276 = sor.u32 %s3274, %s3275
    %s3277 = sand.u32 51, %s3276
    %s3278 = sshrl.u32 %s3277, 2
    %s3279 = sor.u32 %s3277, %s3278
    %s3280 = sand.u32 15, %s3279
    %v3281 = vld [vmem:[%s3271] sm:%s3280]
    %v3282 = vunpack.c.l.bf16 %v3281
    %v3283 = vunpack.c.h.bf16 %v3281
    %s3284 = scalar_lea.vmem [#allocation1], 408
    %3285 = vst [vmem:[%s3284] sm:%s5] %v3282
    %s3286 = smul.addr 4, 50
    %s3287 = scalar_lea.vmem %s0, %s3286
    %s3288 = sshrl.u32 %s5, 1
    %s3289 = sor.u32 %s5, %s3288
    %s3290 = sand.u32 %s3289, 85
    %s3291 = sshrl.u32 %s3290, 1
    %s3292 = sor.u32 %s3290, %s3291
    %s3293 = sand.u32 51, %s3292
    %s3294 = sshrl.u32 %s3293, 2
    %s3295 = sor.u32 %s3293, %s3294
    %s3296 = sand.u32 15, %s3295
    %v3297 = vld [vmem:[%s3287] sm:%s3296]
    %v3298 = vunpack.c.l.bf16 %v3297
    %v3299 = vunpack.c.h.bf16 %v3297
    %s3300 = scalar_lea.vmem [#allocation1], 400
    %3301 = vst [vmem:[%s3300] sm:%s5] %v3298
    %s3302 = smul.addr 4, 49
    %s3303 = scalar_lea.vmem %s0, %s3302
    %s3304 = sshrl.u32 %s5, 1
    %s3305 = sor.u32 %s5, %s3304
    %s3306 = sand.u32 %s3305, 85
    %s3307 = sshrl.u32 %s3306, 1
    %s3308 = sor.u32 %s3306, %s3307
    %s3309 = sand.u32 51, %s3308
    %s3310 = sshrl.u32 %s3309, 2
    %s3311 = sor.u32 %s3309, %s3310
    %s3312 = sand.u32 15, %s3311
    %v3313 = vld [vmem:[%s3303] sm:%s3312]
    %v3314 = vunpack.c.l.bf16 %v3313
    %v3315 = vunpack.c.h.bf16 %v3313
    %s3316 = scalar_lea.vmem [#allocation1], 392
    %3317 = vst [vmem:[%s3316] sm:%s5] %v3314
    %s3318 = smul.addr 4, 48
    %s3319 = scalar_lea.vmem %s0, %s3318
    %s3320 = sshrl.u32 %s5, 1
    %s3321 = sor.u32 %s5, %s3320
    %s3322 = sand.u32 %s3321, 85
    %s3323 = sshrl.u32 %s3322, 1
    %s3324 = sor.u32 %s3322, %s3323
    %s3325 = sand.u32 51, %s3324
    %s3326 = sshrl.u32 %s3325, 2
    %s3327 = sor.u32 %s3325, %s3326
    %s3328 = sand.u32 15, %s3327
    %v3329 = vld [vmem:[%s3319] sm:%s3328]
    %v3330 = vunpack.c.l.bf16 %v3329
    %v3331 = vunpack.c.h.bf16 %v3329
    %s3332 = scalar_lea.vmem [#allocation1], 384
    %3333 = vst [vmem:[%s3332] sm:%s5] %v3330
    %s3334 = smul.addr 4, 47
    %s3335 = scalar_lea.vmem %s0, %s3334
    %s3336 = sshrl.u32 %s5, 1
    %s3337 = sor.u32 %s5, %s3336
    %s3338 = sand.u32 %s3337, 85
    %s3339 = sshrl.u32 %s3338, 1
    %s3340 = sor.u32 %s3338, %s3339
    %s3341 = sand.u32 51, %s3340
    %s3342 = sshrl.u32 %s3341, 2
    %s3343 = sor.u32 %s3341, %s3342
    %s3344 = sand.u32 15, %s3343
    %v3345 = vld [vmem:[%s3335] sm:%s3344]
    %v3346 = vunpack.c.l.bf16 %v3345
    %v3347 = vunpack.c.h.bf16 %v3345
    %s3348 = scalar_lea.vmem [#allocation1], 376
    %3349 = vst [vmem:[%s3348] sm:%s5] %v3346
    %s3350 = smul.addr 4, 46
    %s3351 = scalar_lea.vmem %s0, %s3350
    %s3352 = sshrl.u32 %s5, 1
    %s3353 = sor.u32 %s5, %s3352
    %s3354 = sand.u32 %s3353, 85
    %s3355 = sshrl.u32 %s3354, 1
    %s3356 = sor.u32 %s3354, %s3355
    %s3357 = sand.u32 51, %s3356
    %s3358 = sshrl.u32 %s3357, 2
    %s3359 = sor.u32 %s3357, %s3358
    %s3360 = sand.u32 15, %s3359
    %v3361 = vld [vmem:[%s3351] sm:%s3360]
    %v3362 = vunpack.c.l.bf16 %v3361
    %v3363 = vunpack.c.h.bf16 %v3361
    %s3364 = scalar_lea.vmem [#allocation1], 368
    %3365 = vst [vmem:[%s3364] sm:%s5] %v3362
    %s3366 = smul.addr 4, 45
    %s3367 = scalar_lea.vmem %s0, %s3366
    %s3368 = sshrl.u32 %s5, 1
    %s3369 = sor.u32 %s5, %s3368
    %s3370 = sand.u32 %s3369, 85
    %s3371 = sshrl.u32 %s3370, 1
    %s3372 = sor.u32 %s3370, %s3371
    %s3373 = sand.u32 51, %s3372
    %s3374 = sshrl.u32 %s3373, 2
    %s3375 = sor.u32 %s3373, %s3374
    %s3376 = sand.u32 15, %s3375
    %v3377 = vld [vmem:[%s3367] sm:%s3376]
    %v3378 = vunpack.c.l.bf16 %v3377
    %v3379 = vunpack.c.h.bf16 %v3377
    %s3380 = scalar_lea.vmem [#allocation1], 360
    %3381 = vst [vmem:[%s3380] sm:%s5] %v3378
    %s3382 = smul.addr 4, 44
    %s3383 = scalar_lea.vmem %s0, %s3382
    %s3384 = sshrl.u32 %s5, 1
    %s3385 = sor.u32 %s5, %s3384
    %s3386 = sand.u32 %s3385, 85
    %s3387 = sshrl.u32 %s3386, 1
    %s3388 = sor.u32 %s3386, %s3387
    %s3389 = sand.u32 51, %s3388
    %s3390 = sshrl.u32 %s3389, 2
    %s3391 = sor.u32 %s3389, %s3390
    %s3392 = sand.u32 15, %s3391
    %v3393 = vld [vmem:[%s3383] sm:%s3392]
    %v3394 = vunpack.c.l.bf16 %v3393
    %v3395 = vunpack.c.h.bf16 %v3393
    %s3396 = scalar_lea.vmem [#allocation1], 352
    %3397 = vst [vmem:[%s3396] sm:%s5] %v3394
    %s3398 = smul.addr 4, 43
    %s3399 = scalar_lea.vmem %s0, %s3398
    %s3400 = sshrl.u32 %s5, 1
    %s3401 = sor.u32 %s5, %s3400
    %s3402 = sand.u32 %s3401, 85
    %s3403 = sshrl.u32 %s3402, 1
    %s3404 = sor.u32 %s3402, %s3403
    %s3405 = sand.u32 51, %s3404
    %s3406 = sshrl.u32 %s3405, 2
    %s3407 = sor.u32 %s3405, %s3406
    %s3408 = sand.u32 15, %s3407
    %v3409 = vld [vmem:[%s3399] sm:%s3408]
    %v3410 = vunpack.c.l.bf16 %v3409
    %v3411 = vunpack.c.h.bf16 %v3409
    %s3412 = scalar_lea.vmem [#allocation1], 344
    %3413 = vst [vmem:[%s3412] sm:%s5] %v3410
    %s3414 = smul.addr 4, 42
    %s3415 = scalar_lea.vmem %s0, %s3414
    %s3416 = sshrl.u32 %s5, 1
    %s3417 = sor.u32 %s5, %s3416
    %s3418 = sand.u32 %s3417, 85
    %s3419 = sshrl.u32 %s3418, 1
    %s3420 = sor.u32 %s3418, %s3419
    %s3421 = sand.u32 51, %s3420
    %s3422 = sshrl.u32 %s3421, 2
    %s3423 = sor.u32 %s3421, %s3422
    %s3424 = sand.u32 15, %s3423
    %v3425 = vld [vmem:[%s3415] sm:%s3424]
    %v3426 = vunpack.c.l.bf16 %v3425
    %v3427 = vunpack.c.h.bf16 %v3425
    %s3428 = scalar_lea.vmem [#allocation1], 336
    %3429 = vst [vmem:[%s3428] sm:%s5] %v3426
    %s3430 = smul.addr 4, 41
    %s3431 = scalar_lea.vmem %s0, %s3430
    %s3432 = sshrl.u32 %s5, 1
    %s3433 = sor.u32 %s5, %s3432
    %s3434 = sand.u32 %s3433, 85
    %s3435 = sshrl.u32 %s3434, 1
    %s3436 = sor.u32 %s3434, %s3435
    %s3437 = sand.u32 51, %s3436
    %s3438 = sshrl.u32 %s3437, 2
    %s3439 = sor.u32 %s3437, %s3438
    %s3440 = sand.u32 15, %s3439
    %v3441 = vld [vmem:[%s3431] sm:%s3440]
    %v3442 = vunpack.c.l.bf16 %v3441
    %v3443 = vunpack.c.h.bf16 %v3441
    %s3444 = scalar_lea.vmem [#allocation1], 328
    %3445 = vst [vmem:[%s3444] sm:%s5] %v3442
    %s3446 = smul.addr 4, 40
    %s3447 = scalar_lea.vmem %s0, %s3446
    %s3448 = sshrl.u32 %s5, 1
    %s3449 = sor.u32 %s5, %s3448
    %s3450 = sand.u32 %s3449, 85
    %s3451 = sshrl.u32 %s3450, 1
    %s3452 = sor.u32 %s3450, %s3451
    %s3453 = sand.u32 51, %s3452
    %s3454 = sshrl.u32 %s3453, 2
    %s3455 = sor.u32 %s3453, %s3454
    %s3456 = sand.u32 15, %s3455
    %v3457 = vld [vmem:[%s3447] sm:%s3456]
    %v3458 = vunpack.c.l.bf16 %v3457
    %v3459 = vunpack.c.h.bf16 %v3457
    %s3460 = scalar_lea.vmem [#allocation1], 320
    %3461 = vst [vmem:[%s3460] sm:%s5] %v3458
    %s3462 = smul.addr 4, 39
    %s3463 = scalar_lea.vmem %s0, %s3462
    %s3464 = sshrl.u32 %s5, 1
    %s3465 = sor.u32 %s5, %s3464
    %s3466 = sand.u32 %s3465, 85
    %s3467 = sshrl.u32 %s3466, 1
    %s3468 = sor.u32 %s3466, %s3467
    %s3469 = sand.u32 51, %s3468
    %s3470 = sshrl.u32 %s3469, 2
    %s3471 = sor.u32 %s3469, %s3470
    %s3472 = sand.u32 15, %s3471
    %v3473 = vld [vmem:[%s3463] sm:%s3472]
    %v3474 = vunpack.c.l.bf16 %v3473
    %v3475 = vunpack.c.h.bf16 %v3473
    %s3476 = scalar_lea.vmem [#allocation1], 312
    %3477 = vst [vmem:[%s3476] sm:%s5] %v3474
    %s3478 = smul.addr 4, 38
    %s3479 = scalar_lea.vmem %s0, %s3478
    %s3480 = sshrl.u32 %s5, 1
    %s3481 = sor.u32 %s5, %s3480
    %s3482 = sand.u32 %s3481, 85
    %s3483 = sshrl.u32 %s3482, 1
    %s3484 = sor.u32 %s3482, %s3483
    %s3485 = sand.u32 51, %s3484
    %s3486 = sshrl.u32 %s3485, 2
    %s3487 = sor.u32 %s3485, %s3486
    %s3488 = sand.u32 15, %s3487
    %v3489 = vld [vmem:[%s3479] sm:%s3488]
    %v3490 = vunpack.c.l.bf16 %v3489
    %v3491 = vunpack.c.h.bf16 %v3489
    %s3492 = scalar_lea.vmem [#allocation1], 304
    %3493 = vst [vmem:[%s3492] sm:%s5] %v3490
    %s3494 = smul.addr 4, 37
    %s3495 = scalar_lea.vmem %s0, %s3494
    %s3496 = sshrl.u32 %s5, 1
    %s3497 = sor.u32 %s5, %s3496
    %s3498 = sand.u32 %s3497, 85
    %s3499 = sshrl.u32 %s3498, 1
    %s3500 = sor.u32 %s3498, %s3499
    %s3501 = sand.u32 51, %s3500
    %s3502 = sshrl.u32 %s3501, 2
    %s3503 = sor.u32 %s3501, %s3502
    %s3504 = sand.u32 15, %s3503
    %v3505 = vld [vmem:[%s3495] sm:%s3504]
    %v3506 = vunpack.c.l.bf16 %v3505
    %v3507 = vunpack.c.h.bf16 %v3505
    %s3508 = scalar_lea.vmem [#allocation1], 296
    %3509 = vst [vmem:[%s3508] sm:%s5] %v3506
    %s3510 = smul.addr 4, 36
    %s3511 = scalar_lea.vmem %s0, %s3510
    %s3512 = sshrl.u32 %s5, 1
    %s3513 = sor.u32 %s5, %s3512
    %s3514 = sand.u32 %s3513, 85
    %s3515 = sshrl.u32 %s3514, 1
    %s3516 = sor.u32 %s3514, %s3515
    %s3517 = sand.u32 51, %s3516
    %s3518 = sshrl.u32 %s3517, 2
    %s3519 = sor.u32 %s3517, %s3518
    %s3520 = sand.u32 15, %s3519
    %v3521 = vld [vmem:[%s3511] sm:%s3520]
    %v3522 = vunpack.c.l.bf16 %v3521
    %v3523 = vunpack.c.h.bf16 %v3521
    %s3524 = scalar_lea.vmem [#allocation1], 288
    %3525 = vst [vmem:[%s3524] sm:%s5] %v3522
    %s3526 = smul.addr 4, 35
    %s3527 = scalar_lea.vmem %s0, %s3526
    %s3528 = sshrl.u32 %s5, 1
    %s3529 = sor.u32 %s5, %s3528
    %s3530 = sand.u32 %s3529, 85
    %s3531 = sshrl.u32 %s3530, 1
    %s3532 = sor.u32 %s3530, %s3531
    %s3533 = sand.u32 51, %s3532
    %s3534 = sshrl.u32 %s3533, 2
    %s3535 = sor.u32 %s3533, %s3534
    %s3536 = sand.u32 15, %s3535
    %v3537 = vld [vmem:[%s3527] sm:%s3536]
    %v3538 = vunpack.c.l.bf16 %v3537
    %v3539 = vunpack.c.h.bf16 %v3537
    %s3540 = scalar_lea.vmem [#allocation1], 280
    %3541 = vst [vmem:[%s3540] sm:%s5] %v3538
    %s3542 = smul.addr 4, 34
    %s3543 = scalar_lea.vmem %s0, %s3542
    %s3544 = sshrl.u32 %s5, 1
    %s3545 = sor.u32 %s5, %s3544
    %s3546 = sand.u32 %s3545, 85
    %s3547 = sshrl.u32 %s3546, 1
    %s3548 = sor.u32 %s3546, %s3547
    %s3549 = sand.u32 51, %s3548
    %s3550 = sshrl.u32 %s3549, 2
    %s3551 = sor.u32 %s3549, %s3550
    %s3552 = sand.u32 15, %s3551
    %v3553 = vld [vmem:[%s3543] sm:%s3552]
    %v3554 = vunpack.c.l.bf16 %v3553
    %v3555 = vunpack.c.h.bf16 %v3553
    %s3556 = scalar_lea.vmem [#allocation1], 272
    %3557 = vst [vmem:[%s3556] sm:%s5] %v3554
    %s3558 = smul.addr 4, 33
    %s3559 = scalar_lea.vmem %s0, %s3558
    %s3560 = sshrl.u32 %s5, 1
    %s3561 = sor.u32 %s5, %s3560
    %s3562 = sand.u32 %s3561, 85
    %s3563 = sshrl.u32 %s3562, 1
    %s3564 = sor.u32 %s3562, %s3563
    %s3565 = sand.u32 51, %s3564
    %s3566 = sshrl.u32 %s3565, 2
    %s3567 = sor.u32 %s3565, %s3566
    %s3568 = sand.u32 15, %s3567
    %v3569 = vld [vmem:[%s3559] sm:%s3568]
    %v3570 = vunpack.c.l.bf16 %v3569
    %v3571 = vunpack.c.h.bf16 %v3569
    %s3572 = scalar_lea.vmem [#allocation1], 264
    %3573 = vst [vmem:[%s3572] sm:%s5] %v3570
    %s3574 = smul.addr 4, 32
    %s3575 = scalar_lea.vmem %s0, %s3574
    %s3576 = sshrl.u32 %s5, 1
    %s3577 = sor.u32 %s5, %s3576
    %s3578 = sand.u32 %s3577, 85
    %s3579 = sshrl.u32 %s3578, 1
    %s3580 = sor.u32 %s3578, %s3579
    %s3581 = sand.u32 51, %s3580
    %s3582 = sshrl.u32 %s3581, 2
    %s3583 = sor.u32 %s3581, %s3582
    %s3584 = sand.u32 15, %s3583
    %v3585 = vld [vmem:[%s3575] sm:%s3584]
    %v3586 = vunpack.c.l.bf16 %v3585
    %v3587 = vunpack.c.h.bf16 %v3585
    %s3588 = scalar_lea.vmem [#allocation1], 256
    %3589 = vst [vmem:[%s3588] sm:%s5] %v3586
    %s3590 = smul.addr 4, 31
    %s3591 = scalar_lea.vmem %s0, %s3590
    %s3592 = sshrl.u32 %s5, 1
    %s3593 = sor.u32 %s5, %s3592
    %s3594 = sand.u32 %s3593, 85
    %s3595 = sshrl.u32 %s3594, 1
    %s3596 = sor.u32 %s3594, %s3595
    %s3597 = sand.u32 51, %s3596
    %s3598 = sshrl.u32 %s3597, 2
    %s3599 = sor.u32 %s3597, %s3598
    %s3600 = sand.u32 15, %s3599
    %v3601 = vld [vmem:[%s3591] sm:%s3600]
    %v3602 = vunpack.c.l.bf16 %v3601
    %v3603 = vunpack.c.h.bf16 %v3601
    %s3604 = scalar_lea.vmem [#allocation1], 248
    %3605 = vst [vmem:[%s3604] sm:%s5] %v3602
    %s3606 = smul.addr 4, 30
    %s3607 = scalar_lea.vmem %s0, %s3606
    %s3608 = sshrl.u32 %s5, 1
    %s3609 = sor.u32 %s5, %s3608
    %s3610 = sand.u32 %s3609, 85
    %s3611 = sshrl.u32 %s3610, 1
    %s3612 = sor.u32 %s3610, %s3611
    %s3613 = sand.u32 51, %s3612
    %s3614 = sshrl.u32 %s3613, 2
    %s3615 = sor.u32 %s3613, %s3614
    %s3616 = sand.u32 15, %s3615
    %v3617 = vld [vmem:[%s3607] sm:%s3616]
    %v3618 = vunpack.c.l.bf16 %v3617
    %v3619 = vunpack.c.h.bf16 %v3617
    %s3620 = scalar_lea.vmem [#allocation1], 240
    %3621 = vst [vmem:[%s3620] sm:%s5] %v3618
    %s3622 = smul.addr 4, 29
    %s3623 = scalar_lea.vmem %s0, %s3622
    %s3624 = sshrl.u32 %s5, 1
    %s3625 = sor.u32 %s5, %s3624
    %s3626 = sand.u32 %s3625, 85
    %s3627 = sshrl.u32 %s3626, 1
    %s3628 = sor.u32 %s3626, %s3627
    %s3629 = sand.u32 51, %s3628
    %s3630 = sshrl.u32 %s3629, 2
    %s3631 = sor.u32 %s3629, %s3630
    %s3632 = sand.u32 15, %s3631
    %v3633 = vld [vmem:[%s3623] sm:%s3632]
    %v3634 = vunpack.c.l.bf16 %v3633
    %v3635 = vunpack.c.h.bf16 %v3633
    %s3636 = scalar_lea.vmem [#allocation1], 232
    %3637 = vst [vmem:[%s3636] sm:%s5] %v3634
    %s3638 = smul.addr 4, 28
    %s3639 = scalar_lea.vmem %s0, %s3638
    %s3640 = sshrl.u32 %s5, 1
    %s3641 = sor.u32 %s5, %s3640
    %s3642 = sand.u32 %s3641, 85
    %s3643 = sshrl.u32 %s3642, 1
    %s3644 = sor.u32 %s3642, %s3643
    %s3645 = sand.u32 51, %s3644
    %s3646 = sshrl.u32 %s3645, 2
    %s3647 = sor.u32 %s3645, %s3646
    %s3648 = sand.u32 15, %s3647
    %v3649 = vld [vmem:[%s3639] sm:%s3648]
    %v3650 = vunpack.c.l.bf16 %v3649
    %v3651 = vunpack.c.h.bf16 %v3649
    %s3652 = scalar_lea.vmem [#allocation1], 224
    %3653 = vst [vmem:[%s3652] sm:%s5] %v3650
    %s3654 = smul.addr 4, 27
    %s3655 = scalar_lea.vmem %s0, %s3654
    %s3656 = sshrl.u32 %s5, 1
    %s3657 = sor.u32 %s5, %s3656
    %s3658 = sand.u32 %s3657, 85
    %s3659 = sshrl.u32 %s3658, 1
    %s3660 = sor.u32 %s3658, %s3659
    %s3661 = sand.u32 51, %s3660
    %s3662 = sshrl.u32 %s3661, 2
    %s3663 = sor.u32 %s3661, %s3662
    %s3664 = sand.u32 15, %s3663
    %v3665 = vld [vmem:[%s3655] sm:%s3664]
    %v3666 = vunpack.c.l.bf16 %v3665
    %v3667 = vunpack.c.h.bf16 %v3665
    %s3668 = scalar_lea.vmem [#allocation1], 216
    %3669 = vst [vmem:[%s3668] sm:%s5] %v3666
    %s3670 = smul.addr 4, 26
    %s3671 = scalar_lea.vmem %s0, %s3670
    %s3672 = sshrl.u32 %s5, 1
    %s3673 = sor.u32 %s5, %s3672
    %s3674 = sand.u32 %s3673, 85
    %s3675 = sshrl.u32 %s3674, 1
    %s3676 = sor.u32 %s3674, %s3675
    %s3677 = sand.u32 51, %s3676
    %s3678 = sshrl.u32 %s3677, 2
    %s3679 = sor.u32 %s3677, %s3678
    %s3680 = sand.u32 15, %s3679
    %v3681 = vld [vmem:[%s3671] sm:%s3680]
    %v3682 = vunpack.c.l.bf16 %v3681
    %v3683 = vunpack.c.h.bf16 %v3681
    %s3684 = scalar_lea.vmem [#allocation1], 208
    %3685 = vst [vmem:[%s3684] sm:%s5] %v3682
    %s3686 = smul.addr 4, 25
    %s3687 = scalar_lea.vmem %s0, %s3686
    %s3688 = sshrl.u32 %s5, 1
    %s3689 = sor.u32 %s5, %s3688
    %s3690 = sand.u32 %s3689, 85
    %s3691 = sshrl.u32 %s3690, 1
    %s3692 = sor.u32 %s3690, %s3691
    %s3693 = sand.u32 51, %s3692
    %s3694 = sshrl.u32 %s3693, 2
    %s3695 = sor.u32 %s3693, %s3694
    %s3696 = sand.u32 15, %s3695
    %v3697 = vld [vmem:[%s3687] sm:%s3696]
    %v3698 = vunpack.c.l.bf16 %v3697
    %v3699 = vunpack.c.h.bf16 %v3697
    %s3700 = scalar_lea.vmem [#allocation1], 200
    %3701 = vst [vmem:[%s3700] sm:%s5] %v3698
    %s3702 = smul.addr 4, 24
    %s3703 = scalar_lea.vmem %s0, %s3702
    %s3704 = sshrl.u32 %s5, 1
    %s3705 = sor.u32 %s5, %s3704
    %s3706 = sand.u32 %s3705, 85
    %s3707 = sshrl.u32 %s3706, 1
    %s3708 = sor.u32 %s3706, %s3707
    %s3709 = sand.u32 51, %s3708
    %s3710 = sshrl.u32 %s3709, 2
    %s3711 = sor.u32 %s3709, %s3710
    %s3712 = sand.u32 15, %s3711
    %v3713 = vld [vmem:[%s3703] sm:%s3712]
    %v3714 = vunpack.c.l.bf16 %v3713
    %v3715 = vunpack.c.h.bf16 %v3713
    %s3716 = scalar_lea.vmem [#allocation1], 192
    %3717 = vst [vmem:[%s3716] sm:%s5] %v3714
    %s3718 = smul.addr 4, 23
    %s3719 = scalar_lea.vmem %s0, %s3718
    %s3720 = sshrl.u32 %s5, 1
    %s3721 = sor.u32 %s5, %s3720
    %s3722 = sand.u32 %s3721, 85
    %s3723 = sshrl.u32 %s3722, 1
    %s3724 = sor.u32 %s3722, %s3723
    %s3725 = sand.u32 51, %s3724
    %s3726 = sshrl.u32 %s3725, 2
    %s3727 = sor.u32 %s3725, %s3726
    %s3728 = sand.u32 15, %s3727
    %v3729 = vld [vmem:[%s3719] sm:%s3728]
    %v3730 = vunpack.c.l.bf16 %v3729
    %v3731 = vunpack.c.h.bf16 %v3729
    %s3732 = scalar_lea.vmem [#allocation1], 184
    %3733 = vst [vmem:[%s3732] sm:%s5] %v3730
    %s3734 = smul.addr 4, 22
    %s3735 = scalar_lea.vmem %s0, %s3734
    %s3736 = sshrl.u32 %s5, 1
    %s3737 = sor.u32 %s5, %s3736
    %s3738 = sand.u32 %s3737, 85
    %s3739 = sshrl.u32 %s3738, 1
    %s3740 = sor.u32 %s3738, %s3739
    %s3741 = sand.u32 51, %s3740
    %s3742 = sshrl.u32 %s3741, 2
    %s3743 = sor.u32 %s3741, %s3742
    %s3744 = sand.u32 15, %s3743
    %v3745 = vld [vmem:[%s3735] sm:%s3744]
    %v3746 = vunpack.c.l.bf16 %v3745
    %v3747 = vunpack.c.h.bf16 %v3745
    %s3748 = scalar_lea.vmem [#allocation1], 176
    %3749 = vst [vmem:[%s3748] sm:%s5] %v3746
    %s3750 = smul.addr 4, 21
    %s3751 = scalar_lea.vmem %s0, %s3750
    %s3752 = sshrl.u32 %s5, 1
    %s3753 = sor.u32 %s5, %s3752
    %s3754 = sand.u32 %s3753, 85
    %s3755 = sshrl.u32 %s3754, 1
    %s3756 = sor.u32 %s3754, %s3755
    %s3757 = sand.u32 51, %s3756
    %s3758 = sshrl.u32 %s3757, 2
    %s3759 = sor.u32 %s3757, %s3758
    %s3760 = sand.u32 15, %s3759
    %v3761 = vld [vmem:[%s3751] sm:%s3760]
    %v3762 = vunpack.c.l.bf16 %v3761
    %v3763 = vunpack.c.h.bf16 %v3761
    %s3764 = scalar_lea.vmem [#allocation1], 168
    %3765 = vst [vmem:[%s3764] sm:%s5] %v3762
    %s3766 = smul.addr 4, 20
    %s3767 = scalar_lea.vmem %s0, %s3766
    %s3768 = sshrl.u32 %s5, 1
    %s3769 = sor.u32 %s5, %s3768
    %s3770 = sand.u32 %s3769, 85
    %s3771 = sshrl.u32 %s3770, 1
    %s3772 = sor.u32 %s3770, %s3771
    %s3773 = sand.u32 51, %s3772
    %s3774 = sshrl.u32 %s3773, 2
    %s3775 = sor.u32 %s3773, %s3774
    %s3776 = sand.u32 15, %s3775
    %v3777 = vld [vmem:[%s3767] sm:%s3776]
    %v3778 = vunpack.c.l.bf16 %v3777
    %v3779 = vunpack.c.h.bf16 %v3777
    %s3780 = scalar_lea.vmem [#allocation1], 160
    %3781 = vst [vmem:[%s3780] sm:%s5] %v3778
    %s3782 = smul.addr 4, 19
    %s3783 = scalar_lea.vmem %s0, %s3782
    %s3784 = sshrl.u32 %s5, 1
    %s3785 = sor.u32 %s5, %s3784
    %s3786 = sand.u32 %s3785, 85
    %s3787 = sshrl.u32 %s3786, 1
    %s3788 = sor.u32 %s3786, %s3787
    %s3789 = sand.u32 51, %s3788
    %s3790 = sshrl.u32 %s3789, 2
    %s3791 = sor.u32 %s3789, %s3790
    %s3792 = sand.u32 15, %s3791
    %v3793 = vld [vmem:[%s3783] sm:%s3792]
    %v3794 = vunpack.c.l.bf16 %v3793
    %v3795 = vunpack.c.h.bf16 %v3793
    %s3796 = scalar_lea.vmem [#allocation1], 152
    %3797 = vst [vmem:[%s3796] sm:%s5] %v3794
    %s3798 = smul.addr 4, 18
    %s3799 = scalar_lea.vmem %s0, %s3798
    %s3800 = sshrl.u32 %s5, 1
    %s3801 = sor.u32 %s5, %s3800
    %s3802 = sand.u32 %s3801, 85
    %s3803 = sshrl.u32 %s3802, 1
    %s3804 = sor.u32 %s3802, %s3803
    %s3805 = sand.u32 51, %s3804
    %s3806 = sshrl.u32 %s3805, 2
    %s3807 = sor.u32 %s3805, %s3806
    %s3808 = sand.u32 15, %s3807
    %v3809 = vld [vmem:[%s3799] sm:%s3808]
    %v3810 = vunpack.c.l.bf16 %v3809
    %v3811 = vunpack.c.h.bf16 %v3809
    %s3812 = scalar_lea.vmem [#allocation1], 144
    %3813 = vst [vmem:[%s3812] sm:%s5] %v3810
    %s3814 = smul.addr 4, 17
    %s3815 = scalar_lea.vmem %s0, %s3814
    %s3816 = sshrl.u32 %s5, 1
    %s3817 = sor.u32 %s5, %s3816
    %s3818 = sand.u32 %s3817, 85
    %s3819 = sshrl.u32 %s3818, 1
    %s3820 = sor.u32 %s3818, %s3819
    %s3821 = sand.u32 51, %s3820
    %s3822 = sshrl.u32 %s3821, 2
    %s3823 = sor.u32 %s3821, %s3822
    %s3824 = sand.u32 15, %s3823
    %v3825 = vld [vmem:[%s3815] sm:%s3824]
    %v3826 = vunpack.c.l.bf16 %v3825
    %v3827 = vunpack.c.h.bf16 %v3825
    %s3828 = scalar_lea.vmem [#allocation1], 136
    %3829 = vst [vmem:[%s3828] sm:%s5] %v3826
    %s3830 = smul.addr 4, 16
    %s3831 = scalar_lea.vmem %s0, %s3830
    %s3832 = sshrl.u32 %s5, 1
    %s3833 = sor.u32 %s5, %s3832
    %s3834 = sand.u32 %s3833, 85
    %s3835 = sshrl.u32 %s3834, 1
    %s3836 = sor.u32 %s3834, %s3835
    %s3837 = sand.u32 51, %s3836
    %s3838 = sshrl.u32 %s3837, 2
    %s3839 = sor.u32 %s3837, %s3838
    %s3840 = sand.u32 15, %s3839
    %v3841 = vld [vmem:[%s3831] sm:%s3840]
    %v3842 = vunpack.c.l.bf16 %v3841
    %v3843 = vunpack.c.h.bf16 %v3841
    %s3844 = scalar_lea.vmem [#allocation1], 128
    %3845 = vst [vmem:[%s3844] sm:%s5] %v3842
    %s3846 = smul.addr 4, 15
    %s3847 = scalar_lea.vmem %s0, %s3846
    %s3848 = sshrl.u32 %s5, 1
    %s3849 = sor.u32 %s5, %s3848
    %s3850 = sand.u32 %s3849, 85
    %s3851 = sshrl.u32 %s3850, 1
    %s3852 = sor.u32 %s3850, %s3851
    %s3853 = sand.u32 51, %s3852
    %s3854 = sshrl.u32 %s3853, 2
    %s3855 = sor.u32 %s3853, %s3854
    %s3856 = sand.u32 15, %s3855
    %v3857 = vld [vmem:[%s3847] sm:%s3856]
    %v3858 = vunpack.c.l.bf16 %v3857
    %v3859 = vunpack.c.h.bf16 %v3857
    %s3860 = scalar_lea.vmem [#allocation1], 120
    %3861 = vst [vmem:[%s3860] sm:%s5] %v3858
    %s3862 = smul.addr 4, 14
    %s3863 = scalar_lea.vmem %s0, %s3862
    %s3864 = sshrl.u32 %s5, 1
    %s3865 = sor.u32 %s5, %s3864
    %s3866 = sand.u32 %s3865, 85
    %s3867 = sshrl.u32 %s3866, 1
    %s3868 = sor.u32 %s3866, %s3867
    %s3869 = sand.u32 51, %s3868
    %s3870 = sshrl.u32 %s3869, 2
    %s3871 = sor.u32 %s3869, %s3870
    %s3872 = sand.u32 15, %s3871
    %v3873 = vld [vmem:[%s3863] sm:%s3872]
    %v3874 = vunpack.c.l.bf16 %v3873
    %v3875 = vunpack.c.h.bf16 %v3873
    %s3876 = scalar_lea.vmem [#allocation1], 112
    %3877 = vst [vmem:[%s3876] sm:%s5] %v3874
    %s3878 = smul.addr 4, 13
    %s3879 = scalar_lea.vmem %s0, %s3878
    %s3880 = sshrl.u32 %s5, 1
    %s3881 = sor.u32 %s5, %s3880
    %s3882 = sand.u32 %s3881, 85
    %s3883 = sshrl.u32 %s3882, 1
    %s3884 = sor.u32 %s3882, %s3883
    %s3885 = sand.u32 51, %s3884
    %s3886 = sshrl.u32 %s3885, 2
    %s3887 = sor.u32 %s3885, %s3886
    %s3888 = sand.u32 15, %s3887
    %v3889 = vld [vmem:[%s3879] sm:%s3888]
    %v3890 = vunpack.c.l.bf16 %v3889
    %v3891 = vunpack.c.h.bf16 %v3889
    %s3892 = scalar_lea.vmem [#allocation1], 104
    %3893 = vst [vmem:[%s3892] sm:%s5] %v3890
    %s3894 = smul.addr 4, 12
    %s3895 = scalar_lea.vmem %s0, %s3894
    %s3896 = sshrl.u32 %s5, 1
    %s3897 = sor.u32 %s5, %s3896
    %s3898 = sand.u32 %s3897, 85
    %s3899 = sshrl.u32 %s3898, 1
    %s3900 = sor.u32 %s3898, %s3899
    %s3901 = sand.u32 51, %s3900
    %s3902 = sshrl.u32 %s3901, 2
    %s3903 = sor.u32 %s3901, %s3902
    %s3904 = sand.u32 15, %s3903
    %v3905 = vld [vmem:[%s3895] sm:%s3904]
    %v3906 = vunpack.c.l.bf16 %v3905
    %v3907 = vunpack.c.h.bf16 %v3905
    %s3908 = scalar_lea.vmem [#allocation1], 96
    %3909 = vst [vmem:[%s3908] sm:%s5] %v3906
    %s3910 = smul.addr 4, 11
    %s3911 = scalar_lea.vmem %s0, %s3910
    %s3912 = sshrl.u32 %s5, 1
    %s3913 = sor.u32 %s5, %s3912
    %s3914 = sand.u32 %s3913, 85
    %s3915 = sshrl.u32 %s3914, 1
    %s3916 = sor.u32 %s3914, %s3915
    %s3917 = sand.u32 51, %s3916
    %s3918 = sshrl.u32 %s3917, 2
    %s3919 = sor.u32 %s3917, %s3918
    %s3920 = sand.u32 15, %s3919
    %v3921 = vld [vmem:[%s3911] sm:%s3920]
    %v3922 = vunpack.c.l.bf16 %v3921
    %v3923 = vunpack.c.h.bf16 %v3921
    %s3924 = scalar_lea.vmem [#allocation1], 88
    %3925 = vst [vmem:[%s3924] sm:%s5] %v3922
    %s3926 = smul.addr 4, 10
    %s3927 = scalar_lea.vmem %s0, %s3926
    %s3928 = sshrl.u32 %s5, 1
    %s3929 = sor.u32 %s5, %s3928
    %s3930 = sand.u32 %s3929, 85
    %s3931 = sshrl.u32 %s3930, 1
    %s3932 = sor.u32 %s3930, %s3931
    %s3933 = sand.u32 51, %s3932
    %s3934 = sshrl.u32 %s3933, 2
    %s3935 = sor.u32 %s3933, %s3934
    %s3936 = sand.u32 15, %s3935
    %v3937 = vld [vmem:[%s3927] sm:%s3936]
    %v3938 = vunpack.c.l.bf16 %v3937
    %v3939 = vunpack.c.h.bf16 %v3937
    %s3940 = scalar_lea.vmem [#allocation1], 80
    %3941 = vst [vmem:[%s3940] sm:%s5] %v3938
    %s3942 = smul.addr 4, 9
    %s3943 = scalar_lea.vmem %s0, %s3942
    %s3944 = sshrl.u32 %s5, 1
    %s3945 = sor.u32 %s5, %s3944
    %s3946 = sand.u32 %s3945, 85
    %s3947 = sshrl.u32 %s3946, 1
    %s3948 = sor.u32 %s3946, %s3947
    %s3949 = sand.u32 51, %s3948
    %s3950 = sshrl.u32 %s3949, 2
    %s3951 = sor.u32 %s3949, %s3950
    %s3952 = sand.u32 15, %s3951
    %v3953 = vld [vmem:[%s3943] sm:%s3952]
    %v3954 = vunpack.c.l.bf16 %v3953
    %v3955 = vunpack.c.h.bf16 %v3953
    %s3956 = scalar_lea.vmem [#allocation1], 72
    %3957 = vst [vmem:[%s3956] sm:%s5] %v3954
    %s3958 = smul.addr 4, 8
    %s3959 = scalar_lea.vmem %s0, %s3958
    %s3960 = sshrl.u32 %s5, 1
    %s3961 = sor.u32 %s5, %s3960
    %s3962 = sand.u32 %s3961, 85
    %s3963 = sshrl.u32 %s3962, 1
    %s3964 = sor.u32 %s3962, %s3963
    %s3965 = sand.u32 51, %s3964
    %s3966 = sshrl.u32 %s3965, 2
    %s3967 = sor.u32 %s3965, %s3966
    %s3968 = sand.u32 15, %s3967
    %v3969 = vld [vmem:[%s3959] sm:%s3968]
    %v3970 = vunpack.c.l.bf16 %v3969
    %v3971 = vunpack.c.h.bf16 %v3969
    %s3972 = scalar_lea.vmem [#allocation1], 64
    %3973 = vst [vmem:[%s3972] sm:%s5] %v3970
    %s3974 = smul.addr 4, 7
    %s3975 = scalar_lea.vmem %s0, %s3974
    %s3976 = sshrl.u32 %s5, 1
    %s3977 = sor.u32 %s5, %s3976
    %s3978 = sand.u32 %s3977, 85
    %s3979 = sshrl.u32 %s3978, 1
    %s3980 = sor.u32 %s3978, %s3979
    %s3981 = sand.u32 51, %s3980
    %s3982 = sshrl.u32 %s3981, 2
    %s3983 = sor.u32 %s3981, %s3982
    %s3984 = sand.u32 15, %s3983
    %v3985 = vld [vmem:[%s3975] sm:%s3984]
    %v3986 = vunpack.c.l.bf16 %v3985
    %v3987 = vunpack.c.h.bf16 %v3985
    %s3988 = scalar_lea.vmem [#allocation1], 56
    %3989 = vst [vmem:[%s3988] sm:%s5] %v3986
    %s3990 = smul.addr 4, 6
    %s3991 = scalar_lea.vmem %s0, %s3990
    %s3992 = sshrl.u32 %s5, 1
    %s3993 = sor.u32 %s5, %s3992
    %s3994 = sand.u32 %s3993, 85
    %s3995 = sshrl.u32 %s3994, 1
    %s3996 = sor.u32 %s3994, %s3995
    %s3997 = sand.u32 51, %s3996
    %s3998 = sshrl.u32 %s3997, 2
    %s3999 = sor.u32 %s3997, %s3998
    %s4000 = sand.u32 15, %s3999
    %v4001 = vld [vmem:[%s3991] sm:%s4000]
    %v4002 = vunpack.c.l.bf16 %v4001
    %v4003 = vunpack.c.h.bf16 %v4001
    %s4004 = scalar_lea.vmem [#allocation1], 48
    %4005 = vst [vmem:[%s4004] sm:%s5] %v4002
    %s4006 = smul.addr 4, 5
    %s4007 = scalar_lea.vmem %s0, %s4006
    %s4008 = sshrl.u32 %s5, 1
    %s4009 = sor.u32 %s5, %s4008
    %s4010 = sand.u32 %s4009, 85
    %s4011 = sshrl.u32 %s4010, 1
    %s4012 = sor.u32 %s4010, %s4011
    %s4013 = sand.u32 51, %s4012
    %s4014 = sshrl.u32 %s4013, 2
    %s4015 = sor.u32 %s4013, %s4014
    %s4016 = sand.u32 15, %s4015
    %v4017 = vld [vmem:[%s4007] sm:%s4016]
    %v4018 = vunpack.c.l.bf16 %v4017
    %v4019 = vunpack.c.h.bf16 %v4017
    %s4020 = scalar_lea.vmem [#allocation1], 40
    %4021 = vst [vmem:[%s4020] sm:%s5] %v4018
    %s4022 = smul.addr 4, 4
    %s4023 = scalar_lea.vmem %s0, %s4022
    %s4024 = sshrl.u32 %s5, 1
    %s4025 = sor.u32 %s5, %s4024
    %s4026 = sand.u32 %s4025, 85
    %s4027 = sshrl.u32 %s4026, 1
    %s4028 = sor.u32 %s4026, %s4027
    %s4029 = sand.u32 51, %s4028
    %s4030 = sshrl.u32 %s4029, 2
    %s4031 = sor.u32 %s4029, %s4030
    %s4032 = sand.u32 15, %s4031
    %v4033 = vld [vmem:[%s4023] sm:%s4032]
    %v4034 = vunpack.c.l.bf16 %v4033
    %v4035 = vunpack.c.h.bf16 %v4033
    %s4036 = scalar_lea.vmem [#allocation1], 32
    %4037 = vst [vmem:[%s4036] sm:%s5] %v4034
    %s4038 = smul.addr 4, 3
    %s4039 = scalar_lea.vmem %s0, %s4038
    %s4040 = sshrl.u32 %s5, 1
    %s4041 = sor.u32 %s5, %s4040
    %s4042 = sand.u32 %s4041, 85
    %s4043 = sshrl.u32 %s4042, 1
    %s4044 = sor.u32 %s4042, %s4043
    %s4045 = sand.u32 51, %s4044
    %s4046 = sshrl.u32 %s4045, 2
    %s4047 = sor.u32 %s4045, %s4046
    %s4048 = sand.u32 15, %s4047
    %v4049 = vld [vmem:[%s4039] sm:%s4048]
    %v4050 = vunpack.c.l.bf16 %v4049
    %v4051 = vunpack.c.h.bf16 %v4049
    %s4052 = scalar_lea.vmem [#allocation1], 24
    %4053 = vst [vmem:[%s4052] sm:%s5] %v4050
    %s4054 = smul.addr 4, 2
    %s4055 = scalar_lea.vmem %s0, %s4054
    %s4056 = sshrl.u32 %s5, 1
    %s4057 = sor.u32 %s5, %s4056
    %s4058 = sand.u32 %s4057, 85
    %s4059 = sshrl.u32 %s4058, 1
    %s4060 = sor.u32 %s4058, %s4059
    %s4061 = sand.u32 51, %s4060
    %s4062 = sshrl.u32 %s4061, 2
    %s4063 = sor.u32 %s4061, %s4062
    %s4064 = sand.u32 15, %s4063
    %v4065 = vld [vmem:[%s4055] sm:%s4064]
    %v4066 = vunpack.c.l.bf16 %v4065
    %v4067 = vunpack.c.h.bf16 %v4065
    %s4068 = scalar_lea.vmem [#allocation1], 16
    %4069 = vst [vmem:[%s4068] sm:%s5] %v4066
    %s4070 = scalar_lea.vmem %s0, 4
    %s4071 = sshrl.u32 %s5, 1
    %s4072 = sor.u32 %s5, %s4071
    %s4073 = sand.u32 %s4072, 85
    %s4074 = sshrl.u32 %s4073, 1
    %s4075 = sor.u32 %s4073, %s4074
    %s4076 = sand.u32 51, %s4075
    %s4077 = sshrl.u32 %s4076, 2
    %s4078 = sor.u32 %s4076, %s4077
    %s4079 = sand.u32 15, %s4078
    %v4080 = vld [vmem:[%s4070] sm:%s4079]
    %v4081 = vunpack.c.l.bf16 %v4080
    %v4082 = vunpack.c.h.bf16 %v4080
    %s4083 = scalar_lea.vmem [#allocation1], 8
    %4084 = vst [vmem:[%s4083] sm:%s5] %v4081
    %s4085 = sshrl.u32 %s5, 1
    %s4086 = sor.u32 %s5, %s4085
    %s4087 = sand.u32 %s4086, 85
    %s4088 = sshrl.u32 %s4087, 1
    %s4089 = sor.u32 %s4087, %s4088
    %s4090 = sand.u32 51, %s4089
    %s4091 = sshrl.u32 %s4090, 2
    %s4092 = sor.u32 %s4090, %s4091
    %s4093 = sand.u32 15, %s4092
    %v4094 = vld [vmem:[%s0] sm:%s4093]
    %v4095 = vunpack.c.l.bf16 %v4094
    %v4096 = vunpack.c.h.bf16 %v4094
    %4097 = vst [vmem:[#allocation1] sm:%s5] %v4095
    %v4098 = vld [vmem:[#allocation1] ss:$8 sm:$0xf]
    %v4099 = vld [vmem:[#allocation1] ss:$8 sm:$0xf0]
    %vm4100 = vcmask 1047556
    %v4101 = vsel %vm4100, %v4099, %v4098
    %vm4102 = vcmask 130048
    %4103 = vst.msk [vmem:[#allocation0] sm:$0xff] %vm4102, %v4101
    %s4104 = scalar_lea.vmem [#allocation1], 64
    %v4105 = vld [vmem:[%s4104] ss:$8 sm:$0xf]
    %s4106 = scalar_lea.vmem [#allocation1], 64
    %v4107 = vld [vmem:[%s4106] ss:$8 sm:$0xf0]
    %vm4108 = vcmask 1047556
    %v4109 = vsel %vm4108, %v4107, %v4105
    %vm4110 = vcmask 130048
    %s4111 = scalar_lea.vmem [#allocation0], 8
    %4112 = vst.msk [vmem:[%s4111] sm:$0xff] %vm4110, %v4109
    %s4113 = scalar_lea.vmem [#allocation1], 128
    %v4114 = vld [vmem:[%s4113] ss:$8 sm:$0xf]
    %s4115 = scalar_lea.vmem [#allocation1], 128
    %v4116 = vld [vmem:[%s4115] ss:$8 sm:$0xf0]
    %vm4117 = vcmask 1047556
    %v4118 = vsel %vm4117, %v4116, %v4114
    %vm4119 = vcmask 130048
    %s4120 = scalar_lea.vmem [#allocation0], 16
    %4121 = vst.msk [vmem:[%s4120] sm:$0xff] %vm4119, %v4118
    %s4122 = scalar_lea.vmem [#allocation1], 192
    %v4123 = vld [vmem:[%s4122] ss:$8 sm:$0xf]
    %s4124 = scalar_lea.vmem [#allocation1], 192
    %v4125 = vld [vmem:[%s4124] ss:$8 sm:$0xf0]
    %vm4126 = vcmask 1047556
    %v4127 = vsel %vm4126, %v4125, %v4123
    %vm4128 = vcmask 130048
    %s4129 = scalar_lea.vmem [#allocation0], 24
    %4130 = vst.msk [vmem:[%s4129] sm:$0xff] %vm4128, %v4127
    %s4131 = scalar_lea.vmem [#allocation1], 256
    %v4132 = vld [vmem:[%s4131] ss:$8 sm:$0xf]
    %s4133 = scalar_lea.vmem [#allocation1], 256
    %v4134 = vld [vmem:[%s4133] ss:$8 sm:$0xf0]
    %vm4135 = vcmask 1047556
    %v4136 = vsel %vm4135, %v4134, %v4132
    %vm4137 = vcmask 130048
    %s4138 = scalar_lea.vmem [#allocation0], 32
    %4139 = vst.msk [vmem:[%s4138] sm:$0xff] %vm4137, %v4136
    %s4140 = scalar_lea.vmem [#allocation1], 320
    %v4141 = vld [vmem:[%s4140] ss:$8 sm:$0xf]
    %s4142 = scalar_lea.vmem [#allocation1], 320
    %v4143 = vld [vmem:[%s4142] ss:$8 sm:$0xf0]
    %vm4144 = vcmask 1047556
    %v4145 = vsel %vm4144, %v4143, %v4141
    %vm4146 = vcmask 130048
    %s4147 = scalar_lea.vmem [#allocation0], 40
    %4148 = vst.msk [vmem:[%s4147] sm:$0xff] %vm4146, %v4145
    %s4149 = scalar_lea.vmem [#allocation1], 384
    %v4150 = vld [vmem:[%s4149] ss:$8 sm:$0xf]
    %s4151 = scalar_lea.vmem [#allocation1], 384
    %v4152 = vld [vmem:[%s4151] ss:$8 sm:$0xf0]
    %vm4153 = vcmask 1047556
    %v4154 = vsel %vm4153, %v4152, %v4150
    %vm4155 = vcmask 130048
    %s4156 = scalar_lea.vmem [#allocation0], 48
    %4157 = vst.msk [vmem:[%s4156] sm:$0xff] %vm4155, %v4154
    %s4158 = scalar_lea.vmem [#allocation1], 448
    %v4159 = vld [vmem:[%s4158] ss:$8 sm:$0xf]
    %s4160 = scalar_lea.vmem [#allocation1], 448
    %v4161 = vld [vmem:[%s4160] ss:$8 sm:$0xf0]
    %vm4162 = vcmask 1047556
    %v4163 = vsel %vm4162, %v4161, %v4159
    %vm4164 = vcmask 130048
    %s4165 = scalar_lea.vmem [#allocation0], 56
    %4166 = vst.msk [vmem:[%s4165] sm:$0xff] %vm4164, %v4163
    %s4167 = scalar_lea.vmem [#allocation1], 512
    %v4168 = vld [vmem:[%s4167] ss:$8 sm:$0xf]
    %s4169 = scalar_lea.vmem [#allocation1], 512
    %v4170 = vld [vmem:[%s4169] ss:$8 sm:$0xf0]
    %vm4171 = vcmask 1047556
    %v4172 = vsel %vm4171, %v4170, %v4168
    %vm4173 = vcmask 130048
    %s4174 = scalar_lea.vmem [#allocation0], 64
    %4175 = vst.msk [vmem:[%s4174] sm:$0xff] %vm4173, %v4172
    %s4176 = scalar_lea.vmem [#allocation1], 576
    %v4177 = vld [vmem:[%s4176] ss:$8 sm:$0xf]
    %s4178 = scalar_lea.vmem [#allocation1], 576
    %v4179 = vld [vmem:[%s4178] ss:$8 sm:$0xf0]
    %vm4180 = vcmask 1047556
    %v4181 = vsel %vm4180, %v4179, %v4177
    %vm4182 = vcmask 130048
    %s4183 = scalar_lea.vmem [#allocation0], 72
    %4184 = vst.msk [vmem:[%s4183] sm:$0xff] %vm4182, %v4181
    %s4185 = scalar_lea.vmem [#allocation1], 640
    %v4186 = vld [vmem:[%s4185] ss:$8 sm:$0xf]
    %s4187 = scalar_lea.vmem [#allocation1], 640
    %v4188 = vld [vmem:[%s4187] ss:$8 sm:$0xf0]
    %vm4189 = vcmask 1047556
    %v4190 = vsel %vm4189, %v4188, %v4186
    %vm4191 = vcmask 130048
    %s4192 = scalar_lea.vmem [#allocation0], 80
    %4193 = vst.msk [vmem:[%s4192] sm:$0xff] %vm4191, %v4190
    %s4194 = scalar_lea.vmem [#allocation1], 704
    %v4195 = vld [vmem:[%s4194] ss:$8 sm:$0xf]
    %s4196 = scalar_lea.vmem [#allocation1], 704
    %v4197 = vld [vmem:[%s4196] ss:$8 sm:$0xf0]
    %vm4198 = vcmask 1047556
    %v4199 = vsel %vm4198, %v4197, %v4195
    %vm4200 = vcmask 130048
    %s4201 = scalar_lea.vmem [#allocation0], 88
    %4202 = vst.msk [vmem:[%s4201] sm:$0xff] %vm4200, %v4199
    %s4203 = scalar_lea.vmem [#allocation1], 768
    %v4204 = vld [vmem:[%s4203] ss:$8 sm:$0xf]
    %s4205 = scalar_lea.vmem [#allocation1], 768
    %v4206 = vld [vmem:[%s4205] ss:$8 sm:$0xf0]
    %vm4207 = vcmask 1047556
    %v4208 = vsel %vm4207, %v4206, %v4204
    %vm4209 = vcmask 130048
    %s4210 = scalar_lea.vmem [#allocation0], 96
    %4211 = vst.msk [vmem:[%s4210] sm:$0xff] %vm4209, %v4208
    %s4212 = scalar_lea.vmem [#allocation1], 832
    %v4213 = vld [vmem:[%s4212] ss:$8 sm:$0xf]
    %s4214 = scalar_lea.vmem [#allocation1], 832
    %v4215 = vld [vmem:[%s4214] ss:$8 sm:$0xf0]
    %vm4216 = vcmask 1047556
    %v4217 = vsel %vm4216, %v4215, %v4213
    %vm4218 = vcmask 130048
    %s4219 = scalar_lea.vmem [#allocation0], 104
    %4220 = vst.msk [vmem:[%s4219] sm:$0xff] %vm4218, %v4217
    %s4221 = scalar_lea.vmem [#allocation1], 896
    %v4222 = vld [vmem:[%s4221] ss:$8 sm:$0xf]
    %s4223 = scalar_lea.vmem [#allocation1], 896
    %v4224 = vld [vmem:[%s4223] ss:$8 sm:$0xf0]
    %vm4225 = vcmask 1047556
    %v4226 = vsel %vm4225, %v4224, %v4222
    %vm4227 = vcmask 130048
    %s4228 = scalar_lea.vmem [#allocation0], 112
    %4229 = vst.msk [vmem:[%s4228] sm:$0xff] %vm4227, %v4226
    %s4230 = scalar_lea.vmem [#allocation1], 960
    %v4231 = vld [vmem:[%s4230] ss:$8 sm:$0xf]
    %s4232 = scalar_lea.vmem [#allocation1], 960
    %v4233 = vld [vmem:[%s4232] ss:$8 sm:$0xf0]
    %vm4234 = vcmask 1047556
    %v4235 = vsel %vm4234, %v4233, %v4231
    %vm4236 = vcmask 130048
    %s4237 = scalar_lea.vmem [#allocation0], 120
    %4238 = vst.msk [vmem:[%s4237] sm:$0xff] %vm4236, %v4235
    %s4239 = scalar_lea.vmem [#allocation1], 1024
    %v4240 = vld [vmem:[%s4239] ss:$8 sm:$0xf]
    %s4241 = scalar_lea.vmem [#allocation1], 1024
    %v4242 = vld [vmem:[%s4241] ss:$8 sm:$0xf0]
    %vm4243 = vcmask 1047556
    %v4244 = vsel %vm4243, %v4242, %v4240
    %vm4245 = vcmask 130048
    %s4246 = scalar_lea.vmem [#allocation0], 128
    %4247 = vst.msk [vmem:[%s4246] sm:$0xff] %vm4245, %v4244
    %s4248 = scalar_lea.vmem [#allocation1], 1088
    %v4249 = vld [vmem:[%s4248] ss:$8 sm:$0xf]
    %s4250 = scalar_lea.vmem [#allocation1], 1088
    %v4251 = vld [vmem:[%s4250] ss:$8 sm:$0xf0]
    %vm4252 = vcmask 1047556
    %v4253 = vsel %vm4252, %v4251, %v4249
    %vm4254 = vcmask 130048
    %s4255 = scalar_lea.vmem [#allocation0], 136
    %4256 = vst.msk [vmem:[%s4255] sm:$0xff] %vm4254, %v4253
    %s4257 = scalar_lea.vmem [#allocation1], 1152
    %v4258 = vld [vmem:[%s4257] ss:$8 sm:$0xf]
    %s4259 = scalar_lea.vmem [#allocation1], 1152
    %v4260 = vld [vmem:[%s4259] ss:$8 sm:$0xf0]
    %vm4261 = vcmask 1047556
    %v4262 = vsel %vm4261, %v4260, %v4258
    %vm4263 = vcmask 130048
    %s4264 = scalar_lea.vmem [#allocation0], 144
    %4265 = vst.msk [vmem:[%s4264] sm:$0xff] %vm4263, %v4262
    %s4266 = scalar_lea.vmem [#allocation1], 1216
    %v4267 = vld [vmem:[%s4266] ss:$8 sm:$0xf]
    %s4268 = scalar_lea.vmem [#allocation1], 1216
    %v4269 = vld [vmem:[%s4268] ss:$8 sm:$0xf0]
    %vm4270 = vcmask 1047556
    %v4271 = vsel %vm4270, %v4269, %v4267
    %vm4272 = vcmask 130048
    %s4273 = scalar_lea.vmem [#allocation0], 152
    %4274 = vst.msk [vmem:[%s4273] sm:$0xff] %vm4272, %v4271
    %s4275 = scalar_lea.vmem [#allocation1], 1280
    %v4276 = vld [vmem:[%s4275] ss:$8 sm:$0xf]
    %s4277 = scalar_lea.vmem [#allocation1], 1280
    %v4278 = vld [vmem:[%s4277] ss:$8 sm:$0xf0]
    %vm4279 = vcmask 1047556
    %v4280 = vsel %vm4279, %v4278, %v4276
    %vm4281 = vcmask 130048
    %s4282 = scalar_lea.vmem [#allocation0], 160
    %4283 = vst.msk [vmem:[%s4282] sm:$0xff] %vm4281, %v4280
    %s4284 = scalar_lea.vmem [#allocation1], 1344
    %v4285 = vld [vmem:[%s4284] ss:$8 sm:$0xf]
    %s4286 = scalar_lea.vmem [#allocation1], 1344
    %v4287 = vld [vmem:[%s4286] ss:$8 sm:$0xf0]
    %vm4288 = vcmask 1047556
    %v4289 = vsel %vm4288, %v4287, %v4285
    %vm4290 = vcmask 130048
    %s4291 = scalar_lea.vmem [#allocation0], 168
    %4292 = vst.msk [vmem:[%s4291] sm:$0xff] %vm4290, %v4289
    %s4293 = scalar_lea.vmem [#allocation1], 1408
    %v4294 = vld [vmem:[%s4293] ss:$8 sm:$0xf]
    %s4295 = scalar_lea.vmem [#allocation1], 1408
    %v4296 = vld [vmem:[%s4295] ss:$8 sm:$0xf0]
    %vm4297 = vcmask 1047556
    %v4298 = vsel %vm4297, %v4296, %v4294
    %vm4299 = vcmask 130048
    %s4300 = scalar_lea.vmem [#allocation0], 176
    %4301 = vst.msk [vmem:[%s4300] sm:$0xff] %vm4299, %v4298
    %s4302 = scalar_lea.vmem [#allocation1], 1472
    %v4303 = vld [vmem:[%s4302] ss:$8 sm:$0xf]
    %s4304 = scalar_lea.vmem [#allocation1], 1472
    %v4305 = vld [vmem:[%s4304] ss:$8 sm:$0xf0]
    %vm4306 = vcmask 1047556
    %v4307 = vsel %vm4306, %v4305, %v4303
    %vm4308 = vcmask 130048
    %s4309 = scalar_lea.vmem [#allocation0], 184
    %4310 = vst.msk [vmem:[%s4309] sm:$0xff] %vm4308, %v4307
    %s4311 = scalar_lea.vmem [#allocation1], 1536
    %v4312 = vld [vmem:[%s4311] ss:$8 sm:$0xf]
    %s4313 = scalar_lea.vmem [#allocation1], 1536
    %v4314 = vld [vmem:[%s4313] ss:$8 sm:$0xf0]
    %vm4315 = vcmask 1047556
    %v4316 = vsel %vm4315, %v4314, %v4312
    %vm4317 = vcmask 130048
    %s4318 = scalar_lea.vmem [#allocation0], 192
    %4319 = vst.msk [vmem:[%s4318] sm:$0xff] %vm4317, %v4316
    %s4320 = scalar_lea.vmem [#allocation1], 1600
    %v4321 = vld [vmem:[%s4320] ss:$8 sm:$0xf]
    %s4322 = scalar_lea.vmem [#allocation1], 1600
    %v4323 = vld [vmem:[%s4322] ss:$8 sm:$0xf0]
    %vm4324 = vcmask 1047556
    %v4325 = vsel %vm4324, %v4323, %v4321
    %vm4326 = vcmask 130048
    %s4327 = scalar_lea.vmem [#allocation0], 200
    %4328 = vst.msk [vmem:[%s4327] sm:$0xff] %vm4326, %v4325
    %s4329 = scalar_lea.vmem [#allocation1], 1664
    %v4330 = vld [vmem:[%s4329] ss:$8 sm:$0xf]
    %s4331 = scalar_lea.vmem [#allocation1], 1664
    %v4332 = vld [vmem:[%s4331] ss:$8 sm:$0xf0]
    %vm4333 = vcmask 1047556
    %v4334 = vsel %vm4333, %v4332, %v4330
    %vm4335 = vcmask 130048
    %s4336 = scalar_lea.vmem [#allocation0], 208
    %4337 = vst.msk [vmem:[%s4336] sm:$0xff] %vm4335, %v4334
    %s4338 = scalar_lea.vmem [#allocation1], 1728
    %v4339 = vld [vmem:[%s4338] ss:$8 sm:$0xf]
    %s4340 = scalar_lea.vmem [#allocation1], 1728
    %v4341 = vld [vmem:[%s4340] ss:$8 sm:$0xf0]
    %vm4342 = vcmask 1047556
    %v4343 = vsel %vm4342, %v4341, %v4339
    %vm4344 = vcmask 130048
    %s4345 = scalar_lea.vmem [#allocation0], 216
    %4346 = vst.msk [vmem:[%s4345] sm:$0xff] %vm4344, %v4343
    %s4347 = scalar_lea.vmem [#allocation1], 1792
    %v4348 = vld [vmem:[%s4347] ss:$8 sm:$0xf]
    %s4349 = scalar_lea.vmem [#allocation1], 1792
    %v4350 = vld [vmem:[%s4349] ss:$8 sm:$0xf0]
    %vm4351 = vcmask 1047556
    %v4352 = vsel %vm4351, %v4350, %v4348
    %vm4353 = vcmask 130048
    %s4354 = scalar_lea.vmem [#allocation0], 224
    %4355 = vst.msk [vmem:[%s4354] sm:$0xff] %vm4353, %v4352
    %s4356 = scalar_lea.vmem [#allocation1], 1856
    %v4357 = vld [vmem:[%s4356] ss:$8 sm:$0xf]
    %s4358 = scalar_lea.vmem [#allocation1], 1856
    %v4359 = vld [vmem:[%s4358] ss:$8 sm:$0xf0]
    %vm4360 = vcmask 1047556
    %v4361 = vsel %vm4360, %v4359, %v4357
    %vm4362 = vcmask 130048
    %s4363 = scalar_lea.vmem [#allocation0], 232
    %4364 = vst.msk [vmem:[%s4363] sm:$0xff] %vm4362, %v4361
    %s4365 = scalar_lea.vmem [#allocation1], 1920
    %v4366 = vld [vmem:[%s4365] ss:$8 sm:$0xf]
    %s4367 = scalar_lea.vmem [#allocation1], 1920
    %v4368 = vld [vmem:[%s4367] ss:$8 sm:$0xf0]
    %vm4369 = vcmask 1047556
    %v4370 = vsel %vm4369, %v4368, %v4366
    %vm4371 = vcmask 130048
    %s4372 = scalar_lea.vmem [#allocation0], 240
    %4373 = vst.msk [vmem:[%s4372] sm:$0xff] %vm4371, %v4370
    %s4374 = scalar_lea.vmem [#allocation1], 1984
    %v4375 = vld [vmem:[%s4374] ss:$8 sm:$0xf]
    %s4376 = scalar_lea.vmem [#allocation1], 1984
    %v4377 = vld [vmem:[%s4376] ss:$8 sm:$0xf0]
    %vm4378 = vcmask 1047556
    %v4379 = vsel %vm4378, %v4377, %v4375
    %vm4380 = vcmask 130048
    %s4381 = scalar_lea.vmem [#allocation0], 248
    %4382 = vst.msk [vmem:[%s4381] sm:$0xff] %vm4380, %v4379
    %s4383 = scalar_lea.vmem [#allocation1], 7
    %v4384 = vld [vmem:[%s4383] ss:$8 sm:$0xf]
    %s4385 = scalar_lea.vmem [#allocation1], 7
    %v4386 = vld [vmem:[%s4385] ss:$8 sm:$0xf0]
    %vm4387 = vcmask 1047556
    %v4388 = vsel %vm4387, %v4386, %v4384
    %4389 = vrot.lane.b32.xlu0 %v4388, 112
    %v4390 = vpop.permute.xlu0 %4389
    %vm4391 = vcmask 1048448
    %4392 = vst.msk [vmem:[#allocation0] sm:$0xff] %vm4391, %v4390
    %s4393 = scalar_lea.vmem [#allocation1], 263
    %v4394 = vld [vmem:[%s4393] ss:$8 sm:$0xf]
    %s4395 = scalar_lea.vmem [#allocation1], 263
    %v4396 = vld [vmem:[%s4395] ss:$8 sm:$0xf0]
    %vm4397 = vcmask 1047556
    %v4398 = vsel %vm4397, %v4396, %v4394
    %4399 = vrot.lane.b32.xlu0 %v4398, 112
    %v4400 = vpop.permute.xlu0 %4399
    %vm4401 = vcmask 1048448
    %s4402 = scalar_lea.vmem [#allocation0], 32
    %4403 = vst.msk [vmem:[%s4402] sm:$0xff] %vm4401, %v4400
    %s4404 = scalar_lea.vmem [#allocation1], 519
    %v4405 = vld [vmem:[%s4404] ss:$8 sm:$0xf]
    %s4406 = scalar_lea.vmem [#allocation1], 519
    %v4407 = vld [vmem:[%s4406] ss:$8 sm:$0xf0]
    %vm4408 = vcmask 1047556
    %v4409 = vsel %vm4408, %v4407, %v4405
    %4410 = vrot.lane.b32.xlu0 %v4409, 112
    %v4411 = vpop.permute.xlu0 %4410
    %vm4412 = vcmask 1048448
    %s4413 = scalar_lea.vmem [#allocation0], 64
    %4414 = vst.msk [vmem:[%s4413] sm:$0xff] %vm4412, %v4411
    %s4415 = scalar_lea.vmem [#allocation1], 775
    %v4416 = vld [vmem:[%s4415] ss:$8 sm:$0xf]
    %s4417 = scalar_lea.vmem [#allocation1], 775
    %v4418 = vld [vmem:[%s4417] ss:$8 sm:$0xf0]
    %vm4419 = vcmask 1047556
    %v4420 = vsel %vm4419, %v4418, %v4416
    %4421 = vrot.lane.b32.xlu0 %v4420, 112
    %v4422 = vpop.permute.xlu0 %4421
    %vm4423 = vcmask 1048448
    %s4424 = scalar_lea.vmem [#allocation0], 96
    %4425 = vst.msk [vmem:[%s4424] sm:$0xff] %vm4423, %v4422
    %s4426 = scalar_lea.vmem [#allocation1], 1031
    %v4427 = vld [vmem:[%s4426] ss:$8 sm:$0xf]
    %s4428 = scalar_lea.vmem [#allocation1], 1031
    %v4429 = vld [vmem:[%s4428] ss:$8 sm:$0xf0]
    %vm4430 = vcmask 1047556
    %v4431 = vsel %vm4430, %v4429, %v4427
    %4432 = vrot.lane.b32.xlu0 %v4431, 112
    %v4433 = vpop.permute.xlu0 %4432
    %vm4434 = vcmask 1048448
    %s4435 = scalar_lea.vmem [#allocation0], 128
    %4436 = vst.msk [vmem:[%s4435] sm:$0xff] %vm4434, %v4433
    %s4437 = scalar_lea.vmem [#allocation1], 1287
    %v4438 = vld [vmem:[%s4437] ss:$8 sm:$0xf]
    %s4439 = scalar_lea.vmem [#allocation1], 1287
    %v4440 = vld [vmem:[%s4439] ss:$8 sm:$0xf0]
    %vm4441 = vcmask 1047556
    %v4442 = vsel %vm4441, %v4440, %v4438
    %4443 = vrot.lane.b32.xlu0 %v4442, 112
    %v4444 = vpop.permute.xlu0 %4443
    %vm4445 = vcmask 1048448
    %s4446 = scalar_lea.vmem [#allocation0], 160
    %4447 = vst.msk [vmem:[%s4446] sm:$0xff] %vm4445, %v4444
    %s4448 = scalar_lea.vmem [#allocation1], 1543
    %v4449 = vld [vmem:[%s4448] ss:$8 sm:$0xf]
    %s4450 = scalar_lea.vmem [#allocation1], 1543
    %v4451 = vld [vmem:[%s4450] ss:$8 sm:$0xf0]
    %vm4452 = vcmask 1047556
    %v4453 = vsel %vm4452, %v4451, %v4449
    %4454 = vrot.lane.b32.xlu0 %v4453, 112
    %v4455 = vpop.permute.xlu0 %4454
    %vm4456 = vcmask 1048448
    %s4457 = scalar_lea.vmem [#allocation0], 192
    %4458 = vst.msk [vmem:[%s4457] sm:$0xff] %vm4456, %v4455
    %s4459 = scalar_lea.vmem [#allocation1], 1799
    %v4460 = vld [vmem:[%s4459] ss:$8 sm:$0xf]
    %s4461 = scalar_lea.vmem [#allocation1], 1799
    %v4462 = vld [vmem:[%s4461] ss:$8 sm:$0xf0]
    %vm4463 = vcmask 1047556
    %v4464 = vsel %vm4463, %v4462, %v4460
    %4465 = vrot.lane.b32.xlu0 %v4464, 112
    %v4466 = vpop.permute.xlu0 %4465
    %vm4467 = vcmask 1048448
    %s4468 = scalar_lea.vmem [#allocation0], 224
    %4469 = vst.msk [vmem:[%s4468] sm:$0xff] %vm4467, %v4466
    %s4470 = scalar_lea.vmem [#allocation1], 71
    %v4471 = vld [vmem:[%s4470] ss:$8 sm:$0xf]
    %s4472 = scalar_lea.vmem [#allocation1], 71
    %v4473 = vld [vmem:[%s4472] ss:$8 sm:$0xf0]
    %vm4474 = vcmask 1047556
    %v4475 = vsel %vm4474, %v4473, %v4471
    %4476 = vrot.lane.b32.xlu0 %v4475, 112
    %v4477 = vpop.permute.xlu0 %4476
    %vm4478 = vcmask 1048448
    %s4479 = scalar_lea.vmem [#allocation0], 8
    %4480 = vst.msk [vmem:[%s4479] sm:$0xff] %vm4478, %v4477
    %s4481 = scalar_lea.vmem [#allocation1], 327
    %v4482 = vld [vmem:[%s4481] ss:$8 sm:$0xf]
    %s4483 = scalar_lea.vmem [#allocation1], 327
    %v4484 = vld [vmem:[%s4483] ss:$8 sm:$0xf0]
    %vm4485 = vcmask 1047556
    %v4486 = vsel %vm4485, %v4484, %v4482
    %4487 = vrot.lane.b32.xlu0 %v4486, 112
    %v4488 = vpop.permute.xlu0 %4487
    %vm4489 = vcmask 1048448
    %s4490 = scalar_lea.vmem [#allocation0], 40
    %4491 = vst.msk [vmem:[%s4490] sm:$0xff] %vm4489, %v4488
    %s4492 = scalar_lea.vmem [#allocation1], 583
    %v4493 = vld [vmem:[%s4492] ss:$8 sm:$0xf]
    %s4494 = scalar_lea.vmem [#allocation1], 583
    %v4495 = vld [vmem:[%s4494] ss:$8 sm:$0xf0]
    %vm4496 = vcmask 1047556
    %v4497 = vsel %vm4496, %v4495, %v4493
    %4498 = vrot.lane.b32.xlu0 %v4497, 112
    %v4499 = vpop.permute.xlu0 %4498
    %vm4500 = vcmask 1048448
    %s4501 = scalar_lea.vmem [#allocation0], 72
    %4502 = vst.msk [vmem:[%s4501] sm:$0xff] %vm4500, %v4499
    %s4503 = scalar_lea.vmem [#allocation1], 839
    %v4504 = vld [vmem:[%s4503] ss:$8 sm:$0xf]
    %s4505 = scalar_lea.vmem [#allocation1], 839
    %v4506 = vld [vmem:[%s4505] ss:$8 sm:$0xf0]
    %vm4507 = vcmask 1047556
    %v4508 = vsel %vm4507, %v4506, %v4504
    %4509 = vrot.lane.b32.xlu0 %v4508, 112
    %v4510 = vpop.permute.xlu0 %4509
    %vm4511 = vcmask 1048448
    %s4512 = scalar_lea.vmem [#allocation0], 104
    %4513 = vst.msk [vmem:[%s4512] sm:$0xff] %vm4511, %v4510
    %s4514 = scalar_lea.vmem [#allocation1], 1095
    %v4515 = vld [vmem:[%s4514] ss:$8 sm:$0xf]
    %s4516 = scalar_lea.vmem [#allocation1], 1095
    %v4517 = vld [vmem:[%s4516] ss:$8 sm:$0xf0]
    %vm4518 = vcmask 1047556
    %v4519 = vsel %vm4518, %v4517, %v4515
    %4520 = vrot.lane.b32.xlu0 %v4519, 112
    %v4521 = vpop.permute.xlu0 %4520
    %vm4522 = vcmask 1048448
    %s4523 = scalar_lea.vmem [#allocation0], 136
    %4524 = vst.msk [vmem:[%s4523] sm:$0xff] %vm4522, %v4521
    %s4525 = scalar_lea.vmem [#allocation1], 1351
    %v4526 = vld [vmem:[%s4525] ss:$8 sm:$0xf]
    %s4527 = scalar_lea.vmem [#allocation1], 1351
    %v4528 = vld [vmem:[%s4527] ss:$8 sm:$0xf0]
    %vm4529 = vcmask 1047556
    %v4530 = vsel %vm4529, %v4528, %v4526
    %4531 = vrot.lane.b32.xlu0 %v4530, 112
    %v4532 = vpop.permute.xlu0 %4531
    %vm4533 = vcmask 1048448
    %s4534 = scalar_lea.vmem [#allocation0], 168
    %4535 = vst.msk [vmem:[%s4534] sm:$0xff] %vm4533, %v4532
    %s4536 = scalar_lea.vmem [#allocation1], 1607
    %v4537 = vld [vmem:[%s4536] ss:$8 sm:$0xf]
    %s4538 = scalar_lea.vmem [#allocation1], 1607
    %v4539 = vld [vmem:[%s4538] ss:$8 sm:$0xf0]
    %vm4540 = vcmask 1047556
    %v4541 = vsel %vm4540, %v4539, %v4537
    %4542 = vrot.lane.b32.xlu0 %v4541, 112
    %v4543 = vpop.permute.xlu0 %4542
    %vm4544 = vcmask 1048448
    %s4545 = scalar_lea.vmem [#allocation0], 200
    %4546 = vst.msk [vmem:[%s4545] sm:$0xff] %vm4544, %v4543
    %s4547 = scalar_lea.vmem [#allocation1], 1863
    %v4548 = vld [vmem:[%s4547] ss:$8 sm:$0xf]
    %s4549 = scalar_lea.vmem [#allocation1], 1863
    %v4550 = vld [vmem:[%s4549] ss:$8 sm:$0xf0]
    %vm4551 = vcmask 1047556
    %v4552 = vsel %vm4551, %v4550, %v4548
    %4553 = vrot.lane.b32.xlu0 %v4552, 112
    %v4554 = vpop.permute.xlu0 %4553
    %vm4555 = vcmask 1048448
    %s4556 = scalar_lea.vmem [#allocation0], 232
    %4557 = vst.msk [vmem:[%s4556] sm:$0xff] %vm4555, %v4554
    %s4558 = scalar_lea.vmem [#allocation1], 135
    %v4559 = vld [vmem:[%s4558] ss:$8 sm:$0xf]
    %s4560 = scalar_lea.vmem [#allocation1], 135
    %v4561 = vld [vmem:[%s4560] ss:$8 sm:$0xf0]
    %vm4562 = vcmask 1047556
    %v4563 = vsel %vm4562, %v4561, %v4559
    %4564 = vrot.lane.b32.xlu0 %v4563, 112
    %v4565 = vpop.permute.xlu0 %4564
    %vm4566 = vcmask 1048448
    %s4567 = scalar_lea.vmem [#allocation0], 16
    %4568 = vst.msk [vmem:[%s4567] sm:$0xff] %vm4566, %v4565
    %s4569 = scalar_lea.vmem [#allocation1], 391
    %v4570 = vld [vmem:[%s4569] ss:$8 sm:$0xf]
    %s4571 = scalar_lea.vmem [#allocation1], 391
    %v4572 = vld [vmem:[%s4571] ss:$8 sm:$0xf0]
    %vm4573 = vcmask 1047556
    %v4574 = vsel %vm4573, %v4572, %v4570
    %4575 = vrot.lane.b32.xlu0 %v4574, 112
    %v4576 = vpop.permute.xlu0 %4575
    %vm4577 = vcmask 1048448
    %s4578 = scalar_lea.vmem [#allocation0], 48
    %4579 = vst.msk [vmem:[%s4578] sm:$0xff] %vm4577, %v4576
    %s4580 = scalar_lea.vmem [#allocation1], 647
    %v4581 = vld [vmem:[%s4580] ss:$8 sm:$0xf]
    %s4582 = scalar_lea.vmem [#allocation1], 647
    %v4583 = vld [vmem:[%s4582] ss:$8 sm:$0xf0]
    %vm4584 = vcmask 1047556
    %v4585 = vsel %vm4584, %v4583, %v4581
    %4586 = vrot.lane.b32.xlu0 %v4585, 112
    %v4587 = vpop.permute.xlu0 %4586
    %vm4588 = vcmask 1048448
    %s4589 = scalar_lea.vmem [#allocation0], 80
    %4590 = vst.msk [vmem:[%s4589] sm:$0xff] %vm4588, %v4587
    %s4591 = scalar_lea.vmem [#allocation1], 903
    %v4592 = vld [vmem:[%s4591] ss:$8 sm:$0xf]
    %s4593 = scalar_lea.vmem [#allocation1], 903
    %v4594 = vld [vmem:[%s4593] ss:$8 sm:$0xf0]
    %vm4595 = vcmask 1047556
    %v4596 = vsel %vm4595, %v4594, %v4592
    %4597 = vrot.lane.b32.xlu0 %v4596, 112
    %v4598 = vpop.permute.xlu0 %4597
    %vm4599 = vcmask 1048448
    %s4600 = scalar_lea.vmem [#allocation0], 112
    %4601 = vst.msk [vmem:[%s4600] sm:$0xff] %vm4599, %v4598
    %s4602 = scalar_lea.vmem [#allocation1], 1159
    %v4603 = vld [vmem:[%s4602] ss:$8 sm:$0xf]
    %s4604 = scalar_lea.vmem [#allocation1], 1159
    %v4605 = vld [vmem:[%s4604] ss:$8 sm:$0xf0]
    %vm4606 = vcmask 1047556
    %v4607 = vsel %vm4606, %v4605, %v4603
    %4608 = vrot.lane.b32.xlu0 %v4607, 112
    %v4609 = vpop.permute.xlu0 %4608
    %vm4610 = vcmask 1048448
    %s4611 = scalar_lea.vmem [#allocation0], 144
    %4612 = vst.msk [vmem:[%s4611] sm:$0xff] %vm4610, %v4609
    %s4613 = scalar_lea.vmem [#allocation1], 1415
    %v4614 = vld [vmem:[%s4613] ss:$8 sm:$0xf]
    %s4615 = scalar_lea.vmem [#allocation1], 1415
    %v4616 = vld [vmem:[%s4615] ss:$8 sm:$0xf0]
    %vm4617 = vcmask 1047556
    %v4618 = vsel %vm4617, %v4616, %v4614
    %4619 = vrot.lane.b32.xlu0 %v4618, 112
    %v4620 = vpop.permute.xlu0 %4619
    %vm4621 = vcmask 1048448
    %s4622 = scalar_lea.vmem [#allocation0], 176
    %4623 = vst.msk [vmem:[%s4622] sm:$0xff] %vm4621, %v4620
    %s4624 = scalar_lea.vmem [#allocation1], 1671
    %v4625 = vld [vmem:[%s4624] ss:$8 sm:$0xf]
    %s4626 = scalar_lea.vmem [#allocation1], 1671
    %v4627 = vld [vmem:[%s4626] ss:$8 sm:$0xf0]
    %vm4628 = vcmask 1047556
    %v4629 = vsel %vm4628, %v4627, %v4625
    %4630 = vrot.lane.b32.xlu0 %v4629, 112
    %v4631 = vpop.permute.xlu0 %4630
    %vm4632 = vcmask 1048448
    %s4633 = scalar_lea.vmem [#allocation0], 208
    %4634 = vst.msk [vmem:[%s4633] sm:$0xff] %vm4632, %v4631
    %s4635 = scalar_lea.vmem [#allocation1], 1927
    %v4636 = vld [vmem:[%s4635] ss:$8 sm:$0xf]
    %s4637 = scalar_lea.vmem [#allocation1], 1927
    %v4638 = vld [vmem:[%s4637] ss:$8 sm:$0xf0]
    %vm4639 = vcmask 1047556
    %v4640 = vsel %vm4639, %v4638, %v4636
    %4641 = vrot.lane.b32.xlu0 %v4640, 112
    %v4642 = vpop.permute.xlu0 %4641
    %vm4643 = vcmask 1048448
    %s4644 = scalar_lea.vmem [#allocation0], 240
    %4645 = vst.msk [vmem:[%s4644] sm:$0xff] %vm4643, %v4642
    %s4646 = scalar_lea.vmem [#allocation1], 199
    %v4647 = vld [vmem:[%s4646] ss:$8 sm:$0xf]
    %s4648 = scalar_lea.vmem [#allocation1], 199
    %v4649 = vld [vmem:[%s4648] ss:$8 sm:$0xf0]
    %vm4650 = vcmask 1047556
    %v4651 = vsel %vm4650, %v4649, %v4647
    %4652 = vrot.lane.b32.xlu0 %v4651, 112
    %v4653 = vpop.permute.xlu0 %4652
    %vm4654 = vcmask 1048448
    %s4655 = scalar_lea.vmem [#allocation0], 24
    %4656 = vst.msk [vmem:[%s4655] sm:$0xff] %vm4654, %v4653
    %s4657 = scalar_lea.vmem [#allocation1], 455
    %v4658 = vld [vmem:[%s4657] ss:$8 sm:$0xf]
    %s4659 = scalar_lea.vmem [#allocation1], 455
    %v4660 = vld [vmem:[%s4659] ss:$8 sm:$0xf0]
    %vm4661 = vcmask 1047556
    %v4662 = vsel %vm4661, %v4660, %v4658
    %4663 = vrot.lane.b32.xlu0 %v4662, 112
    %v4664 = vpop.permute.xlu0 %4663
    %vm4665 = vcmask 1048448
    %s4666 = scalar_lea.vmem [#allocation0], 56
    %4667 = vst.msk [vmem:[%s4666] sm:$0xff] %vm4665, %v4664
    %s4668 = scalar_lea.vmem [#allocation1], 711
    %v4669 = vld [vmem:[%s4668] ss:$8 sm:$0xf]
    %s4670 = scalar_lea.vmem [#allocation1], 711
    %v4671 = vld [vmem:[%s4670] ss:$8 sm:$0xf0]
    %vm4672 = vcmask 1047556
    %v4673 = vsel %vm4672, %v4671, %v4669
    %4674 = vrot.lane.b32.xlu0 %v4673, 112
    %v4675 = vpop.permute.xlu0 %4674
    %vm4676 = vcmask 1048448
    %s4677 = scalar_lea.vmem [#allocation0], 88
    %4678 = vst.msk [vmem:[%s4677] sm:$0xff] %vm4676, %v4675
    %s4679 = scalar_lea.vmem [#allocation1], 967
    %v4680 = vld [vmem:[%s4679] ss:$8 sm:$0xf]
    %s4681 = scalar_lea.vmem [#allocation1], 967
    %v4682 = vld [vmem:[%s4681] ss:$8 sm:$0xf0]
    %vm4683 = vcmask 1047556
    %v4684 = vsel %vm4683, %v4682, %v4680
    %4685 = vrot.lane.b32.xlu0 %v4684, 112
    %v4686 = vpop.permute.xlu0 %4685
    %vm4687 = vcmask 1048448
    %s4688 = scalar_lea.vmem [#allocation0], 120
    %4689 = vst.msk [vmem:[%s4688] sm:$0xff] %vm4687, %v4686
    %s4690 = scalar_lea.vmem [#allocation1], 1223
    %v4691 = vld [vmem:[%s4690] ss:$8 sm:$0xf]
    %s4692 = scalar_lea.vmem [#allocation1], 1223
    %v4693 = vld [vmem:[%s4692] ss:$8 sm:$0xf0]
    %vm4694 = vcmask 1047556
    %v4695 = vsel %vm4694, %v4693, %v4691
    %4696 = vrot.lane.b32.xlu0 %v4695, 112
    %v4697 = vpop.permute.xlu0 %4696
    %vm4698 = vcmask 1048448
    %s4699 = scalar_lea.vmem [#allocation0], 152
    %4700 = vst.msk [vmem:[%s4699] sm:$0xff] %vm4698, %v4697
    %s4701 = scalar_lea.vmem [#allocation1], 1479
    %v4702 = vld [vmem:[%s4701] ss:$8 sm:$0xf]
    %s4703 = scalar_lea.vmem [#allocation1], 1479
    %v4704 = vld [vmem:[%s4703] ss:$8 sm:$0xf0]
    %vm4705 = vcmask 1047556
    %v4706 = vsel %vm4705, %v4704, %v4702
    %4707 = vrot.lane.b32.xlu0 %v4706, 112
    %v4708 = vpop.permute.xlu0 %4707
    %vm4709 = vcmask 1048448
    %s4710 = scalar_lea.vmem [#allocation0], 184
    %4711 = vst.msk [vmem:[%s4710] sm:$0xff] %vm4709, %v4708
    %s4712 = scalar_lea.vmem [#allocation1], 1735
    %v4713 = vld [vmem:[%s4712] ss:$8 sm:$0xf]
    %s4714 = scalar_lea.vmem [#allocation1], 1735
    %v4715 = vld [vmem:[%s4714] ss:$8 sm:$0xf0]
    %vm4716 = vcmask 1047556
    %v4717 = vsel %vm4716, %v4715, %v4713
    %4718 = vrot.lane.b32.xlu0 %v4717, 112
    %v4719 = vpop.permute.xlu0 %4718
    %vm4720 = vcmask 1048448
    %s4721 = scalar_lea.vmem [#allocation0], 216
    %4722 = vst.msk [vmem:[%s4721] sm:$0xff] %vm4720, %v4719
    %s4723 = scalar_lea.vmem [#allocation1], 1991
    %v4724 = vld [vmem:[%s4723] ss:$8 sm:$0xf]
    %s4725 = scalar_lea.vmem [#allocation1], 1991
    %v4726 = vld [vmem:[%s4725] ss:$8 sm:$0xf0]
    %vm4727 = vcmask 1047556
    %v4728 = vsel %vm4727, %v4726, %v4724
    %4729 = vrot.lane.b32.xlu0 %v4728, 112
    %v4730 = vpop.permute.xlu0 %4729
    %vm4731 = vcmask 1048448
    %s4732 = scalar_lea.vmem [#allocation0], 248
    %4733 = vst.msk [vmem:[%s4732] sm:$0xff] %vm4731, %v4730
    %s4734 = scalar_lea.vmem [#allocation1], 6
    %v4735 = vld [vmem:[%s4734] ss:$8 sm:$0xf]
    %s4736 = scalar_lea.vmem [#allocation1], 6
    %v4737 = vld [vmem:[%s4736] ss:$8 sm:$0xf0]
    %vm4738 = vcmask 1047556
    %v4739 = vsel %vm4738, %v4737, %v4735
    %4740 = vrot.lane.b32.xlu0 %v4739, 96
    %v4741 = vpop.permute.xlu0 %4740
    %vm4742 = vcmask 917248
    %4743 = vst.msk [vmem:[#allocation0] sm:$0xff] %vm4742, %v4741
    %s4744 = scalar_lea.vmem [#allocation1], 262
    %v4745 = vld [vmem:[%s4744] ss:$8 sm:$0xf]
    %s4746 = scalar_lea.vmem [#allocation1], 262
    %v4747 = vld [vmem:[%s4746] ss:$8 sm:$0xf0]
    %vm4748 = vcmask 1047556
    %v4749 = vsel %vm4748, %v4747, %v4745
    %4750 = vrot.lane.b32.xlu0 %v4749, 96
    %v4751 = vpop.permute.xlu0 %4750
    %vm4752 = vcmask 917248
    %s4753 = scalar_lea.vmem [#allocation0], 32
    %4754 = vst.msk [vmem:[%s4753] sm:$0xff] %vm4752, %v4751
    %s4755 = scalar_lea.vmem [#allocation1], 518
    %v4756 = vld [vmem:[%s4755] ss:$8 sm:$0xf]
    %s4757 = scalar_lea.vmem [#allocation1], 518
    %v4758 = vld [vmem:[%s4757] ss:$8 sm:$0xf0]
    %vm4759 = vcmask 1047556
    %v4760 = vsel %vm4759, %v4758, %v4756
    %4761 = vrot.lane.b32.xlu0 %v4760, 96
    %v4762 = vpop.permute.xlu0 %4761
    %vm4763 = vcmask 917248
    %s4764 = scalar_lea.vmem [#allocation0], 64
    %4765 = vst.msk [vmem:[%s4764] sm:$0xff] %vm4763, %v4762
    %s4766 = scalar_lea.vmem [#allocation1], 774
    %v4767 = vld [vmem:[%s4766] ss:$8 sm:$0xf]
    %s4768 = scalar_lea.vmem [#allocation1], 774
    %v4769 = vld [vmem:[%s4768] ss:$8 sm:$0xf0]
    %vm4770 = vcmask 1047556
    %v4771 = vsel %vm4770, %v4769, %v4767
    %4772 = vrot.lane.b32.xlu0 %v4771, 96
    %v4773 = vpop.permute.xlu0 %4772
    %vm4774 = vcmask 917248
    %s4775 = scalar_lea.vmem [#allocation0], 96
    %4776 = vst.msk [vmem:[%s4775] sm:$0xff] %vm4774, %v4773
    %s4777 = scalar_lea.vmem [#allocation1], 1030
    %v4778 = vld [vmem:[%s4777] ss:$8 sm:$0xf]
    %s4779 = scalar_lea.vmem [#allocation1], 1030
    %v4780 = vld [vmem:[%s4779] ss:$8 sm:$0xf0]
    %vm4781 = vcmask 1047556
    %v4782 = vsel %vm4781, %v4780, %v4778
    %4783 = vrot.lane.b32.xlu0 %v4782, 96
    %v4784 = vpop.permute.xlu0 %4783
    %vm4785 = vcmask 917248
    %s4786 = scalar_lea.vmem [#allocation0], 128
    %4787 = vst.msk [vmem:[%s4786] sm:$0xff] %vm4785, %v4784
    %s4788 = scalar_lea.vmem [#allocation1], 1286
    %v4789 = vld [vmem:[%s4788] ss:$8 sm:$0xf]
    %s4790 = scalar_lea.vmem [#allocation1], 1286
    %v4791 = vld [vmem:[%s4790] ss:$8 sm:$0xf0]
    %vm4792 = vcmask 1047556
    %v4793 = vsel %vm4792, %v4791, %v4789
    %4794 = vrot.lane.b32.xlu0 %v4793, 96
    %v4795 = vpop.permute.xlu0 %4794
    %vm4796 = vcmask 917248
    %s4797 = scalar_lea.vmem [#allocation0], 160
    %4798 = vst.msk [vmem:[%s4797] sm:$0xff] %vm4796, %v4795
    %s4799 = scalar_lea.vmem [#allocation1], 1542
    %v4800 = vld [vmem:[%s4799] ss:$8 sm:$0xf]
    %s4801 = scalar_lea.vmem [#allocation1], 1542
    %v4802 = vld [vmem:[%s4801] ss:$8 sm:$0xf0]
    %vm4803 = vcmask 1047556
    %v4804 = vsel %vm4803, %v4802, %v4800
    %4805 = vrot.lane.b32.xlu0 %v4804, 96
    %v4806 = vpop.permute.xlu0 %4805
    %vm4807 = vcmask 917248
    %s4808 = scalar_lea.vmem [#allocation0], 192
    %4809 = vst.msk [vmem:[%s4808] sm:$0xff] %vm4807, %v4806
    %s4810 = scalar_lea.vmem [#allocation1], 1798
    %v4811 = vld [vmem:[%s4810] ss:$8 sm:$0xf]
    %s4812 = scalar_lea.vmem [#allocation1], 1798
    %v4813 = vld [vmem:[%s4812] ss:$8 sm:$0xf0]
    %vm4814 = vcmask 1047556
    %v4815 = vsel %vm4814, %v4813, %v4811
    %4816 = vrot.lane.b32.xlu0 %v4815, 96
    %v4817 = vpop.permute.xlu0 %4816
    %vm4818 = vcmask 917248
    %s4819 = scalar_lea.vmem [#allocation0], 224
    %4820 = vst.msk [vmem:[%s4819] sm:$0xff] %vm4818, %v4817
    %s4821 = scalar_lea.vmem [#allocation1], 70
    %v4822 = vld [vmem:[%s4821] ss:$8 sm:$0xf]
    %s4823 = scalar_lea.vmem [#allocation1], 70
    %v4824 = vld [vmem:[%s4823] ss:$8 sm:$0xf0]
    %vm4825 = vcmask 1047556
    %v4826 = vsel %vm4825, %v4824, %v4822
    %4827 = vrot.lane.b32.xlu0 %v4826, 96
    %v4828 = vpop.permute.xlu0 %4827
    %vm4829 = vcmask 917248
    %s4830 = scalar_lea.vmem [#allocation0], 8
    %4831 = vst.msk [vmem:[%s4830] sm:$0xff] %vm4829, %v4828
    %s4832 = scalar_lea.vmem [#allocation1], 326
    %v4833 = vld [vmem:[%s4832] ss:$8 sm:$0xf]
    %s4834 = scalar_lea.vmem [#allocation1], 326
    %v4835 = vld [vmem:[%s4834] ss:$8 sm:$0xf0]
    %vm4836 = vcmask 1047556
    %v4837 = vsel %vm4836, %v4835, %v4833
    %4838 = vrot.lane.b32.xlu0 %v4837, 96
    %v4839 = vpop.permute.xlu0 %4838
    %vm4840 = vcmask 917248
    %s4841 = scalar_lea.vmem [#allocation0], 40
    %4842 = vst.msk [vmem:[%s4841] sm:$0xff] %vm4840, %v4839
    %s4843 = scalar_lea.vmem [#allocation1], 582
    %v4844 = vld [vmem:[%s4843] ss:$8 sm:$0xf]
    %s4845 = scalar_lea.vmem [#allocation1], 582
    %v4846 = vld [vmem:[%s4845] ss:$8 sm:$0xf0]
    %vm4847 = vcmask 1047556
    %v4848 = vsel %vm4847, %v4846, %v4844
    %4849 = vrot.lane.b32.xlu0 %v4848, 96
    %v4850 = vpop.permute.xlu0 %4849
    %vm4851 = vcmask 917248
    %s4852 = scalar_lea.vmem [#allocation0], 72
    %4853 = vst.msk [vmem:[%s4852] sm:$0xff] %vm4851, %v4850
    %s4854 = scalar_lea.vmem [#allocation1], 838
    %v4855 = vld [vmem:[%s4854] ss:$8 sm:$0xf]
    %s4856 = scalar_lea.vmem [#allocation1], 838
    %v4857 = vld [vmem:[%s4856] ss:$8 sm:$0xf0]
    %vm4858 = vcmask 1047556
    %v4859 = vsel %vm4858, %v4857, %v4855
    %4860 = vrot.lane.b32.xlu0 %v4859, 96
    %v4861 = vpop.permute.xlu0 %4860
    %vm4862 = vcmask 917248
    %s4863 = scalar_lea.vmem [#allocation0], 104
    %4864 = vst.msk [vmem:[%s4863] sm:$0xff] %vm4862, %v4861
    %s4865 = scalar_lea.vmem [#allocation1], 1094
    %v4866 = vld [vmem:[%s4865] ss:$8 sm:$0xf]
    %s4867 = scalar_lea.vmem [#allocation1], 1094
    %v4868 = vld [vmem:[%s4867] ss:$8 sm:$0xf0]
    %vm4869 = vcmask 1047556
    %v4870 = vsel %vm4869, %v4868, %v4866
    %4871 = vrot.lane.b32.xlu0 %v4870, 96
    %v4872 = vpop.permute.xlu0 %4871
    %vm4873 = vcmask 917248
    %s4874 = scalar_lea.vmem [#allocation0], 136
    %4875 = vst.msk [vmem:[%s4874] sm:$0xff] %vm4873, %v4872
    %s4876 = scalar_lea.vmem [#allocation1], 1350
    %v4877 = vld [vmem:[%s4876] ss:$8 sm:$0xf]
    %s4878 = scalar_lea.vmem [#allocation1], 1350
    %v4879 = vld [vmem:[%s4878] ss:$8 sm:$0xf0]
    %vm4880 = vcmask 1047556
    %v4881 = vsel %vm4880, %v4879, %v4877
    %4882 = vrot.lane.b32.xlu0 %v4881, 96
    %v4883 = vpop.permute.xlu0 %4882
    %vm4884 = vcmask 917248
    %s4885 = scalar_lea.vmem [#allocation0], 168
    %4886 = vst.msk [vmem:[%s4885] sm:$0xff] %vm4884, %v4883
    %s4887 = scalar_lea.vmem [#allocation1], 1606
    %v4888 = vld [vmem:[%s4887] ss:$8 sm:$0xf]
    %s4889 = scalar_lea.vmem [#allocation1], 1606
    %v4890 = vld [vmem:[%s4889] ss:$8 sm:$0xf0]
    %vm4891 = vcmask 1047556
    %v4892 = vsel %vm4891, %v4890, %v4888
    %4893 = vrot.lane.b32.xlu0 %v4892, 96
    %v4894 = vpop.permute.xlu0 %4893
    %vm4895 = vcmask 917248
    %s4896 = scalar_lea.vmem [#allocation0], 200
    %4897 = vst.msk [vmem:[%s4896] sm:$0xff] %vm4895, %v4894
    %s4898 = scalar_lea.vmem [#allocation1], 1862
    %v4899 = vld [vmem:[%s4898] ss:$8 sm:$0xf]
    %s4900 = scalar_lea.vmem [#allocation1], 1862
    %v4901 = vld [vmem:[%s4900] ss:$8 sm:$0xf0]
    %vm4902 = vcmask 1047556
    %v4903 = vsel %vm4902, %v4901, %v4899
    %4904 = vrot.lane.b32.xlu0 %v4903, 96
    %v4905 = vpop.permute.xlu0 %4904
    %vm4906 = vcmask 917248
    %s4907 = scalar_lea.vmem [#allocation0], 232
    %4908 = vst.msk [vmem:[%s4907] sm:$0xff] %vm4906, %v4905
    %s4909 = scalar_lea.vmem [#allocation1], 134
    %v4910 = vld [vmem:[%s4909] ss:$8 sm:$0xf]
    %s4911 = scalar_lea.vmem [#allocation1], 134
    %v4912 = vld [vmem:[%s4911] ss:$8 sm:$0xf0]
    %vm4913 = vcmask 1047556
    %v4914 = vsel %vm4913, %v4912, %v4910
    %4915 = vrot.lane.b32.xlu0 %v4914, 96
    %v4916 = vpop.permute.xlu0 %4915
    %vm4917 = vcmask 917248
    %s4918 = scalar_lea.vmem [#allocation0], 16
    %4919 = vst.msk [vmem:[%s4918] sm:$0xff] %vm4917, %v4916
    %s4920 = scalar_lea.vmem [#allocation1], 390
    %v4921 = vld [vmem:[%s4920] ss:$8 sm:$0xf]
    %s4922 = scalar_lea.vmem [#allocation1], 390
    %v4923 = vld [vmem:[%s4922] ss:$8 sm:$0xf0]
    %vm4924 = vcmask 1047556
    %v4925 = vsel %vm4924, %v4923, %v4921
    %4926 = vrot.lane.b32.xlu0 %v4925, 96
    %v4927 = vpop.permute.xlu0 %4926
    %vm4928 = vcmask 917248
    %s4929 = scalar_lea.vmem [#allocation0], 48
    %4930 = vst.msk [vmem:[%s4929] sm:$0xff] %vm4928, %v4927
    %s4931 = scalar_lea.vmem [#allocation1], 646
    %v4932 = vld [vmem:[%s4931] ss:$8 sm:$0xf]
    %s4933 = scalar_lea.vmem [#allocation1], 646
    %v4934 = vld [vmem:[%s4933] ss:$8 sm:$0xf0]
    %vm4935 = vcmask 1047556
    %v4936 = vsel %vm4935, %v4934, %v4932
    %4937 = vrot.lane.b32.xlu0 %v4936, 96
    %v4938 = vpop.permute.xlu0 %4937
    %vm4939 = vcmask 917248
    %s4940 = scalar_lea.vmem [#allocation0], 80
    %4941 = vst.msk [vmem:[%s4940] sm:$0xff] %vm4939, %v4938
    %s4942 = scalar_lea.vmem [#allocation1], 902
    %v4943 = vld [vmem:[%s4942] ss:$8 sm:$0xf]
    %s4944 = scalar_lea.vmem [#allocation1], 902
    %v4945 = vld [vmem:[%s4944] ss:$8 sm:$0xf0]
    %vm4946 = vcmask 1047556
    %v4947 = vsel %vm4946, %v4945, %v4943
    %4948 = vrot.lane.b32.xlu0 %v4947, 96
    %v4949 = vpop.permute.xlu0 %4948
    %vm4950 = vcmask 917248
    %s4951 = scalar_lea.vmem [#allocation0], 112
    %4952 = vst.msk [vmem:[%s4951] sm:$0xff] %vm4950, %v4949
    %s4953 = scalar_lea.vmem [#allocation1], 1158
    %v4954 = vld [vmem:[%s4953] ss:$8 sm:$0xf]
    %s4955 = scalar_lea.vmem [#allocation1], 1158
    %v4956 = vld [vmem:[%s4955] ss:$8 sm:$0xf0]
    %vm4957 = vcmask 1047556
    %v4958 = vsel %vm4957, %v4956, %v4954
    %4959 = vrot.lane.b32.xlu0 %v4958, 96
    %v4960 = vpop.permute.xlu0 %4959
    %vm4961 = vcmask 917248
    %s4962 = scalar_lea.vmem [#allocation0], 144
    %4963 = vst.msk [vmem:[%s4962] sm:$0xff] %vm4961, %v4960
    %s4964 = scalar_lea.vmem [#allocation1], 1414
    %v4965 = vld [vmem:[%s4964] ss:$8 sm:$0xf]
    %s4966 = scalar_lea.vmem [#allocation1], 1414
    %v4967 = vld [vmem:[%s4966] ss:$8 sm:$0xf0]
    %vm4968 = vcmask 1047556
    %v4969 = vsel %vm4968, %v4967, %v4965
    %4970 = vrot.lane.b32.xlu0 %v4969, 96
    %v4971 = vpop.permute.xlu0 %4970
    %vm4972 = vcmask 917248
    %s4973 = scalar_lea.vmem [#allocation0], 176
    %4974 = vst.msk [vmem:[%s4973] sm:$0xff] %vm4972, %v4971
    %s4975 = scalar_lea.vmem [#allocation1], 1670
    %v4976 = vld [vmem:[%s4975] ss:$8 sm:$0xf]
    %s4977 = scalar_lea.vmem [#allocation1], 1670
    %v4978 = vld [vmem:[%s4977] ss:$8 sm:$0xf0]
    %vm4979 = vcmask 1047556
    %v4980 = vsel %vm4979, %v4978, %v4976
    %4981 = vrot.lane.b32.xlu0 %v4980, 96
    %v4982 = vpop.permute.xlu0 %4981
    %vm4983 = vcmask 917248
    %s4984 = scalar_lea.vmem [#allocation0], 208
    %4985 = vst.msk [vmem:[%s4984] sm:$0xff] %vm4983, %v4982
    %s4986 = scalar_lea.vmem [#allocation1], 1926
    %v4987 = vld [vmem:[%s4986] ss:$8 sm:$0xf]
    %s4988 = scalar_lea.vmem [#allocation1], 1926
    %v4989 = vld [vmem:[%s4988] ss:$8 sm:$0xf0]
    %vm4990 = vcmask 1047556
    %v4991 = vsel %vm4990, %v4989, %v4987
    %4992 = vrot.lane.b32.xlu0 %v4991, 96
    %v4993 = vpop.permute.xlu0 %4992
    %vm4994 = vcmask 917248
    %s4995 = scalar_lea.vmem [#allocation0], 240
    %4996 = vst.msk [vmem:[%s4995] sm:$0xff] %vm4994, %v4993
    %s4997 = scalar_lea.vmem [#allocation1], 198
    %v4998 = vld [vmem:[%s4997] ss:$8 sm:$0xf]
    %s4999 = scalar_lea.vmem [#allocation1], 198
    %v5000 = vld [vmem:[%s4999] ss:$8 sm:$0xf0]
    %vm5001 = vcmask 1047556
    %v5002 = vsel %vm5001, %v5000, %v4998
    %5003 = vrot.lane.b32.xlu0 %v5002, 96
    %v5004 = vpop.permute.xlu0 %5003
    %vm5005 = vcmask 917248
    %s5006 = scalar_lea.vmem [#allocation0], 24
    %5007 = vst.msk [vmem:[%s5006] sm:$0xff] %vm5005, %v5004
    %s5008 = scalar_lea.vmem [#allocation1], 454
    %v5009 = vld [vmem:[%s5008] ss:$8 sm:$0xf]
    %s5010 = scalar_lea.vmem [#allocation1], 454
    %v5011 = vld [vmem:[%s5010] ss:$8 sm:$0xf0]
    %vm5012 = vcmask 1047556
    %v5013 = vsel %vm5012, %v5011, %v5009
    %5014 = vrot.lane.b32.xlu0 %v5013, 96
    %v5015 = vpop.permute.xlu0 %5014
    %vm5016 = vcmask 917248
    %s5017 = scalar_lea.vmem [#allocation0], 56
    %5018 = vst.msk [vmem:[%s5017] sm:$0xff] %vm5016, %v5015
    %s5019 = scalar_lea.vmem [#allocation1], 710
    %v5020 = vld [vmem:[%s5019] ss:$8 sm:$0xf]
    %s5021 = scalar_lea.vmem [#allocation1], 710
    %v5022 = vld [vmem:[%s5021] ss:$8 sm:$0xf0]
    %vm5023 = vcmask 1047556
    %v5024 = vsel %vm5023, %v5022, %v5020
    %5025 = vrot.lane.b32.xlu0 %v5024, 96
    %v5026 = vpop.permute.xlu0 %5025
    %vm5027 = vcmask 917248
    %s5028 = scalar_lea.vmem [#allocation0], 88
    %5029 = vst.msk [vmem:[%s5028] sm:$0xff] %vm5027, %v5026
    %s5030 = scalar_lea.vmem [#allocation1], 966
    %v5031 = vld [vmem:[%s5030] ss:$8 sm:$0xf]
    %s5032 = scalar_lea.vmem [#allocation1], 966
    %v5033 = vld [vmem:[%s5032] ss:$8 sm:$0xf0]
    %vm5034 = vcmask 1047556
    %v5035 = vsel %vm5034, %v5033, %v5031
    %5036 = vrot.lane.b32.xlu0 %v5035, 96
    %v5037 = vpop.permute.xlu0 %5036
    %vm5038 = vcmask 917248
    %s5039 = scalar_lea.vmem [#allocation0], 120
    %5040 = vst.msk [vmem:[%s5039] sm:$0xff] %vm5038, %v5037
    %s5041 = scalar_lea.vmem [#allocation1], 1222
    %v5042 = vld [vmem:[%s5041] ss:$8 sm:$0xf]
    %s5043 = scalar_lea.vmem [#allocation1], 1222
    %v5044 = vld [vmem:[%s5043] ss:$8 sm:$0xf0]
    %vm5045 = vcmask 1047556
    %v5046 = vsel %vm5045, %v5044, %v5042
    %5047 = vrot.lane.b32.xlu0 %v5046, 96
    %v5048 = vpop.permute.xlu0 %5047
    %vm5049 = vcmask 917248
    %s5050 = scalar_lea.vmem [#allocation0], 152
    %5051 = vst.msk [vmem:[%s5050] sm:$0xff] %vm5049, %v5048
    %s5052 = scalar_lea.vmem [#allocation1], 1478
    %v5053 = vld [vmem:[%s5052] ss:$8 sm:$0xf]
    %s5054 = scalar_lea.vmem [#allocation1], 1478
    %v5055 = vld [vmem:[%s5054] ss:$8 sm:$0xf0]
    %vm5056 = vcmask 1047556
    %v5057 = vsel %vm5056, %v5055, %v5053
    %5058 = vrot.lane.b32.xlu0 %v5057, 96
    %v5059 = vpop.permute.xlu0 %5058
    %vm5060 = vcmask 917248
    %s5061 = scalar_lea.vmem [#allocation0], 184
    %5062 = vst.msk [vmem:[%s5061] sm:$0xff] %vm5060, %v5059
    %s5063 = scalar_lea.vmem [#allocation1], 1734
    %v5064 = vld [vmem:[%s5063] ss:$8 sm:$0xf]
    %s5065 = scalar_lea.vmem [#allocation1], 1734
    %v5066 = vld [vmem:[%s5065] ss:$8 sm:$0xf0]
    %vm5067 = vcmask 1047556
    %v5068 = vsel %vm5067, %v5066, %v5064
    %5069 = vrot.lane.b32.xlu0 %v5068, 96
    %v5070 = vpop.permute.xlu0 %5069
    %vm5071 = vcmask 917248
    %s5072 = scalar_lea.vmem [#allocation0], 216
    %5073 = vst.msk [vmem:[%s5072] sm:$0xff] %vm5071, %v5070
    %s5074 = scalar_lea.vmem [#allocation1], 1990
    %v5075 = vld [vmem:[%s5074] ss:$8 sm:$0xf]
    %s5076 = scalar_lea.vmem [#allocation1], 1990
    %v5077 = vld [vmem:[%s5076] ss:$8 sm:$0xf0]
    %vm5078 = vcmask 1047556
    %v5079 = vsel %vm5078, %v5077, %v5075
    %5080 = vrot.lane.b32.xlu0 %v5079, 96
    %v5081 = vpop.permute.xlu0 %5080
    %vm5082 = vcmask 917248
    %s5083 = scalar_lea.vmem [#allocation0], 248
    %5084 = vst.msk [vmem:[%s5083] sm:$0xff] %vm5082, %v5081
    %s5085 = scalar_lea.vmem [#allocation1], 5
    %v5086 = vld [vmem:[%s5085] ss:$8 sm:$0xf]
    %s5087 = scalar_lea.vmem [#allocation1], 5
    %v5088 = vld [vmem:[%s5087] ss:$8 sm:$0xf0]
    %vm5089 = vcmask 1047556
    %v5090 = vsel %vm5089, %v5088, %v5086
    %5091 = vrot.lane.b32.xlu0 %v5090, 80
    %v5092 = vpop.permute.xlu0 %5091
    %vm5093 = vcmask 786048
    %5094 = vst.msk [vmem:[#allocation0] sm:$0xff] %vm5093, %v5092
    %s5095 = scalar_lea.vmem [#allocation1], 261
    %v5096 = vld [vmem:[%s5095] ss:$8 sm:$0xf]
    %s5097 = scalar_lea.vmem [#allocation1], 261
    %v5098 = vld [vmem:[%s5097] ss:$8 sm:$0xf0]
    %vm5099 = vcmask 1047556
    %v5100 = vsel %vm5099, %v5098, %v5096
    %5101 = vrot.lane.b32.xlu0 %v5100, 80
    %v5102 = vpop.permute.xlu0 %5101
    %vm5103 = vcmask 786048
    %s5104 = scalar_lea.vmem [#allocation0], 32
    %5105 = vst.msk [vmem:[%s5104] sm:$0xff] %vm5103, %v5102
    %s5106 = scalar_lea.vmem [#allocation1], 517
    %v5107 = vld [vmem:[%s5106] ss:$8 sm:$0xf]
    %s5108 = scalar_lea.vmem [#allocation1], 517
    %v5109 = vld [vmem:[%s5108] ss:$8 sm:$0xf0]
    %vm5110 = vcmask 1047556
    %v5111 = vsel %vm5110, %v5109, %v5107
    %5112 = vrot.lane.b32.xlu0 %v5111, 80
    %v5113 = vpop.permute.xlu0 %5112
    %vm5114 = vcmask 786048
    %s5115 = scalar_lea.vmem [#allocation0], 64
    %5116 = vst.msk [vmem:[%s5115] sm:$0xff] %vm5114, %v5113
    %s5117 = scalar_lea.vmem [#allocation1], 773
    %v5118 = vld [vmem:[%s5117] ss:$8 sm:$0xf]
    %s5119 = scalar_lea.vmem [#allocation1], 773
    %v5120 = vld [vmem:[%s5119] ss:$8 sm:$0xf0]
    %vm5121 = vcmask 1047556
    %v5122 = vsel %vm5121, %v5120, %v5118
    %5123 = vrot.lane.b32.xlu0 %v5122, 80
    %v5124 = vpop.permute.xlu0 %5123
    %vm5125 = vcmask 786048
    %s5126 = scalar_lea.vmem [#allocation0], 96
    %5127 = vst.msk [vmem:[%s5126] sm:$0xff] %vm5125, %v5124
    %s5128 = scalar_lea.vmem [#allocation1], 1029
    %v5129 = vld [vmem:[%s5128] ss:$8 sm:$0xf]
    %s5130 = scalar_lea.vmem [#allocation1], 1029
    %v5131 = vld [vmem:[%s5130] ss:$8 sm:$0xf0]
    %vm5132 = vcmask 1047556
    %v5133 = vsel %vm5132, %v5131, %v5129
    %5134 = vrot.lane.b32.xlu0 %v5133, 80
    %v5135 = vpop.permute.xlu0 %5134
    %vm5136 = vcmask 786048
    %s5137 = scalar_lea.vmem [#allocation0], 128
    %5138 = vst.msk [vmem:[%s5137] sm:$0xff] %vm5136, %v5135
    %s5139 = scalar_lea.vmem [#allocation1], 1285
    %v5140 = vld [vmem:[%s5139] ss:$8 sm:$0xf]
    %s5141 = scalar_lea.vmem [#allocation1], 1285
    %v5142 = vld [vmem:[%s5141] ss:$8 sm:$0xf0]
    %vm5143 = vcmask 1047556
    %v5144 = vsel %vm5143, %v5142, %v5140
    %5145 = vrot.lane.b32.xlu0 %v5144, 80
    %v5146 = vpop.permute.xlu0 %5145
    %vm5147 = vcmask 786048
    %s5148 = scalar_lea.vmem [#allocation0], 160
    %5149 = vst.msk [vmem:[%s5148] sm:$0xff] %vm5147, %v5146
    %s5150 = scalar_lea.vmem [#allocation1], 1541
    %v5151 = vld [vmem:[%s5150] ss:$8 sm:$0xf]
    %s5152 = scalar_lea.vmem [#allocation1], 1541
    %v5153 = vld [vmem:[%s5152] ss:$8 sm:$0xf0]
    %vm5154 = vcmask 1047556
    %v5155 = vsel %vm5154, %v5153, %v5151
    %5156 = vrot.lane.b32.xlu0 %v5155, 80
    %v5157 = vpop.permute.xlu0 %5156
    %vm5158 = vcmask 786048
    %s5159 = scalar_lea.vmem [#allocation0], 192
    %5160 = vst.msk [vmem:[%s5159] sm:$0xff] %vm5158, %v5157
    %s5161 = scalar_lea.vmem [#allocation1], 1797
    %v5162 = vld [vmem:[%s5161] ss:$8 sm:$0xf]
    %s5163 = scalar_lea.vmem [#allocation1], 1797
    %v5164 = vld [vmem:[%s5163] ss:$8 sm:$0xf0]
    %vm5165 = vcmask 1047556
    %v5166 = vsel %vm5165, %v5164, %v5162
    %5167 = vrot.lane.b32.xlu0 %v5166, 80
    %v5168 = vpop.permute.xlu0 %5167
    %vm5169 = vcmask 786048
    %s5170 = scalar_lea.vmem [#allocation0], 224
    %5171 = vst.msk [vmem:[%s5170] sm:$0xff] %vm5169, %v5168
    %s5172 = scalar_lea.vmem [#allocation1], 69
    %v5173 = vld [vmem:[%s5172] ss:$8 sm:$0xf]
    %s5174 = scalar_lea.vmem [#allocation1], 69
    %v5175 = vld [vmem:[%s5174] ss:$8 sm:$0xf0]
    %vm5176 = vcmask 1047556
    %v5177 = vsel %vm5176, %v5175, %v5173
    %5178 = vrot.lane.b32.xlu0 %v5177, 80
    %v5179 = vpop.permute.xlu0 %5178
    %vm5180 = vcmask 786048
    %s5181 = scalar_lea.vmem [#allocation0], 8
    %5182 = vst.msk [vmem:[%s5181] sm:$0xff] %vm5180, %v5179
    %s5183 = scalar_lea.vmem [#allocation1], 325
    %v5184 = vld [vmem:[%s5183] ss:$8 sm:$0xf]
    %s5185 = scalar_lea.vmem [#allocation1], 325
    %v5186 = vld [vmem:[%s5185] ss:$8 sm:$0xf0]
    %vm5187 = vcmask 1047556
    %v5188 = vsel %vm5187, %v5186, %v5184
    %5189 = vrot.lane.b32.xlu0 %v5188, 80
    %v5190 = vpop.permute.xlu0 %5189
    %vm5191 = vcmask 786048
    %s5192 = scalar_lea.vmem [#allocation0], 40
    %5193 = vst.msk [vmem:[%s5192] sm:$0xff] %vm5191, %v5190
    %s5194 = scalar_lea.vmem [#allocation1], 581
    %v5195 = vld [vmem:[%s5194] ss:$8 sm:$0xf]
    %s5196 = scalar_lea.vmem [#allocation1], 581
    %v5197 = vld [vmem:[%s5196] ss:$8 sm:$0xf0]
    %vm5198 = vcmask 1047556
    %v5199 = vsel %vm5198, %v5197, %v5195
    %5200 = vrot.lane.b32.xlu0 %v5199, 80
    %v5201 = vpop.permute.xlu0 %5200
    %vm5202 = vcmask 786048
    %s5203 = scalar_lea.vmem [#allocation0], 72
    %5204 = vst.msk [vmem:[%s5203] sm:$0xff] %vm5202, %v5201
    %s5205 = scalar_lea.vmem [#allocation1], 837
    %v5206 = vld [vmem:[%s5205] ss:$8 sm:$0xf]
    %s5207 = scalar_lea.vmem [#allocation1], 837
    %v5208 = vld [vmem:[%s5207] ss:$8 sm:$0xf0]
    %vm5209 = vcmask 1047556
    %v5210 = vsel %vm5209, %v5208, %v5206
    %5211 = vrot.lane.b32.xlu0 %v5210, 80
    %v5212 = vpop.permute.xlu0 %5211
    %vm5213 = vcmask 786048
    %s5214 = scalar_lea.vmem [#allocation0], 104
    %5215 = vst.msk [vmem:[%s5214] sm:$0xff] %vm5213, %v5212
    %s5216 = scalar_lea.vmem [#allocation1], 1093
    %v5217 = vld [vmem:[%s5216] ss:$8 sm:$0xf]
    %s5218 = scalar_lea.vmem [#allocation1], 1093
    %v5219 = vld [vmem:[%s5218] ss:$8 sm:$0xf0]
    %vm5220 = vcmask 1047556
    %v5221 = vsel %vm5220, %v5219, %v5217
    %5222 = vrot.lane.b32.xlu0 %v5221, 80
    %v5223 = vpop.permute.xlu0 %5222
    %vm5224 = vcmask 786048
    %s5225 = scalar_lea.vmem [#allocation0], 136
    %5226 = vst.msk [vmem:[%s5225] sm:$0xff] %vm5224, %v5223
    %s5227 = scalar_lea.vmem [#allocation1], 1349
    %v5228 = vld [vmem:[%s5227] ss:$8 sm:$0xf]
    %s5229 = scalar_lea.vmem [#allocation1], 1349
    %v5230 = vld [vmem:[%s5229] ss:$8 sm:$0xf0]
    %vm5231 = vcmask 1047556
    %v5232 = vsel %vm5231, %v5230, %v5228
    %5233 = vrot.lane.b32.xlu0 %v5232, 80
    %v5234 = vpop.permute.xlu0 %5233
    %vm5235 = vcmask 786048
    %s5236 = scalar_lea.vmem [#allocation0], 168
    %5237 = vst.msk [vmem:[%s5236] sm:$0xff] %vm5235, %v5234
    %s5238 = scalar_lea.vmem [#allocation1], 1605
    %v5239 = vld [vmem:[%s5238] ss:$8 sm:$0xf]
    %s5240 = scalar_lea.vmem [#allocation1], 1605
    %v5241 = vld [vmem:[%s5240] ss:$8 sm:$0xf0]
    %vm5242 = vcmask 1047556
    %v5243 = vsel %vm5242, %v5241, %v5239
    %5244 = vrot.lane.b32.xlu0 %v5243, 80
    %v5245 = vpop.permute.xlu0 %5244
    %vm5246 = vcmask 786048
    %s5247 = scalar_lea.vmem [#allocation0], 200
    %5248 = vst.msk [vmem:[%s5247] sm:$0xff] %vm5246, %v5245
    %s5249 = scalar_lea.vmem [#allocation1], 1861
    %v5250 = vld [vmem:[%s5249] ss:$8 sm:$0xf]
    %s5251 = scalar_lea.vmem [#allocation1], 1861
    %v5252 = vld [vmem:[%s5251] ss:$8 sm:$0xf0]
    %vm5253 = vcmask 1047556
    %v5254 = vsel %vm5253, %v5252, %v5250
    %5255 = vrot.lane.b32.xlu0 %v5254, 80
    %v5256 = vpop.permute.xlu0 %5255
    %vm5257 = vcmask 786048
    %s5258 = scalar_lea.vmem [#allocation0], 232
    %5259 = vst.msk [vmem:[%s5258] sm:$0xff] %vm5257, %v5256
    %s5260 = scalar_lea.vmem [#allocation1], 133
    %v5261 = vld [vmem:[%s5260] ss:$8 sm:$0xf]
    %s5262 = scalar_lea.vmem [#allocation1], 133
    %v5263 = vld [vmem:[%s5262] ss:$8 sm:$0xf0]
    %vm5264 = vcmask 1047556
    %v5265 = vsel %vm5264, %v5263, %v5261
    %5266 = vrot.lane.b32.xlu0 %v5265, 80
    %v5267 = vpop.permute.xlu0 %5266
    %vm5268 = vcmask 786048
    %s5269 = scalar_lea.vmem [#allocation0], 16
    %5270 = vst.msk [vmem:[%s5269] sm:$0xff] %vm5268, %v5267
    %s5271 = scalar_lea.vmem [#allocation1], 389
    %v5272 = vld [vmem:[%s5271] ss:$8 sm:$0xf]
    %s5273 = scalar_lea.vmem [#allocation1], 389
    %v5274 = vld [vmem:[%s5273] ss:$8 sm:$0xf0]
    %vm5275 = vcmask 1047556
    %v5276 = vsel %vm5275, %v5274, %v5272
    %5277 = vrot.lane.b32.xlu0 %v5276, 80
    %v5278 = vpop.permute.xlu0 %5277
    %vm5279 = vcmask 786048
    %s5280 = scalar_lea.vmem [#allocation0], 48
    %5281 = vst.msk [vmem:[%s5280] sm:$0xff] %vm5279, %v5278
    %s5282 = scalar_lea.vmem [#allocation1], 645
    %v5283 = vld [vmem:[%s5282] ss:$8 sm:$0xf]
    %s5284 = scalar_lea.vmem [#allocation1], 645
    %v5285 = vld [vmem:[%s5284] ss:$8 sm:$0xf0]
    %vm5286 = vcmask 1047556
    %v5287 = vsel %vm5286, %v5285, %v5283
    %5288 = vrot.lane.b32.xlu0 %v5287, 80
    %v5289 = vpop.permute.xlu0 %5288
    %vm5290 = vcmask 786048
    %s5291 = scalar_lea.vmem [#allocation0], 80
    %5292 = vst.msk [vmem:[%s5291] sm:$0xff] %vm5290, %v5289
    %s5293 = scalar_lea.vmem [#allocation1], 901
    %v5294 = vld [vmem:[%s5293] ss:$8 sm:$0xf]
    %s5295 = scalar_lea.vmem [#allocation1], 901
    %v5296 = vld [vmem:[%s5295] ss:$8 sm:$0xf0]
    %vm5297 = vcmask 1047556
    %v5298 = vsel %vm5297, %v5296, %v5294
    %5299 = vrot.lane.b32.xlu0 %v5298, 80
    %v5300 = vpop.permute.xlu0 %5299
    %vm5301 = vcmask 786048
    %s5302 = scalar_lea.vmem [#allocation0], 112
    %5303 = vst.msk [vmem:[%s5302] sm:$0xff] %vm5301, %v5300
    %s5304 = scalar_lea.vmem [#allocation1], 1157
    %v5305 = vld [vmem:[%s5304] ss:$8 sm:$0xf]
    %s5306 = scalar_lea.vmem [#allocation1], 1157
    %v5307 = vld [vmem:[%s5306] ss:$8 sm:$0xf0]
    %vm5308 = vcmask 1047556
    %v5309 = vsel %vm5308, %v5307, %v5305
    %5310 = vrot.lane.b32.xlu0 %v5309, 80
    %v5311 = vpop.permute.xlu0 %5310
    %vm5312 = vcmask 786048
    %s5313 = scalar_lea.vmem [#allocation0], 144
    %5314 = vst.msk [vmem:[%s5313] sm:$0xff] %vm5312, %v5311
    %s5315 = scalar_lea.vmem [#allocation1], 1413
    %v5316 = vld [vmem:[%s5315] ss:$8 sm:$0xf]
    %s5317 = scalar_lea.vmem [#allocation1], 1413
    %v5318 = vld [vmem:[%s5317] ss:$8 sm:$0xf0]
    %vm5319 = vcmask 1047556
    %v5320 = vsel %vm5319, %v5318, %v5316
    %5321 = vrot.lane.b32.xlu0 %v5320, 80
    %v5322 = vpop.permute.xlu0 %5321
    %vm5323 = vcmask 786048
    %s5324 = scalar_lea.vmem [#allocation0], 176
    %5325 = vst.msk [vmem:[%s5324] sm:$0xff] %vm5323, %v5322
    %s5326 = scalar_lea.vmem [#allocation1], 1669
    %v5327 = vld [vmem:[%s5326] ss:$8 sm:$0xf]
    %s5328 = scalar_lea.vmem [#allocation1], 1669
    %v5329 = vld [vmem:[%s5328] ss:$8 sm:$0xf0]
    %vm5330 = vcmask 1047556
    %v5331 = vsel %vm5330, %v5329, %v5327
    %5332 = vrot.lane.b32.xlu0 %v5331, 80
    %v5333 = vpop.permute.xlu0 %5332
    %vm5334 = vcmask 786048
    %s5335 = scalar_lea.vmem [#allocation0], 208
    %5336 = vst.msk [vmem:[%s5335] sm:$0xff] %vm5334, %v5333
    %s5337 = scalar_lea.vmem [#allocation1], 1925
    %v5338 = vld [vmem:[%s5337] ss:$8 sm:$0xf]
    %s5339 = scalar_lea.vmem [#allocation1], 1925
    %v5340 = vld [vmem:[%s5339] ss:$8 sm:$0xf0]
    %vm5341 = vcmask 1047556
    %v5342 = vsel %vm5341, %v5340, %v5338
    %5343 = vrot.lane.b32.xlu0 %v5342, 80
    %v5344 = vpop.permute.xlu0 %5343
    %vm5345 = vcmask 786048
    %s5346 = scalar_lea.vmem [#allocation0], 240
    %5347 = vst.msk [vmem:[%s5346] sm:$0xff] %vm5345, %v5344
    %s5348 = scalar_lea.vmem [#allocation1], 197
    %v5349 = vld [vmem:[%s5348] ss:$8 sm:$0xf]
    %s5350 = scalar_lea.vmem [#allocation1], 197
    %v5351 = vld [vmem:[%s5350] ss:$8 sm:$0xf0]
    %vm5352 = vcmask 1047556
    %v5353 = vsel %vm5352, %v5351, %v5349
    %5354 = vrot.lane.b32.xlu0 %v5353, 80
    %v5355 = vpop.permute.xlu0 %5354
    %vm5356 = vcmask 786048
    %s5357 = scalar_lea.vmem [#allocation0], 24
    %5358 = vst.msk [vmem:[%s5357] sm:$0xff] %vm5356, %v5355
    %s5359 = scalar_lea.vmem [#allocation1], 453
    %v5360 = vld [vmem:[%s5359] ss:$8 sm:$0xf]
    %s5361 = scalar_lea.vmem [#allocation1], 453
    %v5362 = vld [vmem:[%s5361] ss:$8 sm:$0xf0]
    %vm5363 = vcmask 1047556
    %v5364 = vsel %vm5363, %v5362, %v5360
    %5365 = vrot.lane.b32.xlu0 %v5364, 80
    %v5366 = vpop.permute.xlu0 %5365
    %vm5367 = vcmask 786048
    %s5368 = scalar_lea.vmem [#allocation0], 56
    %5369 = vst.msk [vmem:[%s5368] sm:$0xff] %vm5367, %v5366
    %s5370 = scalar_lea.vmem [#allocation1], 709
    %v5371 = vld [vmem:[%s5370] ss:$8 sm:$0xf]
    %s5372 = scalar_lea.vmem [#allocation1], 709
    %v5373 = vld [vmem:[%s5372] ss:$8 sm:$0xf0]
    %vm5374 = vcmask 1047556
    %v5375 = vsel %vm5374, %v5373, %v5371
    %5376 = vrot.lane.b32.xlu0 %v5375, 80
    %v5377 = vpop.permute.xlu0 %5376
    %vm5378 = vcmask 786048
    %s5379 = scalar_lea.vmem [#allocation0], 88
    %5380 = vst.msk [vmem:[%s5379] sm:$0xff] %vm5378, %v5377
    %s5381 = scalar_lea.vmem [#allocation1], 965
    %v5382 = vld [vmem:[%s5381] ss:$8 sm:$0xf]
    %s5383 = scalar_lea.vmem [#allocation1], 965
    %v5384 = vld [vmem:[%s5383] ss:$8 sm:$0xf0]
    %vm5385 = vcmask 1047556
    %v5386 = vsel %vm5385, %v5384, %v5382
    %5387 = vrot.lane.b32.xlu0 %v5386, 80
    %v5388 = vpop.permute.xlu0 %5387
    %vm5389 = vcmask 786048
    %s5390 = scalar_lea.vmem [#allocation0], 120
    %5391 = vst.msk [vmem:[%s5390] sm:$0xff] %vm5389, %v5388
    %s5392 = scalar_lea.vmem [#allocation1], 1221
    %v5393 = vld [vmem:[%s5392] ss:$8 sm:$0xf]
    %s5394 = scalar_lea.vmem [#allocation1], 1221
    %v5395 = vld [vmem:[%s5394] ss:$8 sm:$0xf0]
    %vm5396 = vcmask 1047556
    %v5397 = vsel %vm5396, %v5395, %v5393
    %5398 = vrot.lane.b32.xlu0 %v5397, 80
    %v5399 = vpop.permute.xlu0 %5398
    %vm5400 = vcmask 786048
    %s5401 = scalar_lea.vmem [#allocation0], 152
    %5402 = vst.msk [vmem:[%s5401] sm:$0xff] %vm5400, %v5399
    %s5403 = scalar_lea.vmem [#allocation1], 1477
    %v5404 = vld [vmem:[%s5403] ss:$8 sm:$0xf]
    %s5405 = scalar_lea.vmem [#allocation1], 1477
    %v5406 = vld [vmem:[%s5405] ss:$8 sm:$0xf0]
    %vm5407 = vcmask 1047556
    %v5408 = vsel %vm5407, %v5406, %v5404
    %5409 = vrot.lane.b32.xlu0 %v5408, 80
    %v5410 = vpop.permute.xlu0 %5409
    %vm5411 = vcmask 786048
    %s5412 = scalar_lea.vmem [#allocation0], 184
    %5413 = vst.msk [vmem:[%s5412] sm:$0xff] %vm5411, %v5410
    %s5414 = scalar_lea.vmem [#allocation1], 1733
    %v5415 = vld [vmem:[%s5414] ss:$8 sm:$0xf]
    %s5416 = scalar_lea.vmem [#allocation1], 1733
    %v5417 = vld [vmem:[%s5416] ss:$8 sm:$0xf0]
    %vm5418 = vcmask 1047556
    %v5419 = vsel %vm5418, %v5417, %v5415
    %5420 = vrot.lane.b32.xlu0 %v5419, 80
    %v5421 = vpop.permute.xlu0 %5420
    %vm5422 = vcmask 786048
    %s5423 = scalar_lea.vmem [#allocation0], 216
    %5424 = vst.msk [vmem:[%s5423] sm:$0xff] %vm5422, %v5421
    %s5425 = scalar_lea.vmem [#allocation1], 1989
    %v5426 = vld [vmem:[%s5425] ss:$8 sm:$0xf]
    %s5427 = scalar_lea.vmem [#allocation1], 1989
    %v5428 = vld [vmem:[%s5427] ss:$8 sm:$0xf0]
    %vm5429 = vcmask 1047556
    %v5430 = vsel %vm5429, %v5428, %v5426
    %5431 = vrot.lane.b32.xlu0 %v5430, 80
    %v5432 = vpop.permute.xlu0 %5431
    %vm5433 = vcmask 786048
    %s5434 = scalar_lea.vmem [#allocation0], 248
    %5435 = vst.msk [vmem:[%s5434] sm:$0xff] %vm5433, %v5432
    %s5436 = scalar_lea.vmem [#allocation1], 4
    %v5437 = vld [vmem:[%s5436] ss:$8 sm:$0xf]
    %s5438 = scalar_lea.vmem [#allocation1], 4
    %v5439 = vld [vmem:[%s5438] ss:$8 sm:$0xf0]
    %vm5440 = vcmask 1047556
    %v5441 = vsel %vm5440, %v5439, %v5437
    %5442 = vrot.lane.b32.xlu0 %v5441, 64
    %v5443 = vpop.permute.xlu0 %5442
    %vm5444 = vcmask 654848
    %5445 = vst.msk [vmem:[#allocation0] sm:$0xff] %vm5444, %v5443
    %s5446 = scalar_lea.vmem [#allocation1], 260
    %v5447 = vld [vmem:[%s5446] ss:$8 sm:$0xf]
    %s5448 = scalar_lea.vmem [#allocation1], 260
    %v5449 = vld [vmem:[%s5448] ss:$8 sm:$0xf0]
    %vm5450 = vcmask 1047556
    %v5451 = vsel %vm5450, %v5449, %v5447
    %5452 = vrot.lane.b32.xlu0 %v5451, 64
    %v5453 = vpop.permute.xlu0 %5452
    %vm5454 = vcmask 654848
    %s5455 = scalar_lea.vmem [#allocation0], 32
    %5456 = vst.msk [vmem:[%s5455] sm:$0xff] %vm5454, %v5453
    %s5457 = scalar_lea.vmem [#allocation1], 516
    %v5458 = vld [vmem:[%s5457] ss:$8 sm:$0xf]
    %s5459 = scalar_lea.vmem [#allocation1], 516
    %v5460 = vld [vmem:[%s5459] ss:$8 sm:$0xf0]
    %vm5461 = vcmask 1047556
    %v5462 = vsel %vm5461, %v5460, %v5458
    %5463 = vrot.lane.b32.xlu0 %v5462, 64
    %v5464 = vpop.permute.xlu0 %5463
    %vm5465 = vcmask 654848
    %s5466 = scalar_lea.vmem [#allocation0], 64
    %5467 = vst.msk [vmem:[%s5466] sm:$0xff] %vm5465, %v5464
    %s5468 = scalar_lea.vmem [#allocation1], 772
    %v5469 = vld [vmem:[%s5468] ss:$8 sm:$0xf]
    %s5470 = scalar_lea.vmem [#allocation1], 772
    %v5471 = vld [vmem:[%s5470] ss:$8 sm:$0xf0]
    %vm5472 = vcmask 1047556
    %v5473 = vsel %vm5472, %v5471, %v5469
    %5474 = vrot.lane.b32.xlu0 %v5473, 64
    %v5475 = vpop.permute.xlu0 %5474
    %vm5476 = vcmask 654848
    %s5477 = scalar_lea.vmem [#allocation0], 96
    %5478 = vst.msk [vmem:[%s5477] sm:$0xff] %vm5476, %v5475
    %s5479 = scalar_lea.vmem [#allocation1], 1028
    %v5480 = vld [vmem:[%s5479] ss:$8 sm:$0xf]
    %s5481 = scalar_lea.vmem [#allocation1], 1028
    %v5482 = vld [vmem:[%s5481] ss:$8 sm:$0xf0]
    %vm5483 = vcmask 1047556
    %v5484 = vsel %vm5483, %v5482, %v5480
    %5485 = vrot.lane.b32.xlu0 %v5484, 64
    %v5486 = vpop.permute.xlu0 %5485
    %vm5487 = vcmask 654848
    %s5488 = scalar_lea.vmem [#allocation0], 128
    %5489 = vst.msk [vmem:[%s5488] sm:$0xff] %vm5487, %v5486
    %s5490 = scalar_lea.vmem [#allocation1], 1284
    %v5491 = vld [vmem:[%s5490] ss:$8 sm:$0xf]
    %s5492 = scalar_lea.vmem [#allocation1], 1284
    %v5493 = vld [vmem:[%s5492] ss:$8 sm:$0xf0]
    %vm5494 = vcmask 1047556
    %v5495 = vsel %vm5494, %v5493, %v5491
    %5496 = vrot.lane.b32.xlu0 %v5495, 64
    %v5497 = vpop.permute.xlu0 %5496
    %vm5498 = vcmask 654848
    %s5499 = scalar_lea.vmem [#allocation0], 160
    %5500 = vst.msk [vmem:[%s5499] sm:$0xff] %vm5498, %v5497
    %s5501 = scalar_lea.vmem [#allocation1], 1540
    %v5502 = vld [vmem:[%s5501] ss:$8 sm:$0xf]
    %s5503 = scalar_lea.vmem [#allocation1], 1540
    %v5504 = vld [vmem:[%s5503] ss:$8 sm:$0xf0]
    %vm5505 = vcmask 1047556
    %v5506 = vsel %vm5505, %v5504, %v5502
    %5507 = vrot.lane.b32.xlu0 %v5506, 64
    %v5508 = vpop.permute.xlu0 %5507
    %vm5509 = vcmask 654848
    %s5510 = scalar_lea.vmem [#allocation0], 192
    %5511 = vst.msk [vmem:[%s5510] sm:$0xff] %vm5509, %v5508
    %s5512 = scalar_lea.vmem [#allocation1], 1796
    %v5513 = vld [vmem:[%s5512] ss:$8 sm:$0xf]
    %s5514 = scalar_lea.vmem [#allocation1], 1796
    %v5515 = vld [vmem:[%s5514] ss:$8 sm:$0xf0]
    %vm5516 = vcmask 1047556
    %v5517 = vsel %vm5516, %v5515, %v5513
    %5518 = vrot.lane.b32.xlu0 %v5517, 64
    %v5519 = vpop.permute.xlu0 %5518
    %vm5520 = vcmask 654848
    %s5521 = scalar_lea.vmem [#allocation0], 224
    %5522 = vst.msk [vmem:[%s5521] sm:$0xff] %vm5520, %v5519
    %s5523 = scalar_lea.vmem [#allocation1], 68
    %v5524 = vld [vmem:[%s5523] ss:$8 sm:$0xf]
    %s5525 = scalar_lea.vmem [#allocation1], 68
    %v5526 = vld [vmem:[%s5525] ss:$8 sm:$0xf0]
    %vm5527 = vcmask 1047556
    %v5528 = vsel %vm5527, %v5526, %v5524
    %5529 = vrot.lane.b32.xlu0 %v5528, 64
    %v5530 = vpop.permute.xlu0 %5529
    %vm5531 = vcmask 654848
    %s5532 = scalar_lea.vmem [#allocation0], 8
    %5533 = vst.msk [vmem:[%s5532] sm:$0xff] %vm5531, %v5530
    %s5534 = scalar_lea.vmem [#allocation1], 324
    %v5535 = vld [vmem:[%s5534] ss:$8 sm:$0xf]
    %s5536 = scalar_lea.vmem [#allocation1], 324
    %v5537 = vld [vmem:[%s5536] ss:$8 sm:$0xf0]
    %vm5538 = vcmask 1047556
    %v5539 = vsel %vm5538, %v5537, %v5535
    %5540 = vrot.lane.b32.xlu0 %v5539, 64
    %v5541 = vpop.permute.xlu0 %5540
    %vm5542 = vcmask 654848
    %s5543 = scalar_lea.vmem [#allocation0], 40
    %5544 = vst.msk [vmem:[%s5543] sm:$0xff] %vm5542, %v5541
    %s5545 = scalar_lea.vmem [#allocation1], 580
    %v5546 = vld [vmem:[%s5545] ss:$8 sm:$0xf]
    %s5547 = scalar_lea.vmem [#allocation1], 580
    %v5548 = vld [vmem:[%s5547] ss:$8 sm:$0xf0]
    %vm5549 = vcmask 1047556
    %v5550 = vsel %vm5549, %v5548, %v5546
    %5551 = vrot.lane.b32.xlu0 %v5550, 64
    %v5552 = vpop.permute.xlu0 %5551
    %vm5553 = vcmask 654848
    %s5554 = scalar_lea.vmem [#allocation0], 72
    %5555 = vst.msk [vmem:[%s5554] sm:$0xff] %vm5553, %v5552
    %s5556 = scalar_lea.vmem [#allocation1], 836
    %v5557 = vld [vmem:[%s5556] ss:$8 sm:$0xf]
    %s5558 = scalar_lea.vmem [#allocation1], 836
    %v5559 = vld [vmem:[%s5558] ss:$8 sm:$0xf0]
    %vm5560 = vcmask 1047556
    %v5561 = vsel %vm5560, %v5559, %v5557
    %5562 = vrot.lane.b32.xlu0 %v5561, 64
    %v5563 = vpop.permute.xlu0 %5562
    %vm5564 = vcmask 654848
    %s5565 = scalar_lea.vmem [#allocation0], 104
    %5566 = vst.msk [vmem:[%s5565] sm:$0xff] %vm5564, %v5563
    %s5567 = scalar_lea.vmem [#allocation1], 1092
    %v5568 = vld [vmem:[%s5567] ss:$8 sm:$0xf]
    %s5569 = scalar_lea.vmem [#allocation1], 1092
    %v5570 = vld [vmem:[%s5569] ss:$8 sm:$0xf0]
    %vm5571 = vcmask 1047556
    %v5572 = vsel %vm5571, %v5570, %v5568
    %5573 = vrot.lane.b32.xlu0 %v5572, 64
    %v5574 = vpop.permute.xlu0 %5573
    %vm5575 = vcmask 654848
    %s5576 = scalar_lea.vmem [#allocation0], 136
    %5577 = vst.msk [vmem:[%s5576] sm:$0xff] %vm5575, %v5574
    %s5578 = scalar_lea.vmem [#allocation1], 1348
    %v5579 = vld [vmem:[%s5578] ss:$8 sm:$0xf]
    %s5580 = scalar_lea.vmem [#allocation1], 1348
    %v5581 = vld [vmem:[%s5580] ss:$8 sm:$0xf0]
    %vm5582 = vcmask 1047556
    %v5583 = vsel %vm5582, %v5581, %v5579
    %5584 = vrot.lane.b32.xlu0 %v5583, 64
    %v5585 = vpop.permute.xlu0 %5584
    %vm5586 = vcmask 654848
    %s5587 = scalar_lea.vmem [#allocation0], 168
    %5588 = vst.msk [vmem:[%s5587] sm:$0xff] %vm5586, %v5585
    %s5589 = scalar_lea.vmem [#allocation1], 1604
    %v5590 = vld [vmem:[%s5589] ss:$8 sm:$0xf]
    %s5591 = scalar_lea.vmem [#allocation1], 1604
    %v5592 = vld [vmem:[%s5591] ss:$8 sm:$0xf0]
    %vm5593 = vcmask 1047556
    %v5594 = vsel %vm5593, %v5592, %v5590
    %5595 = vrot.lane.b32.xlu0 %v5594, 64
    %v5596 = vpop.permute.xlu0 %5595
    %vm5597 = vcmask 654848
    %s5598 = scalar_lea.vmem [#allocation0], 200
    %5599 = vst.msk [vmem:[%s5598] sm:$0xff] %vm5597, %v5596
    %s5600 = scalar_lea.vmem [#allocation1], 1860
    %v5601 = vld [vmem:[%s5600] ss:$8 sm:$0xf]
    %s5602 = scalar_lea.vmem [#allocation1], 1860
    %v5603 = vld [vmem:[%s5602] ss:$8 sm:$0xf0]
    %vm5604 = vcmask 1047556
    %v5605 = vsel %vm5604, %v5603, %v5601
    %5606 = vrot.lane.b32.xlu0 %v5605, 64
    %v5607 = vpop.permute.xlu0 %5606
    %vm5608 = vcmask 654848
    %s5609 = scalar_lea.vmem [#allocation0], 232
    %5610 = vst.msk [vmem:[%s5609] sm:$0xff] %vm5608, %v5607
    %s5611 = scalar_lea.vmem [#allocation1], 132
    %v5612 = vld [vmem:[%s5611] ss:$8 sm:$0xf]
    %s5613 = scalar_lea.vmem [#allocation1], 132
    %v5614 = vld [vmem:[%s5613] ss:$8 sm:$0xf0]
    %vm5615 = vcmask 1047556
    %v5616 = vsel %vm5615, %v5614, %v5612
    %5617 = vrot.lane.b32.xlu0 %v5616, 64
    %v5618 = vpop.permute.xlu0 %5617
    %vm5619 = vcmask 654848
    %s5620 = scalar_lea.vmem [#allocation0], 16
    %5621 = vst.msk [vmem:[%s5620] sm:$0xff] %vm5619, %v5618
    %s5622 = scalar_lea.vmem [#allocation1], 388
    %v5623 = vld [vmem:[%s5622] ss:$8 sm:$0xf]
    %s5624 = scalar_lea.vmem [#allocation1], 388
    %v5625 = vld [vmem:[%s5624] ss:$8 sm:$0xf0]
    %vm5626 = vcmask 1047556
    %v5627 = vsel %vm5626, %v5625, %v5623
    %5628 = vrot.lane.b32.xlu0 %v5627, 64
    %v5629 = vpop.permute.xlu0 %5628
    %vm5630 = vcmask 654848
    %s5631 = scalar_lea.vmem [#allocation0], 48
    %5632 = vst.msk [vmem:[%s5631] sm:$0xff] %vm5630, %v5629
    %s5633 = scalar_lea.vmem [#allocation1], 644
    %v5634 = vld [vmem:[%s5633] ss:$8 sm:$0xf]
    %s5635 = scalar_lea.vmem [#allocation1], 644
    %v5636 = vld [vmem:[%s5635] ss:$8 sm:$0xf0]
    %vm5637 = vcmask 1047556
    %v5638 = vsel %vm5637, %v5636, %v5634
    %5639 = vrot.lane.b32.xlu0 %v5638, 64
    %v5640 = vpop.permute.xlu0 %5639
    %vm5641 = vcmask 654848
    %s5642 = scalar_lea.vmem [#allocation0], 80
    %5643 = vst.msk [vmem:[%s5642] sm:$0xff] %vm5641, %v5640
    %s5644 = scalar_lea.vmem [#allocation1], 900
    %v5645 = vld [vmem:[%s5644] ss:$8 sm:$0xf]
    %s5646 = scalar_lea.vmem [#allocation1], 900
    %v5647 = vld [vmem:[%s5646] ss:$8 sm:$0xf0]
    %vm5648 = vcmask 1047556
    %v5649 = vsel %vm5648, %v5647, %v5645
    %5650 = vrot.lane.b32.xlu0 %v5649, 64
    %v5651 = vpop.permute.xlu0 %5650
    %vm5652 = vcmask 654848
    %s5653 = scalar_lea.vmem [#allocation0], 112
    %5654 = vst.msk [vmem:[%s5653] sm:$0xff] %vm5652, %v5651
    %s5655 = scalar_lea.vmem [#allocation1], 1156
    %v5656 = vld [vmem:[%s5655] ss:$8 sm:$0xf]
    %s5657 = scalar_lea.vmem [#allocation1], 1156
    %v5658 = vld [vmem:[%s5657] ss:$8 sm:$0xf0]
    %vm5659 = vcmask 1047556
    %v5660 = vsel %vm5659, %v5658, %v5656
    %5661 = vrot.lane.b32.xlu0 %v5660, 64
    %v5662 = vpop.permute.xlu0 %5661
    %vm5663 = vcmask 654848
    %s5664 = scalar_lea.vmem [#allocation0], 144
    %5665 = vst.msk [vmem:[%s5664] sm:$0xff] %vm5663, %v5662
    %s5666 = scalar_lea.vmem [#allocation1], 1412
    %v5667 = vld [vmem:[%s5666] ss:$8 sm:$0xf]
    %s5668 = scalar_lea.vmem [#allocation1], 1412
    %v5669 = vld [vmem:[%s5668] ss:$8 sm:$0xf0]
    %vm5670 = vcmask 1047556
    %v5671 = vsel %vm5670, %v5669, %v5667
    %5672 = vrot.lane.b32.xlu0 %v5671, 64
    %v5673 = vpop.permute.xlu0 %5672
    %vm5674 = vcmask 654848
    %s5675 = scalar_lea.vmem [#allocation0], 176
    %5676 = vst.msk [vmem:[%s5675] sm:$0xff] %vm5674, %v5673
    %s5677 = scalar_lea.vmem [#allocation1], 1668
    %v5678 = vld [vmem:[%s5677] ss:$8 sm:$0xf]
    %s5679 = scalar_lea.vmem [#allocation1], 1668
    %v5680 = vld [vmem:[%s5679] ss:$8 sm:$0xf0]
    %vm5681 = vcmask 1047556
    %v5682 = vsel %vm5681, %v5680, %v5678
    %5683 = vrot.lane.b32.xlu0 %v5682, 64
    %v5684 = vpop.permute.xlu0 %5683
    %vm5685 = vcmask 654848
    %s5686 = scalar_lea.vmem [#allocation0], 208
    %5687 = vst.msk [vmem:[%s5686] sm:$0xff] %vm5685, %v5684
    %s5688 = scalar_lea.vmem [#allocation1], 1924
    %v5689 = vld [vmem:[%s5688] ss:$8 sm:$0xf]
    %s5690 = scalar_lea.vmem [#allocation1], 1924
    %v5691 = vld [vmem:[%s5690] ss:$8 sm:$0xf0]
    %vm5692 = vcmask 1047556
    %v5693 = vsel %vm5692, %v5691, %v5689
    %5694 = vrot.lane.b32.xlu0 %v5693, 64
    %v5695 = vpop.permute.xlu0 %5694
    %vm5696 = vcmask 654848
    %s5697 = scalar_lea.vmem [#allocation0], 240
    %5698 = vst.msk [vmem:[%s5697] sm:$0xff] %vm5696, %v5695
    %s5699 = scalar_lea.vmem [#allocation1], 196
    %v5700 = vld [vmem:[%s5699] ss:$8 sm:$0xf]
    %s5701 = scalar_lea.vmem [#allocation1], 196
    %v5702 = vld [vmem:[%s5701] ss:$8 sm:$0xf0]
    %vm5703 = vcmask 1047556
    %v5704 = vsel %vm5703, %v5702, %v5700
    %5705 = vrot.lane.b32.xlu0 %v5704, 64
    %v5706 = vpop.permute.xlu0 %5705
    %vm5707 = vcmask 654848
    %s5708 = scalar_lea.vmem [#allocation0], 24
    %5709 = vst.msk [vmem:[%s5708] sm:$0xff] %vm5707, %v5706
    %s5710 = scalar_lea.vmem [#allocation1], 452
    %v5711 = vld [vmem:[%s5710] ss:$8 sm:$0xf]
    %s5712 = scalar_lea.vmem [#allocation1], 452
    %v5713 = vld [vmem:[%s5712] ss:$8 sm:$0xf0]
    %vm5714 = vcmask 1047556
    %v5715 = vsel %vm5714, %v5713, %v5711
    %5716 = vrot.lane.b32.xlu0 %v5715, 64
    %v5717 = vpop.permute.xlu0 %5716
    %vm5718 = vcmask 654848
    %s5719 = scalar_lea.vmem [#allocation0], 56
    %5720 = vst.msk [vmem:[%s5719] sm:$0xff] %vm5718, %v5717
    %s5721 = scalar_lea.vmem [#allocation1], 708
    %v5722 = vld [vmem:[%s5721] ss:$8 sm:$0xf]
    %s5723 = scalar_lea.vmem [#allocation1], 708
    %v5724 = vld [vmem:[%s5723] ss:$8 sm:$0xf0]
    %vm5725 = vcmask 1047556
    %v5726 = vsel %vm5725, %v5724, %v5722
    %5727 = vrot.lane.b32.xlu0 %v5726, 64
    %v5728 = vpop.permute.xlu0 %5727
    %vm5729 = vcmask 654848
    %s5730 = scalar_lea.vmem [#allocation0], 88
    %5731 = vst.msk [vmem:[%s5730] sm:$0xff] %vm5729, %v5728
    %s5732 = scalar_lea.vmem [#allocation1], 964
    %v5733 = vld [vmem:[%s5732] ss:$8 sm:$0xf]
    %s5734 = scalar_lea.vmem [#allocation1], 964
    %v5735 = vld [vmem:[%s5734] ss:$8 sm:$0xf0]
    %vm5736 = vcmask 1047556
    %v5737 = vsel %vm5736, %v5735, %v5733
    %5738 = vrot.lane.b32.xlu0 %v5737, 64
    %v5739 = vpop.permute.xlu0 %5738
    %vm5740 = vcmask 654848
    %s5741 = scalar_lea.vmem [#allocation0], 120
    %5742 = vst.msk [vmem:[%s5741] sm:$0xff] %vm5740, %v5739
    %s5743 = scalar_lea.vmem [#allocation1], 1220
    %v5744 = vld [vmem:[%s5743] ss:$8 sm:$0xf]
    %s5745 = scalar_lea.vmem [#allocation1], 1220
    %v5746 = vld [vmem:[%s5745] ss:$8 sm:$0xf0]
    %vm5747 = vcmask 1047556
    %v5748 = vsel %vm5747, %v5746, %v5744
    %5749 = vrot.lane.b32.xlu0 %v5748, 64
    %v5750 = vpop.permute.xlu0 %5749
    %vm5751 = vcmask 654848
    %s5752 = scalar_lea.vmem [#allocation0], 152
    %5753 = vst.msk [vmem:[%s5752] sm:$0xff] %vm5751, %v5750
    %s5754 = scalar_lea.vmem [#allocation1], 1476
    %v5755 = vld [vmem:[%s5754] ss:$8 sm:$0xf]
    %s5756 = scalar_lea.vmem [#allocation1], 1476
    %v5757 = vld [vmem:[%s5756] ss:$8 sm:$0xf0]
    %vm5758 = vcmask 1047556
    %v5759 = vsel %vm5758, %v5757, %v5755
    %5760 = vrot.lane.b32.xlu0 %v5759, 64
    %v5761 = vpop.permute.xlu0 %5760
    %vm5762 = vcmask 654848
    %s5763 = scalar_lea.vmem [#allocation0], 184
    %5764 = vst.msk [vmem:[%s5763] sm:$0xff] %vm5762, %v5761
    %s5765 = scalar_lea.vmem [#allocation1], 1732
    %v5766 = vld [vmem:[%s5765] ss:$8 sm:$0xf]
    %s5767 = scalar_lea.vmem [#allocation1], 1732
    %v5768 = vld [vmem:[%s5767] ss:$8 sm:$0xf0]
    %vm5769 = vcmask 1047556
    %v5770 = vsel %vm5769, %v5768, %v5766
    %5771 = vrot.lane.b32.xlu0 %v5770, 64
    %v5772 = vpop.permute.xlu0 %5771
    %vm5773 = vcmask 654848
    %s5774 = scalar_lea.vmem [#allocation0], 216
    %5775 = vst.msk [vmem:[%s5774] sm:$0xff] %vm5773, %v5772
    %s5776 = scalar_lea.vmem [#allocation1], 1988
    %v5777 = vld [vmem:[%s5776] ss:$8 sm:$0xf]
    %s5778 = scalar_lea.vmem [#allocation1], 1988
    %v5779 = vld [vmem:[%s5778] ss:$8 sm:$0xf0]
    %vm5780 = vcmask 1047556
    %v5781 = vsel %vm5780, %v5779, %v5777
    %5782 = vrot.lane.b32.xlu0 %v5781, 64
    %v5783 = vpop.permute.xlu0 %5782
    %vm5784 = vcmask 654848
    %s5785 = scalar_lea.vmem [#allocation0], 248
    %5786 = vst.msk [vmem:[%s5785] sm:$0xff] %vm5784, %v5783
    %s5787 = scalar_lea.vmem [#allocation1], 3
    %v5788 = vld [vmem:[%s5787] ss:$8 sm:$0xf]
    %s5789 = scalar_lea.vmem [#allocation1], 3
    %v5790 = vld [vmem:[%s5789] ss:$8 sm:$0xf0]
    %vm5791 = vcmask 1047556
    %v5792 = vsel %vm5791, %v5790, %v5788
    %5793 = vrot.lane.b32.xlu0 %v5792, 48
    %v5794 = vpop.permute.xlu0 %5793
    %vm5795 = vcmask 523648
    %5796 = vst.msk [vmem:[#allocation0] sm:$0xff] %vm5795, %v5794
    %s5797 = scalar_lea.vmem [#allocation1], 259
    %v5798 = vld [vmem:[%s5797] ss:$8 sm:$0xf]
    %s5799 = scalar_lea.vmem [#allocation1], 259
    %v5800 = vld [vmem:[%s5799] ss:$8 sm:$0xf0]
    %vm5801 = vcmask 1047556
    %v5802 = vsel %vm5801, %v5800, %v5798
    %5803 = vrot.lane.b32.xlu0 %v5802, 48
    %v5804 = vpop.permute.xlu0 %5803
    %vm5805 = vcmask 523648
    %s5806 = scalar_lea.vmem [#allocation0], 32
    %5807 = vst.msk [vmem:[%s5806] sm:$0xff] %vm5805, %v5804
    %s5808 = scalar_lea.vmem [#allocation1], 515
    %v5809 = vld [vmem:[%s5808] ss:$8 sm:$0xf]
    %s5810 = scalar_lea.vmem [#allocation1], 515
    %v5811 = vld [vmem:[%s5810] ss:$8 sm:$0xf0]
    %vm5812 = vcmask 1047556
    %v5813 = vsel %vm5812, %v5811, %v5809
    %5814 = vrot.lane.b32.xlu0 %v5813, 48
    %v5815 = vpop.permute.xlu0 %5814
    %vm5816 = vcmask 523648
    %s5817 = scalar_lea.vmem [#allocation0], 64
    %5818 = vst.msk [vmem:[%s5817] sm:$0xff] %vm5816, %v5815
    %s5819 = scalar_lea.vmem [#allocation1], 771
    %v5820 = vld [vmem:[%s5819] ss:$8 sm:$0xf]
    %s5821 = scalar_lea.vmem [#allocation1], 771
    %v5822 = vld [vmem:[%s5821] ss:$8 sm:$0xf0]
    %vm5823 = vcmask 1047556
    %v5824 = vsel %vm5823, %v5822, %v5820
    %5825 = vrot.lane.b32.xlu0 %v5824, 48
    %v5826 = vpop.permute.xlu0 %5825
    %vm5827 = vcmask 523648
    %s5828 = scalar_lea.vmem [#allocation0], 96
    %5829 = vst.msk [vmem:[%s5828] sm:$0xff] %vm5827, %v5826
    %s5830 = scalar_lea.vmem [#allocation1], 1027
    %v5831 = vld [vmem:[%s5830] ss:$8 sm:$0xf]
    %s5832 = scalar_lea.vmem [#allocation1], 1027
    %v5833 = vld [vmem:[%s5832] ss:$8 sm:$0xf0]
    %vm5834 = vcmask 1047556
    %v5835 = vsel %vm5834, %v5833, %v5831
    %5836 = vrot.lane.b32.xlu0 %v5835, 48
    %v5837 = vpop.permute.xlu0 %5836
    %vm5838 = vcmask 523648
    %s5839 = scalar_lea.vmem [#allocation0], 128
    %5840 = vst.msk [vmem:[%s5839] sm:$0xff] %vm5838, %v5837
    %s5841 = scalar_lea.vmem [#allocation1], 1283
    %v5842 = vld [vmem:[%s5841] ss:$8 sm:$0xf]
    %s5843 = scalar_lea.vmem [#allocation1], 1283
    %v5844 = vld [vmem:[%s5843] ss:$8 sm:$0xf0]
    %vm5845 = vcmask 1047556
    %v5846 = vsel %vm5845, %v5844, %v5842
    %5847 = vrot.lane.b32.xlu0 %v5846, 48
    %v5848 = vpop.permute.xlu0 %5847
    %vm5849 = vcmask 523648
    %s5850 = scalar_lea.vmem [#allocation0], 160
    %5851 = vst.msk [vmem:[%s5850] sm:$0xff] %vm5849, %v5848
    %s5852 = scalar_lea.vmem [#allocation1], 1539
    %v5853 = vld [vmem:[%s5852] ss:$8 sm:$0xf]
    %s5854 = scalar_lea.vmem [#allocation1], 1539
    %v5855 = vld [vmem:[%s5854] ss:$8 sm:$0xf0]
    %vm5856 = vcmask 1047556
    %v5857 = vsel %vm5856, %v5855, %v5853
    %5858 = vrot.lane.b32.xlu0 %v5857, 48
    %v5859 = vpop.permute.xlu0 %5858
    %vm5860 = vcmask 523648
    %s5861 = scalar_lea.vmem [#allocation0], 192
    %5862 = vst.msk [vmem:[%s5861] sm:$0xff] %vm5860, %v5859
    %s5863 = scalar_lea.vmem [#allocation1], 1795
    %v5864 = vld [vmem:[%s5863] ss:$8 sm:$0xf]
    %s5865 = scalar_lea.vmem [#allocation1], 1795
    %v5866 = vld [vmem:[%s5865] ss:$8 sm:$0xf0]
    %vm5867 = vcmask 1047556
    %v5868 = vsel %vm5867, %v5866, %v5864
    %5869 = vrot.lane.b32.xlu0 %v5868, 48
    %v5870 = vpop.permute.xlu0 %5869
    %vm5871 = vcmask 523648
    %s5872 = scalar_lea.vmem [#allocation0], 224
    %5873 = vst.msk [vmem:[%s5872] sm:$0xff] %vm5871, %v5870
    %s5874 = scalar_lea.vmem [#allocation1], 67
    %v5875 = vld [vmem:[%s5874] ss:$8 sm:$0xf]
    %s5876 = scalar_lea.vmem [#allocation1], 67
    %v5877 = vld [vmem:[%s5876] ss:$8 sm:$0xf0]
    %vm5878 = vcmask 1047556
    %v5879 = vsel %vm5878, %v5877, %v5875
    %5880 = vrot.lane.b32.xlu0 %v5879, 48
    %v5881 = vpop.permute.xlu0 %5880
    %vm5882 = vcmask 523648
    %s5883 = scalar_lea.vmem [#allocation0], 8
    %5884 = vst.msk [vmem:[%s5883] sm:$0xff] %vm5882, %v5881
    %s5885 = scalar_lea.vmem [#allocation1], 323
    %v5886 = vld [vmem:[%s5885] ss:$8 sm:$0xf]
    %s5887 = scalar_lea.vmem [#allocation1], 323
    %v5888 = vld [vmem:[%s5887] ss:$8 sm:$0xf0]
    %vm5889 = vcmask 1047556
    %v5890 = vsel %vm5889, %v5888, %v5886
    %5891 = vrot.lane.b32.xlu0 %v5890, 48
    %v5892 = vpop.permute.xlu0 %5891
    %vm5893 = vcmask 523648
    %s5894 = scalar_lea.vmem [#allocation0], 40
    %5895 = vst.msk [vmem:[%s5894] sm:$0xff] %vm5893, %v5892
    %s5896 = scalar_lea.vmem [#allocation1], 579
    %v5897 = vld [vmem:[%s5896] ss:$8 sm:$0xf]
    %s5898 = scalar_lea.vmem [#allocation1], 579
    %v5899 = vld [vmem:[%s5898] ss:$8 sm:$0xf0]
    %vm5900 = vcmask 1047556
    %v5901 = vsel %vm5900, %v5899, %v5897
    %5902 = vrot.lane.b32.xlu0 %v5901, 48
    %v5903 = vpop.permute.xlu0 %5902
    %vm5904 = vcmask 523648
    %s5905 = scalar_lea.vmem [#allocation0], 72
    %5906 = vst.msk [vmem:[%s5905] sm:$0xff] %vm5904, %v5903
    %s5907 = scalar_lea.vmem [#allocation1], 835
    %v5908 = vld [vmem:[%s5907] ss:$8 sm:$0xf]
    %s5909 = scalar_lea.vmem [#allocation1], 835
    %v5910 = vld [vmem:[%s5909] ss:$8 sm:$0xf0]
    %vm5911 = vcmask 1047556
    %v5912 = vsel %vm5911, %v5910, %v5908
    %5913 = vrot.lane.b32.xlu0 %v5912, 48
    %v5914 = vpop.permute.xlu0 %5913
    %vm5915 = vcmask 523648
    %s5916 = scalar_lea.vmem [#allocation0], 104
    %5917 = vst.msk [vmem:[%s5916] sm:$0xff] %vm5915, %v5914
    %s5918 = scalar_lea.vmem [#allocation1], 1091
    %v5919 = vld [vmem:[%s5918] ss:$8 sm:$0xf]
    %s5920 = scalar_lea.vmem [#allocation1], 1091
    %v5921 = vld [vmem:[%s5920] ss:$8 sm:$0xf0]
    %vm5922 = vcmask 1047556
    %v5923 = vsel %vm5922, %v5921, %v5919
    %5924 = vrot.lane.b32.xlu0 %v5923, 48
    %v5925 = vpop.permute.xlu0 %5924
    %vm5926 = vcmask 523648
    %s5927 = scalar_lea.vmem [#allocation0], 136
    %5928 = vst.msk [vmem:[%s5927] sm:$0xff] %vm5926, %v5925
    %s5929 = scalar_lea.vmem [#allocation1], 1347
    %v5930 = vld [vmem:[%s5929] ss:$8 sm:$0xf]
    %s5931 = scalar_lea.vmem [#allocation1], 1347
    %v5932 = vld [vmem:[%s5931] ss:$8 sm:$0xf0]
    %vm5933 = vcmask 1047556
    %v5934 = vsel %vm5933, %v5932, %v5930
    %5935 = vrot.lane.b32.xlu0 %v5934, 48
    %v5936 = vpop.permute.xlu0 %5935
    %vm5937 = vcmask 523648
    %s5938 = scalar_lea.vmem [#allocation0], 168
    %5939 = vst.msk [vmem:[%s5938] sm:$0xff] %vm5937, %v5936
    %s5940 = scalar_lea.vmem [#allocation1], 1603
    %v5941 = vld [vmem:[%s5940] ss:$8 sm:$0xf]
    %s5942 = scalar_lea.vmem [#allocation1], 1603
    %v5943 = vld [vmem:[%s5942] ss:$8 sm:$0xf0]
    %vm5944 = vcmask 1047556
    %v5945 = vsel %vm5944, %v5943, %v5941
    %5946 = vrot.lane.b32.xlu0 %v5945, 48
    %v5947 = vpop.permute.xlu0 %5946
    %vm5948 = vcmask 523648
    %s5949 = scalar_lea.vmem [#allocation0], 200
    %5950 = vst.msk [vmem:[%s5949] sm:$0xff] %vm5948, %v5947
    %s5951 = scalar_lea.vmem [#allocation1], 1859
    %v5952 = vld [vmem:[%s5951] ss:$8 sm:$0xf]
    %s5953 = scalar_lea.vmem [#allocation1], 1859
    %v5954 = vld [vmem:[%s5953] ss:$8 sm:$0xf0]
    %vm5955 = vcmask 1047556
    %v5956 = vsel %vm5955, %v5954, %v5952
    %5957 = vrot.lane.b32.xlu0 %v5956, 48
    %v5958 = vpop.permute.xlu0 %5957
    %vm5959 = vcmask 523648
    %s5960 = scalar_lea.vmem [#allocation0], 232
    %5961 = vst.msk [vmem:[%s5960] sm:$0xff] %vm5959, %v5958
    %s5962 = scalar_lea.vmem [#allocation1], 131
    %v5963 = vld [vmem:[%s5962] ss:$8 sm:$0xf]
    %s5964 = scalar_lea.vmem [#allocation1], 131
    %v5965 = vld [vmem:[%s5964] ss:$8 sm:$0xf0]
    %vm5966 = vcmask 1047556
    %v5967 = vsel %vm5966, %v5965, %v5963
    %5968 = vrot.lane.b32.xlu0 %v5967, 48
    %v5969 = vpop.permute.xlu0 %5968
    %vm5970 = vcmask 523648
    %s5971 = scalar_lea.vmem [#allocation0], 16
    %5972 = vst.msk [vmem:[%s5971] sm:$0xff] %vm5970, %v5969
    %s5973 = scalar_lea.vmem [#allocation1], 387
    %v5974 = vld [vmem:[%s5973] ss:$8 sm:$0xf]
    %s5975 = scalar_lea.vmem [#allocation1], 387
    %v5976 = vld [vmem:[%s5975] ss:$8 sm:$0xf0]
    %vm5977 = vcmask 1047556
    %v5978 = vsel %vm5977, %v5976, %v5974
    %5979 = vrot.lane.b32.xlu0 %v5978, 48
    %v5980 = vpop.permute.xlu0 %5979
    %vm5981 = vcmask 523648
    %s5982 = scalar_lea.vmem [#allocation0], 48
    %5983 = vst.msk [vmem:[%s5982] sm:$0xff] %vm5981, %v5980
    %s5984 = scalar_lea.vmem [#allocation1], 643
    %v5985 = vld [vmem:[%s5984] ss:$8 sm:$0xf]
    %s5986 = scalar_lea.vmem [#allocation1], 643
    %v5987 = vld [vmem:[%s5986] ss:$8 sm:$0xf0]
    %vm5988 = vcmask 1047556
    %v5989 = vsel %vm5988, %v5987, %v5985
    %5990 = vrot.lane.b32.xlu0 %v5989, 48
    %v5991 = vpop.permute.xlu0 %5990
    %vm5992 = vcmask 523648
    %s5993 = scalar_lea.vmem [#allocation0], 80
    %5994 = vst.msk [vmem:[%s5993] sm:$0xff] %vm5992, %v5991
    %s5995 = scalar_lea.vmem [#allocation1], 899
    %v5996 = vld [vmem:[%s5995] ss:$8 sm:$0xf]
    %s5997 = scalar_lea.vmem [#allocation1], 899
    %v5998 = vld [vmem:[%s5997] ss:$8 sm:$0xf0]
    %vm5999 = vcmask 1047556
    %v6000 = vsel %vm5999, %v5998, %v5996
    %6001 = vrot.lane.b32.xlu0 %v6000, 48
    %v6002 = vpop.permute.xlu0 %6001
    %vm6003 = vcmask 523648
    %s6004 = scalar_lea.vmem [#allocation0], 112
    %6005 = vst.msk [vmem:[%s6004] sm:$0xff] %vm6003, %v6002
    %s6006 = scalar_lea.vmem [#allocation1], 1155
    %v6007 = vld [vmem:[%s6006] ss:$8 sm:$0xf]
    %s6008 = scalar_lea.vmem [#allocation1], 1155
    %v6009 = vld [vmem:[%s6008] ss:$8 sm:$0xf0]
    %vm6010 = vcmask 1047556
    %v6011 = vsel %vm6010, %v6009, %v6007
    %6012 = vrot.lane.b32.xlu0 %v6011, 48
    %v6013 = vpop.permute.xlu0 %6012
    %vm6014 = vcmask 523648
    %s6015 = scalar_lea.vmem [#allocation0], 144
    %6016 = vst.msk [vmem:[%s6015] sm:$0xff] %vm6014, %v6013
    %s6017 = scalar_lea.vmem [#allocation1], 1411
    %v6018 = vld [vmem:[%s6017] ss:$8 sm:$0xf]
    %s6019 = scalar_lea.vmem [#allocation1], 1411
    %v6020 = vld [vmem:[%s6019] ss:$8 sm:$0xf0]
    %vm6021 = vcmask 1047556
    %v6022 = vsel %vm6021, %v6020, %v6018
    %6023 = vrot.lane.b32.xlu0 %v6022, 48
    %v6024 = vpop.permute.xlu0 %6023
    %vm6025 = vcmask 523648
    %s6026 = scalar_lea.vmem [#allocation0], 176
    %6027 = vst.msk [vmem:[%s6026] sm:$0xff] %vm6025, %v6024
    %s6028 = scalar_lea.vmem [#allocation1], 1667
    %v6029 = vld [vmem:[%s6028] ss:$8 sm:$0xf]
    %s6030 = scalar_lea.vmem [#allocation1], 1667
    %v6031 = vld [vmem:[%s6030] ss:$8 sm:$0xf0]
    %vm6032 = vcmask 1047556
    %v6033 = vsel %vm6032, %v6031, %v6029
    %6034 = vrot.lane.b32.xlu0 %v6033, 48
    %v6035 = vpop.permute.xlu0 %6034
    %vm6036 = vcmask 523648
    %s6037 = scalar_lea.vmem [#allocation0], 208
    %6038 = vst.msk [vmem:[%s6037] sm:$0xff] %vm6036, %v6035
    %s6039 = scalar_lea.vmem [#allocation1], 1923
    %v6040 = vld [vmem:[%s6039] ss:$8 sm:$0xf]
    %s6041 = scalar_lea.vmem [#allocation1], 1923
    %v6042 = vld [vmem:[%s6041] ss:$8 sm:$0xf0]
    %vm6043 = vcmask 1047556
    %v6044 = vsel %vm6043, %v6042, %v6040
    %6045 = vrot.lane.b32.xlu0 %v6044, 48
    %v6046 = vpop.permute.xlu0 %6045
    %vm6047 = vcmask 523648
    %s6048 = scalar_lea.vmem [#allocation0], 240
    %6049 = vst.msk [vmem:[%s6048] sm:$0xff] %vm6047, %v6046
    %s6050 = scalar_lea.vmem [#allocation1], 195
    %v6051 = vld [vmem:[%s6050] ss:$8 sm:$0xf]
    %s6052 = scalar_lea.vmem [#allocation1], 195
    %v6053 = vld [vmem:[%s6052] ss:$8 sm:$0xf0]
    %vm6054 = vcmask 1047556
    %v6055 = vsel %vm6054, %v6053, %v6051
    %6056 = vrot.lane.b32.xlu0 %v6055, 48
    %v6057 = vpop.permute.xlu0 %6056
    %vm6058 = vcmask 523648
    %s6059 = scalar_lea.vmem [#allocation0], 24
    %6060 = vst.msk [vmem:[%s6059] sm:$0xff] %vm6058, %v6057
    %s6061 = scalar_lea.vmem [#allocation1], 451
    %v6062 = vld [vmem:[%s6061] ss:$8 sm:$0xf]
    %s6063 = scalar_lea.vmem [#allocation1], 451
    %v6064 = vld [vmem:[%s6063] ss:$8 sm:$0xf0]
    %vm6065 = vcmask 1047556
    %v6066 = vsel %vm6065, %v6064, %v6062
    %6067 = vrot.lane.b32.xlu0 %v6066, 48
    %v6068 = vpop.permute.xlu0 %6067
    %vm6069 = vcmask 523648
    %s6070 = scalar_lea.vmem [#allocation0], 56
    %6071 = vst.msk [vmem:[%s6070] sm:$0xff] %vm6069, %v6068
    %s6072 = scalar_lea.vmem [#allocation1], 707
    %v6073 = vld [vmem:[%s6072] ss:$8 sm:$0xf]
    %s6074 = scalar_lea.vmem [#allocation1], 707
    %v6075 = vld [vmem:[%s6074] ss:$8 sm:$0xf0]
    %vm6076 = vcmask 1047556
    %v6077 = vsel %vm6076, %v6075, %v6073
    %6078 = vrot.lane.b32.xlu0 %v6077, 48
    %v6079 = vpop.permute.xlu0 %6078
    %vm6080 = vcmask 523648
    %s6081 = scalar_lea.vmem [#allocation0], 88
    %6082 = vst.msk [vmem:[%s6081] sm:$0xff] %vm6080, %v6079
    %s6083 = scalar_lea.vmem [#allocation1], 963
    %v6084 = vld [vmem:[%s6083] ss:$8 sm:$0xf]
    %s6085 = scalar_lea.vmem [#allocation1], 963
    %v6086 = vld [vmem:[%s6085] ss:$8 sm:$0xf0]
    %vm6087 = vcmask 1047556
    %v6088 = vsel %vm6087, %v6086, %v6084
    %6089 = vrot.lane.b32.xlu0 %v6088, 48
    %v6090 = vpop.permute.xlu0 %6089
    %vm6091 = vcmask 523648
    %s6092 = scalar_lea.vmem [#allocation0], 120
    %6093 = vst.msk [vmem:[%s6092] sm:$0xff] %vm6091, %v6090
    %s6094 = scalar_lea.vmem [#allocation1], 1219
    %v6095 = vld [vmem:[%s6094] ss:$8 sm:$0xf]
    %s6096 = scalar_lea.vmem [#allocation1], 1219
    %v6097 = vld [vmem:[%s6096] ss:$8 sm:$0xf0]
    %vm6098 = vcmask 1047556
    %v6099 = vsel %vm6098, %v6097, %v6095
    %6100 = vrot.lane.b32.xlu0 %v6099, 48
    %v6101 = vpop.permute.xlu0 %6100
    %vm6102 = vcmask 523648
    %s6103 = scalar_lea.vmem [#allocation0], 152
    %6104 = vst.msk [vmem:[%s6103] sm:$0xff] %vm6102, %v6101
    %s6105 = scalar_lea.vmem [#allocation1], 1475
    %v6106 = vld [vmem:[%s6105] ss:$8 sm:$0xf]
    %s6107 = scalar_lea.vmem [#allocation1], 1475
    %v6108 = vld [vmem:[%s6107] ss:$8 sm:$0xf0]
    %vm6109 = vcmask 1047556
    %v6110 = vsel %vm6109, %v6108, %v6106
    %6111 = vrot.lane.b32.xlu0 %v6110, 48
    %v6112 = vpop.permute.xlu0 %6111
    %vm6113 = vcmask 523648
    %s6114 = scalar_lea.vmem [#allocation0], 184
    %6115 = vst.msk [vmem:[%s6114] sm:$0xff] %vm6113, %v6112
    %s6116 = scalar_lea.vmem [#allocation1], 1731
    %v6117 = vld [vmem:[%s6116] ss:$8 sm:$0xf]
    %s6118 = scalar_lea.vmem [#allocation1], 1731
    %v6119 = vld [vmem:[%s6118] ss:$8 sm:$0xf0]
    %vm6120 = vcmask 1047556
    %v6121 = vsel %vm6120, %v6119, %v6117
    %6122 = vrot.lane.b32.xlu0 %v6121, 48
    %v6123 = vpop.permute.xlu0 %6122
    %vm6124 = vcmask 523648
    %s6125 = scalar_lea.vmem [#allocation0], 216
    %6126 = vst.msk [vmem:[%s6125] sm:$0xff] %vm6124, %v6123
    %s6127 = scalar_lea.vmem [#allocation1], 1987
    %v6128 = vld [vmem:[%s6127] ss:$8 sm:$0xf]
    %s6129 = scalar_lea.vmem [#allocation1], 1987
    %v6130 = vld [vmem:[%s6129] ss:$8 sm:$0xf0]
    %vm6131 = vcmask 1047556
    %v6132 = vsel %vm6131, %v6130, %v6128
    %6133 = vrot.lane.b32.xlu0 %v6132, 48
    %v6134 = vpop.permute.xlu0 %6133
    %vm6135 = vcmask 523648
    %s6136 = scalar_lea.vmem [#allocation0], 248
    %6137 = vst.msk [vmem:[%s6136] sm:$0xff] %vm6135, %v6134
    %s6138 = scalar_lea.vmem [#allocation1], 2
    %v6139 = vld [vmem:[%s6138] ss:$8 sm:$0xf]
    %s6140 = scalar_lea.vmem [#allocation1], 2
    %v6141 = vld [vmem:[%s6140] ss:$8 sm:$0xf0]
    %vm6142 = vcmask 1047556
    %v6143 = vsel %vm6142, %v6141, %v6139
    %6144 = vrot.lane.b32.xlu0 %v6143, 32
    %v6145 = vpop.permute.xlu0 %6144
    %vm6146 = vcmask 392448
    %6147 = vst.msk [vmem:[#allocation0] sm:$0xff] %vm6146, %v6145
    %s6148 = scalar_lea.vmem [#allocation1], 258
    %v6149 = vld [vmem:[%s6148] ss:$8 sm:$0xf]
    %s6150 = scalar_lea.vmem [#allocation1], 258
    %v6151 = vld [vmem:[%s6150] ss:$8 sm:$0xf0]
    %vm6152 = vcmask 1047556
    %v6153 = vsel %vm6152, %v6151, %v6149
    %6154 = vrot.lane.b32.xlu0 %v6153, 32
    %v6155 = vpop.permute.xlu0 %6154
    %vm6156 = vcmask 392448
    %s6157 = scalar_lea.vmem [#allocation0], 32
    %6158 = vst.msk [vmem:[%s6157] sm:$0xff] %vm6156, %v6155
    %s6159 = scalar_lea.vmem [#allocation1], 514
    %v6160 = vld [vmem:[%s6159] ss:$8 sm:$0xf]
    %s6161 = scalar_lea.vmem [#allocation1], 514
    %v6162 = vld [vmem:[%s6161] ss:$8 sm:$0xf0]
    %vm6163 = vcmask 1047556
    %v6164 = vsel %vm6163, %v6162, %v6160
    %6165 = vrot.lane.b32.xlu0 %v6164, 32
    %v6166 = vpop.permute.xlu0 %6165
    %vm6167 = vcmask 392448
    %s6168 = scalar_lea.vmem [#allocation0], 64
    %6169 = vst.msk [vmem:[%s6168] sm:$0xff] %vm6167, %v6166
    %s6170 = scalar_lea.vmem [#allocation1], 770
    %v6171 = vld [vmem:[%s6170] ss:$8 sm:$0xf]
    %s6172 = scalar_lea.vmem [#allocation1], 770
    %v6173 = vld [vmem:[%s6172] ss:$8 sm:$0xf0]
    %vm6174 = vcmask 1047556
    %v6175 = vsel %vm6174, %v6173, %v6171
    %6176 = vrot.lane.b32.xlu0 %v6175, 32
    %v6177 = vpop.permute.xlu0 %6176
    %vm6178 = vcmask 392448
    %s6179 = scalar_lea.vmem [#allocation0], 96
    %6180 = vst.msk [vmem:[%s6179] sm:$0xff] %vm6178, %v6177
    %s6181 = scalar_lea.vmem [#allocation1], 1026
    %v6182 = vld [vmem:[%s6181] ss:$8 sm:$0xf]
    %s6183 = scalar_lea.vmem [#allocation1], 1026
    %v6184 = vld [vmem:[%s6183] ss:$8 sm:$0xf0]
    %vm6185 = vcmask 1047556
    %v6186 = vsel %vm6185, %v6184, %v6182
    %6187 = vrot.lane.b32.xlu0 %v6186, 32
    %v6188 = vpop.permute.xlu0 %6187
    %vm6189 = vcmask 392448
    %s6190 = scalar_lea.vmem [#allocation0], 128
    %6191 = vst.msk [vmem:[%s6190] sm:$0xff] %vm6189, %v6188
    %s6192 = scalar_lea.vmem [#allocation1], 1282
    %v6193 = vld [vmem:[%s6192] ss:$8 sm:$0xf]
    %s6194 = scalar_lea.vmem [#allocation1], 1282
    %v6195 = vld [vmem:[%s6194] ss:$8 sm:$0xf0]
    %vm6196 = vcmask 1047556
    %v6197 = vsel %vm6196, %v6195, %v6193
    %6198 = vrot.lane.b32.xlu0 %v6197, 32
    %v6199 = vpop.permute.xlu0 %6198
    %vm6200 = vcmask 392448
    %s6201 = scalar_lea.vmem [#allocation0], 160
    %6202 = vst.msk [vmem:[%s6201] sm:$0xff] %vm6200, %v6199
    %s6203 = scalar_lea.vmem [#allocation1], 1538
    %v6204 = vld [vmem:[%s6203] ss:$8 sm:$0xf]
    %s6205 = scalar_lea.vmem [#allocation1], 1538
    %v6206 = vld [vmem:[%s6205] ss:$8 sm:$0xf0]
    %vm6207 = vcmask 1047556
    %v6208 = vsel %vm6207, %v6206, %v6204
    %6209 = vrot.lane.b32.xlu0 %v6208, 32
    %v6210 = vpop.permute.xlu0 %6209
    %vm6211 = vcmask 392448
    %s6212 = scalar_lea.vmem [#allocation0], 192
    %6213 = vst.msk [vmem:[%s6212] sm:$0xff] %vm6211, %v6210
    %s6214 = scalar_lea.vmem [#allocation1], 1794
    %v6215 = vld [vmem:[%s6214] ss:$8 sm:$0xf]
    %s6216 = scalar_lea.vmem [#allocation1], 1794
    %v6217 = vld [vmem:[%s6216] ss:$8 sm:$0xf0]
    %vm6218 = vcmask 1047556
    %v6219 = vsel %vm6218, %v6217, %v6215
    %6220 = vrot.lane.b32.xlu0 %v6219, 32
    %v6221 = vpop.permute.xlu0 %6220
    %vm6222 = vcmask 392448
    %s6223 = scalar_lea.vmem [#allocation0], 224
    %6224 = vst.msk [vmem:[%s6223] sm:$0xff] %vm6222, %v6221
    %s6225 = scalar_lea.vmem [#allocation1], 66
    %v6226 = vld [vmem:[%s6225] ss:$8 sm:$0xf]
    %s6227 = scalar_lea.vmem [#allocation1], 66
    %v6228 = vld [vmem:[%s6227] ss:$8 sm:$0xf0]
    %vm6229 = vcmask 1047556
    %v6230 = vsel %vm6229, %v6228, %v6226
    %6231 = vrot.lane.b32.xlu0 %v6230, 32
    %v6232 = vpop.permute.xlu0 %6231
    %vm6233 = vcmask 392448
    %s6234 = scalar_lea.vmem [#allocation0], 8
    %6235 = vst.msk [vmem:[%s6234] sm:$0xff] %vm6233, %v6232
    %s6236 = scalar_lea.vmem [#allocation1], 322
    %v6237 = vld [vmem:[%s6236] ss:$8 sm:$0xf]
    %s6238 = scalar_lea.vmem [#allocation1], 322
    %v6239 = vld [vmem:[%s6238] ss:$8 sm:$0xf0]
    %vm6240 = vcmask 1047556
    %v6241 = vsel %vm6240, %v6239, %v6237
    %6242 = vrot.lane.b32.xlu0 %v6241, 32
    %v6243 = vpop.permute.xlu0 %6242
    %vm6244 = vcmask 392448
    %s6245 = scalar_lea.vmem [#allocation0], 40
    %6246 = vst.msk [vmem:[%s6245] sm:$0xff] %vm6244, %v6243
    %s6247 = scalar_lea.vmem [#allocation1], 578
    %v6248 = vld [vmem:[%s6247] ss:$8 sm:$0xf]
    %s6249 = scalar_lea.vmem [#allocation1], 578
    %v6250 = vld [vmem:[%s6249] ss:$8 sm:$0xf0]
    %vm6251 = vcmask 1047556
    %v6252 = vsel %vm6251, %v6250, %v6248
    %6253 = vrot.lane.b32.xlu0 %v6252, 32
    %v6254 = vpop.permute.xlu0 %6253
    %vm6255 = vcmask 392448
    %s6256 = scalar_lea.vmem [#allocation0], 72
    %6257 = vst.msk [vmem:[%s6256] sm:$0xff] %vm6255, %v6254
    %s6258 = scalar_lea.vmem [#allocation1], 834
    %v6259 = vld [vmem:[%s6258] ss:$8 sm:$0xf]
    %s6260 = scalar_lea.vmem [#allocation1], 834
    %v6261 = vld [vmem:[%s6260] ss:$8 sm:$0xf0]
    %vm6262 = vcmask 1047556
    %v6263 = vsel %vm6262, %v6261, %v6259
    %6264 = vrot.lane.b32.xlu0 %v6263, 32
    %v6265 = vpop.permute.xlu0 %6264
    %vm6266 = vcmask 392448
    %s6267 = scalar_lea.vmem [#allocation0], 104
    %6268 = vst.msk [vmem:[%s6267] sm:$0xff] %vm6266, %v6265
    %s6269 = scalar_lea.vmem [#allocation1], 1090
    %v6270 = vld [vmem:[%s6269] ss:$8 sm:$0xf]
    %s6271 = scalar_lea.vmem [#allocation1], 1090
    %v6272 = vld [vmem:[%s6271] ss:$8 sm:$0xf0]
    %vm6273 = vcmask 1047556
    %v6274 = vsel %vm6273, %v6272, %v6270
    %6275 = vrot.lane.b32.xlu0 %v6274, 32
    %v6276 = vpop.permute.xlu0 %6275
    %vm6277 = vcmask 392448
    %s6278 = scalar_lea.vmem [#allocation0], 136
    %6279 = vst.msk [vmem:[%s6278] sm:$0xff] %vm6277, %v6276
    %s6280 = scalar_lea.vmem [#allocation1], 1346
    %v6281 = vld [vmem:[%s6280] ss:$8 sm:$0xf]
    %s6282 = scalar_lea.vmem [#allocation1], 1346
    %v6283 = vld [vmem:[%s6282] ss:$8 sm:$0xf0]
    %vm6284 = vcmask 1047556
    %v6285 = vsel %vm6284, %v6283, %v6281
    %6286 = vrot.lane.b32.xlu0 %v6285, 32
    %v6287 = vpop.permute.xlu0 %6286
    %vm6288 = vcmask 392448
    %s6289 = scalar_lea.vmem [#allocation0], 168
    %6290 = vst.msk [vmem:[%s6289] sm:$0xff] %vm6288, %v6287
    %s6291 = scalar_lea.vmem [#allocation1], 1602
    %v6292 = vld [vmem:[%s6291] ss:$8 sm:$0xf]
    %s6293 = scalar_lea.vmem [#allocation1], 1602
    %v6294 = vld [vmem:[%s6293] ss:$8 sm:$0xf0]
    %vm6295 = vcmask 1047556
    %v6296 = vsel %vm6295, %v6294, %v6292
    %6297 = vrot.lane.b32.xlu0 %v6296, 32
    %v6298 = vpop.permute.xlu0 %6297
    %vm6299 = vcmask 392448
    %s6300 = scalar_lea.vmem [#allocation0], 200
    %6301 = vst.msk [vmem:[%s6300] sm:$0xff] %vm6299, %v6298
    %s6302 = scalar_lea.vmem [#allocation1], 1858
    %v6303 = vld [vmem:[%s6302] ss:$8 sm:$0xf]
    %s6304 = scalar_lea.vmem [#allocation1], 1858
    %v6305 = vld [vmem:[%s6304] ss:$8 sm:$0xf0]
    %vm6306 = vcmask 1047556
    %v6307 = vsel %vm6306, %v6305, %v6303
    %6308 = vrot.lane.b32.xlu0 %v6307, 32
    %v6309 = vpop.permute.xlu0 %6308
    %vm6310 = vcmask 392448
    %s6311 = scalar_lea.vmem [#allocation0], 232
    %6312 = vst.msk [vmem:[%s6311] sm:$0xff] %vm6310, %v6309
    %s6313 = scalar_lea.vmem [#allocation1], 130
    %v6314 = vld [vmem:[%s6313] ss:$8 sm:$0xf]
    %s6315 = scalar_lea.vmem [#allocation1], 130
    %v6316 = vld [vmem:[%s6315] ss:$8 sm:$0xf0]
    %vm6317 = vcmask 1047556
    %v6318 = vsel %vm6317, %v6316, %v6314
    %6319 = vrot.lane.b32.xlu0 %v6318, 32
    %v6320 = vpop.permute.xlu0 %6319
    %vm6321 = vcmask 392448
    %s6322 = scalar_lea.vmem [#allocation0], 16
    %6323 = vst.msk [vmem:[%s6322] sm:$0xff] %vm6321, %v6320
    %s6324 = scalar_lea.vmem [#allocation1], 386
    %v6325 = vld [vmem:[%s6324] ss:$8 sm:$0xf]
    %s6326 = scalar_lea.vmem [#allocation1], 386
    %v6327 = vld [vmem:[%s6326] ss:$8 sm:$0xf0]
    %vm6328 = vcmask 1047556
    %v6329 = vsel %vm6328, %v6327, %v6325
    %6330 = vrot.lane.b32.xlu0 %v6329, 32
    %v6331 = vpop.permute.xlu0 %6330
    %vm6332 = vcmask 392448
    %s6333 = scalar_lea.vmem [#allocation0], 48
    %6334 = vst.msk [vmem:[%s6333] sm:$0xff] %vm6332, %v6331
    %s6335 = scalar_lea.vmem [#allocation1], 642
    %v6336 = vld [vmem:[%s6335] ss:$8 sm:$0xf]
    %s6337 = scalar_lea.vmem [#allocation1], 642
    %v6338 = vld [vmem:[%s6337] ss:$8 sm:$0xf0]
    %vm6339 = vcmask 1047556
    %v6340 = vsel %vm6339, %v6338, %v6336
    %6341 = vrot.lane.b32.xlu0 %v6340, 32
    %v6342 = vpop.permute.xlu0 %6341
    %vm6343 = vcmask 392448
    %s6344 = scalar_lea.vmem [#allocation0], 80
    %6345 = vst.msk [vmem:[%s6344] sm:$0xff] %vm6343, %v6342
    %s6346 = scalar_lea.vmem [#allocation1], 898
    %v6347 = vld [vmem:[%s6346] ss:$8 sm:$0xf]
    %s6348 = scalar_lea.vmem [#allocation1], 898
    %v6349 = vld [vmem:[%s6348] ss:$8 sm:$0xf0]
    %vm6350 = vcmask 1047556
    %v6351 = vsel %vm6350, %v6349, %v6347
    %6352 = vrot.lane.b32.xlu0 %v6351, 32
    %v6353 = vpop.permute.xlu0 %6352
    %vm6354 = vcmask 392448
    %s6355 = scalar_lea.vmem [#allocation0], 112
    %6356 = vst.msk [vmem:[%s6355] sm:$0xff] %vm6354, %v6353
    %s6357 = scalar_lea.vmem [#allocation1], 1154
    %v6358 = vld [vmem:[%s6357] ss:$8 sm:$0xf]
    %s6359 = scalar_lea.vmem [#allocation1], 1154
    %v6360 = vld [vmem:[%s6359] ss:$8 sm:$0xf0]
    %vm6361 = vcmask 1047556
    %v6362 = vsel %vm6361, %v6360, %v6358
    %6363 = vrot.lane.b32.xlu0 %v6362, 32
    %v6364 = vpop.permute.xlu0 %6363
    %vm6365 = vcmask 392448
    %s6366 = scalar_lea.vmem [#allocation0], 144
    %6367 = vst.msk [vmem:[%s6366] sm:$0xff] %vm6365, %v6364
    %s6368 = scalar_lea.vmem [#allocation1], 1410
    %v6369 = vld [vmem:[%s6368] ss:$8 sm:$0xf]
    %s6370 = scalar_lea.vmem [#allocation1], 1410
    %v6371 = vld [vmem:[%s6370] ss:$8 sm:$0xf0]
    %vm6372 = vcmask 1047556
    %v6373 = vsel %vm6372, %v6371, %v6369
    %6374 = vrot.lane.b32.xlu0 %v6373, 32
    %v6375 = vpop.permute.xlu0 %6374
    %vm6376 = vcmask 392448
    %s6377 = scalar_lea.vmem [#allocation0], 176
    %6378 = vst.msk [vmem:[%s6377] sm:$0xff] %vm6376, %v6375
    %s6379 = scalar_lea.vmem [#allocation1], 1666
    %v6380 = vld [vmem:[%s6379] ss:$8 sm:$0xf]
    %s6381 = scalar_lea.vmem [#allocation1], 1666
    %v6382 = vld [vmem:[%s6381] ss:$8 sm:$0xf0]
    %vm6383 = vcmask 1047556
    %v6384 = vsel %vm6383, %v6382, %v6380
    %6385 = vrot.lane.b32.xlu0 %v6384, 32
    %v6386 = vpop.permute.xlu0 %6385
    %vm6387 = vcmask 392448
    %s6388 = scalar_lea.vmem [#allocation0], 208
    %6389 = vst.msk [vmem:[%s6388] sm:$0xff] %vm6387, %v6386
    %s6390 = scalar_lea.vmem [#allocation1], 1922
    %v6391 = vld [vmem:[%s6390] ss:$8 sm:$0xf]
    %s6392 = scalar_lea.vmem [#allocation1], 1922
    %v6393 = vld [vmem:[%s6392] ss:$8 sm:$0xf0]
    %vm6394 = vcmask 1047556
    %v6395 = vsel %vm6394, %v6393, %v6391
    %6396 = vrot.lane.b32.xlu0 %v6395, 32
    %v6397 = vpop.permute.xlu0 %6396
    %vm6398 = vcmask 392448
    %s6399 = scalar_lea.vmem [#allocation0], 240
    %6400 = vst.msk [vmem:[%s6399] sm:$0xff] %vm6398, %v6397
    %s6401 = scalar_lea.vmem [#allocation1], 194
    %v6402 = vld [vmem:[%s6401] ss:$8 sm:$0xf]
    %s6403 = scalar_lea.vmem [#allocation1], 194
    %v6404 = vld [vmem:[%s6403] ss:$8 sm:$0xf0]
    %vm6405 = vcmask 1047556
    %v6406 = vsel %vm6405, %v6404, %v6402
    %6407 = vrot.lane.b32.xlu0 %v6406, 32
    %v6408 = vpop.permute.xlu0 %6407
    %vm6409 = vcmask 392448
    %s6410 = scalar_lea.vmem [#allocation0], 24
    %6411 = vst.msk [vmem:[%s6410] sm:$0xff] %vm6409, %v6408
    %s6412 = scalar_lea.vmem [#allocation1], 450
    %v6413 = vld [vmem:[%s6412] ss:$8 sm:$0xf]
    %s6414 = scalar_lea.vmem [#allocation1], 450
    %v6415 = vld [vmem:[%s6414] ss:$8 sm:$0xf0]
    %vm6416 = vcmask 1047556
    %v6417 = vsel %vm6416, %v6415, %v6413
    %6418 = vrot.lane.b32.xlu0 %v6417, 32
    %v6419 = vpop.permute.xlu0 %6418
    %vm6420 = vcmask 392448
    %s6421 = scalar_lea.vmem [#allocation0], 56
    %6422 = vst.msk [vmem:[%s6421] sm:$0xff] %vm6420, %v6419
    %s6423 = scalar_lea.vmem [#allocation1], 706
    %v6424 = vld [vmem:[%s6423] ss:$8 sm:$0xf]
    %s6425 = scalar_lea.vmem [#allocation1], 706
    %v6426 = vld [vmem:[%s6425] ss:$8 sm:$0xf0]
    %vm6427 = vcmask 1047556
    %v6428 = vsel %vm6427, %v6426, %v6424
    %6429 = vrot.lane.b32.xlu0 %v6428, 32
    %v6430 = vpop.permute.xlu0 %6429
    %vm6431 = vcmask 392448
    %s6432 = scalar_lea.vmem [#allocation0], 88
    %6433 = vst.msk [vmem:[%s6432] sm:$0xff] %vm6431, %v6430
    %s6434 = scalar_lea.vmem [#allocation1], 962
    %v6435 = vld [vmem:[%s6434] ss:$8 sm:$0xf]
    %s6436 = scalar_lea.vmem [#allocation1], 962
    %v6437 = vld [vmem:[%s6436] ss:$8 sm:$0xf0]
    %vm6438 = vcmask 1047556
    %v6439 = vsel %vm6438, %v6437, %v6435
    %6440 = vrot.lane.b32.xlu0 %v6439, 32
    %v6441 = vpop.permute.xlu0 %6440
    %vm6442 = vcmask 392448
    %s6443 = scalar_lea.vmem [#allocation0], 120
    %6444 = vst.msk [vmem:[%s6443] sm:$0xff] %vm6442, %v6441
    %s6445 = scalar_lea.vmem [#allocation1], 1218
    %v6446 = vld [vmem:[%s6445] ss:$8 sm:$0xf]
    %s6447 = scalar_lea.vmem [#allocation1], 1218
    %v6448 = vld [vmem:[%s6447] ss:$8 sm:$0xf0]
    %vm6449 = vcmask 1047556
    %v6450 = vsel %vm6449, %v6448, %v6446
    %6451 = vrot.lane.b32.xlu0 %v6450, 32
    %v6452 = vpop.permute.xlu0 %6451
    %vm6453 = vcmask 392448
    %s6454 = scalar_lea.vmem [#allocation0], 152
    %6455 = vst.msk [vmem:[%s6454] sm:$0xff] %vm6453, %v6452
    %s6456 = scalar_lea.vmem [#allocation1], 1474
    %v6457 = vld [vmem:[%s6456] ss:$8 sm:$0xf]
    %s6458 = scalar_lea.vmem [#allocation1], 1474
    %v6459 = vld [vmem:[%s6458] ss:$8 sm:$0xf0]
    %vm6460 = vcmask 1047556
    %v6461 = vsel %vm6460, %v6459, %v6457
    %6462 = vrot.lane.b32.xlu0 %v6461, 32
    %v6463 = vpop.permute.xlu0 %6462
    %vm6464 = vcmask 392448
    %s6465 = scalar_lea.vmem [#allocation0], 184
    %6466 = vst.msk [vmem:[%s6465] sm:$0xff] %vm6464, %v6463
    %s6467 = scalar_lea.vmem [#allocation1], 1730
    %v6468 = vld [vmem:[%s6467] ss:$8 sm:$0xf]
    %s6469 = scalar_lea.vmem [#allocation1], 1730
    %v6470 = vld [vmem:[%s6469] ss:$8 sm:$0xf0]
    %vm6471 = vcmask 1047556
    %v6472 = vsel %vm6471, %v6470, %v6468
    %6473 = vrot.lane.b32.xlu0 %v6472, 32
    %v6474 = vpop.permute.xlu0 %6473
    %vm6475 = vcmask 392448
    %s6476 = scalar_lea.vmem [#allocation0], 216
    %6477 = vst.msk [vmem:[%s6476] sm:$0xff] %vm6475, %v6474
    %s6478 = scalar_lea.vmem [#allocation1], 1986
    %v6479 = vld [vmem:[%s6478] ss:$8 sm:$0xf]
    %s6480 = scalar_lea.vmem [#allocation1], 1986
    %v6481 = vld [vmem:[%s6480] ss:$8 sm:$0xf0]
    %vm6482 = vcmask 1047556
    %v6483 = vsel %vm6482, %v6481, %v6479
    %6484 = vrot.lane.b32.xlu0 %v6483, 32
    %v6485 = vpop.permute.xlu0 %6484
    %vm6486 = vcmask 392448
    %s6487 = scalar_lea.vmem [#allocation0], 248
    %6488 = vst.msk [vmem:[%s6487] sm:$0xff] %vm6486, %v6485
    %s6489 = scalar_lea.vmem [#allocation1], 1
    %v6490 = vld [vmem:[%s6489] ss:$8 sm:$0xf]
    %s6491 = scalar_lea.vmem [#allocation1], 1
    %v6492 = vld [vmem:[%s6491] ss:$8 sm:$0xf0]
    %vm6493 = vcmask 1047556
    %v6494 = vsel %vm6493, %v6492, %v6490
    %6495 = vrot.lane.b32.xlu0 %v6494, 16
    %v6496 = vpop.permute.xlu0 %6495
    %vm6497 = vcmask 261248
    %6498 = vst.msk [vmem:[#allocation0] sm:$0xff] %vm6497, %v6496
    %s6499 = scalar_lea.vmem [#allocation1], 257
    %v6500 = vld [vmem:[%s6499] ss:$8 sm:$0xf]
    %s6501 = scalar_lea.vmem [#allocation1], 257
    %v6502 = vld [vmem:[%s6501] ss:$8 sm:$0xf0]
    %vm6503 = vcmask 1047556
    %v6504 = vsel %vm6503, %v6502, %v6500
    %6505 = vrot.lane.b32.xlu0 %v6504, 16
    %v6506 = vpop.permute.xlu0 %6505
    %vm6507 = vcmask 261248
    %s6508 = scalar_lea.vmem [#allocation0], 32
    %6509 = vst.msk [vmem:[%s6508] sm:$0xff] %vm6507, %v6506
    %s6510 = scalar_lea.vmem [#allocation1], 513
    %v6511 = vld [vmem:[%s6510] ss:$8 sm:$0xf]
    %s6512 = scalar_lea.vmem [#allocation1], 513
    %v6513 = vld [vmem:[%s6512] ss:$8 sm:$0xf0]
    %vm6514 = vcmask 1047556
    %v6515 = vsel %vm6514, %v6513, %v6511
    %6516 = vrot.lane.b32.xlu0 %v6515, 16
    %v6517 = vpop.permute.xlu0 %6516
    %vm6518 = vcmask 261248
    %s6519 = scalar_lea.vmem [#allocation0], 64
    %6520 = vst.msk [vmem:[%s6519] sm:$0xff] %vm6518, %v6517
    %s6521 = scalar_lea.vmem [#allocation1], 769
    %v6522 = vld [vmem:[%s6521] ss:$8 sm:$0xf]
    %s6523 = scalar_lea.vmem [#allocation1], 769
    %v6524 = vld [vmem:[%s6523] ss:$8 sm:$0xf0]
    %vm6525 = vcmask 1047556
    %v6526 = vsel %vm6525, %v6524, %v6522
    %6527 = vrot.lane.b32.xlu0 %v6526, 16
    %v6528 = vpop.permute.xlu0 %6527
    %vm6529 = vcmask 261248
    %s6530 = scalar_lea.vmem [#allocation0], 96
    %6531 = vst.msk [vmem:[%s6530] sm:$0xff] %vm6529, %v6528
    %s6532 = scalar_lea.vmem [#allocation1], 1025
    %v6533 = vld [vmem:[%s6532] ss:$8 sm:$0xf]
    %s6534 = scalar_lea.vmem [#allocation1], 1025
    %v6535 = vld [vmem:[%s6534] ss:$8 sm:$0xf0]
    %vm6536 = vcmask 1047556
    %v6537 = vsel %vm6536, %v6535, %v6533
    %6538 = vrot.lane.b32.xlu0 %v6537, 16
    %v6539 = vpop.permute.xlu0 %6538
    %vm6540 = vcmask 261248
    %s6541 = scalar_lea.vmem [#allocation0], 128
    %6542 = vst.msk [vmem:[%s6541] sm:$0xff] %vm6540, %v6539
    %s6543 = scalar_lea.vmem [#allocation1], 1281
    %v6544 = vld [vmem:[%s6543] ss:$8 sm:$0xf]
    %s6545 = scalar_lea.vmem [#allocation1], 1281
    %v6546 = vld [vmem:[%s6545] ss:$8 sm:$0xf0]
    %vm6547 = vcmask 1047556
    %v6548 = vsel %vm6547, %v6546, %v6544
    %6549 = vrot.lane.b32.xlu0 %v6548, 16
    %v6550 = vpop.permute.xlu0 %6549
    %vm6551 = vcmask 261248
    %s6552 = scalar_lea.vmem [#allocation0], 160
    %6553 = vst.msk [vmem:[%s6552] sm:$0xff] %vm6551, %v6550
    %s6554 = scalar_lea.vmem [#allocation1], 1537
    %v6555 = vld [vmem:[%s6554] ss:$8 sm:$0xf]
    %s6556 = scalar_lea.vmem [#allocation1], 1537
    %v6557 = vld [vmem:[%s6556] ss:$8 sm:$0xf0]
    %vm6558 = vcmask 1047556
    %v6559 = vsel %vm6558, %v6557, %v6555
    %6560 = vrot.lane.b32.xlu0 %v6559, 16
    %v6561 = vpop.permute.xlu0 %6560
    %vm6562 = vcmask 261248
    %s6563 = scalar_lea.vmem [#allocation0], 192
    %6564 = vst.msk [vmem:[%s6563] sm:$0xff] %vm6562, %v6561
    %s6565 = scalar_lea.vmem [#allocation1], 1793
    %v6566 = vld [vmem:[%s6565] ss:$8 sm:$0xf]
    %s6567 = scalar_lea.vmem [#allocation1], 1793
    %v6568 = vld [vmem:[%s6567] ss:$8 sm:$0xf0]
    %vm6569 = vcmask 1047556
    %v6570 = vsel %vm6569, %v6568, %v6566
    %6571 = vrot.lane.b32.xlu0 %v6570, 16
    %v6572 = vpop.permute.xlu0 %6571
    %vm6573 = vcmask 261248
    %s6574 = scalar_lea.vmem [#allocation0], 224
    %6575 = vst.msk [vmem:[%s6574] sm:$0xff] %vm6573, %v6572
    %s6576 = scalar_lea.vmem [#allocation1], 65
    %v6577 = vld [vmem:[%s6576] ss:$8 sm:$0xf]
    %s6578 = scalar_lea.vmem [#allocation1], 65
    %v6579 = vld [vmem:[%s6578] ss:$8 sm:$0xf0]
    %vm6580 = vcmask 1047556
    %v6581 = vsel %vm6580, %v6579, %v6577
    %6582 = vrot.lane.b32.xlu0 %v6581, 16
    %v6583 = vpop.permute.xlu0 %6582
    %vm6584 = vcmask 261248
    %s6585 = scalar_lea.vmem [#allocation0], 8
    %6586 = vst.msk [vmem:[%s6585] sm:$0xff] %vm6584, %v6583
    %s6587 = scalar_lea.vmem [#allocation1], 321
    %v6588 = vld [vmem:[%s6587] ss:$8 sm:$0xf]
    %s6589 = scalar_lea.vmem [#allocation1], 321
    %v6590 = vld [vmem:[%s6589] ss:$8 sm:$0xf0]
    %vm6591 = vcmask 1047556
    %v6592 = vsel %vm6591, %v6590, %v6588
    %6593 = vrot.lane.b32.xlu0 %v6592, 16
    %v6594 = vpop.permute.xlu0 %6593
    %vm6595 = vcmask 261248
    %s6596 = scalar_lea.vmem [#allocation0], 40
    %6597 = vst.msk [vmem:[%s6596] sm:$0xff] %vm6595, %v6594
    %s6598 = scalar_lea.vmem [#allocation1], 577
    %v6599 = vld [vmem:[%s6598] ss:$8 sm:$0xf]
    %s6600 = scalar_lea.vmem [#allocation1], 577
    %v6601 = vld [vmem:[%s6600] ss:$8 sm:$0xf0]
    %vm6602 = vcmask 1047556
    %v6603 = vsel %vm6602, %v6601, %v6599
    %6604 = vrot.lane.b32.xlu0 %v6603, 16
    %v6605 = vpop.permute.xlu0 %6604
    %vm6606 = vcmask 261248
    %s6607 = scalar_lea.vmem [#allocation0], 72
    %6608 = vst.msk [vmem:[%s6607] sm:$0xff] %vm6606, %v6605
    %s6609 = scalar_lea.vmem [#allocation1], 833
    %v6610 = vld [vmem:[%s6609] ss:$8 sm:$0xf]
    %s6611 = scalar_lea.vmem [#allocation1], 833
    %v6612 = vld [vmem:[%s6611] ss:$8 sm:$0xf0]
    %vm6613 = vcmask 1047556
    %v6614 = vsel %vm6613, %v6612, %v6610
    %6615 = vrot.lane.b32.xlu0 %v6614, 16
    %v6616 = vpop.permute.xlu0 %6615
    %vm6617 = vcmask 261248
    %s6618 = scalar_lea.vmem [#allocation0], 104
    %6619 = vst.msk [vmem:[%s6618] sm:$0xff] %vm6617, %v6616
    %s6620 = scalar_lea.vmem [#allocation1], 1089
    %v6621 = vld [vmem:[%s6620] ss:$8 sm:$0xf]
    %s6622 = scalar_lea.vmem [#allocation1], 1089
    %v6623 = vld [vmem:[%s6622] ss:$8 sm:$0xf0]
    %vm6624 = vcmask 1047556
    %v6625 = vsel %vm6624, %v6623, %v6621
    %6626 = vrot.lane.b32.xlu0 %v6625, 16
    %v6627 = vpop.permute.xlu0 %6626
    %vm6628 = vcmask 261248
    %s6629 = scalar_lea.vmem [#allocation0], 136
    %6630 = vst.msk [vmem:[%s6629] sm:$0xff] %vm6628, %v6627
    %s6631 = scalar_lea.vmem [#allocation1], 1345
    %v6632 = vld [vmem:[%s6631] ss:$8 sm:$0xf]
    %s6633 = scalar_lea.vmem [#allocation1], 1345
    %v6634 = vld [vmem:[%s6633] ss:$8 sm:$0xf0]
    %vm6635 = vcmask 1047556
    %v6636 = vsel %vm6635, %v6634, %v6632
    %6637 = vrot.lane.b32.xlu0 %v6636, 16
    %v6638 = vpop.permute.xlu0 %6637
    %vm6639 = vcmask 261248
    %s6640 = scalar_lea.vmem [#allocation0], 168
    %6641 = vst.msk [vmem:[%s6640] sm:$0xff] %vm6639, %v6638
    %s6642 = scalar_lea.vmem [#allocation1], 1601
    %v6643 = vld [vmem:[%s6642] ss:$8 sm:$0xf]
    %s6644 = scalar_lea.vmem [#allocation1], 1601
    %v6645 = vld [vmem:[%s6644] ss:$8 sm:$0xf0]
    %vm6646 = vcmask 1047556
    %v6647 = vsel %vm6646, %v6645, %v6643
    %6648 = vrot.lane.b32.xlu0 %v6647, 16
    %v6649 = vpop.permute.xlu0 %6648
    %vm6650 = vcmask 261248
    %s6651 = scalar_lea.vmem [#allocation0], 200
    %6652 = vst.msk [vmem:[%s6651] sm:$0xff] %vm6650, %v6649
    %s6653 = scalar_lea.vmem [#allocation1], 1857
    %v6654 = vld [vmem:[%s6653] ss:$8 sm:$0xf]
    %s6655 = scalar_lea.vmem [#allocation1], 1857
    %v6656 = vld [vmem:[%s6655] ss:$8 sm:$0xf0]
    %vm6657 = vcmask 1047556
    %v6658 = vsel %vm6657, %v6656, %v6654
    %6659 = vrot.lane.b32.xlu0 %v6658, 16
    %v6660 = vpop.permute.xlu0 %6659
    %vm6661 = vcmask 261248
    %s6662 = scalar_lea.vmem [#allocation0], 232
    %6663 = vst.msk [vmem:[%s6662] sm:$0xff] %vm6661, %v6660
    %s6664 = scalar_lea.vmem [#allocation1], 129
    %v6665 = vld [vmem:[%s6664] ss:$8 sm:$0xf]
    %s6666 = scalar_lea.vmem [#allocation1], 129
    %v6667 = vld [vmem:[%s6666] ss:$8 sm:$0xf0]
    %vm6668 = vcmask 1047556
    %v6669 = vsel %vm6668, %v6667, %v6665
    %6670 = vrot.lane.b32.xlu0 %v6669, 16
    %v6671 = vpop.permute.xlu0 %6670
    %vm6672 = vcmask 261248
    %s6673 = scalar_lea.vmem [#allocation0], 16
    %6674 = vst.msk [vmem:[%s6673] sm:$0xff] %vm6672, %v6671
    %s6675 = scalar_lea.vmem [#allocation1], 385
    %v6676 = vld [vmem:[%s6675] ss:$8 sm:$0xf]
    %s6677 = scalar_lea.vmem [#allocation1], 385
    %v6678 = vld [vmem:[%s6677] ss:$8 sm:$0xf0]
    %vm6679 = vcmask 1047556
    %v6680 = vsel %vm6679, %v6678, %v6676
    %6681 = vrot.lane.b32.xlu0 %v6680, 16
    %v6682 = vpop.permute.xlu0 %6681
    %vm6683 = vcmask 261248
    %s6684 = scalar_lea.vmem [#allocation0], 48
    %6685 = vst.msk [vmem:[%s6684] sm:$0xff] %vm6683, %v6682
    %s6686 = scalar_lea.vmem [#allocation1], 641
    %v6687 = vld [vmem:[%s6686] ss:$8 sm:$0xf]
    %s6688 = scalar_lea.vmem [#allocation1], 641
    %v6689 = vld [vmem:[%s6688] ss:$8 sm:$0xf0]
    %vm6690 = vcmask 1047556
    %v6691 = vsel %vm6690, %v6689, %v6687
    %6692 = vrot.lane.b32.xlu0 %v6691, 16
    %v6693 = vpop.permute.xlu0 %6692
    %vm6694 = vcmask 261248
    %s6695 = scalar_lea.vmem [#allocation0], 80
    %6696 = vst.msk [vmem:[%s6695] sm:$0xff] %vm6694, %v6693
    %s6697 = scalar_lea.vmem [#allocation1], 897
    %v6698 = vld [vmem:[%s6697] ss:$8 sm:$0xf]
    %s6699 = scalar_lea.vmem [#allocation1], 897
    %v6700 = vld [vmem:[%s6699] ss:$8 sm:$0xf0]
    %vm6701 = vcmask 1047556
    %v6702 = vsel %vm6701, %v6700, %v6698
    %6703 = vrot.lane.b32.xlu0 %v6702, 16
    %v6704 = vpop.permute.xlu0 %6703
    %vm6705 = vcmask 261248
    %s6706 = scalar_lea.vmem [#allocation0], 112
    %6707 = vst.msk [vmem:[%s6706] sm:$0xff] %vm6705, %v6704
    %s6708 = scalar_lea.vmem [#allocation1], 1153
    %v6709 = vld [vmem:[%s6708] ss:$8 sm:$0xf]
    %s6710 = scalar_lea.vmem [#allocation1], 1153
    %v6711 = vld [vmem:[%s6710] ss:$8 sm:$0xf0]
    %vm6712 = vcmask 1047556
    %v6713 = vsel %vm6712, %v6711, %v6709
    %6714 = vrot.lane.b32.xlu0 %v6713, 16
    %v6715 = vpop.permute.xlu0 %6714
    %vm6716 = vcmask 261248
    %s6717 = scalar_lea.vmem [#allocation0], 144
    %6718 = vst.msk [vmem:[%s6717] sm:$0xff] %vm6716, %v6715
    %s6719 = scalar_lea.vmem [#allocation1], 1409
    %v6720 = vld [vmem:[%s6719] ss:$8 sm:$0xf]
    %s6721 = scalar_lea.vmem [#allocation1], 1409
    %v6722 = vld [vmem:[%s6721] ss:$8 sm:$0xf0]
    %vm6723 = vcmask 1047556
    %v6724 = vsel %vm6723, %v6722, %v6720
    %6725 = vrot.lane.b32.xlu0 %v6724, 16
    %v6726 = vpop.permute.xlu0 %6725
    %vm6727 = vcmask 261248
    %s6728 = scalar_lea.vmem [#allocation0], 176
    %6729 = vst.msk [vmem:[%s6728] sm:$0xff] %vm6727, %v6726
    %s6730 = scalar_lea.vmem [#allocation1], 1665
    %v6731 = vld [vmem:[%s6730] ss:$8 sm:$0xf]
    %s6732 = scalar_lea.vmem [#allocation1], 1665
    %v6733 = vld [vmem:[%s6732] ss:$8 sm:$0xf0]
    %vm6734 = vcmask 1047556
    %v6735 = vsel %vm6734, %v6733, %v6731
    %6736 = vrot.lane.b32.xlu0 %v6735, 16
    %v6737 = vpop.permute.xlu0 %6736
    %vm6738 = vcmask 261248
    %s6739 = scalar_lea.vmem [#allocation0], 208
    %6740 = vst.msk [vmem:[%s6739] sm:$0xff] %vm6738, %v6737
    %s6741 = scalar_lea.vmem [#allocation1], 1921
    %v6742 = vld [vmem:[%s6741] ss:$8 sm:$0xf]
    %s6743 = scalar_lea.vmem [#allocation1], 1921
    %v6744 = vld [vmem:[%s6743] ss:$8 sm:$0xf0]
    %vm6745 = vcmask 1047556
    %v6746 = vsel %vm6745, %v6744, %v6742
    %6747 = vrot.lane.b32.xlu0 %v6746, 16
    %v6748 = vpop.permute.xlu0 %6747
    %vm6749 = vcmask 261248
    %s6750 = scalar_lea.vmem [#allocation0], 240
    %6751 = vst.msk [vmem:[%s6750] sm:$0xff] %vm6749, %v6748
    %s6752 = scalar_lea.vmem [#allocation1], 193
    %v6753 = vld [vmem:[%s6752] ss:$8 sm:$0xf]
    %s6754 = scalar_lea.vmem [#allocation1], 193
    %v6755 = vld [vmem:[%s6754] ss:$8 sm:$0xf0]
    %vm6756 = vcmask 1047556
    %v6757 = vsel %vm6756, %v6755, %v6753
    %6758 = vrot.lane.b32.xlu0 %v6757, 16
    %v6759 = vpop.permute.xlu0 %6758
    %vm6760 = vcmask 261248
    %s6761 = scalar_lea.vmem [#allocation0], 24
    %6762 = vst.msk [vmem:[%s6761] sm:$0xff] %vm6760, %v6759
    %s6763 = scalar_lea.vmem [#allocation1], 449
    %v6764 = vld [vmem:[%s6763] ss:$8 sm:$0xf]
    %s6765 = scalar_lea.vmem [#allocation1], 449
    %v6766 = vld [vmem:[%s6765] ss:$8 sm:$0xf0]
    %vm6767 = vcmask 1047556
    %v6768 = vsel %vm6767, %v6766, %v6764
    %6769 = vrot.lane.b32.xlu0 %v6768, 16
    %v6770 = vpop.permute.xlu0 %6769
    %vm6771 = vcmask 261248
    %s6772 = scalar_lea.vmem [#allocation0], 56
    %6773 = vst.msk [vmem:[%s6772] sm:$0xff] %vm6771, %v6770
    %s6774 = scalar_lea.vmem [#allocation1], 705
    %v6775 = vld [vmem:[%s6774] ss:$8 sm:$0xf]
    %s6776 = scalar_lea.vmem [#allocation1], 705
    %v6777 = vld [vmem:[%s6776] ss:$8 sm:$0xf0]
    %vm6778 = vcmask 1047556
    %v6779 = vsel %vm6778, %v6777, %v6775
    %6780 = vrot.lane.b32.xlu0 %v6779, 16
    %v6781 = vpop.permute.xlu0 %6780
    %vm6782 = vcmask 261248
    %s6783 = scalar_lea.vmem [#allocation0], 88
    %6784 = vst.msk [vmem:[%s6783] sm:$0xff] %vm6782, %v6781
    %s6785 = scalar_lea.vmem [#allocation1], 961
    %v6786 = vld [vmem:[%s6785] ss:$8 sm:$0xf]
    %s6787 = scalar_lea.vmem [#allocation1], 961
    %v6788 = vld [vmem:[%s6787] ss:$8 sm:$0xf0]
    %vm6789 = vcmask 1047556
    %v6790 = vsel %vm6789, %v6788, %v6786
    %6791 = vrot.lane.b32.xlu0 %v6790, 16
    %v6792 = vpop.permute.xlu0 %6791
    %vm6793 = vcmask 261248
    %s6794 = scalar_lea.vmem [#allocation0], 120
    %6795 = vst.msk [vmem:[%s6794] sm:$0xff] %vm6793, %v6792
    %s6796 = scalar_lea.vmem [#allocation1], 1217
    %v6797 = vld [vmem:[%s6796] ss:$8 sm:$0xf]
    %s6798 = scalar_lea.vmem [#allocation1], 1217
    %v6799 = vld [vmem:[%s6798] ss:$8 sm:$0xf0]
    %vm6800 = vcmask 1047556
    %v6801 = vsel %vm6800, %v6799, %v6797
    %6802 = vrot.lane.b32.xlu0 %v6801, 16
    %v6803 = vpop.permute.xlu0 %6802
    %vm6804 = vcmask 261248
    %s6805 = scalar_lea.vmem [#allocation0], 152
    %6806 = vst.msk [vmem:[%s6805] sm:$0xff] %vm6804, %v6803
    %s6807 = scalar_lea.vmem [#allocation1], 1473
    %v6808 = vld [vmem:[%s6807] ss:$8 sm:$0xf]
    %s6809 = scalar_lea.vmem [#allocation1], 1473
    %v6810 = vld [vmem:[%s6809] ss:$8 sm:$0xf0]
    %vm6811 = vcmask 1047556
    %v6812 = vsel %vm6811, %v6810, %v6808
    %6813 = vrot.lane.b32.xlu0 %v6812, 16
    %v6814 = vpop.permute.xlu0 %6813
    %vm6815 = vcmask 261248
    %s6816 = scalar_lea.vmem [#allocation0], 184
    %6817 = vst.msk [vmem:[%s6816] sm:$0xff] %vm6815, %v6814
    %s6818 = scalar_lea.vmem [#allocation1], 1729
    %v6819 = vld [vmem:[%s6818] ss:$8 sm:$0xf]
    %s6820 = scalar_lea.vmem [#allocation1], 1729
    %v6821 = vld [vmem:[%s6820] ss:$8 sm:$0xf0]
    %vm6822 = vcmask 1047556
    %v6823 = vsel %vm6822, %v6821, %v6819
    %6824 = vrot.lane.b32.xlu0 %v6823, 16
    %v6825 = vpop.permute.xlu0 %6824
    %vm6826 = vcmask 261248
    %s6827 = scalar_lea.vmem [#allocation0], 216
    %6828 = vst.msk [vmem:[%s6827] sm:$0xff] %vm6826, %v6825
    %s6829 = scalar_lea.vmem [#allocation1], 1985
    %v6830 = vld [vmem:[%s6829] ss:$8 sm:$0xf]
    %s6831 = scalar_lea.vmem [#allocation1], 1985
    %v6832 = vld [vmem:[%s6831] ss:$8 sm:$0xf0]
    %vm6833 = vcmask 1047556
    %v6834 = vsel %vm6833, %v6832, %v6830
    %6835 = vrot.lane.b32.xlu0 %v6834, 16
    %v6836 = vpop.permute.xlu0 %6835
    %vm6837 = vcmask 261248
    %s6838 = scalar_lea.vmem [#allocation0], 248
    %6839 = vst.msk [vmem:[%s6838] sm:$0xff] %vm6837, %v6836
    %s6841 = smul.u32 4, 2
    %s6842 = sshll.u32 1, %s6841
    %s6843 = ssub.s32 %s6842, 1
    %s6844 = sshrl.u32 %s6841, 1
    %v6845 = vld [vmem:[#allocation0] sm:%s6843]
    %v6846 = vpack.c.bf16 0.0, %v6845
    %s6847 = sshll.u32 1, %s6844
    %s6848 = ssub.s32 %s6847, 1
    %6849 = vst [vmem:[%s1] sm:%s6848] %v6846
    %s6850 = scalar_lea.vmem [#allocation0], 8
    %v6851 = vld [vmem:[%s6850] sm:%s6843]
    %v6852 = vpack.c.bf16 0.0, %v6851
    %s6853 = sshll.u32 1, %s6844
    %s6854 = ssub.s32 %s6853, 1
    %s6855 = scalar_lea.vmem %s1, 4
    %6856 = vst [vmem:[%s6855] sm:%s6854] %v6852
    %s6857 = scalar_lea.vmem [#allocation0], 16
    %v6858 = vld [vmem:[%s6857] sm:%s6843]
    %v6859 = vpack.c.bf16 0.0, %v6858
    %s6860 = sshll.u32 1, %s6844
    %s6861 = ssub.s32 %s6860, 1
    %s6862 = smul.addr 4, 2
    %s6863 = scalar_lea.vmem %s1, %s6862
    %6864 = vst [vmem:[%s6863] sm:%s6861] %v6859
    %s6865 = scalar_lea.vmem [#allocation0], 24
    %v6866 = vld [vmem:[%s6865] sm:%s6843]
    %v6867 = vpack.c.bf16 0.0, %v6866
    %s6868 = sshll.u32 1, %s6844
    %s6869 = ssub.s32 %s6868, 1
    %s6870 = smul.addr 4, 3
    %s6871 = scalar_lea.vmem %s1, %s6870
    %6872 = vst [vmem:[%s6871] sm:%s6869] %v6867
    %s6873 = scalar_lea.vmem [#allocation0], 32
    %v6874 = vld [vmem:[%s6873] sm:%s6843]
    %v6875 = vpack.c.bf16 0.0, %v6874
    %s6876 = sshll.u32 1, %s6844
    %s6877 = ssub.s32 %s6876, 1
    %s6878 = smul.addr 4, 4
    %s6879 = scalar_lea.vmem %s1, %s6878
    %6880 = vst [vmem:[%s6879] sm:%s6877] %v6875
    %s6881 = scalar_lea.vmem [#allocation0], 40
    %v6882 = vld [vmem:[%s6881] sm:%s6843]
    %v6883 = vpack.c.bf16 0.0, %v6882
    %s6884 = sshll.u32 1, %s6844
    %s6885 = ssub.s32 %s6884, 1
    %s6886 = smul.addr 4, 5
    %s6887 = scalar_lea.vmem %s1, %s6886
    %6888 = vst [vmem:[%s6887] sm:%s6885] %v6883
    %s6889 = scalar_lea.vmem [#allocation0], 48
    %v6890 = vld [vmem:[%s6889] sm:%s6843]
    %v6891 = vpack.c.bf16 0.0, %v6890
    %s6892 = sshll.u32 1, %s6844
    %s6893 = ssub.s32 %s6892, 1
    %s6894 = smul.addr 4, 6
    %s6895 = scalar_lea.vmem %s1, %s6894
    %6896 = vst [vmem:[%s6895] sm:%s6893] %v6891
    %s6897 = scalar_lea.vmem [#allocation0], 56
    %v6898 = vld [vmem:[%s6897] sm:%s6843]
    %v6899 = vpack.c.bf16 0.0, %v6898
    %s6900 = sshll.u32 1, %s6844
    %s6901 = ssub.s32 %s6900, 1
    %s6902 = smul.addr 4, 7
    %s6903 = scalar_lea.vmem %s1, %s6902
    %6904 = vst [vmem:[%s6903] sm:%s6901] %v6899
    %s6905 = scalar_lea.vmem [#allocation0], 64
    %v6906 = vld [vmem:[%s6905] sm:%s6843]
    %v6907 = vpack.c.bf16 0.0, %v6906
    %s6908 = sshll.u32 1, %s6844
    %s6909 = ssub.s32 %s6908, 1
    %s6910 = smul.addr 4, 8
    %s6911 = scalar_lea.vmem %s1, %s6910
    %6912 = vst [vmem:[%s6911] sm:%s6909] %v6907
    %s6913 = scalar_lea.vmem [#allocation0], 72
    %v6914 = vld [vmem:[%s6913] sm:%s6843]
    %v6915 = vpack.c.bf16 0.0, %v6914
    %s6916 = sshll.u32 1, %s6844
    %s6917 = ssub.s32 %s6916, 1
    %s6918 = smul.addr 4, 9
    %s6919 = scalar_lea.vmem %s1, %s6918
    %6920 = vst [vmem:[%s6919] sm:%s6917] %v6915
    %s6921 = scalar_lea.vmem [#allocation0], 80
    %v6922 = vld [vmem:[%s6921] sm:%s6843]
    %v6923 = vpack.c.bf16 0.0, %v6922
    %s6924 = sshll.u32 1, %s6844
    %s6925 = ssub.s32 %s6924, 1
    %s6926 = smul.addr 4, 10
    %s6927 = scalar_lea.vmem %s1, %s6926
    %6928 = vst [vmem:[%s6927] sm:%s6925] %v6923
    %s6929 = scalar_lea.vmem [#allocation0], 88
    %v6930 = vld [vmem:[%s6929] sm:%s6843]
    %v6931 = vpack.c.bf16 0.0, %v6930
    %s6932 = sshll.u32 1, %s6844
    %s6933 = ssub.s32 %s6932, 1
    %s6934 = smul.addr 4, 11
    %s6935 = scalar_lea.vmem %s1, %s6934
    %6936 = vst [vmem:[%s6935] sm:%s6933] %v6931
    %s6937 = scalar_lea.vmem [#allocation0], 96
    %v6938 = vld [vmem:[%s6937] sm:%s6843]
    %v6939 = vpack.c.bf16 0.0, %v6938
    %s6940 = sshll.u32 1, %s6844
    %s6941 = ssub.s32 %s6940, 1
    %s6942 = smul.addr 4, 12
    %s6943 = scalar_lea.vmem %s1, %s6942
    %6944 = vst [vmem:[%s6943] sm:%s6941] %v6939
    %s6945 = scalar_lea.vmem [#allocation0], 104
    %v6946 = vld [vmem:[%s6945] sm:%s6843]
    %v6947 = vpack.c.bf16 0.0, %v6946
    %s6948 = sshll.u32 1, %s6844
    %s6949 = ssub.s32 %s6948, 1
    %s6950 = smul.addr 4, 13
    %s6951 = scalar_lea.vmem %s1, %s6950
    %6952 = vst [vmem:[%s6951] sm:%s6949] %v6947
    %s6953 = scalar_lea.vmem [#allocation0], 112
    %v6954 = vld [vmem:[%s6953] sm:%s6843]
    %v6955 = vpack.c.bf16 0.0, %v6954
    %s6956 = sshll.u32 1, %s6844
    %s6957 = ssub.s32 %s6956, 1
    %s6958 = smul.addr 4, 14
    %s6959 = scalar_lea.vmem %s1, %s6958
    %6960 = vst [vmem:[%s6959] sm:%s6957] %v6955
    %s6961 = scalar_lea.vmem [#allocation0], 120
    %v6962 = vld [vmem:[%s6961] sm:%s6843]
    %v6963 = vpack.c.bf16 0.0, %v6962
    %s6964 = sshll.u32 1, %s6844
    %s6965 = ssub.s32 %s6964, 1
    %s6966 = smul.addr 4, 15
    %s6967 = scalar_lea.vmem %s1, %s6966
    %6968 = vst [vmem:[%s6967] sm:%s6965] %v6963
    %s6969 = scalar_lea.vmem [#allocation0], 128
    %v6970 = vld [vmem:[%s6969] sm:%s6843]
    %v6971 = vpack.c.bf16 0.0, %v6970
    %s6972 = sshll.u32 1, %s6844
    %s6973 = ssub.s32 %s6972, 1
    %s6974 = smul.addr 4, 16
    %s6975 = scalar_lea.vmem %s1, %s6974
    %6976 = vst [vmem:[%s6975] sm:%s6973] %v6971
    %s6977 = scalar_lea.vmem [#allocation0], 136
    %v6978 = vld [vmem:[%s6977] sm:%s6843]
    %v6979 = vpack.c.bf16 0.0, %v6978
    %s6980 = sshll.u32 1, %s6844
    %s6981 = ssub.s32 %s6980, 1
    %s6982 = smul.addr 4, 17
    %s6983 = scalar_lea.vmem %s1, %s6982
    %6984 = vst [vmem:[%s6983] sm:%s6981] %v6979
    %s6985 = scalar_lea.vmem [#allocation0], 144
    %v6986 = vld [vmem:[%s6985] sm:%s6843]
    %v6987 = vpack.c.bf16 0.0, %v6986
    %s6988 = sshll.u32 1, %s6844
    %s6989 = ssub.s32 %s6988, 1
    %s6990 = smul.addr 4, 18
    %s6991 = scalar_lea.vmem %s1, %s6990
    %6992 = vst [vmem:[%s6991] sm:%s6989] %v6987
    %s6993 = scalar_lea.vmem [#allocation0], 152
    %v6994 = vld [vmem:[%s6993] sm:%s6843]
    %v6995 = vpack.c.bf16 0.0, %v6994
    %s6996 = sshll.u32 1, %s6844
    %s6997 = ssub.s32 %s6996, 1
    %s6998 = smul.addr 4, 19
    %s6999 = scalar_lea.vmem %s1, %s6998
    %7000 = vst [vmem:[%s6999] sm:%s6997] %v6995
    %s7001 = scalar_lea.vmem [#allocation0], 160
    %v7002 = vld [vmem:[%s7001] sm:%s6843]
    %v7003 = vpack.c.bf16 0.0, %v7002
    %s7004 = sshll.u32 1, %s6844
    %s7005 = ssub.s32 %s7004, 1
    %s7006 = smul.addr 4, 20
    %s7007 = scalar_lea.vmem %s1, %s7006
    %7008 = vst [vmem:[%s7007] sm:%s7005] %v7003
    %s7009 = scalar_lea.vmem [#allocation0], 168
    %v7010 = vld [vmem:[%s7009] sm:%s6843]
    %v7011 = vpack.c.bf16 0.0, %v7010
    %s7012 = sshll.u32 1, %s6844
    %s7013 = ssub.s32 %s7012, 1
    %s7014 = smul.addr 4, 21
    %s7015 = scalar_lea.vmem %s1, %s7014
    %7016 = vst [vmem:[%s7015] sm:%s7013] %v7011
    %s7017 = scalar_lea.vmem [#allocation0], 176
    %v7018 = vld [vmem:[%s7017] sm:%s6843]
    %v7019 = vpack.c.bf16 0.0, %v7018
    %s7020 = sshll.u32 1, %s6844
    %s7021 = ssub.s32 %s7020, 1
    %s7022 = smul.addr 4, 22
    %s7023 = scalar_lea.vmem %s1, %s7022
    %7024 = vst [vmem:[%s7023] sm:%s7021] %v7019
    %s7025 = scalar_lea.vmem [#allocation0], 184
    %v7026 = vld [vmem:[%s7025] sm:%s6843]
    %v7027 = vpack.c.bf16 0.0, %v7026
    %s7028 = sshll.u32 1, %s6844
    %s7029 = ssub.s32 %s7028, 1
    %s7030 = smul.addr 4, 23
    %s7031 = scalar_lea.vmem %s1, %s7030
    %7032 = vst [vmem:[%s7031] sm:%s7029] %v7027
    %s7033 = scalar_lea.vmem [#allocation0], 192
    %v7034 = vld [vmem:[%s7033] sm:%s6843]
    %v7035 = vpack.c.bf16 0.0, %v7034
    %s7036 = sshll.u32 1, %s6844
    %s7037 = ssub.s32 %s7036, 1
    %s7038 = smul.addr 4, 24
    %s7039 = scalar_lea.vmem %s1, %s7038
    %7040 = vst [vmem:[%s7039] sm:%s7037] %v7035
    %s7041 = scalar_lea.vmem [#allocation0], 200
    %v7042 = vld [vmem:[%s7041] sm:%s6843]
    %v7043 = vpack.c.bf16 0.0, %v7042
    %s7044 = sshll.u32 1, %s6844
    %s7045 = ssub.s32 %s7044, 1
    %s7046 = smul.addr 4, 25
    %s7047 = scalar_lea.vmem %s1, %s7046
    %7048 = vst [vmem:[%s7047] sm:%s7045] %v7043
    %s7049 = scalar_lea.vmem [#allocation0], 208
    %v7050 = vld [vmem:[%s7049] sm:%s6843]
    %v7051 = vpack.c.bf16 0.0, %v7050
    %s7052 = sshll.u32 1, %s6844
    %s7053 = ssub.s32 %s7052, 1
    %s7054 = smul.addr 4, 26
    %s7055 = scalar_lea.vmem %s1, %s7054
    %7056 = vst [vmem:[%s7055] sm:%s7053] %v7051
    %s7057 = scalar_lea.vmem [#allocation0], 216
    %v7058 = vld [vmem:[%s7057] sm:%s6843]
    %v7059 = vpack.c.bf16 0.0, %v7058
    %s7060 = sshll.u32 1, %s6844
    %s7061 = ssub.s32 %s7060, 1
    %s7062 = smul.addr 4, 27
    %s7063 = scalar_lea.vmem %s1, %s7062
    %7064 = vst [vmem:[%s7063] sm:%s7061] %v7059
    %s7065 = scalar_lea.vmem [#allocation0], 224
    %v7066 = vld [vmem:[%s7065] sm:%s6843]
    %v7067 = vpack.c.bf16 0.0, %v7066
    %s7068 = sshll.u32 1, %s6844
    %s7069 = ssub.s32 %s7068, 1
    %s7070 = smul.addr 4, 28
    %s7071 = scalar_lea.vmem %s1, %s7070
    %7072 = vst [vmem:[%s7071] sm:%s7069] %v7067
    %s7073 = scalar_lea.vmem [#allocation0], 232
    %v7074 = vld [vmem:[%s7073] sm:%s6843]
    %v7075 = vpack.c.bf16 0.0, %v7074
    %s7076 = sshll.u32 1, %s6844
    %s7077 = ssub.s32 %s7076, 1
    %s7078 = smul.addr 4, 29
    %s7079 = scalar_lea.vmem %s1, %s7078
    %7080 = vst [vmem:[%s7079] sm:%s7077] %v7075
    %s7081 = scalar_lea.vmem [#allocation0], 240
    %v7082 = vld [vmem:[%s7081] sm:%s6843]
    %v7083 = vpack.c.bf16 0.0, %v7082
    %s7084 = sshll.u32 1, %s6844
    %s7085 = ssub.s32 %s7084, 1
    %s7086 = smul.addr 4, 30
    %s7087 = scalar_lea.vmem %s1, %s7086
    %7088 = vst [vmem:[%s7087] sm:%s7085] %v7083
    %s7089 = scalar_lea.vmem [#allocation0], 248
    %v7090 = vld [vmem:[%s7089] sm:%s6843]
    %v7091 = vpack.c.bf16 0.0, %v7090
    %s7092 = sshll.u32 1, %s6844
    %s7093 = ssub.s32 %s7092, 1
    %s7094 = smul.addr 4, 31
    %s7095 = scalar_lea.vmem %s1, %s7094
    %7096 = vst [vmem:[%s7095] sm:%s7093] %v7091

// kernel: _lambda_.1
$region0: #{_lambda_.1}
  #allocation0 [shape = 'u32[]', space=smem, size = 0x4, offset = 0x4, fixed_abs, tag = 'smem constant byte address 0x4 - core index']
  #allocation1 [shape = 'u32[144,128]{1,0:T(1,128)}', space=vmem, size = 0x12000, scoped, tag = 'internal scratch']
  #allocation2 [shape = 'f32[1,1]{1,0:T(1,128)S(6)}', space=smem, size = 0x200, scoped, tag = 'scoped memory for _lambda_.1']
  %s0 = inlined_call_operand.<no memory space> [shape: f32[1,1], index: 0, kind: input, shape index: {}]
  %s1 = inlined_call_operand.vmem [shape: bf16[256,64], index: 1, kind: input, shape index: {}]
  %s2 = inlined_call_operand.vmem [shape: bf16[64,128], index: 2, kind: input, shape index: {}]
  %s3 = inlined_call_operand.vmem [shape: bf16[128,128], index: 3, kind: input, shape index: {}]
  %s4 = inlined_call_operand.vmem [shape: bf16[128,384], index: 4, kind: input, shape index: {}]
  %s5 = inlined_call_operand.vmem [shape: bf16[3,64,128], index: 5, kind: input, shape index: {}]
  %s6 = inlined_call_operand.vmem [shape: f32[1,128], index: 6, kind: input, shape index: {}]
  %s7 = inlined_call_operand.vmem [shape: bf16[128,768], index: 7, kind: input, shape index: {}]
  %s8 = inlined_call_operand.vmem [shape: bf16[3,32,64], index: 8, kind: input, shape index: {}]
  %s9 = inlined_call_operand.vmem [shape: f32[1,256], index: 9, kind: input, shape index: {}]
  %s10 = inlined_call_operand.vmem [shape: bf16[8,32], index: 10, kind: input, shape index: {}]
  %s11 = inlined_call_operand.vmem [shape: bf16[256,128], index: 11, kind: input, shape index: {}]
  %s12 = inlined_call_operand.vmem [shape: bf16[128,128], index: 12, kind: input, shape index: {}]
  %s13 = inlined_call_operand.vmem [shape: f32[1,128], index: 13, kind: input, shape index: {}]
  %s14 = inlined_call_operand.hbm [shape: f32[16,128], index: 14, kind: output, shape index: {}]
  %s15 = sld [smem:[#allocation0]]
  $region89: #{_lambda_.1} parent=0
    _
  %s17 = ssub.s32 1, %s15
  %s18 = scalar_select 0, %s17, %s15
  %19 = sst [smem:[#allocation2]] %s0
  $region1: #{_lambda_.1} parent=0
    #allocation3 [shape = 'u8[8192]{0}', space=vmem, size = 0x2000, scoped, tag = 'output window, operand 0']
    #allocation4 [shape = 's32[2]{0}', space=sflag, size = 0x8, scoped, tag = 'scoped memory for _lambda_.1']
    %20 = vsyncpa [#allocation4], 0
    %s21 = scalar_lea.sflag [#allocation4], 1
    %22 = vsyncpa %s21, 0
    loop: start=0, step=1, limit=4
    $region2: #{_lambda_.1} parent=1 // loop_pre_header
      _
    $region3: #{_lambda_.1} parent=1 // loop_header
      %s24 = sphi 0, %s28
      %p25 = scmp.ge.s32.totalorder %s24, 4
      %s32 = sphi 0, %s32
      %s34 = sphi 0, %s32
      %s35 = sphi 0, %s34
      %s49 = sphi 0, %s35
      %s55 = sphi 0, %s57
      %s58 = sphi 0, %s55
      %s59 = sphi 0, %s58
      %s75 = sphi 0, %s59
      %s79 = sphi 0, %s79
      %s81 = sphi 0, %s79
      %s82 = sphi 0, %s81
      %s96 = sphi 0, %s82
      %s100 = sphi 0, %s100
      %s102 = sphi 0, %s100
      %s103 = sphi 0, %s102
      %s117 = sphi 0, %s103
      %s121 = sphi 0, %s121
      %s123 = sphi 0, %s121
      %s124 = sphi 0, %s123
      %s138 = sphi 0, %s124
      %s142 = sphi 0, %s142
      %s144 = sphi 0, %s142
      %s145 = sphi 0, %s144
      %s159 = sphi 0, %s145
      %s163 = sphi 0, %s163
      %s165 = sphi 0, %s163
      %s166 = sphi 0, %s165
      %s180 = sphi 0, %s166
      %s184 = sphi 0, %s184
      %s186 = sphi 0, %s184
      %s187 = sphi 0, %s186
      %s201 = sphi 0, %s187
      %s205 = sphi 0, %s205
      %s207 = sphi 0, %s205
      %s208 = sphi 0, %s207
      %s222 = sphi 0, %s208
      %s226 = sphi 0, %s226
      %s228 = sphi 0, %s226
      %s229 = sphi 0, %s228
      %s243 = sphi 0, %s229
      %s247 = sphi 0, %s247
      %s249 = sphi 0, %s247
      %s250 = sphi 0, %s249
      %s264 = sphi 0, %s250
      %s268 = sphi 0, %s268
      %s270 = sphi 0, %s268
      %s271 = sphi 0, %s270
      %s285 = sphi 0, %s271
      %s289 = sphi 0, %s289
      %s291 = sphi 0, %s289
      %s292 = sphi 0, %s291
      %s306 = sphi 0, %s292
      %s310 = sphi 0, %s310
      %s312 = sphi 0, %s310
      %s313 = sphi 0, %s312
      %s327 = sphi 0, %s313
      %s333 = sphi 0, %s335
      %s336 = sphi 0, %s333
      %s337 = sphi 0, %s336
      %s353 = sphi 0, %s337
    $region4: #{_lambda_.1} parent=1 // loop_header_branch
      %27 = sbr.rel (%p25) target = $region8
    $region5: #{_lambda_.1} parent=1 // loop_body
      %s29 = ssub.s32 %s24, 1
      %s30 = ssub.s32 %s24, 2
      %s31 = sadd.s32 %s24, 1
      %s33 = sadd.s32 %s32, 1
      %p36 = scmp.eq.s32.totalorder %s24, 1
      %p37 = scmp.ne.s32.totalorder %s32, %s34
      %p38 = scmp.eq.s32.totalorder %s24, 0
      %p39 = por %p37, %p38
      %p40 = scmp.ne.s32.totalorder %s32, %s34
      %p41 = scmp.eq.s32.totalorder %s29, 1
      %p42 = por %p40, %p41
      %p43 = scmp.ne.s32.totalorder %s34, %s35
      %p44 = scmp.eq.s32.totalorder %s29, 0
      %p45 = por %p43, %p44
      %p46 = scmp.ne.s32.totalorder %s34, %s35
      %p47 = scmp.eq.s32.totalorder %s30, 1
      %p48 = por %p46, %p47
      %p50 = scmp.ne.s32.totalorder %s35, %s49
      %p51 = scmp.eq.s32.totalorder %s30, 0
      %p52 = por %p50, %p51
      %s53 = ssub.s32 %s24, %s31
      %p54 = scmp.eq.s32.totalorder %s53, 0
      %s56 = sadd.s32 %s55, 1
      %s57 = scalar_select %p54, %s55, %s56
      %p60 = pneg %p54
      %p61 = scmp.eq.s32.totalorder %s24, 1
      %p62 = por %p60, %p61
      %p63 = scmp.ne.s32.totalorder %s55, %s58
      %p64 = scmp.eq.s32.totalorder %s24, 0
      %p65 = por %p63, %p64
      %p66 = scmp.ne.s32.totalorder %s55, %s58
      %p67 = scmp.eq.s32.totalorder %s29, 1
      %p68 = por %p66, %p67
      %p69 = scmp.ne.s32.totalorder %s58, %s59
      %p70 = scmp.eq.s32.totalorder %s29, 0
      %p71 = por %p69, %p70
      %p72 = scmp.ne.s32.totalorder %s58, %s59
      %p73 = scmp.eq.s32.totalorder %s30, 1
      %p74 = por %p72, %p73
      %p76 = scmp.ne.s32.totalorder %s59, %s75
      %p77 = scmp.eq.s32.totalorder %s30, 0
      %p78 = por %p76, %p77
      %s80 = sadd.s32 %s79, 1
      %p83 = scmp.eq.s32.totalorder %s24, 1
      %p84 = scmp.ne.s32.totalorder %s79, %s81
      %p85 = scmp.eq.s32.totalorder %s24, 0
      %p86 = por %p84, %p85
      %p87 = scmp.ne.s32.totalorder %s79, %s81
      %p88 = scmp.eq.s32.totalorder %s29, 1
      %p89 = por %p87, %p88
      %p90 = scmp.ne.s32.totalorder %s81, %s82
      %p91 = scmp.eq.s32.totalorder %s29, 0
      %p92 = por %p90, %p91
      %p93 = scmp.ne.s32.totalorder %s81, %s82
      %p94 = scmp.eq.s32.totalorder %s30, 1
      %p95 = por %p93, %p94
      %p97 = scmp.ne.s32.totalorder %s82, %s96
      %p98 = scmp.eq.s32.totalorder %s30, 0
      %p99 = por %p97, %p98
      %s101 = sadd.s32 %s100, 1
      %p104 = scmp.eq.s32.totalorder %s24, 1
      %p105 = scmp.ne.s32.totalorder %s100, %s102
      %p106 = scmp.eq.s32.totalorder %s24, 0
      %p107 = por %p105, %p106
      %p108 = scmp.ne.s32.totalorder %s100, %s102
      %p109 = scmp.eq.s32.totalorder %s29, 1
      %p110 = por %p108, %p109
      %p111 = scmp.ne.s32.totalorder %s102, %s103
      %p112 = scmp.eq.s32.totalorder %s29, 0
      %p113 = por %p111, %p112
      %p114 = scmp.ne.s32.totalorder %s102, %s103
      %p115 = scmp.eq.s32.totalorder %s30, 1
      %p116 = por %p114, %p115
      %p118 = scmp.ne.s32.totalorder %s103, %s117
      %p119 = scmp.eq.s32.totalorder %s30, 0
      %p120 = por %p118, %p119
      %s122 = sadd.s32 %s121, 1
      %p125 = scmp.eq.s32.totalorder %s24, 1
      %p126 = scmp.ne.s32.totalorder %s121, %s123
      %p127 = scmp.eq.s32.totalorder %s24, 0
      %p128 = por %p126, %p127
      %p129 = scmp.ne.s32.totalorder %s121, %s123
      %p130 = scmp.eq.s32.totalorder %s29, 1
      %p131 = por %p129, %p130
      %p132 = scmp.ne.s32.totalorder %s123, %s124
      %p133 = scmp.eq.s32.totalorder %s29, 0
      %p134 = por %p132, %p133
      %p135 = scmp.ne.s32.totalorder %s123, %s124
      %p136 = scmp.eq.s32.totalorder %s30, 1
      %p137 = por %p135, %p136
      %p139 = scmp.ne.s32.totalorder %s124, %s138
      %p140 = scmp.eq.s32.totalorder %s30, 0
      %p141 = por %p139, %p140
      %s143 = sadd.s32 %s142, 1
      %p146 = scmp.eq.s32.totalorder %s24, 1
      %p147 = scmp.ne.s32.totalorder %s142, %s144
      %p148 = scmp.eq.s32.totalorder %s24, 0
      %p149 = por %p147, %p148
      %p150 = scmp.ne.s32.totalorder %s142, %s144
      %p151 = scmp.eq.s32.totalorder %s29, 1
      %p152 = por %p150, %p151
      %p153 = scmp.ne.s32.totalorder %s144, %s145
      %p154 = scmp.eq.s32.totalorder %s29, 0
      %p155 = por %p153, %p154
      %p156 = scmp.ne.s32.totalorder %s144, %s145
      %p157 = scmp.eq.s32.totalorder %s30, 1
      %p158 = por %p156, %p157
      %p160 = scmp.ne.s32.totalorder %s145, %s159
      %p161 = scmp.eq.s32.totalorder %s30, 0
      %p162 = por %p160, %p161
      %s164 = sadd.s32 %s163, 1
      %p167 = scmp.eq.s32.totalorder %s24, 1
      %p168 = scmp.ne.s32.totalorder %s163, %s165
      %p169 = scmp.eq.s32.totalorder %s24, 0
      %p170 = por %p168, %p169
      %p171 = scmp.ne.s32.totalorder %s163, %s165
      %p172 = scmp.eq.s32.totalorder %s29, 1
      %p173 = por %p171, %p172
      %p174 = scmp.ne.s32.totalorder %s165, %s166
      %p175 = scmp.eq.s32.totalorder %s29, 0
      %p176 = por %p174, %p175
      %p177 = scmp.ne.s32.totalorder %s165, %s166
      %p178 = scmp.eq.s32.totalorder %s30, 1
      %p179 = por %p177, %p178
      %p181 = scmp.ne.s32.totalorder %s166, %s180
      %p182 = scmp.eq.s32.totalorder %s30, 0
      %p183 = por %p181, %p182
      %s185 = sadd.s32 %s184, 1
      %p188 = scmp.eq.s32.totalorder %s24, 1
      %p189 = scmp.ne.s32.totalorder %s184, %s186
      %p190 = scmp.eq.s32.totalorder %s24, 0
      %p191 = por %p189, %p190
      %p192 = scmp.ne.s32.totalorder %s184, %s186
      %p193 = scmp.eq.s32.totalorder %s29, 1
      %p194 = por %p192, %p193
      %p195 = scmp.ne.s32.totalorder %s186, %s187
      %p196 = scmp.eq.s32.totalorder %s29, 0
      %p197 = por %p195, %p196
      %p198 = scmp.ne.s32.totalorder %s186, %s187
      %p199 = scmp.eq.s32.totalorder %s30, 1
      %p200 = por %p198, %p199
      %p202 = scmp.ne.s32.totalorder %s187, %s201
      %p203 = scmp.eq.s32.totalorder %s30, 0
      %p204 = por %p202, %p203
      %s206 = sadd.s32 %s205, 1
      %p209 = scmp.eq.s32.totalorder %s24, 1
      %p210 = scmp.ne.s32.totalorder %s205, %s207
      %p211 = scmp.eq.s32.totalorder %s24, 0
      %p212 = por %p210, %p211
      %p213 = scmp.ne.s32.totalorder %s205, %s207
      %p214 = scmp.eq.s32.totalorder %s29, 1
      %p215 = por %p213, %p214
      %p216 = scmp.ne.s32.totalorder %s207, %s208
      %p217 = scmp.eq.s32.totalorder %s29, 0
      %p218 = por %p216, %p217
      %p219 = scmp.ne.s32.totalorder %s207, %s208
      %p220 = scmp.eq.s32.totalorder %s30, 1
      %p221 = por %p219, %p220
      %p223 = scmp.ne.s32.totalorder %s208, %s222
      %p224 = scmp.eq.s32.totalorder %s30, 0
      %p225 = por %p223, %p224
      %s227 = sadd.s32 %s226, 1
      %p230 = scmp.eq.s32.totalorder %s24, 1
      %p231 = scmp.ne.s32.totalorder %s226, %s228
      %p232 = scmp.eq.s32.totalorder %s24, 0
      %p233 = por %p231, %p232
      %p234 = scmp.ne.s32.totalorder %s226, %s228
      %p235 = scmp.eq.s32.totalorder %s29, 1
      %p236 = por %p234, %p235
      %p237 = scmp.ne.s32.totalorder %s228, %s229
      %p238 = scmp.eq.s32.totalorder %s29, 0
      %p239 = por %p237, %p238
      %p240 = scmp.ne.s32.totalorder %s228, %s229
      %p241 = scmp.eq.s32.totalorder %s30, 1
      %p242 = por %p240, %p241
      %p244 = scmp.ne.s32.totalorder %s229, %s243
      %p245 = scmp.eq.s32.totalorder %s30, 0
      %p246 = por %p244, %p245
      %s248 = sadd.s32 %s247, 1
      %p251 = scmp.eq.s32.totalorder %s24, 1
      %p252 = scmp.ne.s32.totalorder %s247, %s249
      %p253 = scmp.eq.s32.totalorder %s24, 0
      %p254 = por %p252, %p253
      %p255 = scmp.ne.s32.totalorder %s247, %s249
      %p256 = scmp.eq.s32.totalorder %s29, 1
      %p257 = por %p255, %p256
      %p258 = scmp.ne.s32.totalorder %s249, %s250
      %p259 = scmp.eq.s32.totalorder %s29, 0
      %p260 = por %p258, %p259
      %p261 = scmp.ne.s32.totalorder %s249, %s250
      %p262 = scmp.eq.s32.totalorder %s30, 1
      %p263 = por %p261, %p262
      %p265 = scmp.ne.s32.totalorder %s250, %s264
      %p266 = scmp.eq.s32.totalorder %s30, 0
      %p267 = por %p265, %p266
      %s269 = sadd.s32 %s268, 1
      %p272 = scmp.eq.s32.totalorder %s24, 1
      %p273 = scmp.ne.s32.totalorder %s268, %s270
      %p274 = scmp.eq.s32.totalorder %s24, 0
      %p275 = por %p273, %p274
      %p276 = scmp.ne.s32.totalorder %s268, %s270
      %p277 = scmp.eq.s32.totalorder %s29, 1
      %p278 = por %p276, %p277
      %p279 = scmp.ne.s32.totalorder %s270, %s271
      %p280 = scmp.eq.s32.totalorder %s29, 0
      %p281 = por %p279, %p280
      %p282 = scmp.ne.s32.totalorder %s270, %s271
      %p283 = scmp.eq.s32.totalorder %s30, 1
      %p284 = por %p282, %p283
      %p286 = scmp.ne.s32.totalorder %s271, %s285
      %p287 = scmp.eq.s32.totalorder %s30, 0
      %p288 = por %p286, %p287
      %s290 = sadd.s32 %s289, 1
      %p293 = scmp.eq.s32.totalorder %s24, 1
      %p294 = scmp.ne.s32.totalorder %s289, %s291
      %p295 = scmp.eq.s32.totalorder %s24, 0
      %p296 = por %p294, %p295
      %p297 = scmp.ne.s32.totalorder %s289, %s291
      %p298 = scmp.eq.s32.totalorder %s29, 1
      %p299 = por %p297, %p298
      %p300 = scmp.ne.s32.totalorder %s291, %s292
      %p301 = scmp.eq.s32.totalorder %s29, 0
      %p302 = por %p300, %p301
      %p303 = scmp.ne.s32.totalorder %s291, %s292
      %p304 = scmp.eq.s32.totalorder %s30, 1
      %p305 = por %p303, %p304
      %p307 = scmp.ne.s32.totalorder %s292, %s306
      %p308 = scmp.eq.s32.totalorder %s30, 0
      %p309 = por %p307, %p308
      %s311 = sadd.s32 %s310, 1
      %p314 = scmp.eq.s32.totalorder %s24, 1
      %p315 = scmp.ne.s32.totalorder %s310, %s312
      %p316 = scmp.eq.s32.totalorder %s24, 0
      %p317 = por %p315, %p316
      %p318 = scmp.ne.s32.totalorder %s310, %s312
      %p319 = scmp.eq.s32.totalorder %s29, 1
      %p320 = por %p318, %p319
      %p321 = scmp.ne.s32.totalorder %s312, %s313
      %p322 = scmp.eq.s32.totalorder %s29, 0
      %p323 = por %p321, %p322
      %p324 = scmp.ne.s32.totalorder %s312, %s313
      %p325 = scmp.eq.s32.totalorder %s30, 1
      %p326 = por %p324, %p325
      %p328 = scmp.ne.s32.totalorder %s313, %s327
      %p329 = scmp.eq.s32.totalorder %s30, 0
      %p330 = por %p328, %p329
      %s331 = ssub.s32 %s24, %s31
      %p332 = scmp.eq.s32.totalorder %s331, 0
      %s334 = sadd.s32 %s333, 1
      %s335 = scalar_select %p332, %s333, %s334
      %p338 = pneg %p332
      %p339 = scmp.eq.s32.totalorder %s24, 1
      %p340 = por %p338, %p339
      %p341 = scmp.ne.s32.totalorder %s333, %s336
      %p342 = scmp.eq.s32.totalorder %s24, 0
      %p343 = por %p341, %p342
      %p344 = scmp.ne.s32.totalorder %s333, %s336
      %p345 = scmp.eq.s32.totalorder %s29, 1
      %p346 = por %p344, %p345
      %p347 = scmp.ne.s32.totalorder %s336, %s337
      %p348 = scmp.eq.s32.totalorder %s29, 0
      %p349 = por %p347, %p348
      %p350 = scmp.ne.s32.totalorder %s336, %s337
      %p351 = scmp.eq.s32.totalorder %s30, 1
      %p352 = por %p350, %p351
      %p354 = scmp.ne.s32.totalorder %s337, %s353
      %p355 = scmp.eq.s32.totalorder %s30, 0
      %p356 = por %p354, %p355
      %p357 = scmp.le.s32.totalorder 1, %s24
      %p358 = scmp.lt.s32.totalorder %s24, 3
      %p359 = pnand %p357, %p358
      %p360 = pneg %p359
      // Predicated region
      $region9: #{_lambda_.1} parent=5 // pred_check
        _
      $region10: #{_lambda_.1} parent=5 // pred_check_branch
        %362 = sbr.rel (%p359) target = $region12
      $region11: #{_lambda_.1} parent=5 // pred_region
        %s363 = ssub.s32 %s24, 1
        // Predicated region
        $region13: #{_lambda_.1} parent=11 // pred_check
          %p364 = pneg %p45
        $region14: #{_lambda_.1} parent=11 // pred_check_branch
          %366 = sbr.rel (%p364) target = $region16
        $region15: #{_lambda_.1} parent=11 // pred_region
          _
        $region16: #{_lambda_.1} parent=11 // pred_fallthru
          _
        // Predicated region
        $region17: #{_lambda_.1} parent=11 // pred_check
          %p367 = pneg %p92
        $region18: #{_lambda_.1} parent=11 // pred_check_branch
          %369 = sbr.rel (%p367) target = $region20
        $region19: #{_lambda_.1} parent=11 // pred_region
          _
        $region20: #{_lambda_.1} parent=11 // pred_fallthru
          _
        // Predicated region
        $region21: #{_lambda_.1} parent=11 // pred_check
          %p370 = pneg %p113
        $region22: #{_lambda_.1} parent=11 // pred_check_branch
          %372 = sbr.rel (%p370) target = $region24
        $region23: #{_lambda_.1} parent=11 // pred_region
          _
        $region24: #{_lambda_.1} parent=11 // pred_fallthru
          _
        // Predicated region
        $region25: #{_lambda_.1} parent=11 // pred_check
          %p373 = pneg %p134
        $region26: #{_lambda_.1} parent=11 // pred_check_branch
          %375 = sbr.rel (%p373) target = $region28
        $region27: #{_lambda_.1} parent=11 // pred_region
          _
        $region28: #{_lambda_.1} parent=11 // pred_fallthru
          _
        // Predicated region
        $region29: #{_lambda_.1} parent=11 // pred_check
          %p376 = pneg %p155
        $region30: #{_lambda_.1} parent=11 // pred_check_branch
          %378 = sbr.rel (%p376) target = $region32
        $region31: #{_lambda_.1} parent=11 // pred_region
          _
        $region32: #{_lambda_.1} parent=11 // pred_fallthru
          _
        // Predicated region
        $region33: #{_lambda_.1} parent=11 // pred_check
          %p379 = pneg %p176
        $region34: #{_lambda_.1} parent=11 // pred_check_branch
          %381 = sbr.rel (%p379) target = $region36
        $region35: #{_lambda_.1} parent=11 // pred_region
          _
        $region36: #{_lambda_.1} parent=11 // pred_fallthru
          _
        // Predicated region
        $region37: #{_lambda_.1} parent=11 // pred_check
          %p382 = pneg %p197
        $region38: #{_lambda_.1} parent=11 // pred_check_branch
          %384 = sbr.rel (%p382) target = $region40
        $region39: #{_lambda_.1} parent=11 // pred_region
          _
        $region40: #{_lambda_.1} parent=11 // pred_fallthru
          _
        // Predicated region
        $region41: #{_lambda_.1} parent=11 // pred_check
          %p385 = pneg %p218
        $region42: #{_lambda_.1} parent=11 // pred_check_branch
          %387 = sbr.rel (%p385) target = $region44
        $region43: #{_lambda_.1} parent=11 // pred_region
          _
        $region44: #{_lambda_.1} parent=11 // pred_fallthru
          _
        // Predicated region
        $region45: #{_lambda_.1} parent=11 // pred_check
          %p388 = pneg %p239
        $region46: #{_lambda_.1} parent=11 // pred_check_branch
          %390 = sbr.rel (%p388) target = $region48
        $region47: #{_lambda_.1} parent=11 // pred_region
          _
        $region48: #{_lambda_.1} parent=11 // pred_fallthru
          _
        // Predicated region
        $region49: #{_lambda_.1} parent=11 // pred_check
          %p391 = pneg %p260
        $region50: #{_lambda_.1} parent=11 // pred_check_branch
          %393 = sbr.rel (%p391) target = $region52
        $region51: #{_lambda_.1} parent=11 // pred_region
          _
        $region52: #{_lambda_.1} parent=11 // pred_fallthru
          _
        // Predicated region
        $region53: #{_lambda_.1} parent=11 // pred_check
          %p394 = pneg %p281
        $region54: #{_lambda_.1} parent=11 // pred_check_branch
          %396 = sbr.rel (%p394) target = $region56
        $region55: #{_lambda_.1} parent=11 // pred_region
          _
        $region56: #{_lambda_.1} parent=11 // pred_fallthru
          _
        // Predicated region
        $region57: #{_lambda_.1} parent=11 // pred_check
          %p397 = pneg %p302
        $region58: #{_lambda_.1} parent=11 // pred_check_branch
          %399 = sbr.rel (%p397) target = $region60
        $region59: #{_lambda_.1} parent=11 // pred_region
          _
        $region60: #{_lambda_.1} parent=11 // pred_fallthru
          _
        // Predicated region
        $region61: #{_lambda_.1} parent=11 // pred_check
          %p400 = pneg %p323
        $region62: #{_lambda_.1} parent=11 // pred_check_branch
          %402 = sbr.rel (%p400) target = $region64
        $region63: #{_lambda_.1} parent=11 // pred_region
          _
        $region64: #{_lambda_.1} parent=11 // pred_fallthru
          _
      $region12: #{_lambda_.1} parent=5 // pred_fallthru
        _
      %p403 = scmp.lt.s32.totalorder %s24, 2
      // Predicated region
      $region65: #{_lambda_.1} parent=5 // pred_check
        %p404 = pneg %p403
      $region66: #{_lambda_.1} parent=5 // pred_check_branch
        %406 = sbr.rel (%p404) target = $region68
      $region67: #{_lambda_.1} parent=5 // pred_region
        // Predicated region
        $region69: #{_lambda_.1} parent=67 // pred_check
          %p407 = pneg %p65
        $region70: #{_lambda_.1} parent=67 // pred_check_branch
          %409 = sbr.rel (%p407) target = $region72
        $region71: #{_lambda_.1} parent=67 // pred_region
          %s410 = smul.u32 16, %s24
          %p411 = scmp.lt.s32.totalorder %s410, 31
          %s412 = scalar_select %p411, %s410, 31
          %s413 = smul.addr %s412, 4
          %s414 = scalar_lea.vmem %s1, %s413
          %s415 = smul.u32 16, %s24
        $region72: #{_lambda_.1} parent=67 // pred_fallthru
          _
      $region68: #{_lambda_.1} parent=5 // pred_fallthru
        _
      %p416 = scmp.le.s32.totalorder 1, %s24
      %p417 = scmp.lt.s32.totalorder %s24, 3
      %p418 = pnand %p416, %p417
      %p419 = pneg %p418
      // Predicated region
      $region73: #{_lambda_.1} parent=5 // pred_check
        _
      $region74: #{_lambda_.1} parent=5 // pred_check_branch
        %421 = sbr.rel (%p418) target = $region76
      $region75: #{_lambda_.1} parent=5 // pred_region
        %s422 = ssub.s32 %s24, 1
        %p423 = pneg %p45
        %p424 = pneg %p42
        %s425 = smul.u32 16, %s29
        %p426 = scmp.lt.s32.totalorder %s425, 31
        %s427 = scalar_select %p426, %s425, 31
        %s428 = smul.addr %s427, 4
        %s429 = scalar_lea.vmem %s1, %s428
        %p430 = pneg %p71
        %p431 = pneg %p68
        %p432 = pneg %p92
        %p433 = pneg %p89
        %p434 = pneg %p113
        %p435 = pneg %p110
        %p436 = pneg %p134
        %p437 = pneg %p131
        %p438 = pneg %p155
        %p439 = pneg %p152
        %p440 = pneg %p176
        %p441 = pneg %p173
        %p442 = pneg %p197
        %p443 = pneg %p194
        %p444 = pneg %p218
        %p445 = pneg %p215
        %p446 = pneg %p239
        %p447 = pneg %p236
        %p448 = pneg %p260
        %p449 = pneg %p257
        %p450 = pneg %p281
        %p451 = pneg %p278
        %p452 = pneg %p302
        %p453 = pneg %p299
        %p454 = pneg %p323
        %p455 = pneg %p320
        %p456 = pneg %p349
        %p457 = pneg %p346
        %s458 = sand.u32 %s336, 1
        %s459 = scalar_lea.sflag [#allocation4], %s458
        %s460 = sand.u32 %s336, 1
        %s461 = smul.addr %s460, 8
        %s462 = scalar_lea.vmem [#allocation3], %s461
        %s463 = smul.u32 16, %s29
        %p464 = scmp.lt.s32.totalorder %s463, 31
        %s465 = scalar_select %p464, %s463, 31
        %s466 = smul.addr %s465, 4
        %s467 = scalar_lea.vmem %s1, %s466
        %s468 = smul.u32 16, %s29
        %v470 = vld [vmem:[%s467] sm:$0xf]
        %v471 = vld [vmem:[%s467 + $0x4] sm:$0xf]
        %v472 = vld [vmem:[%s467 + $0x8] sm:$0xf]
        %v473 = vld [vmem:[%s467 + $0xc] sm:$0xf]
        %v474 = vld [vmem:[%s467 + $0x10] sm:$0xf]
        %v475 = vld [vmem:[%s467 + $0x14] sm:$0xf]
        %v476 = vld [vmem:[%s467 + $0x18] sm:$0xf]
        %v477 = vld [vmem:[%s467 + $0x1c] sm:$0xf]
        %v478 = vld [vmem:[%s467 + $0x20] sm:$0xf]
        %v479 = vld [vmem:[%s467 + $0x24] sm:$0xf]
        %v480 = vld [vmem:[%s467 + $0x28] sm:$0xf]
        %v481 = vld [vmem:[%s467 + $0x2c] sm:$0xf]
        %v482 = vld [vmem:[%s467 + $0x30] sm:$0xf]
        %v483 = vld [vmem:[%s467 + $0x34] sm:$0xf]
        %v484 = vld [vmem:[%s467 + $0x38] sm:$0xf]
        %v485 = vld [vmem:[%s467 + $0x3c] sm:$0xf]
        %v486 = vld [vmem:[%s2] sm:$0xf]
        %v487 = vld [vmem:[%s2 + $0x4] sm:$0xf]
        %v488 = vld [vmem:[%s2 + $0x8] sm:$0xf]
        %v489 = vld [vmem:[%s2 + $0xc] sm:$0xf]
        %v490 = vld [vmem:[%s2 + $0x10] sm:$0xf]
        %v491 = vld [vmem:[%s2 + $0x14] sm:$0xf]
        %v492 = vld [vmem:[%s2 + $0x18] sm:$0xf]
        %v493 = vld [vmem:[%s2 + $0x1c] sm:$0xf]
        %v510 = vunpack.c.l.b16 %v470
        %v511 = vunpack.c.l.b16 %v471
        %v512 = vunpack.c.l.b16 %v472
        %v513 = vunpack.c.l.b16 %v473
        %v514 = vunpack.c.l.b16 %v474
        %v515 = vunpack.c.l.b16 %v475
        %v516 = vunpack.c.l.b16 %v476
        %v517 = vunpack.c.l.b16 %v477
        %v518 = vunpack.c.l.b16 %v478
        %v519 = vunpack.c.l.b16 %v479
        %v520 = vunpack.c.l.b16 %v480
        %v521 = vunpack.c.l.b16 %v481
        %v522 = vunpack.c.l.b16 %v482
        %v523 = vunpack.c.l.b16 %v483
        %v524 = vunpack.c.l.b16 %v484
        %v525 = vunpack.c.l.b16 %v485
        %v526 = vpack.c.b16 %v511, %v510
        %v527 = vpack.c.b16 %v513, %v512
        %v528 = vpack.c.b16 %v515, %v514
        %v529 = vpack.c.b16 %v517, %v516
        %v530 = vpack.c.b16 %v519, %v518
        %v531 = vpack.c.b16 %v521, %v520
        %v532 = vpack.c.b16 %v523, %v522
        %v533 = vpack.c.b16 %v525, %v524
        %v542 = vunpack.c.l.b16 %v486
        %v543 = vunpack.c.l.b16 %v487
        %v544 = vunpack.c.l.b16 %v488
        %v545 = vunpack.c.l.b16 %v489
        %v546 = vunpack.c.l.b16 %v490
        %v547 = vunpack.c.l.b16 %v491
        %v548 = vunpack.c.l.b16 %v492
        %v549 = vunpack.c.l.b16 %v493
        %v550 = vpack.c.b16 %v543, %v542
        %v551 = vpack.c.b16 %v545, %v544
        %v552 = vpack.c.b16 %v547, %v546
        %v553 = vpack.c.b16 %v549, %v548
        %vm558 = vcmask 523264
        %v560 = vsel %vm558, %v526, 0
        %v563 = vsel %vm558, %v527, 0
        %v566 = vsel %vm558, %v528, 0
        %v569 = vsel %vm558, %v529, 0
        %v572 = vsel %vm558, %v530, 0
        %v575 = vsel %vm558, %v531, 0
        %v578 = vsel %vm558, %v532, 0
        %v581 = vsel %vm558, %v533, 0
        %583 = vmatprep.subr.bf16.mxu0 0
        %584 = vmatpush1.bf16.msra.mxu0 0
        %585 = vmatprep.subr.bf16.mxu0 0
        %586 = vmatpush1.bf16.msra.mxu0 0
        %587 = vmatprep.subr.bf16.mxu0 0
        %588 = vmatpush1.bf16.msra.mxu0 0
        %589 = vmatprep.subr.bf16.mxu0 0
        %590 = vmatpush1.bf16.msra.mxu0 0
        %591 = vmatprep.subr.bf16.mxu0 0
        %592 = vmatpush1.bf16.msra.mxu0 %v553
        %593 = vmatprep.subr.bf16.mxu0 0
        %594 = vmatpush1.bf16.msra.mxu0 %v552
        %595 = vmatprep.subr.bf16.mxu0 0
        %596 = vmatpush1.bf16.msra.mxu0 %v551
        %597 = vmatprep.subr.bf16.mxu0 0
        %598 = vmatpush1.bf16.msra.mxu0 %v550
        %599 = vmatprep.subr.bf16.mxu0 0
        %600 = vmatpush2.bf16.msra.mxu0 0
        %601 = vmatprep.subr.bf16.mxu0 0
        %602 = vmatpush2.bf16.msra.mxu0 0
        %603 = vmatprep.subr.bf16.mxu0 0
        %604 = vmatpush2.bf16.msra.mxu0 0
        %605 = vmatprep.subr.bf16.mxu0 0
        %606 = vmatpush2.bf16.msra.mxu0 0
        %607 = vmatprep.subr.bf16.mxu0 0
        %608 = vmatpush2.bf16.msra.mxu0 0
        %609 = vmatprep.subr.bf16.mxu0 0
        %610 = vmatpush2.bf16.msra.mxu0 0
        %611 = vmatprep.subr.bf16.mxu0 0
        %612 = vmatpush2.bf16.msra.mxu0 0
        %613 = vmatprep.subr.bf16.mxu0 0
        %614 = vmatpush2.bf16.msra.mxu0 0
        %615 = vmatprep.mubr.bf16.mxu0 0
        %616 = vmatmul.mubr.bf16.gmra.mxu0 %v560
        %v617 = vpop.f32.mrf.mxu0
        %v618 = vadd.f32 0.0, %v617
        %v619 = vpop.f32.mrf.mxu0
        %v620 = vpop.f32.mrf.mxu0
        %v621 = vadd.f32 0.0, %v620
        %v622 = vpop.f32.mrf.mxu0
        %623 = vmatprep.mubr.bf16.mxu0 0
        %624 = vmatmul.mubr.bf16.gmra.mxu0 %v563
        %v625 = vpop.f32.mrf.mxu0
        %v626 = vadd.f32 0.0, %v625
        %v627 = vpop.f32.mrf.mxu0
        %v628 = vpop.f32.mrf.mxu0
        %v629 = vadd.f32 0.0, %v628
        %v630 = vpop.f32.mrf.mxu0
        %631 = vmatprep.mubr.bf16.mxu0 0
        %632 = vmatmul.mubr.bf16.gmra.mxu0 %v566
        %v633 = vpop.f32.mrf.mxu0
        %v634 = vadd.f32 0.0, %v633
        %v635 = vpop.f32.mrf.mxu0
        %v636 = vpop.f32.mrf.mxu0
        %v637 = vadd.f32 0.0, %v636
        %v638 = vpop.f32.mrf.mxu0
        %639 = vmatprep.mubr.bf16.mxu0 0
        %640 = vmatmul.mubr.bf16.gmra.mxu0 %v569
        %v641 = vpop.f32.mrf.mxu0
        %v642 = vadd.f32 0.0, %v641
        %v643 = vpop.f32.mrf.mxu0
        %v644 = vpop.f32.mrf.mxu0
        %v645 = vadd.f32 0.0, %v644
        %v646 = vpop.f32.mrf.mxu0
        %647 = vmatprep.mubr.bf16.mxu0 0
        %648 = vmatmul.mubr.bf16.gmra.mxu0 %v572
        %v649 = vpop.f32.mrf.mxu0
        %v650 = vadd.f32 0.0, %v649
        %v651 = vpop.f32.mrf.mxu0
        %v652 = vpop.f32.mrf.mxu0
        %v653 = vadd.f32 0.0, %v652
        %v654 = vpop.f32.mrf.mxu0
        %655 = vmatprep.mubr.bf16.mxu0 0
        %656 = vmatmul.mubr.bf16.gmra.mxu0 %v575
        %v657 = vpop.f32.mrf.mxu0
        %v658 = vadd.f32 0.0, %v657
        %v659 = vpop.f32.mrf.mxu0
        %v660 = vpop.f32.mrf.mxu0
        %v661 = vadd.f32 0.0, %v660
        %v662 = vpop.f32.mrf.mxu0
        %663 = vmatprep.mubr.bf16.mxu0 0
        %664 = vmatmul.mubr.bf16.gmra.mxu0 %v578
        %v665 = vpop.f32.mrf.mxu0
        %v666 = vadd.f32 0.0, %v665
        %v667 = vpop.f32.mrf.mxu0
        %v668 = vpop.f32.mrf.mxu0
        %v669 = vadd.f32 0.0, %v668
        %v670 = vpop.f32.mrf.mxu0
        %671 = vmatprep.mubr.bf16.mxu0 0
        %672 = vmatmul.mubr.bf16.gmra.mxu0 %v581
        %v673 = vpop.f32.mrf.mxu0
        %v674 = vadd.f32 0.0, %v673
        %v675 = vpop.f32.mrf.mxu0
        %v676 = vpop.f32.mrf.mxu0
        %v677 = vadd.f32 0.0, %v676
        %v678 = vpop.f32.mrf.mxu0
        %679 = vdwg.mxu0
        %v680 = vmul.f32 %v618, %v618
        %v681 = vmul.f32 %v621, %v621
        %v682 = vmul.f32 %v626, %v626
        %v683 = vmul.f32 %v629, %v629
        %v684 = vmul.f32 %v634, %v634
        %v685 = vmul.f32 %v637, %v637
        %v686 = vmul.f32 %v642, %v642
        %v687 = vmul.f32 %v645, %v645
        %v688 = vmul.f32 %v650, %v650
        %v689 = vmul.f32 %v653, %v653
        %v690 = vmul.f32 %v658, %v658
        %v691 = vmul.f32 %v661, %v661
        %v692 = vmul.f32 %v666, %v666
        %v693 = vmul.f32 %v669, %v669
        %v694 = vmul.f32 %v674, %v674
        %v695 = vmul.f32 %v677, %v677
        %v696 = vpack.c.bf16 %v681, %v680
        %v697 = vpack.c.bf16 %v683, %v682
        %v698 = vpack.c.bf16 %v685, %v684
        %v699 = vpack.c.bf16 %v687, %v686
        %v700 = vpack.c.bf16 %v689, %v688
        %v701 = vpack.c.bf16 %v691, %v690
        %v702 = vpack.c.bf16 %v693, %v692
        %v703 = vpack.c.bf16 %v695, %v694
        %v704 = vld [vmem:[%s3] sm:$0xf]
        %v705 = vld [vmem:[%s3 + $0x4] sm:$0xf]
        %v706 = vld [vmem:[%s3 + $0x8] sm:$0xf]
        %v707 = vld [vmem:[%s3 + $0xc] sm:$0xf]
        %v708 = vld [vmem:[%s3 + $0x10] sm:$0xf]
        %v709 = vld [vmem:[%s3 + $0x14] sm:$0xf]
        %v710 = vld [vmem:[%s3 + $0x18] sm:$0xf]
        %v711 = vld [vmem:[%s3 + $0x1c] sm:$0xf]
        %v712 = vld [vmem:[%s3 + $0x20] sm:$0xf]
        %v713 = vld [vmem:[%s3 + $0x24] sm:$0xf]
        %v714 = vld [vmem:[%s3 + $0x28] sm:$0xf]
        %v715 = vld [vmem:[%s3 + $0x2c] sm:$0xf]
        %v716 = vld [vmem:[%s3 + $0x30] sm:$0xf]
        %v717 = vld [vmem:[%s3 + $0x34] sm:$0xf]
        %v718 = vld [vmem:[%s3 + $0x38] sm:$0xf]
        %v719 = vld [vmem:[%s3 + $0x3c] sm:$0xf]
        %v736 = vunpack.c.l.b16 %v704
        %v737 = vunpack.c.l.b16 %v705
        %v738 = vunpack.c.l.b16 %v706
        %v739 = vunpack.c.l.b16 %v707
        %v740 = vunpack.c.l.b16 %v708
        %v741 = vunpack.c.l.b16 %v709
        %v742 = vunpack.c.l.b16 %v710
        %v743 = vunpack.c.l.b16 %v711
        %v744 = vunpack.c.l.b16 %v712
        %v745 = vunpack.c.l.b16 %v713
        %v746 = vunpack.c.l.b16 %v714
        %v747 = vunpack.c.l.b16 %v715
        %v748 = vunpack.c.l.b16 %v716
        %v749 = vunpack.c.l.b16 %v717
        %v750 = vunpack.c.l.b16 %v718
        %v751 = vunpack.c.l.b16 %v719
        %v752 = vpack.c.b16 %v737, %v736
        %v753 = vpack.c.b16 %v739, %v738
        %v754 = vpack.c.b16 %v741, %v740
        %v755 = vpack.c.b16 %v743, %v742
        %v756 = vpack.c.b16 %v745, %v744
        %v757 = vpack.c.b16 %v747, %v746
        %v758 = vpack.c.b16 %v749, %v748
        %v759 = vpack.c.b16 %v751, %v750
        %768 = vmatprep.subr.bf16.mxu0 0
        %769 = vmatpush1.bf16.msra.mxu0 %v759
        %770 = vmatprep.subr.bf16.mxu0 0
        %771 = vmatpush1.bf16.msra.mxu0 %v758
        %772 = vmatprep.subr.bf16.mxu0 0
        %773 = vmatpush1.bf16.msra.mxu0 %v757
        %774 = vmatprep.subr.bf16.mxu0 0
        %775 = vmatpush1.bf16.msra.mxu0 %v756
        %776 = vmatprep.subr.bf16.mxu0 0
        %777 = vmatpush1.bf16.msra.mxu0 %v755
        %778 = vmatprep.subr.bf16.mxu0 0
        %779 = vmatpush1.bf16.msra.mxu0 %v754
        %780 = vmatprep.subr.bf16.mxu0 0
        %781 = vmatpush1.bf16.msra.mxu0 %v753
        %782 = vmatprep.subr.bf16.mxu0 0
        %783 = vmatpush1.bf16.msra.mxu0 %v752
        %784 = vmatprep.subr.bf16.mxu0 0
        %785 = vmatpush2.bf16.msra.mxu0 0
        %786 = vmatprep.subr.bf16.mxu0 0
        %787 = vmatpush2.bf16.msra.mxu0 0
        %788 = vmatprep.subr.bf16.mxu0 0
        %789 = vmatpush2.bf16.msra.mxu0 0
        %790 = vmatprep.subr.bf16.mxu0 0
        %791 = vmatpush2.bf16.msra.mxu0 0
        %792 = vmatprep.subr.bf16.mxu0 0
        %793 = vmatpush2.bf16.msra.mxu0 0
        %794 = vmatprep.subr.bf16.mxu0 0
        %795 = vmatpush2.bf16.msra.mxu0 0
        %796 = vmatprep.subr.bf16.mxu0 0
        %797 = vmatpush2.bf16.msra.mxu0 0
        %798 = vmatprep.subr.bf16.mxu0 0
        %799 = vmatpush2.bf16.msra.mxu0 0
        %800 = vmatprep.mubr.bf16.mxu0 0
        %801 = vmatmul.mubr.bf16.gmra.mxu0 %v696
        %v802 = vpop.f32.mrf.mxu0
        %v803 = vadd.f32 0.0, %v802
        %v804 = vpop.f32.mrf.mxu0
        %v805 = vpop.f32.mrf.mxu0
        %v806 = vadd.f32 0.0, %v805
        %v807 = vpop.f32.mrf.mxu0
        %808 = vmatprep.mubr.bf16.mxu0 0
        %809 = vmatmul.mubr.bf16.gmra.mxu0 %v697
        %v810 = vpop.f32.mrf.mxu0
        %v811 = vadd.f32 0.0, %v810
        %v812 = vpop.f32.mrf.mxu0
        %v813 = vpop.f32.mrf.mxu0
        %v814 = vadd.f32 0.0, %v813
        %v815 = vpop.f32.mrf.mxu0
        %816 = vmatprep.mubr.bf16.mxu0 0
        %817 = vmatmul.mubr.bf16.gmra.mxu0 %v698
        %v818 = vpop.f32.mrf.mxu0
        %v819 = vadd.f32 0.0, %v818
        %v820 = vpop.f32.mrf.mxu0
        %v821 = vpop.f32.mrf.mxu0
        %v822 = vadd.f32 0.0, %v821
        %v823 = vpop.f32.mrf.mxu0
        %824 = vmatprep.mubr.bf16.mxu0 0
        %825 = vmatmul.mubr.bf16.gmra.mxu0 %v699
        %v826 = vpop.f32.mrf.mxu0
        %v827 = vadd.f32 0.0, %v826
        %v828 = vpop.f32.mrf.mxu0
        %v829 = vpop.f32.mrf.mxu0
        %v830 = vadd.f32 0.0, %v829
        %v831 = vpop.f32.mrf.mxu0
        %832 = vmatprep.mubr.bf16.mxu0 0
        %833 = vmatmul.mubr.bf16.gmra.mxu0 %v700
        %v834 = vpop.f32.mrf.mxu0
        %v835 = vadd.f32 0.0, %v834
        %v836 = vpop.f32.mrf.mxu0
        %v837 = vpop.f32.mrf.mxu0
        %v838 = vadd.f32 0.0, %v837
        %v839 = vpop.f32.mrf.mxu0
        %840 = vmatprep.mubr.bf16.mxu0 0
        %841 = vmatmul.mubr.bf16.gmra.mxu0 %v701
        %v842 = vpop.f32.mrf.mxu0
        %v843 = vadd.f32 0.0, %v842
        %v844 = vpop.f32.mrf.mxu0
        %v845 = vpop.f32.mrf.mxu0
        %v846 = vadd.f32 0.0, %v845
        %v847 = vpop.f32.mrf.mxu0
        %848 = vmatprep.mubr.bf16.mxu0 0
        %849 = vmatmul.mubr.bf16.gmra.mxu0 %v702
        %v850 = vpop.f32.mrf.mxu0
        %v851 = vadd.f32 0.0, %v850
        %v852 = vpop.f32.mrf.mxu0
        %v853 = vpop.f32.mrf.mxu0
        %v854 = vadd.f32 0.0, %v853
        %v855 = vpop.f32.mrf.mxu0
        %856 = vmatprep.mubr.bf16.mxu0 0
        %857 = vmatmul.mubr.bf16.gmra.mxu0 %v703
        %v858 = vpop.f32.mrf.mxu0
        %v859 = vadd.f32 0.0, %v858
        %v860 = vpop.f32.mrf.mxu0
        %v861 = vpop.f32.mrf.mxu0
        %v862 = vadd.f32 0.0, %v861
        %v863 = vpop.f32.mrf.mxu0
        %864 = vdwg.mxu0
        %v865 = vlaneseq
        %v866 = vand.u32 %v865, 127
        %vm867 = vcmp.lt.s32.totalorder %v866, 32
        %v868 = vmax.f32 %v803, 1e-10
        %v869 = vmax.f32 %v806, 1e-10
        %v870 = vmax.f32 %v811, 1e-10
        %v871 = vmax.f32 %v814, 1e-10
        %v872 = vmax.f32 %v819, 1e-10
        %v873 = vmax.f32 %v822, 1e-10
        %v874 = vmax.f32 %v827, 1e-10
        %v875 = vmax.f32 %v830, 1e-10
        %v876 = vmax.f32 %v835, 1e-10
        %v877 = vmax.f32 %v838, 1e-10
        %v878 = vmax.f32 %v843, 1e-10
        %v879 = vmax.f32 %v846, 1e-10
        %v880 = vmax.f32 %v851, 1e-10
        %v881 = vmax.f32 %v854, 1e-10
        %v882 = vmax.f32 %v859, 1e-10
        %v883 = vmax.f32 %v862, 1e-10
        %v884 = vlog2.pop %v868
        %v885 = vmul.f32 %v884, 0.6931472
        %v886 = vlog2.pop %v869
        %v887 = vmul.f32 %v886, 0.6931472
        %v888 = vlog2.pop %v870
        %v889 = vmul.f32 %v888, 0.6931472
        %v890 = vlog2.pop %v871
        %v891 = vmul.f32 %v890, 0.6931472
        %v892 = vlog2.pop %v872
        %v893 = vmul.f32 %v892, 0.6931472
        %v894 = vlog2.pop %v873
        %v895 = vmul.f32 %v894, 0.6931472
        %v896 = vlog2.pop %v874
        %v897 = vmul.f32 %v896, 0.6931472
        %v898 = vlog2.pop %v875
        %v899 = vmul.f32 %v898, 0.6931472
        %v900 = vlog2.pop %v876
        %v901 = vmul.f32 %v900, 0.6931472
        %v902 = vlog2.pop %v877
        %v903 = vmul.f32 %v902, 0.6931472
        %v904 = vlog2.pop %v878
        %v905 = vmul.f32 %v904, 0.6931472
        %v906 = vlog2.pop %v879
        %v907 = vmul.f32 %v906, 0.6931472
        %v908 = vlog2.pop %v880
        %v909 = vmul.f32 %v908, 0.6931472
        %v910 = vlog2.pop %v881
        %v911 = vmul.f32 %v910, 0.6931472
        %v912 = vlog2.pop %v882
        %v913 = vmul.f32 %v912, 0.6931472
        %v914 = vlog2.pop %v883
        %v915 = vmul.f32 %v914, 0.6931472
        %v916 = vmul.f32 %v885, 4.3429446
        %v917 = vmul.f32 %v887, 4.3429446
        %v918 = vmul.f32 %v889, 4.3429446
        %v919 = vmul.f32 %v891, 4.3429446
        %v920 = vmul.f32 %v893, 4.3429446
        %v921 = vmul.f32 %v895, 4.3429446
        %v922 = vmul.f32 %v897, 4.3429446
        %v923 = vmul.f32 %v899, 4.3429446
        %v924 = vmul.f32 %v901, 4.3429446
        %v925 = vmul.f32 %v903, 4.3429446
        %v926 = vmul.f32 %v905, 4.3429446
        %v927 = vmul.f32 %v907, 4.3429446
        %v928 = vmul.f32 %v909, 4.3429446
        %v929 = vmul.f32 %v911, 4.3429446
        %v930 = vmul.f32 %v913, 4.3429446
        %v931 = vmul.f32 %v915, 4.3429446
        %v932 = vsel %vm867, %v916, 0.0
        %v933 = vsel %vm867, %v917, 0.0
        %v934 = vsel %vm867, %v918, 0.0
        %v935 = vsel %vm867, %v919, 0.0
        %v936 = vsel %vm867, %v920, 0.0
        %v937 = vsel %vm867, %v921, 0.0
        %v938 = vsel %vm867, %v922, 0.0
        %v939 = vsel %vm867, %v923, 0.0
        %v940 = vsel %vm867, %v924, 0.0
        %v941 = vsel %vm867, %v925, 0.0
        %v942 = vsel %vm867, %v926, 0.0
        %v943 = vsel %vm867, %v927, 0.0
        %v944 = vsel %vm867, %v928, 0.0
        %v945 = vsel %vm867, %v929, 0.0
        %v946 = vsel %vm867, %v930, 0.0
        %v947 = vsel %vm867, %v931, 0.0
        %948 = vadd.xlane.f32.xlu0 %v932
        %v949 = vpop.xlane.xlu0 %948
        %950 = vadd.xlane.f32.xlu0 %v933
        %v951 = vpop.xlane.xlu0 %950
        %952 = vadd.xlane.f32.xlu0 %v934
        %v953 = vpop.xlane.xlu0 %952
        %954 = vadd.xlane.f32.xlu0 %v935
        %v955 = vpop.xlane.xlu0 %954
        %956 = vadd.xlane.f32.xlu0 %v936
        %v957 = vpop.xlane.xlu0 %956
        %958 = vadd.xlane.f32.xlu0 %v937
        %v959 = vpop.xlane.xlu0 %958
        %960 = vadd.xlane.f32.xlu0 %v938
        %v961 = vpop.xlane.xlu0 %960
        %962 = vadd.xlane.f32.xlu0 %v939
        %v963 = vpop.xlane.xlu0 %962
        %964 = vadd.xlane.f32.xlu0 %v940
        %v965 = vpop.xlane.xlu0 %964
        %966 = vadd.xlane.f32.xlu0 %v941
        %v967 = vpop.xlane.xlu0 %966
        %968 = vadd.xlane.f32.xlu0 %v942
        %v969 = vpop.xlane.xlu0 %968
        %970 = vadd.xlane.f32.xlu0 %v943
        %v971 = vpop.xlane.xlu0 %970
        %972 = vadd.xlane.f32.xlu0 %v944
        %v973 = vpop.xlane.xlu0 %972
        %974 = vadd.xlane.f32.xlu0 %v945
        %v975 = vpop.xlane.xlu0 %974
        %976 = vadd.xlane.f32.xlu0 %v946
        %v977 = vpop.xlane.xlu0 %976
        %978 = vadd.xlane.f32.xlu0 %v947
        %v979 = vpop.xlane.xlu0 %978
        %v980 = vadd.f32 %v949, %v951
        %v981 = vrot.slane %v980, 4
        %v982 = vadd.f32 %v980, %v981
        %v983 = vrot.slane %v982, 2
        %v984 = vadd.f32 %v982, %v983
        %v985 = vrot.slane %v984, 1
        %v986 = vadd.f32 %v984, %v985
        %v987 = vadd.f32 %v953, %v955
        %v988 = vrot.slane %v987, 4
        %v989 = vadd.f32 %v987, %v988
        %v990 = vrot.slane %v989, 2
        %v991 = vadd.f32 %v989, %v990
        %v992 = vrot.slane %v991, 1
        %v993 = vadd.f32 %v991, %v992
        %v994 = vadd.f32 %v957, %v959
        %v995 = vrot.slane %v994, 4
        %v996 = vadd.f32 %v994, %v995
        %v997 = vrot.slane %v996, 2
        %v998 = vadd.f32 %v996, %v997
        %v999 = vrot.slane %v998, 1
        %v1000 = vadd.f32 %v998, %v999
        %v1001 = vadd.f32 %v961, %v963
        %v1002 = vrot.slane %v1001, 4
        %v1003 = vadd.f32 %v1001, %v1002
        %v1004 = vrot.slane %v1003, 2
        %v1005 = vadd.f32 %v1003, %v1004
        %v1006 = vrot.slane %v1005, 1
        %v1007 = vadd.f32 %v1005, %v1006
        %v1008 = vadd.f32 %v965, %v967
        %v1009 = vrot.slane %v1008, 4
        %v1010 = vadd.f32 %v1008, %v1009
        %v1011 = vrot.slane %v1010, 2
        %v1012 = vadd.f32 %v1010, %v1011
        %v1013 = vrot.slane %v1012, 1
        %v1014 = vadd.f32 %v1012, %v1013
        %v1015 = vadd.f32 %v969, %v971
        %v1016 = vrot.slane %v1015, 4
        %v1017 = vadd.f32 %v1015, %v1016
        %v1018 = vrot.slane %v1017, 2
        %v1019 = vadd.f32 %v1017, %v1018
        %v1020 = vrot.slane %v1019, 1
        %v1021 = vadd.f32 %v1019, %v1020
        %v1022 = vadd.f32 %v973, %v975
        %v1023 = vrot.slane %v1022, 4
        %v1024 = vadd.f32 %v1022, %v1023
        %v1025 = vrot.slane %v1024, 2
        %v1026 = vadd.f32 %v1024, %v1025
        %v1027 = vrot.slane %v1026, 1
        %v1028 = vadd.f32 %v1026, %v1027
        %v1029 = vadd.f32 %v977, %v979
        %v1030 = vrot.slane %v1029, 4
        %v1031 = vadd.f32 %v1029, %v1030
        %v1032 = vrot.slane %v1031, 2
        %v1033 = vadd.f32 %v1031, %v1032
        %v1034 = vrot.slane %v1033, 1
        %v1035 = vadd.f32 %v1033, %v1034
        %v1036 = vmul.f32 %v986, 0.001953125
        %v1037 = vmul.f32 %v993, 0.001953125
        %v1038 = vmul.f32 %v1000, 0.001953125
        %v1039 = vmul.f32 %v1007, 0.001953125
        %v1040 = vmul.f32 %v1014, 0.001953125
        %v1041 = vmul.f32 %v1021, 0.001953125
        %v1042 = vmul.f32 %v1028, 0.001953125
        %v1043 = vmul.f32 %v1035, 0.001953125
        %v1044 = vsub.f32 %v932, %v1036
        %v1045 = vsub.f32 %v933, %v1036
        %v1046 = vsub.f32 %v934, %v1037
        %v1047 = vsub.f32 %v935, %v1037
        %v1048 = vsub.f32 %v936, %v1038
        %v1049 = vsub.f32 %v937, %v1038
        %v1050 = vsub.f32 %v938, %v1039
        %v1051 = vsub.f32 %v939, %v1039
        %v1052 = vsub.f32 %v940, %v1040
        %v1053 = vsub.f32 %v941, %v1040
        %v1054 = vsub.f32 %v942, %v1041
        %v1055 = vsub.f32 %v943, %v1041
        %v1056 = vsub.f32 %v944, %v1042
        %v1057 = vsub.f32 %v945, %v1042
        %v1058 = vsub.f32 %v946, %v1043
        %v1059 = vsub.f32 %v947, %v1043
        %v1060 = vmul.f32 %v1044, %v1044
        %v1061 = vmul.f32 %v1045, %v1045
        %v1062 = vmul.f32 %v1046, %v1046
        %v1063 = vmul.f32 %v1047, %v1047
        %v1064 = vmul.f32 %v1048, %v1048
        %v1065 = vmul.f32 %v1049, %v1049
        %v1066 = vmul.f32 %v1050, %v1050
        %v1067 = vmul.f32 %v1051, %v1051
        %v1068 = vmul.f32 %v1052, %v1052
        %v1069 = vmul.f32 %v1053, %v1053
        %v1070 = vmul.f32 %v1054, %v1054
        %v1071 = vmul.f32 %v1055, %v1055
        %v1072 = vmul.f32 %v1056, %v1056
        %v1073 = vmul.f32 %v1057, %v1057
        %v1074 = vmul.f32 %v1058, %v1058
        %v1075 = vmul.f32 %v1059, %v1059
        %v1076 = vsel %vm867, %v1060, 0.0
        %v1077 = vsel %vm867, %v1061, 0.0
        %v1078 = vsel %vm867, %v1062, 0.0
        %v1079 = vsel %vm867, %v1063, 0.0
        %v1080 = vsel %vm867, %v1064, 0.0
        %v1081 = vsel %vm867, %v1065, 0.0
        %v1082 = vsel %vm867, %v1066, 0.0
        %v1083 = vsel %vm867, %v1067, 0.0
        %v1084 = vsel %vm867, %v1068, 0.0
        %v1085 = vsel %vm867, %v1069, 0.0
        %v1086 = vsel %vm867, %v1070, 0.0
        %v1087 = vsel %vm867, %v1071, 0.0
        %v1088 = vsel %vm867, %v1072, 0.0
        %v1089 = vsel %vm867, %v1073, 0.0
        %v1090 = vsel %vm867, %v1074, 0.0
        %v1091 = vsel %vm867, %v1075, 0.0
        %1092 = vadd.xlane.f32.xlu0 %v1076
        %v1093 = vpop.xlane.xlu0 %1092
        %1094 = vadd.xlane.f32.xlu0 %v1077
        %v1095 = vpop.xlane.xlu0 %1094
        %1096 = vadd.xlane.f32.xlu0 %v1078
        %v1097 = vpop.xlane.xlu0 %1096
        %1098 = vadd.xlane.f32.xlu0 %v1079
        %v1099 = vpop.xlane.xlu0 %1098
        %1100 = vadd.xlane.f32.xlu0 %v1080
        %v1101 = vpop.xlane.xlu0 %1100
        %1102 = vadd.xlane.f32.xlu0 %v1081
        %v1103 = vpop.xlane.xlu0 %1102
        %1104 = vadd.xlane.f32.xlu0 %v1082
        %v1105 = vpop.xlane.xlu0 %1104
        %1106 = vadd.xlane.f32.xlu0 %v1083
        %v1107 = vpop.xlane.xlu0 %1106
        %1108 = vadd.xlane.f32.xlu0 %v1084
        %v1109 = vpop.xlane.xlu0 %1108
        %1110 = vadd.xlane.f32.xlu0 %v1085
        %v1111 = vpop.xlane.xlu0 %1110
        %1112 = vadd.xlane.f32.xlu0 %v1086
        %v1113 = vpop.xlane.xlu0 %1112
        %1114 = vadd.xlane.f32.xlu0 %v1087
        %v1115 = vpop.xlane.xlu0 %1114
        %1116 = vadd.xlane.f32.xlu0 %v1088
        %v1117 = vpop.xlane.xlu0 %1116
        %1118 = vadd.xlane.f32.xlu0 %v1089
        %v1119 = vpop.xlane.xlu0 %1118
        %1120 = vadd.xlane.f32.xlu0 %v1090
        %v1121 = vpop.xlane.xlu0 %1120
        %1122 = vadd.xlane.f32.xlu0 %v1091
        %v1123 = vpop.xlane.xlu0 %1122
        %v1124 = vadd.f32 %v1093, %v1095
        %v1125 = vrot.slane %v1124, 4
        %v1126 = vadd.f32 %v1124, %v1125
        %v1127 = vrot.slane %v1126, 2
        %v1128 = vadd.f32 %v1126, %v1127
        %v1129 = vrot.slane %v1128, 1
        %v1130 = vadd.f32 %v1128, %v1129
        %v1131 = vadd.f32 %v1097, %v1099
        %v1132 = vrot.slane %v1131, 4
        %v1133 = vadd.f32 %v1131, %v1132
        %v1134 = vrot.slane %v1133, 2
        %v1135 = vadd.f32 %v1133, %v1134
        %v1136 = vrot.slane %v1135, 1
        %v1137 = vadd.f32 %v1135, %v1136
        %v1138 = vadd.f32 %v1101, %v1103
        %v1139 = vrot.slane %v1138, 4
        %v1140 = vadd.f32 %v1138, %v1139
        %v1141 = vrot.slane %v1140, 2
        %v1142 = vadd.f32 %v1140, %v1141
        %v1143 = vrot.slane %v1142, 1
        %v1144 = vadd.f32 %v1142, %v1143
        %v1145 = vadd.f32 %v1105, %v1107
        %v1146 = vrot.slane %v1145, 4
        %v1147 = vadd.f32 %v1145, %v1146
        %v1148 = vrot.slane %v1147, 2
        %v1149 = vadd.f32 %v1147, %v1148
        %v1150 = vrot.slane %v1149, 1
        %v1151 = vadd.f32 %v1149, %v1150
        %v1152 = vadd.f32 %v1109, %v1111
        %v1153 = vrot.slane %v1152, 4
        %v1154 = vadd.f32 %v1152, %v1153
        %v1155 = vrot.slane %v1154, 2
        %v1156 = vadd.f32 %v1154, %v1155
        %v1157 = vrot.slane %v1156, 1
        %v1158 = vadd.f32 %v1156, %v1157
        %v1159 = vadd.f32 %v1113, %v1115
        %v1160 = vrot.slane %v1159, 4
        %v1161 = vadd.f32 %v1159, %v1160
        %v1162 = vrot.slane %v1161, 2
        %v1163 = vadd.f32 %v1161, %v1162
        %v1164 = vrot.slane %v1163, 1
        %v1165 = vadd.f32 %v1163, %v1164
        %v1166 = vadd.f32 %v1117, %v1119
        %v1167 = vrot.slane %v1166, 4
        %v1168 = vadd.f32 %v1166, %v1167
        %v1169 = vrot.slane %v1168, 2
        %v1170 = vadd.f32 %v1168, %v1169
        %v1171 = vrot.slane %v1170, 1
        %v1172 = vadd.f32 %v1170, %v1171
        %v1173 = vadd.f32 %v1121, %v1123
        %v1174 = vrot.slane %v1173, 4
        %v1175 = vadd.f32 %v1173, %v1174
        %v1176 = vrot.slane %v1175, 2
        %v1177 = vadd.f32 %v1175, %v1176
        %v1178 = vrot.slane %v1177, 1
        %v1179 = vadd.f32 %v1177, %v1178
        %v1180 = vmul.f32 %v1130, 0.001953125
        %v1181 = vmul.f32 %v1137, 0.001953125
        %v1182 = vmul.f32 %v1144, 0.001953125
        %v1183 = vmul.f32 %v1151, 0.001953125
        %v1184 = vmul.f32 %v1158, 0.001953125
        %v1185 = vmul.f32 %v1165, 0.001953125
        %v1186 = vmul.f32 %v1172, 0.001953125
        %v1187 = vmul.f32 %v1179, 0.001953125
        %v1188 = vadd.f32 %v1180, 1e-06
        %v1189 = vadd.f32 %v1181, 1e-06
        %v1190 = vadd.f32 %v1182, 1e-06
        %v1191 = vadd.f32 %v1183, 1e-06
        %v1192 = vadd.f32 %v1184, 1e-06
        %v1193 = vadd.f32 %v1185, 1e-06
        %v1194 = vadd.f32 %v1186, 1e-06
        %v1195 = vadd.f32 %v1187, 1e-06
        %v1196 = vrsqrt.pop %v1188
        %v1197 = vrsqrt.pop %v1189
        %v1198 = vrsqrt.pop %v1190
        %v1199 = vrsqrt.pop %v1191
        %v1200 = vrsqrt.pop %v1192
        %v1201 = vrsqrt.pop %v1193
        %v1202 = vrsqrt.pop %v1194
        %v1203 = vrsqrt.pop %v1195
        %v1204 = vmul.f32 %v1044, %v1196
        %v1205 = vmul.f32 %v1045, %v1196
        %v1206 = vmul.f32 %v1046, %v1197
        %v1207 = vmul.f32 %v1047, %v1197
        %v1208 = vmul.f32 %v1048, %v1198
        %v1209 = vmul.f32 %v1049, %v1198
        %v1210 = vmul.f32 %v1050, %v1199
        %v1211 = vmul.f32 %v1051, %v1199
        %v1212 = vmul.f32 %v1052, %v1200
        %v1213 = vmul.f32 %v1053, %v1200
        %v1214 = vmul.f32 %v1054, %v1201
        %v1215 = vmul.f32 %v1055, %v1201
        %v1216 = vmul.f32 %v1056, %v1202
        %v1217 = vmul.f32 %v1057, %v1202
        %v1218 = vmul.f32 %v1058, %v1203
        %v1219 = vmul.f32 %v1059, %v1203
        %v1220 = vsel %vm867, %v1204, 0.0
        %v1221 = vsel %vm867, %v1205, 0.0
        %v1222 = vsel %vm867, %v1206, 0.0
        %v1223 = vsel %vm867, %v1207, 0.0
        %v1224 = vsel %vm867, %v1208, 0.0
        %v1225 = vsel %vm867, %v1209, 0.0
        %v1226 = vsel %vm867, %v1210, 0.0
        %v1227 = vsel %vm867, %v1211, 0.0
        %v1228 = vsel %vm867, %v1212, 0.0
        %v1229 = vsel %vm867, %v1213, 0.0
        %v1230 = vsel %vm867, %v1214, 0.0
        %v1231 = vsel %vm867, %v1215, 0.0
        %v1232 = vsel %vm867, %v1216, 0.0
        %v1233 = vsel %vm867, %v1217, 0.0
        %v1234 = vsel %vm867, %v1218, 0.0
        %v1235 = vsel %vm867, %v1219, 0.0
        %v1236 = vpack.c.bf16 %v1221, %v1220
        %v1237 = vpack.c.bf16 %v1223, %v1222
        %v1238 = vpack.c.bf16 %v1225, %v1224
        %v1239 = vpack.c.bf16 %v1227, %v1226
        %v1240 = vpack.c.bf16 %v1229, %v1228
        %v1241 = vpack.c.bf16 %v1231, %v1230
        %v1242 = vpack.c.bf16 %v1233, %v1232
        %v1243 = vpack.c.bf16 %v1235, %v1234
        %v1244 = vld [vmem:[%s4] sm:$0xff]
        %v1245 = vld [vmem:[%s4 + $0x8] sm:$0xf]
        %v1246 = vld [vmem:[%s4 + $0xc] sm:$0xff]
        %v1247 = vld [vmem:[%s4 + $0x14] sm:$0xf]
        %v1248 = vld [vmem:[%s4 + $0x18] sm:$0xff]
        %v1249 = vld [vmem:[%s4 + $0x20] sm:$0xf]
        %v1250 = vld [vmem:[%s4 + $0x24] sm:$0xff]
        %v1251 = vld [vmem:[%s4 + $0x2c] sm:$0xf]
        %v1252 = vld [vmem:[%s4 + $0x30] sm:$0xff]
        %v1253 = vld [vmem:[%s4 + $0x38] sm:$0xf]
        %v1254 = vld [vmem:[%s4 + $0x3c] sm:$0xff]
        %v1255 = vld [vmem:[%s4 + $0x44] sm:$0xf]
        %v1256 = vld [vmem:[%s4 + $0x48] sm:$0xff]
        %v1257 = vld [vmem:[%s4 + $0x50] sm:$0xf]
        %v1258 = vld [vmem:[%s4 + $0x54] sm:$0xff]
        %v1259 = vld [vmem:[%s4 + $0x5c] sm:$0xf]
        %v1260 = vld [vmem:[%s4 + $0x60] sm:$0xff]
        %v1261 = vld [vmem:[%s4 + $0x68] sm:$0xf]
        %v1262 = vld [vmem:[%s4 + $0x6c] sm:$0xff]
        %v1263 = vld [vmem:[%s4 + $0x74] sm:$0xf]
        %v1264 = vld [vmem:[%s4 + $0x78] sm:$0xff]
        %v1265 = vld [vmem:[%s4 + $0x80] sm:$0xf]
        %v1266 = vld [vmem:[%s4 + $0x84] sm:$0xff]
        %v1267 = vld [vmem:[%s4 + $0x8c] sm:$0xf]
        %v1268 = vld [vmem:[%s4 + $0x90] sm:$0xff]
        %v1269 = vld [vmem:[%s4 + $0x98] sm:$0xf]
        %v1270 = vld [vmem:[%s4 + $0x9c] sm:$0xff]
        %v1271 = vld [vmem:[%s4 + $0xa4] sm:$0xf]
        %v1272 = vld [vmem:[%s4 + $0xa8] sm:$0xff]
        %v1273 = vld [vmem:[%s4 + $0xb0] sm:$0xf]
        %v1274 = vld [vmem:[%s4 + $0xb4] sm:$0xff]
        %v1275 = vld [vmem:[%s4 + $0xbc] sm:$0xf]
        %v1308 = vunpack.c.l.b16 %v1244
        %v1309 = vunpack.c.h.b16 %v1244
        %v1310 = vunpack.c.l.b16 %v1245
        %v1311 = vunpack.c.l.b16 %v1246
        %v1312 = vunpack.c.h.b16 %v1246
        %v1313 = vunpack.c.l.b16 %v1247
        %v1314 = vunpack.c.l.b16 %v1248
        %v1315 = vunpack.c.h.b16 %v1248
        %v1316 = vunpack.c.l.b16 %v1249
        %v1317 = vunpack.c.l.b16 %v1250
        %v1318 = vunpack.c.h.b16 %v1250
        %v1319 = vunpack.c.l.b16 %v1251
        %v1320 = vunpack.c.l.b16 %v1252
        %v1321 = vunpack.c.h.b16 %v1252
        %v1322 = vunpack.c.l.b16 %v1253
        %v1323 = vunpack.c.l.b16 %v1254
        %v1324 = vunpack.c.h.b16 %v1254
        %v1325 = vunpack.c.l.b16 %v1255
        %v1326 = vunpack.c.l.b16 %v1256
        %v1327 = vunpack.c.h.b16 %v1256
        %v1328 = vunpack.c.l.b16 %v1257
        %v1329 = vunpack.c.l.b16 %v1258
        %v1330 = vunpack.c.h.b16 %v1258
        %v1331 = vunpack.c.l.b16 %v1259
        %v1332 = vunpack.c.l.b16 %v1260
        %v1333 = vunpack.c.h.b16 %v1260
        %v1334 = vunpack.c.l.b16 %v1261
        %v1335 = vunpack.c.l.b16 %v1262
        %v1336 = vunpack.c.h.b16 %v1262
        %v1337 = vunpack.c.l.b16 %v1263
        %v1338 = vunpack.c.l.b16 %v1264
        %v1339 = vunpack.c.h.b16 %v1264
        %v1340 = vunpack.c.l.b16 %v1265
        %v1341 = vunpack.c.l.b16 %v1266
        %v1342 = vunpack.c.h.b16 %v1266
        %v1343 = vunpack.c.l.b16 %v1267
        %v1344 = vunpack.c.l.b16 %v1268
        %v1345 = vunpack.c.h.b16 %v1268
        %v1346 = vunpack.c.l.b16 %v1269
        %v1347 = vunpack.c.l.b16 %v1270
        %v1348 = vunpack.c.h.b16 %v1270
        %v1349 = vunpack.c.l.b16 %v1271
        %v1350 = vunpack.c.l.b16 %v1272
        %v1351 = vunpack.c.h.b16 %v1272
        %v1352 = vunpack.c.l.b16 %v1273
        %v1353 = vunpack.c.l.b16 %v1274
        %v1354 = vunpack.c.h.b16 %v1274
        %v1355 = vunpack.c.l.b16 %v1275
        %v1356 = vpack.c.b16 %v1311, %v1308
        %v1357 = vpack.c.b16 %v1312, %v1309
        %v1358 = vpack.c.b16 %v1313, %v1310
        %v1359 = vpack.c.b16 %v1317, %v1314
        %v1360 = vpack.c.b16 %v1318, %v1315
        %v1361 = vpack.c.b16 %v1319, %v1316
        %v1362 = vpack.c.b16 %v1323, %v1320
        %v1363 = vpack.c.b16 %v1324, %v1321
        %v1364 = vpack.c.b16 %v1325, %v1322
        %v1365 = vpack.c.b16 %v1329, %v1326
        %v1366 = vpack.c.b16 %v1330, %v1327
        %v1367 = vpack.c.b16 %v1331, %v1328
        %v1368 = vpack.c.b16 %v1335, %v1332
        %v1369 = vpack.c.b16 %v1336, %v1333
        %v1370 = vpack.c.b16 %v1337, %v1334
        %v1371 = vpack.c.b16 %v1341, %v1338
        %v1372 = vpack.c.b16 %v1342, %v1339
        %v1373 = vpack.c.b16 %v1343, %v1340
        %v1374 = vpack.c.b16 %v1347, %v1344
        %v1375 = vpack.c.b16 %v1348, %v1345
        %v1376 = vpack.c.b16 %v1349, %v1346
        %v1377 = vpack.c.b16 %v1353, %v1350
        %v1378 = vpack.c.b16 %v1354, %v1351
        %v1379 = vpack.c.b16 %v1355, %v1352
        %1404 = vmatprep.subr.bf16.mxu0 %v1378
        %1405 = vmatpush1.bf16.msra.mxu0 %v1377
        %1406 = vmatprep.subr.bf16.mxu0 %v1375
        %1407 = vmatpush1.bf16.msra.mxu0 %v1374
        %1408 = vmatprep.subr.bf16.mxu0 %v1372
        %1409 = vmatpush1.bf16.msra.mxu0 %v1371
        %1410 = vmatprep.subr.bf16.mxu0 %v1369
        %1411 = vmatpush1.bf16.msra.mxu0 %v1368
        %1412 = vmatprep.subr.bf16.mxu0 %v1366
        %1413 = vmatpush1.bf16.msra.mxu0 %v1365
        %1414 = vmatprep.subr.bf16.mxu0 %v1363
        %1415 = vmatpush1.bf16.msra.mxu0 %v1362
        %1416 = vmatprep.subr.bf16.mxu0 %v1360
        %1417 = vmatpush1.bf16.msra.mxu0 %v1359
        %1418 = vmatprep.subr.bf16.mxu0 %v1357
        %1419 = vmatpush1.bf16.msra.mxu0 %v1356
        %1420 = vmatprep.subr.bf16.mxu0 0
        %1421 = vmatpush2.bf16.msra.mxu0 0
        %1422 = vmatprep.subr.bf16.mxu0 0
        %1423 = vmatpush2.bf16.msra.mxu0 0
        %1424 = vmatprep.subr.bf16.mxu0 0
        %1425 = vmatpush2.bf16.msra.mxu0 0
        %1426 = vmatprep.subr.bf16.mxu0 0
        %1427 = vmatpush2.bf16.msra.mxu0 0
        %1428 = vmatprep.subr.bf16.mxu0 0
        %1429 = vmatpush2.bf16.msra.mxu0 0
        %1430 = vmatprep.subr.bf16.mxu0 0
        %1431 = vmatpush2.bf16.msra.mxu0 0
        %1432 = vmatprep.subr.bf16.mxu0 0
        %1433 = vmatpush2.bf16.msra.mxu0 0
        %1434 = vmatprep.subr.bf16.mxu0 0
        %1435 = vmatpush2.bf16.msra.mxu0 0
        %1436 = vmatprep.mubr.bf16.mxu0 0
        %1437 = vmatmul.mubr.bf16.gmra.mxu0 %v1236
        %v1438 = vpop.f32.mrf.mxu0
        %v1439 = vadd.f32 0.0, %v1438
        %v1440 = vpop.f32.mrf.mxu0
        %v1441 = vadd.f32 0.0, %v1440
        %v1442 = vpop.f32.mrf.mxu0
        %v1443 = vadd.f32 0.0, %v1442
        %v1444 = vpop.f32.mrf.mxu0
        %v1445 = vadd.f32 0.0, %v1444
        %1446 = vmatprep.mubr.bf16.mxu0 0
        %1447 = vmatmul.mubr.bf16.gmra.mxu0 %v1237
        %v1448 = vpop.f32.mrf.mxu0
        %v1449 = vadd.f32 0.0, %v1448
        %v1450 = vpop.f32.mrf.mxu0
        %v1451 = vadd.f32 0.0, %v1450
        %v1452 = vpop.f32.mrf.mxu0
        %v1453 = vadd.f32 0.0, %v1452
        %v1454 = vpop.f32.mrf.mxu0
        %v1455 = vadd.f32 0.0, %v1454
        %1456 = vmatprep.mubr.bf16.mxu0 0
        %1457 = vmatmul.mubr.bf16.gmra.mxu0 %v1238
        %v1458 = vpop.f32.mrf.mxu0
        %v1459 = vadd.f32 0.0, %v1458
        %v1460 = vpop.f32.mrf.mxu0
        %v1461 = vadd.f32 0.0, %v1460
        %v1462 = vpop.f32.mrf.mxu0
        %v1463 = vadd.f32 0.0, %v1462
        %v1464 = vpop.f32.mrf.mxu0
        %v1465 = vadd.f32 0.0, %v1464
        %1466 = vmatprep.mubr.bf16.mxu0 0
        %1467 = vmatmul.mubr.bf16.gmra.mxu0 %v1239
        %v1468 = vpop.f32.mrf.mxu0
        %v1469 = vadd.f32 0.0, %v1468
        %v1470 = vpop.f32.mrf.mxu0
        %v1471 = vadd.f32 0.0, %v1470
        %v1472 = vpop.f32.mrf.mxu0
        %v1473 = vadd.f32 0.0, %v1472
        %v1474 = vpop.f32.mrf.mxu0
        %v1475 = vadd.f32 0.0, %v1474
        %1476 = vmatprep.mubr.bf16.mxu0 0
        %1477 = vmatmul.mubr.bf16.gmra.mxu0 %v1240
        %v1478 = vpop.f32.mrf.mxu0
        %v1479 = vadd.f32 0.0, %v1478
        %v1480 = vpop.f32.mrf.mxu0
        %v1481 = vadd.f32 0.0, %v1480
        %v1482 = vpop.f32.mrf.mxu0
        %v1483 = vadd.f32 0.0, %v1482
        %v1484 = vpop.f32.mrf.mxu0
        %v1485 = vadd.f32 0.0, %v1484
        %1486 = vmatprep.mubr.bf16.mxu0 0
        %1487 = vmatmul.mubr.bf16.gmra.mxu0 %v1241
        %v1488 = vpop.f32.mrf.mxu0
        %v1489 = vadd.f32 0.0, %v1488
        %v1490 = vpop.f32.mrf.mxu0
        %v1491 = vadd.f32 0.0, %v1490
        %v1492 = vpop.f32.mrf.mxu0
        %v1493 = vadd.f32 0.0, %v1492
        %v1494 = vpop.f32.mrf.mxu0
        %v1495 = vadd.f32 0.0, %v1494
        %1496 = vmatprep.mubr.bf16.mxu0 0
        %1497 = vmatmul.mubr.bf16.gmra.mxu0 %v1242
        %v1498 = vpop.f32.mrf.mxu0
        %v1499 = vadd.f32 0.0, %v1498
        %v1500 = vpop.f32.mrf.mxu0
        %v1501 = vadd.f32 0.0, %v1500
        %v1502 = vpop.f32.mrf.mxu0
        %v1503 = vadd.f32 0.0, %v1502
        %v1504 = vpop.f32.mrf.mxu0
        %v1505 = vadd.f32 0.0, %v1504
        %1506 = vmatprep.mubr.bf16.mxu0 0
        %1507 = vmatmul.mubr.bf16.gmra.mxu0 %v1243
        %v1508 = vpop.f32.mrf.mxu0
        %v1509 = vadd.f32 0.0, %v1508
        %v1510 = vpop.f32.mrf.mxu0
        %v1511 = vadd.f32 0.0, %v1510
        %v1512 = vpop.f32.mrf.mxu0
        %v1513 = vadd.f32 0.0, %v1512
        %v1514 = vpop.f32.mrf.mxu0
        %v1515 = vadd.f32 0.0, %v1514
        %1516 = vdwg.mxu0
        %1517 = vmatprep.subr.bf16.mxu0 0
        %1518 = vmatpush1.bf16.msra.mxu0 %v1379
        %1519 = vmatprep.subr.bf16.mxu0 0
        %1520 = vmatpush1.bf16.msra.mxu0 %v1376
        %1521 = vmatprep.subr.bf16.mxu0 0
        %1522 = vmatpush1.bf16.msra.mxu0 %v1373
        %1523 = vmatprep.subr.bf16.mxu0 0
        %1524 = vmatpush1.bf16.msra.mxu0 %v1370
        %1525 = vmatprep.subr.bf16.mxu0 0
        %1526 = vmatpush1.bf16.msra.mxu0 %v1367
        %1527 = vmatprep.subr.bf16.mxu0 0
        %1528 = vmatpush1.bf16.msra.mxu0 %v1364
        %1529 = vmatprep.subr.bf16.mxu0 0
        %1530 = vmatpush1.bf16.msra.mxu0 %v1361
        %1531 = vmatprep.subr.bf16.mxu0 0
        %1532 = vmatpush1.bf16.msra.mxu0 %v1358
        %1533 = vmatprep.subr.bf16.mxu0 0
        %1534 = vmatpush2.bf16.msra.mxu0 0
        %1535 = vmatprep.subr.bf16.mxu0 0
        %1536 = vmatpush2.bf16.msra.mxu0 0
        %1537 = vmatprep.subr.bf16.mxu0 0
        %1538 = vmatpush2.bf16.msra.mxu0 0
        %1539 = vmatprep.subr.bf16.mxu0 0
        %1540 = vmatpush2.bf16.msra.mxu0 0
        %1541 = vmatprep.subr.bf16.mxu0 0
        %1542 = vmatpush2.bf16.msra.mxu0 0
        %1543 = vmatprep.subr.bf16.mxu0 0
        %1544 = vmatpush2.bf16.msra.mxu0 0
        %1545 = vmatprep.subr.bf16.mxu0 0
        %1546 = vmatpush2.bf16.msra.mxu0 0
        %1547 = vmatprep.subr.bf16.mxu0 0
        %1548 = vmatpush2.bf16.msra.mxu0 0
        %1549 = vmatprep.mubr.bf16.mxu0 0
        %1550 = vmatmul.mubr.bf16.gmra.mxu0 %v1236
        %v1551 = vpop.f32.mrf.mxu0
        %v1552 = vadd.f32 0.0, %v1551
        %v1553 = vpop.f32.mrf.mxu0
        %v1554 = vpop.f32.mrf.mxu0
        %v1555 = vadd.f32 0.0, %v1554
        %v1556 = vpop.f32.mrf.mxu0
        %1557 = vmatprep.mubr.bf16.mxu0 0
        %1558 = vmatmul.mubr.bf16.gmra.mxu0 %v1237
        %v1559 = vpop.f32.mrf.mxu0
        %v1560 = vadd.f32 0.0, %v1559
        %v1561 = vpop.f32.mrf.mxu0
        %v1562 = vpop.f32.mrf.mxu0
        %v1563 = vadd.f32 0.0, %v1562
        %v1564 = vpop.f32.mrf.mxu0
        %1565 = vmatprep.mubr.bf16.mxu0 0
        %1566 = vmatmul.mubr.bf16.gmra.mxu0 %v1238
        %v1567 = vpop.f32.mrf.mxu0
        %v1568 = vadd.f32 0.0, %v1567
        %v1569 = vpop.f32.mrf.mxu0
        %v1570 = vpop.f32.mrf.mxu0
        %v1571 = vadd.f32 0.0, %v1570
        %v1572 = vpop.f32.mrf.mxu0
        %1573 = vmatprep.mubr.bf16.mxu0 0
        %1574 = vmatmul.mubr.bf16.gmra.mxu0 %v1239
        %v1575 = vpop.f32.mrf.mxu0
        %v1576 = vadd.f32 0.0, %v1575
        %v1577 = vpop.f32.mrf.mxu0
        %v1578 = vpop.f32.mrf.mxu0
        %v1579 = vadd.f32 0.0, %v1578
        %v1580 = vpop.f32.mrf.mxu0
        %1581 = vmatprep.mubr.bf16.mxu0 0
        %1582 = vmatmul.mubr.bf16.gmra.mxu0 %v1240
        %v1583 = vpop.f32.mrf.mxu0
        %v1584 = vadd.f32 0.0, %v1583
        %v1585 = vpop.f32.mrf.mxu0
        %v1586 = vpop.f32.mrf.mxu0
        %v1587 = vadd.f32 0.0, %v1586
        %v1588 = vpop.f32.mrf.mxu0
        %1589 = vmatprep.mubr.bf16.mxu0 0
        %1590 = vmatmul.mubr.bf16.gmra.mxu0 %v1241
        %v1591 = vpop.f32.mrf.mxu0
        %v1592 = vadd.f32 0.0, %v1591
        %v1593 = vpop.f32.mrf.mxu0
        %v1594 = vpop.f32.mrf.mxu0
        %v1595 = vadd.f32 0.0, %v1594
        %v1596 = vpop.f32.mrf.mxu0
        %1597 = vmatprep.mubr.bf16.mxu0 0
        %1598 = vmatmul.mubr.bf16.gmra.mxu0 %v1242
        %v1599 = vpop.f32.mrf.mxu0
        %v1600 = vadd.f32 0.0, %v1599
        %v1601 = vpop.f32.mrf.mxu0
        %v1602 = vpop.f32.mrf.mxu0
        %v1603 = vadd.f32 0.0, %v1602
        %v1604 = vpop.f32.mrf.mxu0
        %1605 = vmatprep.mubr.bf16.mxu0 0
        %1606 = vmatmul.mubr.bf16.gmra.mxu0 %v1243
        %v1607 = vpop.f32.mrf.mxu0
        %v1608 = vadd.f32 0.0, %v1607
        %v1609 = vpop.f32.mrf.mxu0
        %v1610 = vpop.f32.mrf.mxu0
        %v1611 = vadd.f32 0.0, %v1610
        %v1612 = vpop.f32.mrf.mxu0
        %1613 = vdwg.mxu0
        %v1614 = vpack.c.bf16 %v1443, %v1439
        %v1615 = vpack.c.bf16 %v1445, %v1441
        %v1616 = vpack.c.bf16 %v1555, %v1552
        %v1617 = vpack.c.bf16 %v1453, %v1449
        %v1618 = vpack.c.bf16 %v1455, %v1451
        %v1619 = vpack.c.bf16 %v1563, %v1560
        %v1620 = vpack.c.bf16 %v1463, %v1459
        %v1621 = vpack.c.bf16 %v1465, %v1461
        %v1622 = vpack.c.bf16 %v1571, %v1568
        %v1623 = vpack.c.bf16 %v1473, %v1469
        %v1624 = vpack.c.bf16 %v1475, %v1471
        %v1625 = vpack.c.bf16 %v1579, %v1576
        %v1626 = vpack.c.bf16 %v1483, %v1479
        %v1627 = vpack.c.bf16 %v1485, %v1481
        %v1628 = vpack.c.bf16 %v1587, %v1584
        %v1629 = vpack.c.bf16 %v1493, %v1489
        %v1630 = vpack.c.bf16 %v1495, %v1491
        %v1631 = vpack.c.bf16 %v1595, %v1592
        %v1632 = vpack.c.bf16 %v1503, %v1499
        %v1633 = vpack.c.bf16 %v1505, %v1501
        %v1634 = vpack.c.bf16 %v1603, %v1600
        %v1635 = vpack.c.bf16 %v1513, %v1509
        %v1636 = vpack.c.bf16 %v1515, %v1511
        %v1637 = vpack.c.bf16 %v1611, %v1608
        %v1638 = vld [vmem:[%s5] sm:$0xf]
        %v1639 = vld [vmem:[%s5 + $0x4] sm:$0xf]
        %v1640 = vld [vmem:[%s5 + $0x8] sm:$0xf]
        %v1641 = vld [vmem:[%s5 + $0xc] sm:$0xf]
        %v1642 = vld [vmem:[%s5 + $0x10] sm:$0xf]
        %v1643 = vld [vmem:[%s5 + $0x14] sm:$0xf]
        %v1644 = vld [vmem:[%s5 + $0x18] sm:$0xf]
        %v1645 = vld [vmem:[%s5 + $0x1c] sm:$0xf]
        %s1646 = scalar_lea.vmem %s5, 32
        %v1647 = vld [vmem:[%s1646] sm:$0xf]
        %v1648 = vld [vmem:[%s1646 + $0x4] sm:$0xf]
        %v1649 = vld [vmem:[%s1646 + $0x8] sm:$0xf]
        %v1650 = vld [vmem:[%s1646 + $0xc] sm:$0xf]
        %v1651 = vld [vmem:[%s1646 + $0x10] sm:$0xf]
        %v1652 = vld [vmem:[%s1646 + $0x14] sm:$0xf]
        %v1653 = vld [vmem:[%s1646 + $0x18] sm:$0xf]
        %v1654 = vld [vmem:[%s1646 + $0x1c] sm:$0xf]
        %v1663 = vunpack.c.l.b16 %v1647
        %v1664 = vunpack.c.l.b16 %v1648
        %v1665 = vunpack.c.l.b16 %v1649
        %v1666 = vunpack.c.l.b16 %v1650
        %v1667 = vunpack.c.l.b16 %v1651
        %v1668 = vunpack.c.l.b16 %v1652
        %v1669 = vunpack.c.l.b16 %v1653
        %v1670 = vunpack.c.l.b16 %v1654
        %v1671 = vpack.c.b16 %v1664, %v1663
        %v1672 = vpack.c.b16 %v1666, %v1665
        %v1673 = vpack.c.b16 %v1668, %v1667
        %v1674 = vpack.c.b16 %v1670, %v1669
        %1679 = vmatprep.subr.bf16.mxu0 0
        %1680 = vmatpush1.bf16.msra.mxu0 %v1636
        %1681 = vmatprep.subr.bf16.mxu0 0
        %1682 = vmatpush1.bf16.msra.mxu0 %v1633
        %1683 = vmatprep.subr.bf16.mxu0 0
        %1684 = vmatpush1.bf16.msra.mxu0 %v1630
        %1685 = vmatprep.subr.bf16.mxu0 0
        %1686 = vmatpush1.bf16.msra.mxu0 %v1627
        %1687 = vmatprep.subr.bf16.mxu0 0
        %1688 = vmatpush1.bf16.msra.mxu0 %v1624
        %1689 = vmatprep.subr.bf16.mxu0 0
        %1690 = vmatpush1.bf16.msra.mxu0 %v1621
        %1691 = vmatprep.subr.bf16.mxu0 0
        %1692 = vmatpush1.bf16.msra.mxu0 %v1618
        %1693 = vmatprep.subr.bf16.mxu0 0
        %1694 = vmatpush1.bf16.msra.mxu0 %v1615
        %1695 = vmatprep.subr.bf16.mxu0 0
        %1696 = vmatpush2.bf16.msra.mxu0 0
        %1697 = vmatprep.subr.bf16.mxu0 0
        %1698 = vmatpush2.bf16.msra.mxu0 0
        %1699 = vmatprep.subr.bf16.mxu0 0
        %1700 = vmatpush2.bf16.msra.mxu0 0
        %1701 = vmatprep.subr.bf16.mxu0 0
        %1702 = vmatpush2.bf16.msra.mxu0 0
        %1703 = vmatprep.subr.bf16.mxu0 0
        %1704 = vmatpush2.bf16.msra.mxu0 0
        %1705 = vmatprep.subr.bf16.mxu0 0
        %1706 = vmatpush2.bf16.msra.mxu0 0
        %1707 = vmatprep.subr.bf16.mxu0 0
        %1708 = vmatpush2.bf16.msra.mxu0 0
        %1709 = vmatprep.subr.bf16.mxu0 0
        %1710 = vmatpush2.bf16.msra.mxu0 0
        %1711 = vmatprep.mubr.bf16.mxu0 0
        %1712 = vmatmul.mubr.bf16.gmra.mxu0 %v1671
        %v1713 = vpop.f32.mrf.mxu0
        %v1714 = vadd.f32 0.0, %v1713
        %v1715 = vpop.f32.mrf.mxu0
        %v1716 = vpop.f32.mrf.mxu0
        %v1717 = vadd.f32 0.0, %v1716
        %v1718 = vpop.f32.mrf.mxu0
        %1719 = vmatprep.mubr.bf16.mxu0 0
        %1720 = vmatmul.mubr.bf16.gmra.mxu0 %v1672
        %v1721 = vpop.f32.mrf.mxu0
        %v1722 = vadd.f32 0.0, %v1721
        %v1723 = vpop.f32.mrf.mxu0
        %v1724 = vpop.f32.mrf.mxu0
        %v1725 = vadd.f32 0.0, %v1724
        %v1726 = vpop.f32.mrf.mxu0
        %1727 = vmatprep.mubr.bf16.mxu0 0
        %1728 = vmatmul.mubr.bf16.gmra.mxu0 %v1673
        %v1729 = vpop.f32.mrf.mxu0
        %v1730 = vadd.f32 0.0, %v1729
        %v1731 = vpop.f32.mrf.mxu0
        %v1732 = vpop.f32.mrf.mxu0
        %v1733 = vadd.f32 0.0, %v1732
        %v1734 = vpop.f32.mrf.mxu0
        %1735 = vmatprep.mubr.bf16.mxu0 0
        %1736 = vmatmul.mubr.bf16.gmra.mxu0 %v1674
        %v1737 = vpop.f32.mrf.mxu0
        %v1738 = vadd.f32 0.0, %v1737
        %v1739 = vpop.f32.mrf.mxu0
        %v1740 = vpop.f32.mrf.mxu0
        %v1741 = vadd.f32 0.0, %v1740
        %v1742 = vpop.f32.mrf.mxu0
        %1743 = vdwg.mxu0
        %v1752 = vunpack.c.l.b16 %v1638
        %v1753 = vunpack.c.l.b16 %v1639
        %v1754 = vunpack.c.l.b16 %v1640
        %v1755 = vunpack.c.l.b16 %v1641
        %v1756 = vunpack.c.l.b16 %v1642
        %v1757 = vunpack.c.l.b16 %v1643
        %v1758 = vunpack.c.l.b16 %v1644
        %v1759 = vunpack.c.l.b16 %v1645
        %v1760 = vpack.c.b16 %v1753, %v1752
        %v1761 = vpack.c.b16 %v1755, %v1754
        %v1762 = vpack.c.b16 %v1757, %v1756
        %v1763 = vpack.c.b16 %v1759, %v1758
        %1768 = vmatprep.subr.bf16.mxu0 0
        %1769 = vmatpush1.bf16.msra.mxu0 %v1635
        %1770 = vmatprep.subr.bf16.mxu0 0
        %1771 = vmatpush1.bf16.msra.mxu0 %v1632
        %1772 = vmatprep.subr.bf16.mxu0 0
        %1773 = vmatpush1.bf16.msra.mxu0 %v1629
        %1774 = vmatprep.subr.bf16.mxu0 0
        %1775 = vmatpush1.bf16.msra.mxu0 %v1626
        %1776 = vmatprep.subr.bf16.mxu0 0
        %1777 = vmatpush1.bf16.msra.mxu0 %v1623
        %1778 = vmatprep.subr.bf16.mxu0 0
        %1779 = vmatpush1.bf16.msra.mxu0 %v1620
        %1780 = vmatprep.subr.bf16.mxu0 0
        %1781 = vmatpush1.bf16.msra.mxu0 %v1617
        %1782 = vmatprep.subr.bf16.mxu0 0
        %1783 = vmatpush1.bf16.msra.mxu0 %v1614
        %1784 = vmatprep.subr.bf16.mxu0 0
        %1785 = vmatpush2.bf16.msra.mxu0 0
        %1786 = vmatprep.subr.bf16.mxu0 0
        %1787 = vmatpush2.bf16.msra.mxu0 0
        %1788 = vmatprep.subr.bf16.mxu0 0
        %1789 = vmatpush2.bf16.msra.mxu0 0
        %1790 = vmatprep.subr.bf16.mxu0 0
        %1791 = vmatpush2.bf16.msra.mxu0 0
        %1792 = vmatprep.subr.bf16.mxu0 0
        %1793 = vmatpush2.bf16.msra.mxu0 0
        %1794 = vmatprep.subr.bf16.mxu0 0
        %1795 = vmatpush2.bf16.msra.mxu0 0
        %1796 = vmatprep.subr.bf16.mxu0 0
        %1797 = vmatpush2.bf16.msra.mxu0 0
        %1798 = vmatprep.subr.bf16.mxu0 0
        %1799 = vmatpush2.bf16.msra.mxu0 0
        %1800 = vmatprep.mubr.bf16.mxu0 0
        %1801 = vmatmul.mubr.bf16.gmra.mxu0 %v1760
        %v1802 = vpop.f32.mrf.mxu0
        %v1803 = vadd.f32 %v1714, %v1802
        %v1804 = vpop.f32.mrf.mxu0
        %v1805 = vpop.f32.mrf.mxu0
        %v1806 = vadd.f32 %v1717, %v1805
        %v1807 = vpop.f32.mrf.mxu0
        %1808 = vmatprep.mubr.bf16.mxu0 0
        %1809 = vmatmul.mubr.bf16.gmra.mxu0 %v1761
        %v1810 = vpop.f32.mrf.mxu0
        %v1811 = vadd.f32 %v1722, %v1810
        %v1812 = vpop.f32.mrf.mxu0
        %v1813 = vpop.f32.mrf.mxu0
        %v1814 = vadd.f32 %v1725, %v1813
        %v1815 = vpop.f32.mrf.mxu0
        %1816 = vmatprep.mubr.bf16.mxu0 0
        %1817 = vmatmul.mubr.bf16.gmra.mxu0 %v1762
        %v1818 = vpop.f32.mrf.mxu0
        %v1819 = vadd.f32 %v1730, %v1818
        %v1820 = vpop.f32.mrf.mxu0
        %v1821 = vpop.f32.mrf.mxu0
        %v1822 = vadd.f32 %v1733, %v1821
        %v1823 = vpop.f32.mrf.mxu0
        %1824 = vmatprep.mubr.bf16.mxu0 0
        %1825 = vmatmul.mubr.bf16.gmra.mxu0 %v1763
        %v1826 = vpop.f32.mrf.mxu0
        %v1827 = vadd.f32 %v1738, %v1826
        %v1828 = vpop.f32.mrf.mxu0
        %v1829 = vpop.f32.mrf.mxu0
        %v1830 = vadd.f32 %v1741, %v1829
        %v1831 = vpop.f32.mrf.mxu0
        %1832 = vdwg.mxu0
        %s1833 = scalar_lea.vmem %s5, 64
        %v1834 = vld [vmem:[%s1833] sm:$0xf]
        %v1835 = vld [vmem:[%s1833 + $0x4] sm:$0xf]
        %v1836 = vld [vmem:[%s1833 + $0x8] sm:$0xf]
        %v1837 = vld [vmem:[%s1833 + $0xc] sm:$0xf]
        %v1838 = vld [vmem:[%s1833 + $0x10] sm:$0xf]
        %v1839 = vld [vmem:[%s1833 + $0x14] sm:$0xf]
        %v1840 = vld [vmem:[%s1833 + $0x18] sm:$0xf]
        %v1841 = vld [vmem:[%s1833 + $0x1c] sm:$0xf]
        %v1850 = vunpack.c.l.b16 %v1834
        %v1851 = vunpack.c.l.b16 %v1835
        %v1852 = vunpack.c.l.b16 %v1836
        %v1853 = vunpack.c.l.b16 %v1837
        %v1854 = vunpack.c.l.b16 %v1838
        %v1855 = vunpack.c.l.b16 %v1839
        %v1856 = vunpack.c.l.b16 %v1840
        %v1857 = vunpack.c.l.b16 %v1841
        %v1858 = vpack.c.b16 %v1851, %v1850
        %v1859 = vpack.c.b16 %v1853, %v1852
        %v1860 = vpack.c.b16 %v1855, %v1854
        %v1861 = vpack.c.b16 %v1857, %v1856
        %1866 = vmatprep.subr.bf16.mxu0 0
        %1867 = vmatpush1.bf16.msra.mxu0 %v1637
        %1868 = vmatprep.subr.bf16.mxu0 0
        %1869 = vmatpush1.bf16.msra.mxu0 %v1634
        %1870 = vmatprep.subr.bf16.mxu0 0
        %1871 = vmatpush1.bf16.msra.mxu0 %v1631
        %1872 = vmatprep.subr.bf16.mxu0 0
        %1873 = vmatpush1.bf16.msra.mxu0 %v1628
        %1874 = vmatprep.subr.bf16.mxu0 0
        %1875 = vmatpush1.bf16.msra.mxu0 %v1625
        %1876 = vmatprep.subr.bf16.mxu0 0
        %1877 = vmatpush1.bf16.msra.mxu0 %v1622
        %1878 = vmatprep.subr.bf16.mxu0 0
        %1879 = vmatpush1.bf16.msra.mxu0 %v1619
        %1880 = vmatprep.subr.bf16.mxu0 0
        %1881 = vmatpush1.bf16.msra.mxu0 %v1616
        %1882 = vmatprep.subr.bf16.mxu0 0
        %1883 = vmatpush2.bf16.msra.mxu0 0
        %1884 = vmatprep.subr.bf16.mxu0 0
        %1885 = vmatpush2.bf16.msra.mxu0 0
        %1886 = vmatprep.subr.bf16.mxu0 0
        %1887 = vmatpush2.bf16.msra.mxu0 0
        %1888 = vmatprep.subr.bf16.mxu0 0
        %1889 = vmatpush2.bf16.msra.mxu0 0
        %1890 = vmatprep.subr.bf16.mxu0 0
        %1891 = vmatpush2.bf16.msra.mxu0 0
        %1892 = vmatprep.subr.bf16.mxu0 0
        %1893 = vmatpush2.bf16.msra.mxu0 0
        %1894 = vmatprep.subr.bf16.mxu0 0
        %1895 = vmatpush2.bf16.msra.mxu0 0
        %1896 = vmatprep.subr.bf16.mxu0 0
        %1897 = vmatpush2.bf16.msra.mxu0 0
        %1898 = vmatprep.mubr.bf16.mxu0 0
        %1899 = vmatmul.mubr.bf16.gmra.mxu0 %v1858
        %v1900 = vpop.f32.mrf.mxu0
        %v1901 = vadd.f32 0.0, %v1900
        %v1902 = vpop.f32.mrf.mxu0
        %v1903 = vpop.f32.mrf.mxu0
        %v1904 = vadd.f32 0.0, %v1903
        %v1905 = vpop.f32.mrf.mxu0
        %1906 = vmatprep.mubr.bf16.mxu0 0
        %1907 = vmatmul.mubr.bf16.gmra.mxu0 %v1859
        %v1908 = vpop.f32.mrf.mxu0
        %v1909 = vadd.f32 0.0, %v1908
        %v1910 = vpop.f32.mrf.mxu0
        %v1911 = vpop.f32.mrf.mxu0
        %v1912 = vadd.f32 0.0, %v1911
        %v1913 = vpop.f32.mrf.mxu0
        %1914 = vmatprep.mubr.bf16.mxu0 0
        %1915 = vmatmul.mubr.bf16.gmra.mxu0 %v1860
        %v1916 = vpop.f32.mrf.mxu0
        %v1917 = vadd.f32 0.0, %v1916
        %v1918 = vpop.f32.mrf.mxu0
        %v1919 = vpop.f32.mrf.mxu0
        %v1920 = vadd.f32 0.0, %v1919
        %v1921 = vpop.f32.mrf.mxu0
        %1922 = vmatprep.mubr.bf16.mxu0 0
        %1923 = vmatmul.mubr.bf16.gmra.mxu0 %v1861
        %v1924 = vpop.f32.mrf.mxu0
        %v1925 = vadd.f32 0.0, %v1924
        %v1926 = vpop.f32.mrf.mxu0
        %v1927 = vpop.f32.mrf.mxu0
        %v1928 = vadd.f32 0.0, %v1927
        %v1929 = vpop.f32.mrf.mxu0
        %1930 = vdwg.mxu0
        %v1931 = vadd.f32 %v1803, %v1901
        %v1932 = vadd.f32 %v1806, %v1904
        %v1933 = vadd.f32 %v1811, %v1909
        %v1934 = vadd.f32 %v1814, %v1912
        %v1935 = vadd.f32 %v1819, %v1917
        %v1936 = vadd.f32 %v1822, %v1920
        %v1937 = vadd.f32 %v1827, %v1925
        %v1938 = vadd.f32 %v1830, %v1928
        %v1939 = vld [vmem:[%s6] sm:$0x1]
        %v1941 = vlaneseq
        %v1942 = vshrl.u32 %v1941, 7
        %v1943 = vsub.s32 0, %v1942
        %v1944 = vrot.slane %v1939, %v1943
        %v1946 = vadd.f32 %v1931, %v1944
        %v1947 = vadd.f32 %v1932, %v1944
        %v1948 = vadd.f32 %v1933, %v1944
        %v1949 = vadd.f32 %v1934, %v1944
        %v1950 = vadd.f32 %v1935, %v1944
        %v1951 = vadd.f32 %v1936, %v1944
        %v1952 = vadd.f32 %v1937, %v1944
        %v1953 = vadd.f32 %v1938, %v1944
        %v1954 = vmax.f32 %v1946, 0.0
        %v1955 = vmax.f32 %v1947, 0.0
        %v1956 = vmax.f32 %v1948, 0.0
        %v1957 = vmax.f32 %v1949, 0.0
        %v1958 = vmax.f32 %v1950, 0.0
        %v1959 = vmax.f32 %v1951, 0.0
        %v1960 = vmax.f32 %v1952, 0.0
        %v1961 = vmax.f32 %v1953, 0.0
        %v1962 = vpack.c.bf16 %v1955, %v1954
        %v1963 = vpack.c.bf16 %v1957, %v1956
        %v1964 = vpack.c.bf16 %v1959, %v1958
        %v1965 = vpack.c.bf16 %v1961, %v1960
        %v1966 = vld [vmem:[%s7] sm:$0xff]
        %v1967 = vld [vmem:[%s7 + $0x8] sm:$0xff]
        %v1968 = vld [vmem:[%s7 + $0x10] sm:$0xff]
        %v1969 = vld [vmem:[%s7 + $0x18] sm:$0xff]
        %v1970 = vld [vmem:[%s7 + $0x20] sm:$0xff]
        %v1971 = vld [vmem:[%s7 + $0x28] sm:$0xff]
        %v1972 = vld [vmem:[%s7 + $0x30] sm:$0xff]
        %v1973 = vld [vmem:[%s7 + $0x38] sm:$0xff]
        %v1974 = vld [vmem:[%s7 + $0x40] sm:$0xff]
        %v1975 = vld [vmem:[%s7 + $0x48] sm:$0xff]
        %v1976 = vld [vmem:[%s7 + $0x50] sm:$0xff]
        %v1977 = vld [vmem:[%s7 + $0x58] sm:$0xff]
        %v1978 = vld [vmem:[%s7 + $0x60] sm:$0xff]
        %v1979 = vld [vmem:[%s7 + $0x68] sm:$0xff]
        %v1980 = vld [vmem:[%s7 + $0x70] sm:$0xff]
        %v1981 = vld [vmem:[%s7 + $0x78] sm:$0xff]
        %v1982 = vld [vmem:[%s7 + $0x80] sm:$0xff]
        %v1983 = vld [vmem:[%s7 + $0x88] sm:$0xff]
        %v1984 = vld [vmem:[%s7 + $0x90] sm:$0xff]
        %v1985 = vld [vmem:[%s7 + $0x98] sm:$0xff]
        %v1986 = vld [vmem:[%s7 + $0xa0] sm:$0xff]
        %v1987 = vld [vmem:[%s7 + $0xa8] sm:$0xff]
        %v1988 = vld [vmem:[%s7 + $0xb0] sm:$0xff]
        %v1989 = vld [vmem:[%s7 + $0xb8] sm:$0xff]
        %v1990 = vld [vmem:[%s7 + $0xc0] sm:$0xff]
        %v1991 = vld [vmem:[%s7 + $0xc8] sm:$0xff]
        %v1992 = vld [vmem:[%s7 + $0xd0] sm:$0xff]
        %v1993 = vld [vmem:[%s7 + $0xd8] sm:$0xff]
        %v1994 = vld [vmem:[%s7 + $0xe0] sm:$0xff]
        %v1995 = vld [vmem:[%s7 + $0xe8] sm:$0xff]
        %v1996 = vld [vmem:[%s7 + $0xf0] sm:$0xff]
        %v1997 = vld [vmem:[%s7 + $0xf8] sm:$0xff]
        %v1998 = vld [vmem:[%s7 + $0x100] sm:$0xff]
        %v1999 = vld [vmem:[%s7 + $0x108] sm:$0xff]
        %v2000 = vld [vmem:[%s7 + $0x110] sm:$0xff]
        %v2001 = vld [vmem:[%s7 + $0x118] sm:$0xff]
        %v2002 = vld [vmem:[%s7 + $0x120] sm:$0xff]
        %v2003 = vld [vmem:[%s7 + $0x128] sm:$0xff]
        %v2004 = vld [vmem:[%s7 + $0x130] sm:$0xff]
        %v2005 = vld [vmem:[%s7 + $0x138] sm:$0xff]
        %v2006 = vld [vmem:[%s7 + $0x140] sm:$0xff]
        %v2007 = vld [vmem:[%s7 + $0x148] sm:$0xff]
        %v2008 = vld [vmem:[%s7 + $0x150] sm:$0xff]
        %v2009 = vld [vmem:[%s7 + $0x158] sm:$0xff]
        %v2010 = vld [vmem:[%s7 + $0x160] sm:$0xff]
        %v2011 = vld [vmem:[%s7 + $0x168] sm:$0xff]
        %v2012 = vld [vmem:[%s7 + $0x170] sm:$0xff]
        %v2013 = vld [vmem:[%s7 + $0x178] sm:$0xff]
        %v2062 = vunpack.c.l.b16 %v1966
        %v2063 = vunpack.c.h.b16 %v1966
        %v2064 = vunpack.c.l.b16 %v1967
        %v2065 = vunpack.c.h.b16 %v1967
        %v2066 = vunpack.c.l.b16 %v1968
        %v2067 = vunpack.c.h.b16 %v1968
        %v2068 = vunpack.c.l.b16 %v1969
        %v2069 = vunpack.c.h.b16 %v1969
        %v2070 = vunpack.c.l.b16 %v1970
        %v2071 = vunpack.c.h.b16 %v1970
        %v2072 = vunpack.c.l.b16 %v1971
        %v2073 = vunpack.c.h.b16 %v1971
        %v2074 = vunpack.c.l.b16 %v1972
        %v2075 = vunpack.c.h.b16 %v1972
        %v2076 = vunpack.c.l.b16 %v1973
        %v2077 = vunpack.c.h.b16 %v1973
        %v2078 = vunpack.c.l.b16 %v1974
        %v2079 = vunpack.c.h.b16 %v1974
        %v2080 = vunpack.c.l.b16 %v1975
        %v2081 = vunpack.c.h.b16 %v1975
        %v2082 = vunpack.c.l.b16 %v1976
        %v2083 = vunpack.c.h.b16 %v1976
        %v2084 = vunpack.c.l.b16 %v1977
        %v2085 = vunpack.c.h.b16 %v1977
        %v2086 = vunpack.c.l.b16 %v1978
        %v2087 = vunpack.c.h.b16 %v1978
        %v2088 = vunpack.c.l.b16 %v1979
        %v2089 = vunpack.c.h.b16 %v1979
        %v2090 = vunpack.c.l.b16 %v1980
        %v2091 = vunpack.c.h.b16 %v1980
        %v2092 = vunpack.c.l.b16 %v1981
        %v2093 = vunpack.c.h.b16 %v1981
        %v2094 = vunpack.c.l.b16 %v1982
        %v2095 = vunpack.c.h.b16 %v1982
        %v2096 = vunpack.c.l.b16 %v1983
        %v2097 = vunpack.c.h.b16 %v1983
        %v2098 = vunpack.c.l.b16 %v1984
        %v2099 = vunpack.c.h.b16 %v1984
        %v2100 = vunpack.c.l.b16 %v1985
        %v2101 = vunpack.c.h.b16 %v1985
        %v2102 = vunpack.c.l.b16 %v1986
        %v2103 = vunpack.c.h.b16 %v1986
        %v2104 = vunpack.c.l.b16 %v1987
        %v2105 = vunpack.c.h.b16 %v1987
        %v2106 = vunpack.c.l.b16 %v1988
        %v2107 = vunpack.c.h.b16 %v1988
        %v2108 = vunpack.c.l.b16 %v1989
        %v2109 = vunpack.c.h.b16 %v1989
        %v2110 = vunpack.c.l.b16 %v1990
        %v2111 = vunpack.c.h.b16 %v1990
        %v2112 = vunpack.c.l.b16 %v1991
        %v2113 = vunpack.c.h.b16 %v1991
        %v2114 = vunpack.c.l.b16 %v1992
        %v2115 = vunpack.c.h.b16 %v1992
        %v2116 = vunpack.c.l.b16 %v1993
        %v2117 = vunpack.c.h.b16 %v1993
        %v2118 = vunpack.c.l.b16 %v1994
        %v2119 = vunpack.c.h.b16 %v1994
        %v2120 = vunpack.c.l.b16 %v1995
        %v2121 = vunpack.c.h.b16 %v1995
        %v2122 = vunpack.c.l.b16 %v1996
        %v2123 = vunpack.c.h.b16 %v1996
        %v2124 = vunpack.c.l.b16 %v1997
        %v2125 = vunpack.c.h.b16 %v1997
        %v2126 = vunpack.c.l.b16 %v1998
        %v2127 = vunpack.c.h.b16 %v1998
        %v2128 = vunpack.c.l.b16 %v1999
        %v2129 = vunpack.c.h.b16 %v1999
        %v2130 = vunpack.c.l.b16 %v2000
        %v2131 = vunpack.c.h.b16 %v2000
        %v2132 = vunpack.c.l.b16 %v2001
        %v2133 = vunpack.c.h.b16 %v2001
        %v2134 = vunpack.c.l.b16 %v2002
        %v2135 = vunpack.c.h.b16 %v2002
        %v2136 = vunpack.c.l.b16 %v2003
        %v2137 = vunpack.c.h.b16 %v2003
        %v2138 = vunpack.c.l.b16 %v2004
        %v2139 = vunpack.c.h.b16 %v2004
        %v2140 = vunpack.c.l.b16 %v2005
        %v2141 = vunpack.c.h.b16 %v2005
        %v2142 = vunpack.c.l.b16 %v2006
        %v2143 = vunpack.c.h.b16 %v2006
        %v2144 = vunpack.c.l.b16 %v2007
        %v2145 = vunpack.c.h.b16 %v2007
        %v2146 = vunpack.c.l.b16 %v2008
        %v2147 = vunpack.c.h.b16 %v2008
        %v2148 = vunpack.c.l.b16 %v2009
        %v2149 = vunpack.c.h.b16 %v2009
        %v2150 = vunpack.c.l.b16 %v2010
        %v2151 = vunpack.c.h.b16 %v2010
        %v2152 = vunpack.c.l.b16 %v2011
        %v2153 = vunpack.c.h.b16 %v2011
        %v2154 = vunpack.c.l.b16 %v2012
        %v2155 = vunpack.c.h.b16 %v2012
        %v2156 = vunpack.c.l.b16 %v2013
        %v2157 = vunpack.c.h.b16 %v2013
        %v2158 = vpack.c.b16 %v2068, %v2062
        %v2159 = vpack.c.b16 %v2069, %v2063
        %v2160 = vpack.c.b16 %v2070, %v2064
        %v2161 = vpack.c.b16 %v2071, %v2065
        %v2162 = vpack.c.b16 %v2072, %v2066
        %v2163 = vpack.c.b16 %v2073, %v2067
        %v2164 = vpack.c.b16 %v2080, %v2074
        %v2165 = vpack.c.b16 %v2081, %v2075
        %v2166 = vpack.c.b16 %v2082, %v2076
        %v2167 = vpack.c.b16 %v2083, %v2077
        %v2168 = vpack.c.b16 %v2084, %v2078
        %v2169 = vpack.c.b16 %v2085, %v2079
        %v2170 = vpack.c.b16 %v2092, %v2086
        %v2171 = vpack.c.b16 %v2093, %v2087
        %v2172 = vpack.c.b16 %v2094, %v2088
        %v2173 = vpack.c.b16 %v2095, %v2089
        %v2174 = vpack.c.b16 %v2096, %v2090
        %v2175 = vpack.c.b16 %v2097, %v2091
        %v2176 = vpack.c.b16 %v2104, %v2098
        %v2177 = vpack.c.b16 %v2105, %v2099
        %v2178 = vpack.c.b16 %v2106, %v2100
        %v2179 = vpack.c.b16 %v2107, %v2101
        %v2180 = vpack.c.b16 %v2108, %v2102
        %v2181 = vpack.c.b16 %v2109, %v2103
        %v2182 = vpack.c.b16 %v2116, %v2110
        %v2183 = vpack.c.b16 %v2117, %v2111
        %v2184 = vpack.c.b16 %v2118, %v2112
        %v2185 = vpack.c.b16 %v2119, %v2113
        %v2186 = vpack.c.b16 %v2120, %v2114
        %v2187 = vpack.c.b16 %v2121, %v2115
        %v2188 = vpack.c.b16 %v2128, %v2122
        %v2189 = vpack.c.b16 %v2129, %v2123
        %v2190 = vpack.c.b16 %v2130, %v2124
        %v2191 = vpack.c.b16 %v2131, %v2125
        %v2192 = vpack.c.b16 %v2132, %v2126
        %v2193 = vpack.c.b16 %v2133, %v2127
        %v2194 = vpack.c.b16 %v2140, %v2134
        %v2195 = vpack.c.b16 %v2141, %v2135
        %v2196 = vpack.c.b16 %v2142, %v2136
        %v2197 = vpack.c.b16 %v2143, %v2137
        %v2198 = vpack.c.b16 %v2144, %v2138
        %v2199 = vpack.c.b16 %v2145, %v2139
        %v2200 = vpack.c.b16 %v2152, %v2146
        %v2201 = vpack.c.b16 %v2153, %v2147
        %v2202 = vpack.c.b16 %v2154, %v2148
        %v2203 = vpack.c.b16 %v2155, %v2149
        %v2204 = vpack.c.b16 %v2156, %v2150
        %v2205 = vpack.c.b16 %v2157, %v2151
        %2254 = vmatprep.subr.bf16.mxu0 %v2201
        %2255 = vmatpush1.bf16.msra.mxu0 %v2200
        %2256 = vmatprep.subr.bf16.mxu0 %v2195
        %2257 = vmatpush1.bf16.msra.mxu0 %v2194
        %2258 = vmatprep.subr.bf16.mxu0 %v2189
        %2259 = vmatpush1.bf16.msra.mxu0 %v2188
        %2260 = vmatprep.subr.bf16.mxu0 %v2183
        %2261 = vmatpush1.bf16.msra.mxu0 %v2182
        %2262 = vmatprep.subr.bf16.mxu0 %v2177
        %2263 = vmatpush1.bf16.msra.mxu0 %v2176
        %2264 = vmatprep.subr.bf16.mxu0 %v2171
        %2265 = vmatpush1.bf16.msra.mxu0 %v2170
        %2266 = vmatprep.subr.bf16.mxu0 %v2165
        %2267 = vmatpush1.bf16.msra.mxu0 %v2164
        %2268 = vmatprep.subr.bf16.mxu0 %v2159
        %2269 = vmatpush1.bf16.msra.mxu0 %v2158
        %2270 = vmatprep.subr.bf16.mxu0 0
        %2271 = vmatpush2.bf16.msra.mxu0 0
        %2272 = vmatprep.subr.bf16.mxu0 0
        %2273 = vmatpush2.bf16.msra.mxu0 0
        %2274 = vmatprep.subr.bf16.mxu0 0
        %2275 = vmatpush2.bf16.msra.mxu0 0
        %2276 = vmatprep.subr.bf16.mxu0 0
        %2277 = vmatpush2.bf16.msra.mxu0 0
        %2278 = vmatprep.subr.bf16.mxu0 0
        %2279 = vmatpush2.bf16.msra.mxu0 0
        %2280 = vmatprep.subr.bf16.mxu0 0
        %2281 = vmatpush2.bf16.msra.mxu0 0
        %2282 = vmatprep.subr.bf16.mxu0 0
        %2283 = vmatpush2.bf16.msra.mxu0 0
        %2284 = vmatprep.subr.bf16.mxu0 0
        %2285 = vmatpush2.bf16.msra.mxu0 0
        %2286 = vmatprep.mubr.bf16.mxu0 0
        %2287 = vmatmul.mubr.bf16.gmra.mxu0 %v1962
        %v2288 = vpop.f32.mrf.mxu0
        %v2289 = vadd.f32 0.0, %v2288
        %v2290 = vpop.f32.mrf.mxu0
        %v2291 = vadd.f32 0.0, %v2290
        %v2292 = vpop.f32.mrf.mxu0
        %v2293 = vadd.f32 0.0, %v2292
        %v2294 = vpop.f32.mrf.mxu0
        %v2295 = vadd.f32 0.0, %v2294
        %2296 = vmatprep.mubr.bf16.mxu0 0
        %2297 = vmatmul.mubr.bf16.gmra.mxu0 %v1963
        %v2298 = vpop.f32.mrf.mxu0
        %v2299 = vadd.f32 0.0, %v2298
        %v2300 = vpop.f32.mrf.mxu0
        %v2301 = vadd.f32 0.0, %v2300
        %v2302 = vpop.f32.mrf.mxu0
        %v2303 = vadd.f32 0.0, %v2302
        %v2304 = vpop.f32.mrf.mxu0
        %v2305 = vadd.f32 0.0, %v2304
        %2306 = vmatprep.mubr.bf16.mxu0 0
        %2307 = vmatmul.mubr.bf16.gmra.mxu0 %v1964
        %v2308 = vpop.f32.mrf.mxu0
        %v2309 = vadd.f32 0.0, %v2308
        %v2310 = vpop.f32.mrf.mxu0
        %v2311 = vadd.f32 0.0, %v2310
        %v2312 = vpop.f32.mrf.mxu0
        %v2313 = vadd.f32 0.0, %v2312
        %v2314 = vpop.f32.mrf.mxu0
        %v2315 = vadd.f32 0.0, %v2314
        %2316 = vmatprep.mubr.bf16.mxu0 0
        %2317 = vmatmul.mubr.bf16.gmra.mxu0 %v1965
        %v2318 = vpop.f32.mrf.mxu0
        %v2319 = vadd.f32 0.0, %v2318
        %v2320 = vpop.f32.mrf.mxu0
        %v2321 = vadd.f32 0.0, %v2320
        %v2322 = vpop.f32.mrf.mxu0
        %v2323 = vadd.f32 0.0, %v2322
        %v2324 = vpop.f32.mrf.mxu0
        %v2325 = vadd.f32 0.0, %v2324
        %2326 = vdwg.mxu0
        %2327 = vmatprep.subr.bf16.mxu0 %v2203
        %2328 = vmatpush1.bf16.msra.mxu0 %v2202
        %2329 = vmatprep.subr.bf16.mxu0 %v2197
        %2330 = vmatpush1.bf16.msra.mxu0 %v2196
        %2331 = vmatprep.subr.bf16.mxu0 %v2191
        %2332 = vmatpush1.bf16.msra.mxu0 %v2190
        %2333 = vmatprep.subr.bf16.mxu0 %v2185
        %2334 = vmatpush1.bf16.msra.mxu0 %v2184
        %2335 = vmatprep.subr.bf16.mxu0 %v2179
        %2336 = vmatpush1.bf16.msra.mxu0 %v2178
        %2337 = vmatprep.subr.bf16.mxu0 %v2173
        %2338 = vmatpush1.bf16.msra.mxu0 %v2172
        %2339 = vmatprep.subr.bf16.mxu0 %v2167
        %2340 = vmatpush1.bf16.msra.mxu0 %v2166
        %2341 = vmatprep.subr.bf16.mxu0 %v2161
        %2342 = vmatpush1.bf16.msra.mxu0 %v2160
        %2343 = vmatprep.subr.bf16.mxu0 0
        %2344 = vmatpush2.bf16.msra.mxu0 0
        %2345 = vmatprep.subr.bf16.mxu0 0
        %2346 = vmatpush2.bf16.msra.mxu0 0
        %2347 = vmatprep.subr.bf16.mxu0 0
        %2348 = vmatpush2.bf16.msra.mxu0 0
        %2349 = vmatprep.subr.bf16.mxu0 0
        %2350 = vmatpush2.bf16.msra.mxu0 0
        %2351 = vmatprep.subr.bf16.mxu0 0
        %2352 = vmatpush2.bf16.msra.mxu0 0
        %2353 = vmatprep.subr.bf16.mxu0 0
        %2354 = vmatpush2.bf16.msra.mxu0 0
        %2355 = vmatprep.subr.bf16.mxu0 0
        %2356 = vmatpush2.bf16.msra.mxu0 0
        %2357 = vmatprep.subr.bf16.mxu0 0
        %2358 = vmatpush2.bf16.msra.mxu0 0
        %2359 = vmatprep.mubr.bf16.mxu0 0
        %2360 = vmatmul.mubr.bf16.gmra.mxu0 %v1962
        %v2361 = vpop.f32.mrf.mxu0
        %v2362 = vadd.f32 0.0, %v2361
        %v2363 = vpop.f32.mrf.mxu0
        %v2364 = vadd.f32 0.0, %v2363
        %v2365 = vpop.f32.mrf.mxu0
        %v2366 = vadd.f32 0.0, %v2365
        %v2367 = vpop.f32.mrf.mxu0
        %v2368 = vadd.f32 0.0, %v2367
        %2369 = vmatprep.mubr.bf16.mxu0 0
        %2370 = vmatmul.mubr.bf16.gmra.mxu0 %v1963
        %v2371 = vpop.f32.mrf.mxu0
        %v2372 = vadd.f32 0.0, %v2371
        %v2373 = vpop.f32.mrf.mxu0
        %v2374 = vadd.f32 0.0, %v2373
        %v2375 = vpop.f32.mrf.mxu0
        %v2376 = vadd.f32 0.0, %v2375
        %v2377 = vpop.f32.mrf.mxu0
        %v2378 = vadd.f32 0.0, %v2377
        %2379 = vmatprep.mubr.bf16.mxu0 0
        %2380 = vmatmul.mubr.bf16.gmra.mxu0 %v1964
        %v2381 = vpop.f32.mrf.mxu0
        %v2382 = vadd.f32 0.0, %v2381
        %v2383 = vpop.f32.mrf.mxu0
        %v2384 = vadd.f32 0.0, %v2383
        %v2385 = vpop.f32.mrf.mxu0
        %v2386 = vadd.f32 0.0, %v2385
        %v2387 = vpop.f32.mrf.mxu0
        %v2388 = vadd.f32 0.0, %v2387
        %2389 = vmatprep.mubr.bf16.mxu0 0
        %2390 = vmatmul.mubr.bf16.gmra.mxu0 %v1965
        %v2391 = vpop.f32.mrf.mxu0
        %v2392 = vadd.f32 0.0, %v2391
        %v2393 = vpop.f32.mrf.mxu0
        %v2394 = vadd.f32 0.0, %v2393
        %v2395 = vpop.f32.mrf.mxu0
        %v2396 = vadd.f32 0.0, %v2395
        %v2397 = vpop.f32.mrf.mxu0
        %v2398 = vadd.f32 0.0, %v2397
        %2399 = vdwg.mxu0
        %2400 = vmatprep.subr.bf16.mxu0 %v2205
        %2401 = vmatpush1.bf16.msra.mxu0 %v2204
        %2402 = vmatprep.subr.bf16.mxu0 %v2199
        %2403 = vmatpush1.bf16.msra.mxu0 %v2198
        %2404 = vmatprep.subr.bf16.mxu0 %v2193
        %2405 = vmatpush1.bf16.msra.mxu0 %v2192
        %2406 = vmatprep.subr.bf16.mxu0 %v2187
        %2407 = vmatpush1.bf16.msra.mxu0 %v2186
        %2408 = vmatprep.subr.bf16.mxu0 %v2181
        %2409 = vmatpush1.bf16.msra.mxu0 %v2180
        %2410 = vmatprep.subr.bf16.mxu0 %v2175
        %2411 = vmatpush1.bf16.msra.mxu0 %v2174
        %2412 = vmatprep.subr.bf16.mxu0 %v2169
        %2413 = vmatpush1.bf16.msra.mxu0 %v2168
        %2414 = vmatprep.subr.bf16.mxu0 %v2163
        %2415 = vmatpush1.bf16.msra.mxu0 %v2162
        %2416 = vmatprep.subr.bf16.mxu0 0
        %2417 = vmatpush2.bf16.msra.mxu0 0
        %2418 = vmatprep.subr.bf16.mxu0 0
        %2419 = vmatpush2.bf16.msra.mxu0 0
        %2420 = vmatprep.subr.bf16.mxu0 0
        %2421 = vmatpush2.bf16.msra.mxu0 0
        %2422 = vmatprep.subr.bf16.mxu0 0
        %2423 = vmatpush2.bf16.msra.mxu0 0
        %2424 = vmatprep.subr.bf16.mxu0 0
        %2425 = vmatpush2.bf16.msra.mxu0 0
        %2426 = vmatprep.subr.bf16.mxu0 0
        %2427 = vmatpush2.bf16.msra.mxu0 0
        %2428 = vmatprep.subr.bf16.mxu0 0
        %2429 = vmatpush2.bf16.msra.mxu0 0
        %2430 = vmatprep.subr.bf16.mxu0 0
        %2431 = vmatpush2.bf16.msra.mxu0 0
        %2432 = vmatprep.mubr.bf16.mxu0 0
        %2433 = vmatmul.mubr.bf16.gmra.mxu0 %v1962
        %v2434 = vpop.f32.mrf.mxu0
        %v2435 = vadd.f32 0.0, %v2434
        %v2436 = vpop.f32.mrf.mxu0
        %v2437 = vadd.f32 0.0, %v2436
        %v2438 = vpop.f32.mrf.mxu0
        %v2439 = vadd.f32 0.0, %v2438
        %v2440 = vpop.f32.mrf.mxu0
        %v2441 = vadd.f32 0.0, %v2440
        %2442 = vmatprep.mubr.bf16.mxu0 0
        %2443 = vmatmul.mubr.bf16.gmra.mxu0 %v1963
        %v2444 = vpop.f32.mrf.mxu0
        %v2445 = vadd.f32 0.0, %v2444
        %v2446 = vpop.f32.mrf.mxu0
        %v2447 = vadd.f32 0.0, %v2446
        %v2448 = vpop.f32.mrf.mxu0
        %v2449 = vadd.f32 0.0, %v2448
        %v2450 = vpop.f32.mrf.mxu0
        %v2451 = vadd.f32 0.0, %v2450
        %2452 = vmatprep.mubr.bf16.mxu0 0
        %2453 = vmatmul.mubr.bf16.gmra.mxu0 %v1964
        %v2454 = vpop.f32.mrf.mxu0
        %v2455 = vadd.f32 0.0, %v2454
        %v2456 = vpop.f32.mrf.mxu0
        %v2457 = vadd.f32 0.0, %v2456
        %v2458 = vpop.f32.mrf.mxu0
        %v2459 = vadd.f32 0.0, %v2458
        %v2460 = vpop.f32.mrf.mxu0
        %v2461 = vadd.f32 0.0, %v2460
        %2462 = vmatprep.mubr.bf16.mxu0 0
        %2463 = vmatmul.mubr.bf16.gmra.mxu0 %v1965
        %v2464 = vpop.f32.mrf.mxu0
        %v2465 = vadd.f32 0.0, %v2464
        %v2466 = vpop.f32.mrf.mxu0
        %v2467 = vadd.f32 0.0, %v2466
        %v2468 = vpop.f32.mrf.mxu0
        %v2469 = vadd.f32 0.0, %v2468
        %v2470 = vpop.f32.mrf.mxu0
        %v2471 = vadd.f32 0.0, %v2470
        %2472 = vdwg.mxu0
        %v2473 = vpack.c.bf16 %v2293, %v2289
        %v2474 = vpack.c.bf16 %v2295, %v2291
        %v2475 = vpack.c.bf16 %v2366, %v2362
        %v2476 = vpack.c.bf16 %v2368, %v2364
        %v2477 = vpack.c.bf16 %v2439, %v2435
        %v2478 = vpack.c.bf16 %v2441, %v2437
        %v2479 = vpack.c.bf16 %v2303, %v2299
        %v2480 = vpack.c.bf16 %v2305, %v2301
        %v2481 = vpack.c.bf16 %v2376, %v2372
        %v2482 = vpack.c.bf16 %v2378, %v2374
        %v2483 = vpack.c.bf16 %v2449, %v2445
        %v2484 = vpack.c.bf16 %v2451, %v2447
        %v2485 = vpack.c.bf16 %v2313, %v2309
        %v2486 = vpack.c.bf16 %v2315, %v2311
        %v2487 = vpack.c.bf16 %v2386, %v2382
        %v2488 = vpack.c.bf16 %v2388, %v2384
        %v2489 = vpack.c.bf16 %v2459, %v2455
        %v2490 = vpack.c.bf16 %v2461, %v2457
        %v2491 = vpack.c.bf16 %v2323, %v2319
        %v2492 = vpack.c.bf16 %v2325, %v2321
        %v2493 = vpack.c.bf16 %v2396, %v2392
        %v2494 = vpack.c.bf16 %v2398, %v2394
        %v2495 = vpack.c.bf16 %v2469, %v2465
        %v2496 = vpack.c.bf16 %v2471, %v2467
        %v2497 = vld [vmem:[%s8] sm:$0xf]
        %v2498 = vld [vmem:[%s8 + $0x4] sm:$0xf]
        %v2499 = vld [vmem:[%s8 + $0x8] sm:$0xf]
        %v2500 = vld [vmem:[%s8 + $0xc] sm:$0xf]
        %s2501 = scalar_lea.vmem %s8, 16
        %v2502 = vld [vmem:[%s2501] sm:$0xf]
        %v2503 = vld [vmem:[%s2501 + $0x4] sm:$0xf]
        %v2504 = vld [vmem:[%s2501 + $0x8] sm:$0xf]
        %v2505 = vld [vmem:[%s2501 + $0xc] sm:$0xf]
        %v2510 = vunpack.c.l.b16 %v2502
        %v2511 = vunpack.c.l.b16 %v2503
        %v2512 = vunpack.c.l.b16 %v2504
        %v2513 = vunpack.c.l.b16 %v2505
        %v2514 = vpack.c.b16 %v2511, %v2510
        %v2515 = vpack.c.b16 %v2513, %v2512
        %v2517 = vsel %vm558, %v2514, 0
        %v2520 = vsel %vm558, %v2515, 0
        %2522 = vmatprep.subr.bf16.mxu0 0
        %2523 = vmatpush1.bf16.msra.mxu0 0
        %2524 = vmatprep.subr.bf16.mxu0 0
        %2525 = vmatpush1.bf16.msra.mxu0 0
        %2526 = vmatprep.subr.bf16.mxu0 0
        %2527 = vmatpush1.bf16.msra.mxu0 0
        %2528 = vmatprep.subr.bf16.mxu0 0
        %2529 = vmatpush1.bf16.msra.mxu0 0
        %2530 = vmatprep.subr.bf16.mxu0 %v2494
        %2531 = vmatpush1.bf16.msra.mxu0 %v2493
        %2532 = vmatprep.subr.bf16.mxu0 %v2488
        %2533 = vmatpush1.bf16.msra.mxu0 %v2487
        %2534 = vmatprep.subr.bf16.mxu0 %v2482
        %2535 = vmatpush1.bf16.msra.mxu0 %v2481
        %2536 = vmatprep.subr.bf16.mxu0 %v2476
        %2537 = vmatpush1.bf16.msra.mxu0 %v2475
        %2538 = vmatprep.subr.bf16.mxu0 0
        %2539 = vmatpush2.bf16.msra.mxu0 0
        %2540 = vmatprep.subr.bf16.mxu0 0
        %2541 = vmatpush2.bf16.msra.mxu0 0
        %2542 = vmatprep.subr.bf16.mxu0 0
        %2543 = vmatpush2.bf16.msra.mxu0 0
        %2544 = vmatprep.subr.bf16.mxu0 0
        %2545 = vmatpush2.bf16.msra.mxu0 0
        %2546 = vmatprep.subr.bf16.mxu0 0
        %2547 = vmatpush2.bf16.msra.mxu0 0
        %2548 = vmatprep.subr.bf16.mxu0 0
        %2549 = vmatpush2.bf16.msra.mxu0 0
        %2550 = vmatprep.subr.bf16.mxu0 0
        %2551 = vmatpush2.bf16.msra.mxu0 0
        %2552 = vmatprep.subr.bf16.mxu0 0
        %2553 = vmatpush2.bf16.msra.mxu0 0
        %2554 = vmatprep.mubr.bf16.mxu0 0
        %2555 = vmatmul.mubr.bf16.gmra.mxu0 %v2517
        %v2556 = vpop.f32.mrf.mxu0
        %v2557 = vadd.f32 0.0, %v2556
        %v2558 = vpop.f32.mrf.mxu0
        %v2559 = vadd.f32 0.0, %v2558
        %v2560 = vpop.f32.mrf.mxu0
        %v2561 = vadd.f32 0.0, %v2560
        %v2562 = vpop.f32.mrf.mxu0
        %v2563 = vadd.f32 0.0, %v2562
        %2564 = vmatprep.mubr.bf16.mxu0 0
        %2565 = vmatmul.mubr.bf16.gmra.mxu0 %v2520
        %v2566 = vpop.f32.mrf.mxu0
        %v2567 = vadd.f32 0.0, %v2566
        %v2568 = vpop.f32.mrf.mxu0
        %v2569 = vadd.f32 0.0, %v2568
        %v2570 = vpop.f32.mrf.mxu0
        %v2571 = vadd.f32 0.0, %v2570
        %v2572 = vpop.f32.mrf.mxu0
        %v2573 = vadd.f32 0.0, %v2572
        %2574 = vdwg.mxu0
        %v2579 = vunpack.c.l.b16 %v2497
        %v2580 = vunpack.c.l.b16 %v2498
        %v2581 = vunpack.c.l.b16 %v2499
        %v2582 = vunpack.c.l.b16 %v2500
        %v2583 = vpack.c.b16 %v2580, %v2579
        %v2584 = vpack.c.b16 %v2582, %v2581
        %v2586 = vsel %vm558, %v2583, 0
        %v2589 = vsel %vm558, %v2584, 0
        %2591 = vmatprep.subr.bf16.mxu0 0
        %2592 = vmatpush1.bf16.msra.mxu0 0
        %2593 = vmatprep.subr.bf16.mxu0 0
        %2594 = vmatpush1.bf16.msra.mxu0 0
        %2595 = vmatprep.subr.bf16.mxu0 0
        %2596 = vmatpush1.bf16.msra.mxu0 0
        %2597 = vmatprep.subr.bf16.mxu0 0
        %2598 = vmatpush1.bf16.msra.mxu0 0
        %2599 = vmatprep.subr.bf16.mxu0 %v2492
        %2600 = vmatpush1.bf16.msra.mxu0 %v2491
        %2601 = vmatprep.subr.bf16.mxu0 %v2486
        %2602 = vmatpush1.bf16.msra.mxu0 %v2485
        %2603 = vmatprep.subr.bf16.mxu0 %v2480
        %2604 = vmatpush1.bf16.msra.mxu0 %v2479
        %2605 = vmatprep.subr.bf16.mxu0 %v2474
        %2606 = vmatpush1.bf16.msra.mxu0 %v2473
        %2607 = vmatprep.subr.bf16.mxu0 0
        %2608 = vmatpush2.bf16.msra.mxu0 0
        %2609 = vmatprep.subr.bf16.mxu0 0
        %2610 = vmatpush2.bf16.msra.mxu0 0
        %2611 = vmatprep.subr.bf16.mxu0 0
        %2612 = vmatpush2.bf16.msra.mxu0 0
        %2613 = vmatprep.subr.bf16.mxu0 0
        %2614 = vmatpush2.bf16.msra.mxu0 0
        %2615 = vmatprep.subr.bf16.mxu0 0
        %2616 = vmatpush2.bf16.msra.mxu0 0
        %2617 = vmatprep.subr.bf16.mxu0 0
        %2618 = vmatpush2.bf16.msra.mxu0 0
        %2619 = vmatprep.subr.bf16.mxu0 0
        %2620 = vmatpush2.bf16.msra.mxu0 0
        %2621 = vmatprep.subr.bf16.mxu0 0
        %2622 = vmatpush2.bf16.msra.mxu0 0
        %2623 = vmatprep.mubr.bf16.mxu0 0
        %2624 = vmatmul.mubr.bf16.gmra.mxu0 %v2586
        %v2625 = vpop.f32.mrf.mxu0
        %v2626 = vadd.f32 %v2557, %v2625
        %v2627 = vpop.f32.mrf.mxu0
        %v2628 = vadd.f32 %v2559, %v2627
        %v2629 = vpop.f32.mrf.mxu0
        %v2630 = vadd.f32 %v2561, %v2629
        %v2631 = vpop.f32.mrf.mxu0
        %v2632 = vadd.f32 %v2563, %v2631
        %2633 = vmatprep.mubr.bf16.mxu0 0
        %2634 = vmatmul.mubr.bf16.gmra.mxu0 %v2589
        %v2635 = vpop.f32.mrf.mxu0
        %v2636 = vadd.f32 %v2567, %v2635
        %v2637 = vpop.f32.mrf.mxu0
        %v2638 = vadd.f32 %v2569, %v2637
        %v2639 = vpop.f32.mrf.mxu0
        %v2640 = vadd.f32 %v2571, %v2639
        %v2641 = vpop.f32.mrf.mxu0
        %v2642 = vadd.f32 %v2573, %v2641
        %2643 = vdwg.mxu0
        %s2644 = scalar_lea.vmem %s8, 32
        %v2645 = vld [vmem:[%s2644] sm:$0xf]
        %v2646 = vld [vmem:[%s2644 + $0x4] sm:$0xf]
        %v2647 = vld [vmem:[%s2644 + $0x8] sm:$0xf]
        %v2648 = vld [vmem:[%s2644 + $0xc] sm:$0xf]
        %v2653 = vunpack.c.l.b16 %v2645
        %v2654 = vunpack.c.l.b16 %v2646
        %v2655 = vunpack.c.l.b16 %v2647
        %v2656 = vunpack.c.l.b16 %v2648
        %v2657 = vpack.c.b16 %v2654, %v2653
        %v2658 = vpack.c.b16 %v2656, %v2655
        %v2660 = vsel %vm558, %v2657, 0
        %v2663 = vsel %vm558, %v2658, 0
        %2665 = vmatprep.subr.bf16.mxu0 0
        %2666 = vmatpush1.bf16.msra.mxu0 0
        %2667 = vmatprep.subr.bf16.mxu0 0
        %2668 = vmatpush1.bf16.msra.mxu0 0
        %2669 = vmatprep.subr.bf16.mxu0 0
        %2670 = vmatpush1.bf16.msra.mxu0 0
        %2671 = vmatprep.subr.bf16.mxu0 0
        %2672 = vmatpush1.bf16.msra.mxu0 0
        %2673 = vmatprep.subr.bf16.mxu0 %v2496
        %2674 = vmatpush1.bf16.msra.mxu0 %v2495
        %2675 = vmatprep.subr.bf16.mxu0 %v2490
        %2676 = vmatpush1.bf16.msra.mxu0 %v2489
        %2677 = vmatprep.subr.bf16.mxu0 %v2484
        %2678 = vmatpush1.bf16.msra.mxu0 %v2483
        %2679 = vmatprep.subr.bf16.mxu0 %v2478
        %2680 = vmatpush1.bf16.msra.mxu0 %v2477
        %2681 = vmatprep.subr.bf16.mxu0 0
        %2682 = vmatpush2.bf16.msra.mxu0 0
        %2683 = vmatprep.subr.bf16.mxu0 0
        %2684 = vmatpush2.bf16.msra.mxu0 0
        %2685 = vmatprep.subr.bf16.mxu0 0
        %2686 = vmatpush2.bf16.msra.mxu0 0
        %2687 = vmatprep.subr.bf16.mxu0 0
        %2688 = vmatpush2.bf16.msra.mxu0 0
        %2689 = vmatprep.subr.bf16.mxu0 0
        %2690 = vmatpush2.bf16.msra.mxu0 0
        %2691 = vmatprep.subr.bf16.mxu0 0
        %2692 = vmatpush2.bf16.msra.mxu0 0
        %2693 = vmatprep.subr.bf16.mxu0 0
        %2694 = vmatpush2.bf16.msra.mxu0 0
        %2695 = vmatprep.subr.bf16.mxu0 0
        %2696 = vmatpush2.bf16.msra.mxu0 0
        %2697 = vmatprep.mubr.bf16.mxu0 0
        %2698 = vmatmul.mubr.bf16.gmra.mxu0 %v2660
        %v2699 = vpop.f32.mrf.mxu0
        %v2700 = vadd.f32 0.0, %v2699
        %v2701 = vpop.f32.mrf.mxu0
        %v2702 = vadd.f32 0.0, %v2701
        %v2703 = vpop.f32.mrf.mxu0
        %v2704 = vadd.f32 0.0, %v2703
        %v2705 = vpop.f32.mrf.mxu0
        %v2706 = vadd.f32 0.0, %v2705
        %2707 = vmatprep.mubr.bf16.mxu0 0
        %2708 = vmatmul.mubr.bf16.gmra.mxu0 %v2663
        %v2709 = vpop.f32.mrf.mxu0
        %v2710 = vadd.f32 0.0, %v2709
        %v2711 = vpop.f32.mrf.mxu0
        %v2712 = vadd.f32 0.0, %v2711
        %v2713 = vpop.f32.mrf.mxu0
        %v2714 = vadd.f32 0.0, %v2713
        %v2715 = vpop.f32.mrf.mxu0
        %v2716 = vadd.f32 0.0, %v2715
        %2717 = vdwg.mxu0
        %v2718 = vadd.f32 %v2626, %v2700
        %v2719 = vadd.f32 %v2628, %v2702
        %v2720 = vadd.f32 %v2630, %v2704
        %v2721 = vadd.f32 %v2632, %v2706
        %v2722 = vadd.f32 %v2636, %v2710
        %v2723 = vadd.f32 %v2638, %v2712
        %v2724 = vadd.f32 %v2640, %v2714
        %v2725 = vadd.f32 %v2642, %v2716
        %v2726 = vld [vmem:[%s9] sm:$0x3]
        %v2728 = vlaneseq
        %v2729 = vshrl.u32 %v2728, 7
        %v2730 = vsub.s32 0, %v2729
        %v2731 = vrot.slane %v2726, %v2730
        %v2732 = vlaneseq
        %v2733 = vshrl.u32 %v2732, 7
        %v2734 = vsub.s32 1, %v2733
        %v2735 = vrot.slane %v2726, %v2734
        %v2738 = vadd.f32 %v2718, %v2731
        %v2739 = vadd.f32 %v2719, %v2735
        %v2740 = vadd.f32 %v2720, %v2731
        %v2741 = vadd.f32 %v2721, %v2735
        %v2742 = vadd.f32 %v2722, %v2731
        %v2743 = vadd.f32 %v2723, %v2735
        %v2744 = vadd.f32 %v2724, %v2731
        %v2745 = vadd.f32 %v2725, %v2735
        %v2746 = vmax.f32 %v2738, 0.0
        %v2747 = vmax.f32 %v2739, 0.0
        %v2748 = vmax.f32 %v2740, 0.0
        %v2749 = vmax.f32 %v2741, 0.0
        %v2750 = vmax.f32 %v2742, 0.0
        %v2751 = vmax.f32 %v2743, 0.0
        %v2752 = vmax.f32 %v2744, 0.0
        %v2753 = vmax.f32 %v2745, 0.0
        %s2754 = sld [smem:[#allocation2]]
        %v2755 = vmax.f32 %v2746, 1e-06
        %v2756 = vmax.f32 %v2747, 1e-06
        %v2757 = vmax.f32 %v2748, 1e-06
        %v2758 = vmax.f32 %v2749, 1e-06
        %v2759 = vmax.f32 %v2750, 1e-06
        %v2760 = vmax.f32 %v2751, 1e-06
        %v2761 = vmax.f32 %v2752, 1e-06
        %v2762 = vmax.f32 %v2753, 1e-06
        %v2763 = vlog2.pop %v2755
        %v2764 = vmul.f32 %v2763, 0.6931472
        %v2765 = vlog2.pop %v2756
        %v2766 = vmul.f32 %v2765, 0.6931472
        %v2767 = vlog2.pop %v2757
        %v2768 = vmul.f32 %v2767, 0.6931472
        %v2769 = vlog2.pop %v2758
        %v2770 = vmul.f32 %v2769, 0.6931472
        %v2771 = vlog2.pop %v2759
        %v2772 = vmul.f32 %v2771, 0.6931472
        %v2773 = vlog2.pop %v2760
        %v2774 = vmul.f32 %v2773, 0.6931472
        %v2775 = vlog2.pop %v2761
        %v2776 = vmul.f32 %v2775, 0.6931472
        %v2777 = vlog2.pop %v2762
        %v2778 = vmul.f32 %v2777, 0.6931472
        %v2779 = vstv %s2754
        %v2780 = vmul.f32 %v2779, %v2764
        %v2781 = vmul.f32 %v2779, %v2766
        %v2782 = vmul.f32 %v2779, %v2768
        %v2783 = vmul.f32 %v2779, %v2770
        %v2784 = vmul.f32 %v2779, %v2772
        %v2785 = vmul.f32 %v2779, %v2774
        %v2786 = vmul.f32 %v2779, %v2776
        %v2787 = vmul.f32 %v2779, %v2778
        %v2788 = vmul.f32 %v2780, 1.442695
        %v2789 = vpow.pop %v2788
        %v2790 = vmul.f32 %v2781, 1.442695
        %v2791 = vpow.pop %v2790
        %v2792 = vmul.f32 %v2782, 1.442695
        %v2793 = vpow.pop %v2792
        %v2794 = vmul.f32 %v2783, 1.442695
        %v2795 = vpow.pop %v2794
        %v2796 = vmul.f32 %v2784, 1.442695
        %v2797 = vpow.pop %v2796
        %v2798 = vmul.f32 %v2785, 1.442695
        %v2799 = vpow.pop %v2798
        %v2800 = vmul.f32 %v2786, 1.442695
        %v2801 = vpow.pop %v2800
        %v2802 = vmul.f32 %v2787, 1.442695
        %v2803 = vpow.pop %v2802
        %v2804 = vpack.c.bf16 %v2793, %v2789
        %v2805 = vpack.c.bf16 %v2795, %v2791
        %v2806 = vpack.c.bf16 %v2801, %v2797
        %v2807 = vpack.c.bf16 %v2803, %v2799
        %v2808 = vld [vmem:[%s10] sm:$0xf]
        %vm2809 = vcmask 261120
        %v2811 = vsel %vm2809, %v2808, 0
        %2813 = vmatprep.subr.bf16.mxu0 0
        %2814 = vmatpush1.bf16.msra.mxu0 0
        %2815 = vmatprep.subr.bf16.mxu0 0
        %2816 = vmatpush1.bf16.msra.mxu0 0
        %2817 = vmatprep.subr.bf16.mxu0 0
        %2818 = vmatpush1.bf16.msra.mxu0 0
        %2819 = vmatprep.subr.bf16.mxu0 0
        %2820 = vmatpush1.bf16.msra.mxu0 0
        %2821 = vmatprep.subr.bf16.mxu0 0
        %2822 = vmatpush1.bf16.msra.mxu0 0
        %2823 = vmatprep.subr.bf16.mxu0 0
        %2824 = vmatpush1.bf16.msra.mxu0 0
        %2825 = vmatprep.subr.bf16.mxu0 %v2807
        %2826 = vmatpush1.bf16.msra.mxu0 %v2806
        %2827 = vmatprep.subr.bf16.mxu0 %v2805
        %2828 = vmatpush1.bf16.msra.mxu0 %v2804
        %2829 = vmatprep.subr.bf16.mxu0 0
        %2830 = vmatpush2.bf16.msra.mxu0 0
        %2831 = vmatprep.subr.bf16.mxu0 0
        %2832 = vmatpush2.bf16.msra.mxu0 0
        %2833 = vmatprep.subr.bf16.mxu0 0
        %2834 = vmatpush2.bf16.msra.mxu0 0
        %2835 = vmatprep.subr.bf16.mxu0 0
        %2836 = vmatpush2.bf16.msra.mxu0 0
        %2837 = vmatprep.subr.bf16.mxu0 0
        %2838 = vmatpush2.bf16.msra.mxu0 0
        %2839 = vmatprep.subr.bf16.mxu0 0
        %2840 = vmatpush2.bf16.msra.mxu0 0
        %2841 = vmatprep.subr.bf16.mxu0 0
        %2842 = vmatpush2.bf16.msra.mxu0 0
        %2843 = vmatprep.subr.bf16.mxu0 0
        %2844 = vmatpush2.bf16.msra.mxu0 0
        %2845 = vmatprep.mubr.bf16.mxu0 0
        %2846 = vmatmul.mubr.bf16.gmra.mxu0 %v2811
        %v2847 = vpop.f32.mrf.mxu0
        %v2848 = vadd.f32 0.0, %v2847
        %v2849 = vpop.f32.mrf.mxu0
        %v2850 = vadd.f32 0.0, %v2849
        %v2851 = vpop.f32.mrf.mxu0
        %v2852 = vpop.f32.mrf.mxu0
        %2853 = vdwg.mxu0
        %v2854 = vpack.c.bf16 %v2848, %v2848
        %v2855 = vpack.c.bf16 %v2850, %v2850
        %v2856 = vld [vmem:[%s11] sm:$0xf]
        %v2857 = vld [vmem:[%s11 + $0x4] sm:$0xf]
        %v2858 = vld [vmem:[%s11 + $0x8] sm:$0xf]
        %v2859 = vld [vmem:[%s11 + $0xc] sm:$0xf]
        %v2860 = vld [vmem:[%s11 + $0x10] sm:$0xf]
        %v2861 = vld [vmem:[%s11 + $0x14] sm:$0xf]
        %v2862 = vld [vmem:[%s11 + $0x18] sm:$0xf]
        %v2863 = vld [vmem:[%s11 + $0x1c] sm:$0xf]
        %v2864 = vld [vmem:[%s11 + $0x20] sm:$0xf]
        %v2865 = vld [vmem:[%s11 + $0x24] sm:$0xf]
        %v2866 = vld [vmem:[%s11 + $0x28] sm:$0xf]
        %v2867 = vld [vmem:[%s11 + $0x2c] sm:$0xf]
        %v2868 = vld [vmem:[%s11 + $0x30] sm:$0xf]
        %v2869 = vld [vmem:[%s11 + $0x34] sm:$0xf]
        %v2870 = vld [vmem:[%s11 + $0x38] sm:$0xf]
        %v2871 = vld [vmem:[%s11 + $0x3c] sm:$0xf]
        %v2872 = vld [vmem:[%s11 + $0x40] sm:$0xf]
        %v2873 = vld [vmem:[%s11 + $0x44] sm:$0xf]
        %v2874 = vld [vmem:[%s11 + $0x48] sm:$0xf]
        %v2875 = vld [vmem:[%s11 + $0x4c] sm:$0xf]
        %v2876 = vld [vmem:[%s11 + $0x50] sm:$0xf]
        %v2877 = vld [vmem:[%s11 + $0x54] sm:$0xf]
        %v2878 = vld [vmem:[%s11 + $0x58] sm:$0xf]
        %v2879 = vld [vmem:[%s11 + $0x5c] sm:$0xf]
        %v2880 = vld [vmem:[%s11 + $0x60] sm:$0xf]
        %v2881 = vld [vmem:[%s11 + $0x64] sm:$0xf]
        %v2882 = vld [vmem:[%s11 + $0x68] sm:$0xf]
        %v2883 = vld [vmem:[%s11 + $0x6c] sm:$0xf]
        %v2884 = vld [vmem:[%s11 + $0x70] sm:$0xf]
        %v2885 = vld [vmem:[%s11 + $0x74] sm:$0xf]
        %v2886 = vld [vmem:[%s11 + $0x78] sm:$0xf]
        %v2887 = vld [vmem:[%s11 + $0x7c] sm:$0xf]
        %v2920 = vunpack.c.l.b16 %v2856
        %v2921 = vunpack.c.l.b16 %v2857
        %v2922 = vunpack.c.l.b16 %v2858
        %v2923 = vunpack.c.l.b16 %v2859
        %v2924 = vunpack.c.l.b16 %v2860
        %v2925 = vunpack.c.l.b16 %v2861
        %v2926 = vunpack.c.l.b16 %v2862
        %v2927 = vunpack.c.l.b16 %v2863
        %v2928 = vunpack.c.l.b16 %v2864
        %v2929 = vunpack.c.l.b16 %v2865
        %v2930 = vunpack.c.l.b16 %v2866
        %v2931 = vunpack.c.l.b16 %v2867
        %v2932 = vunpack.c.l.b16 %v2868
        %v2933 = vunpack.c.l.b16 %v2869
        %v2934 = vunpack.c.l.b16 %v2870
        %v2935 = vunpack.c.l.b16 %v2871
        %v2936 = vunpack.c.l.b16 %v2872
        %v2937 = vunpack.c.l.b16 %v2873
        %v2938 = vunpack.c.l.b16 %v2874
        %v2939 = vunpack.c.l.b16 %v2875
        %v2940 = vunpack.c.l.b16 %v2876
        %v2941 = vunpack.c.l.b16 %v2877
        %v2942 = vunpack.c.l.b16 %v2878
        %v2943 = vunpack.c.l.b16 %v2879
        %v2944 = vunpack.c.l.b16 %v2880
        %v2945 = vunpack.c.l.b16 %v2881
        %v2946 = vunpack.c.l.b16 %v2882
        %v2947 = vunpack.c.l.b16 %v2883
        %v2948 = vunpack.c.l.b16 %v2884
        %v2949 = vunpack.c.l.b16 %v2885
        %v2950 = vunpack.c.l.b16 %v2886
        %v2951 = vunpack.c.l.b16 %v2887
        %v2952 = vpack.c.b16 %v2921, %v2920
        %v2953 = vpack.c.b16 %v2923, %v2922
        %v2954 = vpack.c.b16 %v2925, %v2924
        %v2955 = vpack.c.b16 %v2927, %v2926
        %v2956 = vpack.c.b16 %v2929, %v2928
        %v2957 = vpack.c.b16 %v2931, %v2930
        %v2958 = vpack.c.b16 %v2933, %v2932
        %v2959 = vpack.c.b16 %v2935, %v2934
        %v2960 = vpack.c.b16 %v2937, %v2936
        %v2961 = vpack.c.b16 %v2939, %v2938
        %v2962 = vpack.c.b16 %v2941, %v2940
        %v2963 = vpack.c.b16 %v2943, %v2942
        %v2964 = vpack.c.b16 %v2945, %v2944
        %v2965 = vpack.c.b16 %v2947, %v2946
        %v2966 = vpack.c.b16 %v2949, %v2948
        %v2967 = vpack.c.b16 %v2951, %v2950
        %2984 = vmatprep.subr.bf16.mxu0 0
        %2985 = vmatpush1.bf16.msra.mxu0 %v2959
        %2986 = vmatprep.subr.bf16.mxu0 0
        %2987 = vmatpush1.bf16.msra.mxu0 %v2958
        %2988 = vmatprep.subr.bf16.mxu0 0
        %2989 = vmatpush1.bf16.msra.mxu0 %v2957
        %2990 = vmatprep.subr.bf16.mxu0 0
        %2991 = vmatpush1.bf16.msra.mxu0 %v2956
        %2992 = vmatprep.subr.bf16.mxu0 0
        %2993 = vmatpush1.bf16.msra.mxu0 %v2955
        %2994 = vmatprep.subr.bf16.mxu0 0
        %2995 = vmatpush1.bf16.msra.mxu0 %v2954
        %2996 = vmatprep.subr.bf16.mxu0 0
        %2997 = vmatpush1.bf16.msra.mxu0 %v2953
        %2998 = vmatprep.subr.bf16.mxu0 0
        %2999 = vmatpush1.bf16.msra.mxu0 %v2952
        %3000 = vmatprep.subr.bf16.mxu0 0
        %3001 = vmatpush2.bf16.msra.mxu0 %v2967
        %3002 = vmatprep.subr.bf16.mxu0 0
        %3003 = vmatpush2.bf16.msra.mxu0 %v2966
        %3004 = vmatprep.subr.bf16.mxu0 0
        %3005 = vmatpush2.bf16.msra.mxu0 %v2965
        %3006 = vmatprep.subr.bf16.mxu0 0
        %3007 = vmatpush2.bf16.msra.mxu0 %v2964
        %3008 = vmatprep.subr.bf16.mxu0 0
        %3009 = vmatpush2.bf16.msra.mxu0 %v2963
        %3010 = vmatprep.subr.bf16.mxu0 0
        %3011 = vmatpush2.bf16.msra.mxu0 %v2962
        %3012 = vmatprep.subr.bf16.mxu0 0
        %3013 = vmatpush2.bf16.msra.mxu0 %v2961
        %3014 = vmatprep.subr.bf16.mxu0 0
        %3015 = vmatpush2.bf16.msra.mxu0 %v2960
        %3016 = vmatprep.mubr.bf16.mxu0 %v2855
        %3017 = vmatmul.mubr.bf16.gmra.mxu0 %v2854
        %v3018 = vpop.f32.mrf.mxu0
        %v3019 = vadd.f32 0.0, %v3018
        %v3020 = vpop.f32.mrf.mxu0
        %v3021 = vpop.f32.mrf.mxu0
        %v3022 = vpop.f32.mrf.mxu0
        %3023 = vdwg.mxu0
        %v3024 = vmax.f32 %v3019, 1e-30
        %v3025 = vlog2.pop %v3024
        %v3026 = vmul.f32 %v3025, 0.6931472
        %v3027 = vstv %s2754
        %v3028 = vrcp.pop %v3027
        %s3029 = vtos %v3028
        %v3030 = vstv %s3029
        %v3031 = vmul.f32 %v3026, %v3030
        %v3032 = vmul.f32 %v3031, 1.442695
        %v3033 = vpow.pop %v3032
        %v3034 = vpack.c.bf16 %v3033, %v3033
        %v3035 = vld [vmem:[%s12] sm:$0xf]
        %v3036 = vld [vmem:[%s12 + $0x4] sm:$0xf]
        %v3037 = vld [vmem:[%s12 + $0x8] sm:$0xf]
        %v3038 = vld [vmem:[%s12 + $0xc] sm:$0xf]
        %v3039 = vld [vmem:[%s12 + $0x10] sm:$0xf]
        %v3040 = vld [vmem:[%s12 + $0x14] sm:$0xf]
        %v3041 = vld [vmem:[%s12 + $0x18] sm:$0xf]
        %v3042 = vld [vmem:[%s12 + $0x1c] sm:$0xf]
        %v3043 = vld [vmem:[%s12 + $0x20] sm:$0xf]
        %v3044 = vld [vmem:[%s12 + $0x24] sm:$0xf]
        %v3045 = vld [vmem:[%s12 + $0x28] sm:$0xf]
        %v3046 = vld [vmem:[%s12 + $0x2c] sm:$0xf]
        %v3047 = vld [vmem:[%s12 + $0x30] sm:$0xf]
        %v3048 = vld [vmem:[%s12 + $0x34] sm:$0xf]
        %v3049 = vld [vmem:[%s12 + $0x38] sm:$0xf]
        %v3050 = vld [vmem:[%s12 + $0x3c] sm:$0xf]
        %v3051 = vld [vmem:[%s13] sm:$0x1]
        %v3053 = vlaneseq
        %v3054 = vshrl.u32 %v3053, 7
        %v3055 = vsub.s32 0, %v3054
        %v3056 = vrot.slane %v3051, %v3055
        %v3074 = vunpack.c.l.b16 %v3035
        %v3075 = vunpack.c.l.b16 %v3036
        %v3076 = vunpack.c.l.b16 %v3037
        %v3077 = vunpack.c.l.b16 %v3038
        %v3078 = vunpack.c.l.b16 %v3039
        %v3079 = vunpack.c.l.b16 %v3040
        %v3080 = vunpack.c.l.b16 %v3041
        %v3081 = vunpack.c.l.b16 %v3042
        %v3082 = vunpack.c.l.b16 %v3043
        %v3083 = vunpack.c.l.b16 %v3044
        %v3084 = vunpack.c.l.b16 %v3045
        %v3085 = vunpack.c.l.b16 %v3046
        %v3086 = vunpack.c.l.b16 %v3047
        %v3087 = vunpack.c.l.b16 %v3048
        %v3088 = vunpack.c.l.b16 %v3049
        %v3089 = vunpack.c.l.b16 %v3050
        %v3090 = vpack.c.b16 %v3075, %v3074
        %v3091 = vpack.c.b16 %v3077, %v3076
        %v3092 = vpack.c.b16 %v3079, %v3078
        %v3093 = vpack.c.b16 %v3081, %v3080
        %v3094 = vpack.c.b16 %v3083, %v3082
        %v3095 = vpack.c.b16 %v3085, %v3084
        %v3096 = vpack.c.b16 %v3087, %v3086
        %v3097 = vpack.c.b16 %v3089, %v3088
        %3106 = vmatprep.subr.bf16.mxu0 0
        %3107 = vmatpush1.bf16.msra.mxu0 %v3097
        %3108 = vmatprep.subr.bf16.mxu0 0
        %3109 = vmatpush1.bf16.msra.mxu0 %v3096
        %3110 = vmatprep.subr.bf16.mxu0 0
        %3111 = vmatpush1.bf16.msra.mxu0 %v3095
        %3112 = vmatprep.subr.bf16.mxu0 0
        %3113 = vmatpush1.bf16.msra.mxu0 %v3094
        %3114 = vmatprep.subr.bf16.mxu0 0
        %3115 = vmatpush1.bf16.msra.mxu0 %v3093
        %3116 = vmatprep.subr.bf16.mxu0 0
        %3117 = vmatpush1.bf16.msra.mxu0 %v3092
        %3118 = vmatprep.subr.bf16.mxu0 0
        %3119 = vmatpush1.bf16.msra.mxu0 %v3091
        %3120 = vmatprep.subr.bf16.mxu0 0
        %3121 = vmatpush1.bf16.msra.mxu0 %v3090
        %3122 = vmatprep.subr.bf16.mxu0 0
        %3123 = vmatpush2.bf16.msra.mxu0 0
        %3124 = vmatprep.subr.bf16.mxu0 0
        %3125 = vmatpush2.bf16.msra.mxu0 0
        %3126 = vmatprep.subr.bf16.mxu0 0
        %3127 = vmatpush2.bf16.msra.mxu0 0
        %3128 = vmatprep.subr.bf16.mxu0 0
        %3129 = vmatpush2.bf16.msra.mxu0 0
        %3130 = vmatprep.subr.bf16.mxu0 0
        %3131 = vmatpush2.bf16.msra.mxu0 0
        %3132 = vmatprep.subr.bf16.mxu0 0
        %3133 = vmatpush2.bf16.msra.mxu0 0
        %3134 = vmatprep.subr.bf16.mxu0 0
        %3135 = vmatpush2.bf16.msra.mxu0 0
        %3136 = vmatprep.subr.bf16.mxu0 0
        %3137 = vmatpush2.bf16.msra.mxu0 0
        %3138 = vmatprep.mubr.bf16.mxu0 0
        %3139 = vmatmul.mubr.bf16.gmra.mxu0 %v3034
        %v3140 = vpop.f32.mrf.mxu0
        %v3141 = vadd.f32 %v3056, %v3140
        %v3142 = vpop.f32.mrf.mxu0
        %v3143 = vpop.f32.mrf.mxu0
        %v3144 = vpop.f32.mrf.mxu0
        %3145 = vdwg.mxu0
        %3146 = vst [vmem:[%s462] sm:$0xff] %v3141
        %s3147 = sand.u32 %s336, 1
        %s3148 = scalar_lea.sflag [#allocation4], %s3147
        %s3149 = sand.u32 %s336, 1
        %s3150 = smul.addr %s3149, 8
        %s3151 = scalar_lea.vmem [#allocation3], %s3150
        // Predicated region
        $region77: #{_lambda_.1} parent=75 // pred_check
          %p3152 = pneg %p346
        $region78: #{_lambda_.1} parent=75 // pred_check_branch
          %3154 = sbr.rel (%p3152) target = $region80
        $region79: #{_lambda_.1} parent=75 // pred_region
          %s3156 = ssub.s32 128, 128
          %3157 = vsyncadd %s3148, %s3156
          %s3158 = smul.addr %s29, 128
          %s3159 = scalar_lea.hbm %s14, %s3158
          %s3161 = sshll.u32 %s3151, 4
          %s3162 = int_to_ptr.vmem [resolvable:$true] %s3161
          %3164 = dma.vmem_to_hbm [thread:$0]  %s3162, 128, %s3159, %s3148
        $region80: #{_lambda_.1} parent=75 // pred_fallthru
          _
      $region76: #{_lambda_.1} parent=5 // pred_fallthru
        _
      %p3165 = scmp.le.s32.totalorder 2, %s24
      // Predicated region
      $region81: #{_lambda_.1} parent=5 // pred_check
        %p3166 = pneg %p3165
      $region82: #{_lambda_.1} parent=5 // pred_check_branch
        %3168 = sbr.rel (%p3166) target = $region84
      $region83: #{_lambda_.1} parent=5 // pred_region
        %s3169 = ssub.s32 %s24, 2
        // Predicated region
        $region85: #{_lambda_.1} parent=83 // pred_check
          %p3170 = pneg %p352
        $region86: #{_lambda_.1} parent=83 // pred_check_branch
          %3172 = sbr.rel (%p3170) target = $region88
        $region87: #{_lambda_.1} parent=83 // pred_region
          %s3173 = sand.u32 %s337, 1
          %s3174 = scalar_lea.sflag [#allocation4], %s3173
          %s3175 = sand.u32 %s337, 1
          %s3176 = smul.addr %s3175, 8
          %s3177 = scalar_lea.vmem [#allocation3], %s3176
          %3178 = dma.done %s3174, 128
        $region88: #{_lambda_.1} parent=83 // pred_fallthru
          _
      $region84: #{_lambda_.1} parent=5 // pred_fallthru
        _
    $region6: #{_lambda_.1} parent=1 // loop_footer
      %s28 = sadd.s32 1, %s24
    $region7: #{_lambda_.1} parent=1 // loop_footer_branch
      %23 = sbr.rel target = $region3
    $region8: #{_lambda_.1} parent=1 // loop_exit
      _
    %3179 = vsyncpa [#allocation4], 1
    %s3180 = scalar_lea.sflag [#allocation4], 1
    %3181 = vsyncpa %s3180, 1

</llo_original>
